<compile_context>
chip_gen: v7x
topology: tpu7x:2x2x1
jax: 0.10.0
libtpu: 0.0.40
codegen_flags: <defaults>
</compile_context>

<pallas_src>
import functools
import math

import jax
import jax.numpy as jnp
from jax.experimental import pallas as pl
from jax.experimental.pallas import tpu as pltpu


def neural_flow_kernel(tm, nx,
                       g_ref, x2_ref, trow_ref, cummat_ref,
                       w1_ref, b1_ref, w2_ref, b2_ref, w3_ref, b3_ref,
                       w4_ref, b4_ref,
                       wz1_ref, bz1_ref, wz2t_ref, bz2_ref,
                       log_px_ref, log_pz_ref, log_jacob_ref, z_ref):
    # ---- main network on the (tm*nx, 2) point block (MXU matmuls) -----------
    g = g_ref[...]                                                  # (tm*nx, 2)
    h = jnp.tanh(jnp.dot(g, w1_ref[...], preferred_element_type=jnp.float32) + b1_ref[...])
    h = jnp.tanh(jnp.dot(h, w2_ref[...], preferred_element_type=jnp.float32) + b2_ref[...])
    h = jnp.tanh(jnp.dot(h, w3_ref[...], preferred_element_type=jnp.float32) + b3_ref[...])
    lj_flat = jnp.dot(h, w4_ref[...], preferred_element_type=jnp.float32) + b4_ref[...]  # (tm*nx, 1)

    # ---- lane-dense tail: everything below lives in (tm, nx) ----------------
    log_jacob = lj_flat.reshape(tm, nx)        # single relayout to lane-dense
    dzdx = jnp.exp(log_jacob)                  # EUP on full-width vregs
    x2 = x2_ref[...]                           # (tm, nx)

    # Adjacent-column pairing via XLU roll (shift by nx-1 == circular "+1");
    # the wrapped last column is garbage but is killed by the cumsum matrix.
    f_next = pltpu.roll(dzdx, nx - 1, 1)       # [:, k] -> dzdx[:, (k+1) % nx]
    x_next = pltpu.roll(x2, nx - 1, 1)
    trapz = 0.5 * (f_next + dzdx) * (x_next - x2)   # (tm, nx); col nx-1 unused

    # Cumsum-with-leading-zero as one MXU matmul against the precomputed
    # strictly-upper-triangular matrix; its last row is all zeros, so the
    # wrapped trapezoid column never contributes.  Column 0 of z2d is 0.
    z2d = jnp.dot(trapz, cummat_ref[...], preferred_element_type=jnp.float32)  # (tm, nx)

    # ---- z0 network on the tm unique t values only (VPU + XLU, no MXU) ------
    t_rows = trow_ref[...]                                          # (tm, 1)
    hz = jnp.tanh(t_rows * wz1_ref[...] + bz1_ref[...])             # (tm, 100)
    z0_rows = jnp.sum(hz * wz2t_ref[...], axis=-1, keepdims=True) + bz2_ref[...]  # (tm, 1)

    z = z2d + z0_rows                                               # lane broadcast
    log_pz = -0.5 * z * z - 0.5 * math.log(2.0 * math.pi)
    log_px = log_pz + log_jacob

    log_px_ref[...] = log_px
    log_pz_ref[...] = log_pz
    log_jacob_ref[...] = log_jacob
    z_ref[...] = z


def neural_flow_forward(grid_data, params, nt, nx, block_rows=None):
    """grid_data: (nt*nx, 2) f32, row-major over (t, x) with x fastest.
    Returns (log_px, log_pz, log_jacob, z), each (nt*nx, 1) f32."""
    (w1, b1, w2, b2, w3, b3, w4, b4, wz1, bz1, wz2, bz2) = params
    n = nt * nx
    assert grid_data.shape == (n, 2)

    # Row-block size: a multiple of 8 that divides nt, targeting ~64K f32 per
    # (block_rows, nx) operand block -- comfortably inside the default scoped
    # VMEM with double buffering on v5e/v6e and on v7x's smaller 64 MiB VMEM.
    if block_rows is None:
        block_rows = max(8, ((64 * 1024) // max(nx, 1)) // 8 * 8)
    block_rows = min(block_rows, nt)
    if block_rows % 8 != 0 or nt % block_rows != 0:
        block_rows = nt                      # fall back to a single untiled block
    tm = block_rows
    grid = (nt // tm,)

    # Per-row quantities in lane-dense 2-D layout, and deduplicated t per row.
    x2d = grid_data[:, 1].reshape(nt, nx)
    t_rows = grid_data[:, 0].reshape(nt, nx)[:, :1]     # (nt, 1) unique t per row
    wz2_t = wz2.T                                       # (1, 100) for lane reduce

    # Strictly-upper-triangular cumsum matrix, built once outside the kernel.
    # (For nx >> 256 a blocked per-128-column scan would bound the O(nx^2) cost.)
    idx = jnp.arange(nx)
    cummat = (idx[None, :] >= idx[:, None] + 1).astype(jnp.float32)   # (nx, nx)

    rows = lambda i: (i, 0)
    const = lambda i: (0, 0)
    weight_args = (w1, b1, w2, b2, w3, b3, w4, b4, wz1, bz1, wz2_t, bz2)

    in_specs = (
        [pl.BlockSpec((tm * nx, 2), rows),      # grid points (main-MLP input)
         pl.BlockSpec((tm, nx), rows),          # x grid, lane-dense
         pl.BlockSpec((tm, 1), rows),           # unique t per row
         pl.BlockSpec((nx, nx), const)]         # cumsum matrix (VMEM-resident)
        + [pl.BlockSpec(w.shape, const) for w in weight_args]  # resident weights
    )
    out_specs = tuple(pl.BlockSpec((tm, nx), rows) for _ in range(4))
    out_shape = tuple(jax.ShapeDtypeStruct((nt, nx), jnp.float32) for _ in range(4))

    kern = functools.partial(neural_flow_kernel, tm, nx)
    outs2d = pl.pallas_call(
        kern,
        out_shape=out_shape,
        grid=grid,
        in_specs=in_specs,
        out_specs=out_specs,
        compiler_params=pltpu.CompilerParams(
            dimension_semantics=("parallel",)),   # rows independent -> megacore
    )(grid_data, x2d, t_rows, cummat, *weight_args)

    # Back to the module's (N, 1) output convention (cheap wrapper reshape).
    return tuple(o.reshape(n, 1) for o in outs2d)


# ----------------------------- parameter setup ------------------------------

def _linear_init(key, fan_in, fan_out):
    """Deterministic PyTorch-style init: U(-1/sqrt(fan_in), 1/sqrt(fan_in))."""
    kw, kb = jax.random.split(key)
    bound = 1.0 / math.sqrt(fan_in)
    w = jax.random.uniform(kw, (fan_in, fan_out), jnp.float32, -bound, bound)
    b = jax.random.uniform(kb, (1, fan_out), jnp.float32, -bound, bound)
    return w, b


def init_params(key):
    keys = jax.random.split(key, 6)
    w1, b1 = _linear_init(keys[0], 2, 30)
    w2, b2 = _linear_init(keys[1], 30, 30)
    w3, b3 = _linear_init(keys[2], 30, 30)
    w4, b4 = _linear_init(keys[3], 30, 1)
    wz1, bz1 = _linear_init(keys[4], 1, 100)
    wz2, bz2 = _linear_init(keys[5], 100, 1)
    return (w1, b1, w2, b2, w3, b3, w4, b4, wz1, bz1, wz2, bz2)


# ----------------------------- pure-JAX reference ----------------------------

def reference_forward(grid_data, params, nt, nx):
    (w1, b1, w2, b2, w3, b3, w4, b4, wz1, bz1, wz2, bz2) = params
    h = jnp.tanh(grid_data @ w1 + b1)
    h = jnp.tanh(h @ w2 + b2)
    h = jnp.tanh(h @ w3 + b3)
    log_jacob = h @ w4 + b4
    dzdx = jnp.exp(log_jacob).reshape(nt, nx)
    x = grid_data[:, 1:2].reshape(nt, nx)
    dx = x[:, 1:] - x[:, :-1]
    integrated = jnp.cumsum((dzdx[:, 1:] + dzdx[:, :-1]) / 2.0 * dx, axis=1)
    z2d = jnp.concatenate([jnp.zeros((nt, 1), jnp.float32), integrated], axis=1)
    hz = jnp.tanh(grid_data[:, 0:1] @ wz1 + bz1)
    z0 = hz @ wz2 + bz2
    z = z2d.reshape(-1, 1) + z0
    log_pz = -0.5 * z * z - 0.5 * math.log(2.0 * math.pi)
    log_px = log_pz + log_jacob
    return log_px, log_pz, log_jacob, z


# ----------------------------------- main ------------------------------------

if __name__ == "__main__":
    nt, nx = 16, 128                    # grid_dims = (nt, nx); N = 2048 points
    key = jax.random.PRNGKey(0)

    # deterministic (t, x) grid; x varies fastest (column 1 of grid_data)
    t = jnp.linspace(0.0, 1.0, nt, dtype=jnp.float32)
    x = jnp.linspace(-2.0, 2.0, nx, dtype=jnp.float32)
    tt, xx = jnp.meshgrid(t, x, indexing="ij")
    grid_data = jnp.stack([tt.reshape(-1), xx.reshape(-1)], axis=1)   # (2048, 2)

    params = init_params(key)

    # block_rows=8 -> grid of 2 row-blocks, exercising the pipelined/parallel path
    outs = neural_flow_forward(grid_data, params, nt, nx, block_rows=8)
    outs = jax.block_until_ready(outs)

    ref = reference_forward(grid_data, params, nt, nx)
    for got, want in zip(outs, ref):
        assert got.shape == want.shape
        assert jnp.allclose(got, want, atol=1e-4, rtol=1e-4), \
            float(jnp.max(jnp.abs(got - want)))

    print("KERNEL_OK")
</pallas_src>

<mosaic_0001>
module attributes {stable_mosaic.version = 11 : i64} {
  func.func @neural_flow_kernel(%arg0: i32, %arg1: memref<1024x2xf32, #tpu.memory_space<vmem>>, %arg2: memref<8x128xf32, #tpu.memory_space<vmem>>, %arg3: memref<8x1xf32, #tpu.memory_space<vmem>>, %arg4: memref<128x128xf32, #tpu.memory_space<vmem>>, %arg5: memref<2x30xf32, #tpu.memory_space<vmem>>, %arg6: memref<1x30xf32, #tpu.memory_space<vmem>>, %arg7: memref<30x30xf32, #tpu.memory_space<vmem>>, %arg8: memref<1x30xf32, #tpu.memory_space<vmem>>, %arg9: memref<30x30xf32, #tpu.memory_space<vmem>>, %arg10: memref<1x30xf32, #tpu.memory_space<vmem>>, %arg11: memref<30x1xf32, #tpu.memory_space<vmem>>, %arg12: memref<1x1xf32, #tpu.memory_space<vmem>>, %arg13: memref<1x100xf32, #tpu.memory_space<vmem>>, %arg14: memref<1x100xf32, #tpu.memory_space<vmem>>, %arg15: memref<1x100xf32, #tpu.memory_space<vmem>>, %arg16: memref<1x1xf32, #tpu.memory_space<vmem>>, %arg17: memref<8x128xf32, #tpu.memory_space<vmem>>, %arg18: memref<8x128xf32, #tpu.memory_space<vmem>>, %arg19: memref<8x128xf32, #tpu.memory_space<vmem>>, %arg20: memref<8x128xf32, #tpu.memory_space<vmem>>) attributes {dimension_semantics = [#tpu.dimension_semantics<parallel>], iteration_bounds = array<i64: 2>, scalar_prefetch = 0 : i64, scratch_operands = 0 : i64, tpu.core_type = #tpu.core_type<tc>, window_params = [{transform_indices = @transform_0, window_bounds = array<i64: 1024, 2>}, {transform_indices = @transform_1, window_bounds = array<i64: 8, 128>}, {transform_indices = @transform_2, window_bounds = array<i64: 8, 1>}, {pipeline_mode = #tpu.pipeline_mode<synchronous>, transform_indices = @transform_3, window_bounds = array<i64: 128, 128>}, {pipeline_mode = #tpu.pipeline_mode<synchronous>, transform_indices = @transform_4, window_bounds = array<i64: 2, 30>}, {pipeline_mode = #tpu.pipeline_mode<synchronous>, transform_indices = @transform_5, window_bounds = array<i64: 1, 30>}, {pipeline_mode = #tpu.pipeline_mode<synchronous>, transform_indices = @transform_6, window_bounds = array<i64: 30, 30>}, {pipeline_mode = #tpu.pipeline_mode<synchronous>, transform_indices = @transform_7, window_bounds = array<i64: 1, 30>}, {pipeline_mode = #tpu.pipeline_mode<synchronous>, transform_indices = @transform_8, window_bounds = array<i64: 30, 30>}, {pipeline_mode = #tpu.pipeline_mode<synchronous>, transform_indices = @transform_9, window_bounds = array<i64: 1, 30>}, {pipeline_mode = #tpu.pipeline_mode<synchronous>, transform_indices = @transform_10, window_bounds = array<i64: 30, 1>}, {pipeline_mode = #tpu.pipeline_mode<synchronous>, transform_indices = @transform_11, window_bounds = array<i64: 1, 1>}, {pipeline_mode = #tpu.pipeline_mode<synchronous>, transform_indices = @transform_12, window_bounds = array<i64: 1, 100>}, {pipeline_mode = #tpu.pipeline_mode<synchronous>, transform_indices = @transform_13, window_bounds = array<i64: 1, 100>}, {pipeline_mode = #tpu.pipeline_mode<synchronous>, transform_indices = @transform_14, window_bounds = array<i64: 1, 100>}, {pipeline_mode = #tpu.pipeline_mode<synchronous>, transform_indices = @transform_15, window_bounds = array<i64: 1, 1>}, {transform_indices = @transform_16, window_bounds = array<i64: 8, 128>}, {transform_indices = @transform_17, window_bounds = array<i64: 8, 128>}, {transform_indices = @transform_18, window_bounds = array<i64: 8, 128>}, {transform_indices = @transform_19, window_bounds = array<i64: 8, 128>}]} {
    %c0 = arith.constant 0 : index
    %c0_0 = arith.constant 0 : index
    %0 = vector.load %arg1[%c0, %c0_0] : memref<1024x2xf32, #tpu.memory_space<vmem>>, vector<1024x2xf32>
    %c0_1 = arith.constant 0 : index
    %c0_2 = arith.constant 0 : index
    %1 = vector.load %arg5[%c0_1, %c0_2] : memref<2x30xf32, #tpu.memory_space<vmem>>, vector<2x30xf32>
    %cst = arith.constant dense<0.000000e+00> : vector<1024x30xf32>
    %2 = tpu.matmul %0, %1, %cst {dimension_numbers = #tpu.dot_dimension_numbers<[1], [0], [0], [1], [0, 0, 1, 1], [], []>} : vector<1024x2xf32>, vector<2x30xf32>, vector<1024x30xf32> -> vector<1024x30xf32>
    %c0_3 = arith.constant 0 : index
    %c0_4 = arith.constant 0 : index
    %3 = vector.load %arg6[%c0_3, %c0_4] : memref<1x30xf32, #tpu.memory_space<vmem>>, vector<1x30xf32>
    %4 = vector.broadcast %3 : vector<1x30xf32> to vector<1024x30xf32>
    %5 = arith.addf %2, %4 : vector<1024x30xf32>
    %6 = math.tanh %5 : vector<1024x30xf32>
    %c0_5 = arith.constant 0 : index
    %c0_6 = arith.constant 0 : index
    %7 = vector.load %arg7[%c0_5, %c0_6] : memref<30x30xf32, #tpu.memory_space<vmem>>, vector<30x30xf32>
    %cst_7 = arith.constant dense<0.000000e+00> : vector<1024x30xf32>
    %8 = tpu.matmul %6, %7, %cst_7 {dimension_numbers = #tpu.dot_dimension_numbers<[1], [0], [0], [1], [0, 0, 1, 1], [], []>} : vector<1024x30xf32>, vector<30x30xf32>, vector<1024x30xf32> -> vector<1024x30xf32>
    %c0_8 = arith.constant 0 : index
    %c0_9 = arith.constant 0 : index
    %9 = vector.load %arg8[%c0_8, %c0_9] : memref<1x30xf32, #tpu.memory_space<vmem>>, vector<1x30xf32>
    %10 = vector.broadcast %9 : vector<1x30xf32> to vector<1024x30xf32>
    %11 = arith.addf %8, %10 : vector<1024x30xf32>
    %12 = math.tanh %11 : vector<1024x30xf32>
    %c0_10 = arith.constant 0 : index
    %c0_11 = arith.constant 0 : index
    %13 = vector.load %arg9[%c0_10, %c0_11] : memref<30x30xf32, #tpu.memory_space<vmem>>, vector<30x30xf32>
    %cst_12 = arith.constant dense<0.000000e+00> : vector<1024x30xf32>
    %14 = tpu.matmul %12, %13, %cst_12 {dimension_numbers = #tpu.dot_dimension_numbers<[1], [0], [0], [1], [0, 0, 1, 1], [], []>} : vector<1024x30xf32>, vector<30x30xf32>, vector<1024x30xf32> -> vector<1024x30xf32>
    %c0_13 = arith.constant 0 : index
    %c0_14 = arith.constant 0 : index
    %15 = vector.load %arg10[%c0_13, %c0_14] : memref<1x30xf32, #tpu.memory_space<vmem>>, vector<1x30xf32>
    %16 = vector.broadcast %15 : vector<1x30xf32> to vector<1024x30xf32>
    %17 = arith.addf %14, %16 : vector<1024x30xf32>
    %18 = math.tanh %17 : vector<1024x30xf32>
    %c0_15 = arith.constant 0 : index
    %c0_16 = arith.constant 0 : index
    %19 = vector.load %arg11[%c0_15, %c0_16] : memref<30x1xf32, #tpu.memory_space<vmem>>, vector<30x1xf32>
    %cst_17 = arith.constant dense<0.000000e+00> : vector<1024x1xf32>
    %20 = tpu.matmul %18, %19, %cst_17 {dimension_numbers = #tpu.dot_dimension_numbers<[1], [0], [0], [1], [0, 0, 1, 1], [], []>} : vector<1024x30xf32>, vector<30x1xf32>, vector<1024x1xf32> -> vector<1024x1xf32>
    %c0_18 = arith.constant 0 : index
    %c0_19 = arith.constant 0 : index
    %21 = vector.load %arg12[%c0_18, %c0_19] : memref<1x1xf32, #tpu.memory_space<vmem>>, vector<1x1xf32>
    %22 = vector.broadcast %21 : vector<1x1xf32> to vector<1024x1xf32>
    %23 = arith.addf %20, %22 : vector<1024x1xf32>
    %24 = vector.shape_cast %23 : vector<1024x1xf32> to vector<8x128xf32>
    %25 = math.exp %24 : vector<8x128xf32>
    %c0_20 = arith.constant 0 : index
    %c0_21 = arith.constant 0 : index
    %26 = vector.load %arg2[%c0_20, %c0_21] : memref<8x128xf32, #tpu.memory_space<vmem>>, vector<8x128xf32>
    %c127_i32 = arith.constant 127 : i32
    %27 = tpu.dynamic_rotate %25 by %c127_i32 dim 1 : vector<8x128xf32>, i32 -> vector<8x128xf32>
    %c127_i32_22 = arith.constant 127 : i32
    %28 = tpu.dynamic_rotate %26 by %c127_i32_22 dim 1 : vector<8x128xf32>, i32 -> vector<8x128xf32>
    %29 = arith.addf %27, %25 : vector<8x128xf32>
    %cst_23 = arith.constant 5.000000e-01 : f32
    %30 = vector.broadcast %cst_23 : f32 to vector<8x128xf32>
    %31 = arith.mulf %30, %29 : vector<8x128xf32>
    %32 = arith.subf %28, %26 : vector<8x128xf32>
    %33 = arith.mulf %31, %32 : vector<8x128xf32>
    %c0_24 = arith.constant 0 : index
    %c0_25 = arith.constant 0 : index
    %34 = vector.load %arg4[%c0_24, %c0_25] : memref<128x128xf32, #tpu.memory_space<vmem>>, vector<128x128xf32>
    %cst_26 = arith.constant dense<0.000000e+00> : vector<8x128xf32>
    %35 = tpu.matmul %33, %34, %cst_26 {dimension_numbers = #tpu.dot_dimension_numbers<[1], [0], [0], [1], [0, 0, 1, 1], [], []>} : vector<8x128xf32>, vector<128x128xf32>, vector<8x128xf32> -> vector<8x128xf32>
    %c0_27 = arith.constant 0 : index
    %c0_28 = arith.constant 0 : index
    %36 = vector.load %arg3[%c0_27, %c0_28] : memref<8x1xf32, #tpu.memory_space<vmem>>, vector<8x1xf32>
    %c0_29 = arith.constant 0 : index
    %c0_30 = arith.constant 0 : index
    %37 = vector.load %arg13[%c0_29, %c0_30] : memref<1x100xf32, #tpu.memory_space<vmem>>, vector<1x100xf32>
    %38 = vector.broadcast %36 : vector<8x1xf32> to vector<8x100xf32>
    %39 = vector.broadcast %37 : vector<1x100xf32> to vector<8x100xf32>
    %40 = arith.mulf %38, %39 : vector<8x100xf32>
    %c0_31 = arith.constant 0 : index
    %c0_32 = arith.constant 0 : index
    %41 = vector.load %arg14[%c0_31, %c0_32] : memref<1x100xf32, #tpu.memory_space<vmem>>, vector<1x100xf32>
    %42 = vector.broadcast %41 : vector<1x100xf32> to vector<8x100xf32>
    %43 = arith.addf %40, %42 : vector<8x100xf32>
    %44 = math.tanh %43 : vector<8x100xf32>
    %c0_33 = arith.constant 0 : index
    %c0_34 = arith.constant 0 : index
    %45 = vector.load %arg15[%c0_33, %c0_34] : memref<1x100xf32, #tpu.memory_space<vmem>>, vector<1x100xf32>
    %46 = vector.broadcast %45 : vector<1x100xf32> to vector<8x100xf32>
    %47 = arith.mulf %44, %46 : vector<8x100xf32>
    %cst_35 = arith.constant dense<0.000000e+00> : vector<8xf32>
    %48 = vector.multi_reduction <add>, %47, %cst_35 [1] : vector<8x100xf32> to vector<8xf32>
    %49 = vector.shape_cast %48 : vector<8xf32> to vector<8x1xf32>
    %c0_36 = arith.constant 0 : index
    %c0_37 = arith.constant 0 : index
    %50 = vector.load %arg16[%c0_36, %c0_37] : memref<1x1xf32, #tpu.memory_space<vmem>>, vector<1x1xf32>
    %51 = vector.broadcast %50 : vector<1x1xf32> to vector<8x1xf32>
    %52 = arith.addf %49, %51 : vector<8x1xf32>
    %53 = vector.broadcast %52 : vector<8x1xf32> to vector<8x128xf32>
    %54 = arith.addf %35, %53 : vector<8x128xf32>
    %cst_38 = arith.constant -5.000000e-01 : f32
    %55 = vector.broadcast %cst_38 : f32 to vector<8x128xf32>
    %56 = arith.mulf %55, %54 : vector<8x128xf32>
    %57 = arith.mulf %56, %54 : vector<8x128xf32>
    %cst_39 = arith.constant 0.918938517 : f32
    %58 = vector.broadcast %cst_39 : f32 to vector<8x128xf32>
    %59 = arith.subf %57, %58 : vector<8x128xf32>
    %60 = arith.addf %59, %24 : vector<8x128xf32>
    %c0_40 = arith.constant 0 : index
    %c0_41 = arith.constant 0 : index
    %61 = vector.load %arg17[%c0_40, %c0_41] : memref<8x128xf32, #tpu.memory_space<vmem>>, vector<8x128xf32>
    tpu.vector_store %arg17[%c0_40, %c0_41], %60 {strides = array<i32>} : memref<8x128xf32, #tpu.memory_space<vmem>>, vector<8x128xf32>,
    %c0_42 = arith.constant 0 : index
    %c0_43 = arith.constant 0 : index
    %62 = vector.load %arg18[%c0_42, %c0_43] : memref<8x128xf32, #tpu.memory_space<vmem>>, vector<8x128xf32>
    tpu.vector_store %arg18[%c0_42, %c0_43], %59 {strides = array<i32>} : memref<8x128xf32, #tpu.memory_space<vmem>>, vector<8x128xf32>,
    %c0_44 = arith.constant 0 : index
    %c0_45 = arith.constant 0 : index
    %63 = vector.load %arg19[%c0_44, %c0_45] : memref<8x128xf32, #tpu.memory_space<vmem>>, vector<8x128xf32>
    tpu.vector_store %arg19[%c0_44, %c0_45], %24 {strides = array<i32>} : memref<8x128xf32, #tpu.memory_space<vmem>>, vector<8x128xf32>,
    %c0_46 = arith.constant 0 : index
    %c0_47 = arith.constant 0 : index
    %64 = vector.load %arg20[%c0_46, %c0_47] : memref<8x128xf32, #tpu.memory_space<vmem>>, vector<8x128xf32>
    tpu.vector_store %arg20[%c0_46, %c0_47], %54 {strides = array<i32>} : memref<8x128xf32, #tpu.memory_space<vmem>>, vector<8x128xf32>,
    return
  }
  func.func @transform_0(%arg0: i32) -> (i32, i32) {
    %c0_i32 = arith.constant 0 : i32
    %c0_i32_0 = arith.constant 0 : i32
    return %arg0, %c0_i32 : i32, i32
  }
  func.func @transform_1(%arg0: i32) -> (i32, i32) {
    %c0_i32 = arith.constant 0 : i32
    %c0_i32_0 = arith.constant 0 : i32
    return %arg0, %c0_i32 : i32, i32
  }
  func.func @transform_2(%arg0: i32) -> (i32, i32) {
    %c0_i32 = arith.constant 0 : i32
    %c0_i32_0 = arith.constant 0 : i32
    return %arg0, %c0_i32 : i32, i32
  }
  func.func @transform_3(%arg0: i32) -> (i32, i32) {
    %c0_i32 = arith.constant 0 : i32
    %c0_i32_0 = arith.constant 0 : i32
    %c0_i32_1 = arith.constant 0 : i32
    return %c0_i32, %c0_i32_0 : i32, i32
  }
  func.func @transform_4(%arg0: i32) -> (i32, i32) {
    %c0_i32 = arith.constant 0 : i32
    %c0_i32_0 = arith.constant 0 : i32
    %c0_i32_1 = arith.constant 0 : i32
    return %c0_i32, %c0_i32_0 : i32, i32
  }
  func.func @transform_5(%arg0: i32) -> (i32, i32) {
    %c0_i32 = arith.constant 0 : i32
    %c0_i32_0 = arith.constant 0 : i32
    %c0_i32_1 = arith.constant 0 : i32
    return %c0_i32, %c0_i32_0 : i32, i32
  }
  func.func @transform_6(%arg0: i32) -> (i32, i32) {
    %c0_i32 = arith.constant 0 : i32
    %c0_i32_0 = arith.constant 0 : i32
    %c0_i32_1 = arith.constant 0 : i32
    return %c0_i32, %c0_i32_0 : i32, i32
  }
  func.func @transform_7(%arg0: i32) -> (i32, i32) {
    %c0_i32 = arith.constant 0 : i32
    %c0_i32_0 = arith.constant 0 : i32
    %c0_i32_1 = arith.constant 0 : i32
    return %c0_i32, %c0_i32_0 : i32, i32
  }
  func.func @transform_8(%arg0: i32) -> (i32, i32) {
    %c0_i32 = arith.constant 0 : i32
    %c0_i32_0 = arith.constant 0 : i32
    %c0_i32_1 = arith.constant 0 : i32
    return %c0_i32, %c0_i32_0 : i32, i32
  }
  func.func @transform_9(%arg0: i32) -> (i32, i32) {
    %c0_i32 = arith.constant 0 : i32
    %c0_i32_0 = arith.constant 0 : i32
    %c0_i32_1 = arith.constant 0 : i32
    return %c0_i32, %c0_i32_0 : i32, i32
  }
  func.func @transform_10(%arg0: i32) -> (i32, i32) {
    %c0_i32 = arith.constant 0 : i32
    %c0_i32_0 = arith.constant 0 : i32
    %c0_i32_1 = arith.constant 0 : i32
    return %c0_i32, %c0_i32_0 : i32, i32
  }
  func.func @transform_11(%arg0: i32) -> (i32, i32) {
    %c0_i32 = arith.constant 0 : i32
    %c0_i32_0 = arith.constant 0 : i32
    %c0_i32_1 = arith.constant 0 : i32
    return %c0_i32, %c0_i32_0 : i32, i32
  }
  func.func @transform_12(%arg0: i32) -> (i32, i32) {
    %c0_i32 = arith.constant 0 : i32
    %c0_i32_0 = arith.constant 0 : i32
    %c0_i32_1 = arith.constant 0 : i32
    return %c0_i32, %c0_i32_0 : i32, i32
  }
  func.func @transform_13(%arg0: i32) -> (i32, i32) {
    %c0_i32 = arith.constant 0 : i32
    %c0_i32_0 = arith.constant 0 : i32
    %c0_i32_1 = arith.constant 0 : i32
    return %c0_i32, %c0_i32_0 : i32, i32
  }
  func.func @transform_14(%arg0: i32) -> (i32, i32) {
    %c0_i32 = arith.constant 0 : i32
    %c0_i32_0 = arith.constant 0 : i32
    %c0_i32_1 = arith.constant 0 : i32
    return %c0_i32, %c0_i32_0 : i32, i32
  }
  func.func @transform_15(%arg0: i32) -> (i32, i32) {
    %c0_i32 = arith.constant 0 : i32
    %c0_i32_0 = arith.constant 0 : i32
    %c0_i32_1 = arith.constant 0 : i32
    return %c0_i32, %c0_i32_0 : i32, i32
  }
  func.func @transform_16(%arg0: i32) -> (i32, i32) {
    %c0_i32 = arith.constant 0 : i32
    %c0_i32_0 = arith.constant 0 : i32
    return %arg0, %c0_i32 : i32, i32
  }
  func.func @transform_17(%arg0: i32) -> (i32, i32) {
    %c0_i32 = arith.constant 0 : i32
    %c0_i32_0 = arith.constant 0 : i32
    return %arg0, %c0_i32 : i32, i32
  }
  func.func @transform_18(%arg0: i32) -> (i32, i32) {
    %c0_i32 = arith.constant 0 : i32
    %c0_i32_0 = arith.constant 0 : i32
    return %arg0, %c0_i32 : i32, i32
  }
  func.func @transform_19(%arg0: i32) -> (i32, i32) {
    %c0_i32 = arith.constant 0 : i32
    %c0_i32_0 = arith.constant 0 : i32
    return %arg0, %c0_i32 : i32, i32
  }
}

</mosaic_0001>

<llo_original>
// kernel: tpu_custom_call.1
$region0: #{tpu_custom_call.1}
  #allocation0 [shape = 'u32[]', space=smem, size = 0x4, offset = 0x4, fixed_abs, tag = 'smem constant byte address 0x4 - core index']
  #allocation1 [shape = 'u32[144,128]{1,0:T(1,128)}', space=vmem, size = 0x12000, scoped, tag = 'internal scratch']
  #allocation2 [shape = 'f32[1,1]{1,0:T(1,128)S(1)}', space=vmem, size = 0x200, scoped, tag = 'scoped memory for tpu_custom_call.1']
  #allocation3 [shape = 'f32[1,1]{1,0:T(1,128)S(1)}', space=vmem, size = 0x200, scoped, tag = 'scoped memory for tpu_custom_call.1']
  %s0 = inlined_call_operand.vmem [shape: f32[2048,2], index: 0, kind: input, shape index: {}]
  %s1 = inlined_call_operand.vmem [shape: f32[16,128], index: 1, kind: input, shape index: {}]
  %s2 = inlined_call_operand.vmem [shape: f32[16,1], index: 2, kind: input, shape index: {}]
  %s3 = inlined_call_operand.vmem [shape: f32[128,128], index: 3, kind: input, shape index: {}]
  %s4 = inlined_call_operand.vmem [shape: f32[2,30], index: 4, kind: input, shape index: {}]
  %s5 = inlined_call_operand.vmem [shape: f32[1,30], index: 5, kind: input, shape index: {}]
  %s6 = inlined_call_operand.vmem [shape: f32[30,30], index: 6, kind: input, shape index: {}]
  %s7 = inlined_call_operand.vmem [shape: f32[1,30], index: 7, kind: input, shape index: {}]
  %s8 = inlined_call_operand.vmem [shape: f32[30,30], index: 8, kind: input, shape index: {}]
  %s9 = inlined_call_operand.vmem [shape: f32[1,30], index: 9, kind: input, shape index: {}]
  %s10 = inlined_call_operand.vmem [shape: f32[30,1], index: 10, kind: input, shape index: {}]
  %s11 = inlined_call_operand.<no memory space> [shape: f32[1,1], index: 11, kind: input, shape index: {}]
  %s12 = inlined_call_operand.vmem [shape: f32[1,100], index: 12, kind: input, shape index: {}]
  %s13 = inlined_call_operand.vmem [shape: f32[1,100], index: 13, kind: input, shape index: {}]
  %s14 = inlined_call_operand.vmem [shape: f32[1,100], index: 14, kind: input, shape index: {}]
  %s15 = inlined_call_operand.<no memory space> [shape: f32[1,1], index: 15, kind: input, shape index: {}]
  %s16 = inlined_call_operand.hbm [shape: f32[16,128], index: 16, kind: output, shape index: {0}]
  %s17 = inlined_call_operand.hbm [shape: f32[16,128], index: 17, kind: output, shape index: {1}]
  %s18 = inlined_call_operand.hbm [shape: f32[16,128], index: 18, kind: output, shape index: {2}]
  %s19 = inlined_call_operand.hbm [shape: f32[16,128], index: 19, kind: output, shape index: {3}]
  %20 = xla_tuple %s16, %s17, %s18, %s19
  %s21 = sld [smem:[#allocation0]]
  $region121: #{tpu_custom_call.1} parent=0
    _
  %s23 = ssub.s32 1, %s21
  %s24 = scalar_select 0, %s23, %s21
  %v25 = vstv %s11
  %26 = vst [vmem:[#allocation2] sm:$0x1] %v25
  %v27 = vstv %s15
  %28 = vst [vmem:[#allocation3] sm:$0x1] %v27
  $region1: #{tpu_custom_call.1} parent=0
    #allocation4 [shape = 'u8[8192]{0}', space=vmem, size = 0x2000, scoped, tag = 'output window, operand 0']
    #allocation5 [shape = 's32[2]{0}', space=sflag, size = 0x8, scoped, tag = 'scoped memory for tpu_custom_call.1']
    #allocation6 [shape = 'u8[8192]{0}', space=vmem, size = 0x2000, scoped, tag = 'output window, operand 1']
    #allocation7 [shape = 's32[2]{0}', space=sflag, size = 0x8, scoped, tag = 'scoped memory for tpu_custom_call.1']
    #allocation8 [shape = 'u8[8192]{0}', space=vmem, size = 0x2000, scoped, tag = 'output window, operand 2']
    #allocation9 [shape = 'u8[8192]{0}', space=vmem, size = 0x2000, scoped, tag = 'output window, operand 3']
    #allocation10 [shape = 's32[2]{0}', space=sflag, size = 0x8, scoped, tag = 'scoped memory for tpu_custom_call.1']
    %29 = vsyncpa [#allocation5], 0
    %s30 = scalar_lea.sflag [#allocation5], 1
    %31 = vsyncpa %s30, 0
    %32 = vsyncpa [#allocation7], 0
    %s33 = scalar_lea.sflag [#allocation7], 1
    %34 = vsyncpa %s33, 0
    %35 = vsyncpa [#allocation10], 0
    %s36 = scalar_lea.sflag [#allocation10], 1
    %37 = vsyncpa %s36, 0
    loop: start=0, step=1, limit=4
    $region2: #{tpu_custom_call.1} parent=1 // loop_pre_header
      _
    $region3: #{tpu_custom_call.1} parent=1 // loop_header
      %s39 = sphi 0, %s43
      %p40 = scmp.ge.s32.totalorder %s39, 4
      %s49 = sphi 0, %s51
      %s52 = sphi 0, %s49
      %s53 = sphi 0, %s52
      %s69 = sphi 0, %s53
      %s75 = sphi 0, %s77
      %s78 = sphi 0, %s75
      %s79 = sphi 0, %s78
      %s95 = sphi 0, %s79
      %s101 = sphi 0, %s103
      %s104 = sphi 0, %s101
      %s105 = sphi 0, %s104
      %s121 = sphi 0, %s105
      %s125 = sphi 0, %s125
      %s127 = sphi 0, %s125
      %s128 = sphi 0, %s127
      %s142 = sphi 0, %s128
      %s146 = sphi 0, %s146
      %s148 = sphi 0, %s146
      %s149 = sphi 0, %s148
      %s163 = sphi 0, %s149
      %s167 = sphi 0, %s167
      %s169 = sphi 0, %s167
      %s170 = sphi 0, %s169
      %s184 = sphi 0, %s170
      %s188 = sphi 0, %s188
      %s190 = sphi 0, %s188
      %s191 = sphi 0, %s190
      %s205 = sphi 0, %s191
      %s209 = sphi 0, %s209
      %s211 = sphi 0, %s209
      %s212 = sphi 0, %s211
      %s226 = sphi 0, %s212
      %s230 = sphi 0, %s230
      %s232 = sphi 0, %s230
      %s233 = sphi 0, %s232
      %s247 = sphi 0, %s233
      %s251 = sphi 0, %s251
      %s253 = sphi 0, %s251
      %s254 = sphi 0, %s253
      %s268 = sphi 0, %s254
      %s272 = sphi 0, %s272
      %s274 = sphi 0, %s272
      %s275 = sphi 0, %s274
      %s289 = sphi 0, %s275
      %s293 = sphi 0, %s293
      %s295 = sphi 0, %s293
      %s296 = sphi 0, %s295
      %s310 = sphi 0, %s296
      %s314 = sphi 0, %s314
      %s316 = sphi 0, %s314
      %s317 = sphi 0, %s316
      %s331 = sphi 0, %s317
      %s335 = sphi 0, %s335
      %s337 = sphi 0, %s335
      %s338 = sphi 0, %s337
      %s352 = sphi 0, %s338
      %s356 = sphi 0, %s356
      %s358 = sphi 0, %s356
      %s359 = sphi 0, %s358
      %s373 = sphi 0, %s359
      %s377 = sphi 0, %s377
      %s379 = sphi 0, %s377
      %s380 = sphi 0, %s379
      %s394 = sphi 0, %s380
      %s400 = sphi 0, %s402
      %s403 = sphi 0, %s400
      %s404 = sphi 0, %s403
      %s420 = sphi 0, %s404
      %s426 = sphi 0, %s428
      %s429 = sphi 0, %s426
      %s430 = sphi 0, %s429
      %s446 = sphi 0, %s430
      %s452 = sphi 0, %s454
      %s455 = sphi 0, %s452
      %s456 = sphi 0, %s455
      %s472 = sphi 0, %s456
      %s478 = sphi 0, %s480
      %s481 = sphi 0, %s478
      %s482 = sphi 0, %s481
      %s498 = sphi 0, %s482
    $region4: #{tpu_custom_call.1} parent=1 // loop_header_branch
      %42 = sbr.rel (%p40) target = $region8
    $region5: #{tpu_custom_call.1} parent=1 // loop_body
      %s44 = ssub.s32 %s39, 1
      %s45 = ssub.s32 %s39, 2
      %s46 = sadd.s32 %s39, 1
      %s47 = ssub.s32 %s39, %s46
      %p48 = scmp.eq.s32.totalorder %s47, 0
      %s50 = sadd.s32 %s49, 1
      %s51 = scalar_select %p48, %s49, %s50
      %p54 = pneg %p48
      %p55 = scmp.eq.s32.totalorder %s39, 1
      %p56 = por %p54, %p55
      %p57 = scmp.ne.s32.totalorder %s49, %s52
      %p58 = scmp.eq.s32.totalorder %s39, 0
      %p59 = por %p57, %p58
      %p60 = scmp.ne.s32.totalorder %s49, %s52
      %p61 = scmp.eq.s32.totalorder %s44, 1
      %p62 = por %p60, %p61
      %p63 = scmp.ne.s32.totalorder %s52, %s53
      %p64 = scmp.eq.s32.totalorder %s44, 0
      %p65 = por %p63, %p64
      %p66 = scmp.ne.s32.totalorder %s52, %s53
      %p67 = scmp.eq.s32.totalorder %s45, 1
      %p68 = por %p66, %p67
      %p70 = scmp.ne.s32.totalorder %s53, %s69
      %p71 = scmp.eq.s32.totalorder %s45, 0
      %p72 = por %p70, %p71
      %s73 = ssub.s32 %s39, %s46
      %p74 = scmp.eq.s32.totalorder %s73, 0
      %s76 = sadd.s32 %s75, 1
      %s77 = scalar_select %p74, %s75, %s76
      %p80 = pneg %p74
      %p81 = scmp.eq.s32.totalorder %s39, 1
      %p82 = por %p80, %p81
      %p83 = scmp.ne.s32.totalorder %s75, %s78
      %p84 = scmp.eq.s32.totalorder %s39, 0
      %p85 = por %p83, %p84
      %p86 = scmp.ne.s32.totalorder %s75, %s78
      %p87 = scmp.eq.s32.totalorder %s44, 1
      %p88 = por %p86, %p87
      %p89 = scmp.ne.s32.totalorder %s78, %s79
      %p90 = scmp.eq.s32.totalorder %s44, 0
      %p91 = por %p89, %p90
      %p92 = scmp.ne.s32.totalorder %s78, %s79
      %p93 = scmp.eq.s32.totalorder %s45, 1
      %p94 = por %p92, %p93
      %p96 = scmp.ne.s32.totalorder %s79, %s95
      %p97 = scmp.eq.s32.totalorder %s45, 0
      %p98 = por %p96, %p97
      %s99 = ssub.s32 %s39, %s46
      %p100 = scmp.eq.s32.totalorder %s99, 0
      %s102 = sadd.s32 %s101, 1
      %s103 = scalar_select %p100, %s101, %s102
      %p106 = pneg %p100
      %p107 = scmp.eq.s32.totalorder %s39, 1
      %p108 = por %p106, %p107
      %p109 = scmp.ne.s32.totalorder %s101, %s104
      %p110 = scmp.eq.s32.totalorder %s39, 0
      %p111 = por %p109, %p110
      %p112 = scmp.ne.s32.totalorder %s101, %s104
      %p113 = scmp.eq.s32.totalorder %s44, 1
      %p114 = por %p112, %p113
      %p115 = scmp.ne.s32.totalorder %s104, %s105
      %p116 = scmp.eq.s32.totalorder %s44, 0
      %p117 = por %p115, %p116
      %p118 = scmp.ne.s32.totalorder %s104, %s105
      %p119 = scmp.eq.s32.totalorder %s45, 1
      %p120 = por %p118, %p119
      %p122 = scmp.ne.s32.totalorder %s105, %s121
      %p123 = scmp.eq.s32.totalorder %s45, 0
      %p124 = por %p122, %p123
      %s126 = sadd.s32 %s125, 1
      %p129 = scmp.eq.s32.totalorder %s39, 1
      %p130 = scmp.ne.s32.totalorder %s125, %s127
      %p131 = scmp.eq.s32.totalorder %s39, 0
      %p132 = por %p130, %p131
      %p133 = scmp.ne.s32.totalorder %s125, %s127
      %p134 = scmp.eq.s32.totalorder %s44, 1
      %p135 = por %p133, %p134
      %p136 = scmp.ne.s32.totalorder %s127, %s128
      %p137 = scmp.eq.s32.totalorder %s44, 0
      %p138 = por %p136, %p137
      %p139 = scmp.ne.s32.totalorder %s127, %s128
      %p140 = scmp.eq.s32.totalorder %s45, 1
      %p141 = por %p139, %p140
      %p143 = scmp.ne.s32.totalorder %s128, %s142
      %p144 = scmp.eq.s32.totalorder %s45, 0
      %p145 = por %p143, %p144
      %s147 = sadd.s32 %s146, 1
      %p150 = scmp.eq.s32.totalorder %s39, 1
      %p151 = scmp.ne.s32.totalorder %s146, %s148
      %p152 = scmp.eq.s32.totalorder %s39, 0
      %p153 = por %p151, %p152
      %p154 = scmp.ne.s32.totalorder %s146, %s148
      %p155 = scmp.eq.s32.totalorder %s44, 1
      %p156 = por %p154, %p155
      %p157 = scmp.ne.s32.totalorder %s148, %s149
      %p158 = scmp.eq.s32.totalorder %s44, 0
      %p159 = por %p157, %p158
      %p160 = scmp.ne.s32.totalorder %s148, %s149
      %p161 = scmp.eq.s32.totalorder %s45, 1
      %p162 = por %p160, %p161
      %p164 = scmp.ne.s32.totalorder %s149, %s163
      %p165 = scmp.eq.s32.totalorder %s45, 0
      %p166 = por %p164, %p165
      %s168 = sadd.s32 %s167, 1
      %p171 = scmp.eq.s32.totalorder %s39, 1
      %p172 = scmp.ne.s32.totalorder %s167, %s169
      %p173 = scmp.eq.s32.totalorder %s39, 0
      %p174 = por %p172, %p173
      %p175 = scmp.ne.s32.totalorder %s167, %s169
      %p176 = scmp.eq.s32.totalorder %s44, 1
      %p177 = por %p175, %p176
      %p178 = scmp.ne.s32.totalorder %s169, %s170
      %p179 = scmp.eq.s32.totalorder %s44, 0
      %p180 = por %p178, %p179
      %p181 = scmp.ne.s32.totalorder %s169, %s170
      %p182 = scmp.eq.s32.totalorder %s45, 1
      %p183 = por %p181, %p182
      %p185 = scmp.ne.s32.totalorder %s170, %s184
      %p186 = scmp.eq.s32.totalorder %s45, 0
      %p187 = por %p185, %p186
      %s189 = sadd.s32 %s188, 1
      %p192 = scmp.eq.s32.totalorder %s39, 1
      %p193 = scmp.ne.s32.totalorder %s188, %s190
      %p194 = scmp.eq.s32.totalorder %s39, 0
      %p195 = por %p193, %p194
      %p196 = scmp.ne.s32.totalorder %s188, %s190
      %p197 = scmp.eq.s32.totalorder %s44, 1
      %p198 = por %p196, %p197
      %p199 = scmp.ne.s32.totalorder %s190, %s191
      %p200 = scmp.eq.s32.totalorder %s44, 0
      %p201 = por %p199, %p200
      %p202 = scmp.ne.s32.totalorder %s190, %s191
      %p203 = scmp.eq.s32.totalorder %s45, 1
      %p204 = por %p202, %p203
      %p206 = scmp.ne.s32.totalorder %s191, %s205
      %p207 = scmp.eq.s32.totalorder %s45, 0
      %p208 = por %p206, %p207
      %s210 = sadd.s32 %s209, 1
      %p213 = scmp.eq.s32.totalorder %s39, 1
      %p214 = scmp.ne.s32.totalorder %s209, %s211
      %p215 = scmp.eq.s32.totalorder %s39, 0
      %p216 = por %p214, %p215
      %p217 = scmp.ne.s32.totalorder %s209, %s211
      %p218 = scmp.eq.s32.totalorder %s44, 1
      %p219 = por %p217, %p218
      %p220 = scmp.ne.s32.totalorder %s211, %s212
      %p221 = scmp.eq.s32.totalorder %s44, 0
      %p222 = por %p220, %p221
      %p223 = scmp.ne.s32.totalorder %s211, %s212
      %p224 = scmp.eq.s32.totalorder %s45, 1
      %p225 = por %p223, %p224
      %p227 = scmp.ne.s32.totalorder %s212, %s226
      %p228 = scmp.eq.s32.totalorder %s45, 0
      %p229 = por %p227, %p228
      %s231 = sadd.s32 %s230, 1
      %p234 = scmp.eq.s32.totalorder %s39, 1
      %p235 = scmp.ne.s32.totalorder %s230, %s232
      %p236 = scmp.eq.s32.totalorder %s39, 0
      %p237 = por %p235, %p236
      %p238 = scmp.ne.s32.totalorder %s230, %s232
      %p239 = scmp.eq.s32.totalorder %s44, 1
      %p240 = por %p238, %p239
      %p241 = scmp.ne.s32.totalorder %s232, %s233
      %p242 = scmp.eq.s32.totalorder %s44, 0
      %p243 = por %p241, %p242
      %p244 = scmp.ne.s32.totalorder %s232, %s233
      %p245 = scmp.eq.s32.totalorder %s45, 1
      %p246 = por %p244, %p245
      %p248 = scmp.ne.s32.totalorder %s233, %s247
      %p249 = scmp.eq.s32.totalorder %s45, 0
      %p250 = por %p248, %p249
      %s252 = sadd.s32 %s251, 1
      %p255 = scmp.eq.s32.totalorder %s39, 1
      %p256 = scmp.ne.s32.totalorder %s251, %s253
      %p257 = scmp.eq.s32.totalorder %s39, 0
      %p258 = por %p256, %p257
      %p259 = scmp.ne.s32.totalorder %s251, %s253
      %p260 = scmp.eq.s32.totalorder %s44, 1
      %p261 = por %p259, %p260
      %p262 = scmp.ne.s32.totalorder %s253, %s254
      %p263 = scmp.eq.s32.totalorder %s44, 0
      %p264 = por %p262, %p263
      %p265 = scmp.ne.s32.totalorder %s253, %s254
      %p266 = scmp.eq.s32.totalorder %s45, 1
      %p267 = por %p265, %p266
      %p269 = scmp.ne.s32.totalorder %s254, %s268
      %p270 = scmp.eq.s32.totalorder %s45, 0
      %p271 = por %p269, %p270
      %s273 = sadd.s32 %s272, 1
      %p276 = scmp.eq.s32.totalorder %s39, 1
      %p277 = scmp.ne.s32.totalorder %s272, %s274
      %p278 = scmp.eq.s32.totalorder %s39, 0
      %p279 = por %p277, %p278
      %p280 = scmp.ne.s32.totalorder %s272, %s274
      %p281 = scmp.eq.s32.totalorder %s44, 1
      %p282 = por %p280, %p281
      %p283 = scmp.ne.s32.totalorder %s274, %s275
      %p284 = scmp.eq.s32.totalorder %s44, 0
      %p285 = por %p283, %p284
      %p286 = scmp.ne.s32.totalorder %s274, %s275
      %p287 = scmp.eq.s32.totalorder %s45, 1
      %p288 = por %p286, %p287
      %p290 = scmp.ne.s32.totalorder %s275, %s289
      %p291 = scmp.eq.s32.totalorder %s45, 0
      %p292 = por %p290, %p291
      %s294 = sadd.s32 %s293, 1
      %p297 = scmp.eq.s32.totalorder %s39, 1
      %p298 = scmp.ne.s32.totalorder %s293, %s295
      %p299 = scmp.eq.s32.totalorder %s39, 0
      %p300 = por %p298, %p299
      %p301 = scmp.ne.s32.totalorder %s293, %s295
      %p302 = scmp.eq.s32.totalorder %s44, 1
      %p303 = por %p301, %p302
      %p304 = scmp.ne.s32.totalorder %s295, %s296
      %p305 = scmp.eq.s32.totalorder %s44, 0
      %p306 = por %p304, %p305
      %p307 = scmp.ne.s32.totalorder %s295, %s296
      %p308 = scmp.eq.s32.totalorder %s45, 1
      %p309 = por %p307, %p308
      %p311 = scmp.ne.s32.totalorder %s296, %s310
      %p312 = scmp.eq.s32.totalorder %s45, 0
      %p313 = por %p311, %p312
      %s315 = sadd.s32 %s314, 1
      %p318 = scmp.eq.s32.totalorder %s39, 1
      %p319 = scmp.ne.s32.totalorder %s314, %s316
      %p320 = scmp.eq.s32.totalorder %s39, 0
      %p321 = por %p319, %p320
      %p322 = scmp.ne.s32.totalorder %s314, %s316
      %p323 = scmp.eq.s32.totalorder %s44, 1
      %p324 = por %p322, %p323
      %p325 = scmp.ne.s32.totalorder %s316, %s317
      %p326 = scmp.eq.s32.totalorder %s44, 0
      %p327 = por %p325, %p326
      %p328 = scmp.ne.s32.totalorder %s316, %s317
      %p329 = scmp.eq.s32.totalorder %s45, 1
      %p330 = por %p328, %p329
      %p332 = scmp.ne.s32.totalorder %s317, %s331
      %p333 = scmp.eq.s32.totalorder %s45, 0
      %p334 = por %p332, %p333
      %s336 = sadd.s32 %s335, 1
      %p339 = scmp.eq.s32.totalorder %s39, 1
      %p340 = scmp.ne.s32.totalorder %s335, %s337
      %p341 = scmp.eq.s32.totalorder %s39, 0
      %p342 = por %p340, %p341
      %p343 = scmp.ne.s32.totalorder %s335, %s337
      %p344 = scmp.eq.s32.totalorder %s44, 1
      %p345 = por %p343, %p344
      %p346 = scmp.ne.s32.totalorder %s337, %s338
      %p347 = scmp.eq.s32.totalorder %s44, 0
      %p348 = por %p346, %p347
      %p349 = scmp.ne.s32.totalorder %s337, %s338
      %p350 = scmp.eq.s32.totalorder %s45, 1
      %p351 = por %p349, %p350
      %p353 = scmp.ne.s32.totalorder %s338, %s352
      %p354 = scmp.eq.s32.totalorder %s45, 0
      %p355 = por %p353, %p354
      %s357 = sadd.s32 %s356, 1
      %p360 = scmp.eq.s32.totalorder %s39, 1
      %p361 = scmp.ne.s32.totalorder %s356, %s358
      %p362 = scmp.eq.s32.totalorder %s39, 0
      %p363 = por %p361, %p362
      %p364 = scmp.ne.s32.totalorder %s356, %s358
      %p365 = scmp.eq.s32.totalorder %s44, 1
      %p366 = por %p364, %p365
      %p367 = scmp.ne.s32.totalorder %s358, %s359
      %p368 = scmp.eq.s32.totalorder %s44, 0
      %p369 = por %p367, %p368
      %p370 = scmp.ne.s32.totalorder %s358, %s359
      %p371 = scmp.eq.s32.totalorder %s45, 1
      %p372 = por %p370, %p371
      %p374 = scmp.ne.s32.totalorder %s359, %s373
      %p375 = scmp.eq.s32.totalorder %s45, 0
      %p376 = por %p374, %p375
      %s378 = sadd.s32 %s377, 1
      %p381 = scmp.eq.s32.totalorder %s39, 1
      %p382 = scmp.ne.s32.totalorder %s377, %s379
      %p383 = scmp.eq.s32.totalorder %s39, 0
      %p384 = por %p382, %p383
      %p385 = scmp.ne.s32.totalorder %s377, %s379
      %p386 = scmp.eq.s32.totalorder %s44, 1
      %p387 = por %p385, %p386
      %p388 = scmp.ne.s32.totalorder %s379, %s380
      %p389 = scmp.eq.s32.totalorder %s44, 0
      %p390 = por %p388, %p389
      %p391 = scmp.ne.s32.totalorder %s379, %s380
      %p392 = scmp.eq.s32.totalorder %s45, 1
      %p393 = por %p391, %p392
      %p395 = scmp.ne.s32.totalorder %s380, %s394
      %p396 = scmp.eq.s32.totalorder %s45, 0
      %p397 = por %p395, %p396
      %s398 = ssub.s32 %s39, %s46
      %p399 = scmp.eq.s32.totalorder %s398, 0
      %s401 = sadd.s32 %s400, 1
      %s402 = scalar_select %p399, %s400, %s401
      %p405 = pneg %p399
      %p406 = scmp.eq.s32.totalorder %s39, 1
      %p407 = por %p405, %p406
      %p408 = scmp.ne.s32.totalorder %s400, %s403
      %p409 = scmp.eq.s32.totalorder %s39, 0
      %p410 = por %p408, %p409
      %p411 = scmp.ne.s32.totalorder %s400, %s403
      %p412 = scmp.eq.s32.totalorder %s44, 1
      %p413 = por %p411, %p412
      %p414 = scmp.ne.s32.totalorder %s403, %s404
      %p415 = scmp.eq.s32.totalorder %s44, 0
      %p416 = por %p414, %p415
      %p417 = scmp.ne.s32.totalorder %s403, %s404
      %p418 = scmp.eq.s32.totalorder %s45, 1
      %p419 = por %p417, %p418
      %p421 = scmp.ne.s32.totalorder %s404, %s420
      %p422 = scmp.eq.s32.totalorder %s45, 0
      %p423 = por %p421, %p422
      %s424 = ssub.s32 %s39, %s46
      %p425 = scmp.eq.s32.totalorder %s424, 0
      %s427 = sadd.s32 %s426, 1
      %s428 = scalar_select %p425, %s426, %s427
      %p431 = pneg %p425
      %p432 = scmp.eq.s32.totalorder %s39, 1
      %p433 = por %p431, %p432
      %p434 = scmp.ne.s32.totalorder %s426, %s429
      %p435 = scmp.eq.s32.totalorder %s39, 0
      %p436 = por %p434, %p435
      %p437 = scmp.ne.s32.totalorder %s426, %s429
      %p438 = scmp.eq.s32.totalorder %s44, 1
      %p439 = por %p437, %p438
      %p440 = scmp.ne.s32.totalorder %s429, %s430
      %p441 = scmp.eq.s32.totalorder %s44, 0
      %p442 = por %p440, %p441
      %p443 = scmp.ne.s32.totalorder %s429, %s430
      %p444 = scmp.eq.s32.totalorder %s45, 1
      %p445 = por %p443, %p444
      %p447 = scmp.ne.s32.totalorder %s430, %s446
      %p448 = scmp.eq.s32.totalorder %s45, 0
      %p449 = por %p447, %p448
      %s450 = ssub.s32 %s39, %s46
      %p451 = scmp.eq.s32.totalorder %s450, 0
      %s453 = sadd.s32 %s452, 1
      %s454 = scalar_select %p451, %s452, %s453
      %p457 = pneg %p451
      %p458 = scmp.eq.s32.totalorder %s39, 1
      %p459 = por %p457, %p458
      %p460 = scmp.ne.s32.totalorder %s452, %s455
      %p461 = scmp.eq.s32.totalorder %s39, 0
      %p462 = por %p460, %p461
      %p463 = scmp.ne.s32.totalorder %s452, %s455
      %p464 = scmp.eq.s32.totalorder %s44, 1
      %p465 = por %p463, %p464
      %p466 = scmp.ne.s32.totalorder %s455, %s456
      %p467 = scmp.eq.s32.totalorder %s44, 0
      %p468 = por %p466, %p467
      %p469 = scmp.ne.s32.totalorder %s455, %s456
      %p470 = scmp.eq.s32.totalorder %s45, 1
      %p471 = por %p469, %p470
      %p473 = scmp.ne.s32.totalorder %s456, %s472
      %p474 = scmp.eq.s32.totalorder %s45, 0
      %p475 = por %p473, %p474
      %s476 = ssub.s32 %s39, %s46
      %p477 = scmp.eq.s32.totalorder %s476, 0
      %s479 = sadd.s32 %s478, 1
      %s480 = scalar_select %p477, %s478, %s479
      %p483 = pneg %p477
      %p484 = scmp.eq.s32.totalorder %s39, 1
      %p485 = por %p483, %p484
      %p486 = scmp.ne.s32.totalorder %s478, %s481
      %p487 = scmp.eq.s32.totalorder %s39, 0
      %p488 = por %p486, %p487
      %p489 = scmp.ne.s32.totalorder %s478, %s481
      %p490 = scmp.eq.s32.totalorder %s44, 1
      %p491 = por %p489, %p490
      %p492 = scmp.ne.s32.totalorder %s481, %s482
      %p493 = scmp.eq.s32.totalorder %s44, 0
      %p494 = por %p492, %p493
      %p495 = scmp.ne.s32.totalorder %s481, %s482
      %p496 = scmp.eq.s32.totalorder %s45, 1
      %p497 = por %p495, %p496
      %p499 = scmp.ne.s32.totalorder %s482, %s498
      %p500 = scmp.eq.s32.totalorder %s45, 0
      %p501 = por %p499, %p500
      %p502 = scmp.le.s32.totalorder 1, %s39
      %p503 = scmp.lt.s32.totalorder %s39, 3
      %p504 = pnand %p502, %p503
      %p505 = pneg %p504
      // Predicated region
      $region9: #{tpu_custom_call.1} parent=5 // pred_check
        _
      $region10: #{tpu_custom_call.1} parent=5 // pred_check_branch
        %507 = sbr.rel (%p504) target = $region12
      $region11: #{tpu_custom_call.1} parent=5 // pred_region
        %s508 = ssub.s32 %s39, 1
        // Predicated region
        $region13: #{tpu_custom_call.1} parent=11 // pred_check
          %p509 = pneg %p138
        $region14: #{tpu_custom_call.1} parent=11 // pred_check_branch
          %511 = sbr.rel (%p509) target = $region16
        $region15: #{tpu_custom_call.1} parent=11 // pred_region
          _
        $region16: #{tpu_custom_call.1} parent=11 // pred_fallthru
          _
        // Predicated region
        $region17: #{tpu_custom_call.1} parent=11 // pred_check
          %p512 = pneg %p159
        $region18: #{tpu_custom_call.1} parent=11 // pred_check_branch
          %514 = sbr.rel (%p512) target = $region20
        $region19: #{tpu_custom_call.1} parent=11 // pred_region
          _
        $region20: #{tpu_custom_call.1} parent=11 // pred_fallthru
          _
        // Predicated region
        $region21: #{tpu_custom_call.1} parent=11 // pred_check
          %p515 = pneg %p180
        $region22: #{tpu_custom_call.1} parent=11 // pred_check_branch
          %517 = sbr.rel (%p515) target = $region24
        $region23: #{tpu_custom_call.1} parent=11 // pred_region
          _
        $region24: #{tpu_custom_call.1} parent=11 // pred_fallthru
          _
        // Predicated region
        $region25: #{tpu_custom_call.1} parent=11 // pred_check
          %p518 = pneg %p201
        $region26: #{tpu_custom_call.1} parent=11 // pred_check_branch
          %520 = sbr.rel (%p518) target = $region28
        $region27: #{tpu_custom_call.1} parent=11 // pred_region
          _
        $region28: #{tpu_custom_call.1} parent=11 // pred_fallthru
          _
        // Predicated region
        $region29: #{tpu_custom_call.1} parent=11 // pred_check
          %p521 = pneg %p222
        $region30: #{tpu_custom_call.1} parent=11 // pred_check_branch
          %523 = sbr.rel (%p521) target = $region32
        $region31: #{tpu_custom_call.1} parent=11 // pred_region
          _
        $region32: #{tpu_custom_call.1} parent=11 // pred_fallthru
          _
        // Predicated region
        $region33: #{tpu_custom_call.1} parent=11 // pred_check
          %p524 = pneg %p243
        $region34: #{tpu_custom_call.1} parent=11 // pred_check_branch
          %526 = sbr.rel (%p524) target = $region36
        $region35: #{tpu_custom_call.1} parent=11 // pred_region
          _
        $region36: #{tpu_custom_call.1} parent=11 // pred_fallthru
          _
        // Predicated region
        $region37: #{tpu_custom_call.1} parent=11 // pred_check
          %p527 = pneg %p264
        $region38: #{tpu_custom_call.1} parent=11 // pred_check_branch
          %529 = sbr.rel (%p527) target = $region40
        $region39: #{tpu_custom_call.1} parent=11 // pred_region
          _
        $region40: #{tpu_custom_call.1} parent=11 // pred_fallthru
          _
        // Predicated region
        $region41: #{tpu_custom_call.1} parent=11 // pred_check
          %p530 = pneg %p285
        $region42: #{tpu_custom_call.1} parent=11 // pred_check_branch
          %532 = sbr.rel (%p530) target = $region44
        $region43: #{tpu_custom_call.1} parent=11 // pred_region
          _
        $region44: #{tpu_custom_call.1} parent=11 // pred_fallthru
          _
        // Predicated region
        $region45: #{tpu_custom_call.1} parent=11 // pred_check
          %p533 = pneg %p306
        $region46: #{tpu_custom_call.1} parent=11 // pred_check_branch
          %535 = sbr.rel (%p533) target = $region48
        $region47: #{tpu_custom_call.1} parent=11 // pred_region
          _
        $region48: #{tpu_custom_call.1} parent=11 // pred_fallthru
          _
        // Predicated region
        $region49: #{tpu_custom_call.1} parent=11 // pred_check
          %p536 = pneg %p327
        $region50: #{tpu_custom_call.1} parent=11 // pred_check_branch
          %538 = sbr.rel (%p536) target = $region52
        $region51: #{tpu_custom_call.1} parent=11 // pred_region
          _
        $region52: #{tpu_custom_call.1} parent=11 // pred_fallthru
          _
        // Predicated region
        $region53: #{tpu_custom_call.1} parent=11 // pred_check
          %p539 = pneg %p348
        $region54: #{tpu_custom_call.1} parent=11 // pred_check_branch
          %541 = sbr.rel (%p539) target = $region56
        $region55: #{tpu_custom_call.1} parent=11 // pred_region
          _
        $region56: #{tpu_custom_call.1} parent=11 // pred_fallthru
          _
        // Predicated region
        $region57: #{tpu_custom_call.1} parent=11 // pred_check
          %p542 = pneg %p369
        $region58: #{tpu_custom_call.1} parent=11 // pred_check_branch
          %544 = sbr.rel (%p542) target = $region60
        $region59: #{tpu_custom_call.1} parent=11 // pred_region
          _
        $region60: #{tpu_custom_call.1} parent=11 // pred_fallthru
          _
        // Predicated region
        $region61: #{tpu_custom_call.1} parent=11 // pred_check
          %p545 = pneg %p390
        $region62: #{tpu_custom_call.1} parent=11 // pred_check_branch
          %547 = sbr.rel (%p545) target = $region64
        $region63: #{tpu_custom_call.1} parent=11 // pred_region
          _
        $region64: #{tpu_custom_call.1} parent=11 // pred_fallthru
          _
      $region12: #{tpu_custom_call.1} parent=5 // pred_fallthru
        _
      %p548 = scmp.lt.s32.totalorder %s39, 2
      // Predicated region
      $region65: #{tpu_custom_call.1} parent=5 // pred_check
        %p549 = pneg %p548
      $region66: #{tpu_custom_call.1} parent=5 // pred_check_branch
        %551 = sbr.rel (%p549) target = $region68
      $region67: #{tpu_custom_call.1} parent=5 // pred_region
        // Predicated region
        $region69: #{tpu_custom_call.1} parent=67 // pred_check
          %p552 = pneg %p59
        $region70: #{tpu_custom_call.1} parent=67 // pred_check_branch
          %554 = sbr.rel (%p552) target = $region72
        $region71: #{tpu_custom_call.1} parent=67 // pred_region
          %s555 = smul.u32 128, %s39
          %p556 = scmp.lt.s32.totalorder %s555, 255
          %s557 = scalar_select %p556, %s555, 255
          %s558 = smul.addr %s557, 8
          %s559 = scalar_lea.vmem %s0, %s558
          %s560 = smul.u32 128, %s39
        $region72: #{tpu_custom_call.1} parent=67 // pred_fallthru
          _
        // Predicated region
        $region73: #{tpu_custom_call.1} parent=67 // pred_check
          %p561 = pneg %p85
        $region74: #{tpu_custom_call.1} parent=67 // pred_check_branch
          %563 = sbr.rel (%p561) target = $region76
        $region75: #{tpu_custom_call.1} parent=67 // pred_region
          %p564 = scmp.lt.s32.totalorder %s39, 1
          %s565 = scalar_select %p564, %s39, 1
          %s566 = smul.addr %s565, 8
          %s567 = scalar_lea.vmem %s1, %s566
        $region76: #{tpu_custom_call.1} parent=67 // pred_fallthru
          _
        // Predicated region
        $region77: #{tpu_custom_call.1} parent=67 // pred_check
          %p568 = pneg %p111
        $region78: #{tpu_custom_call.1} parent=67 // pred_check_branch
          %570 = sbr.rel (%p568) target = $region80
        $region79: #{tpu_custom_call.1} parent=67 // pred_region
          %p571 = scmp.lt.s32.totalorder %s39, 1
          %s572 = scalar_select %p571, %s39, 1
          %s573 = smul.addr %s572, 8
          %s574 = scalar_lea.vmem %s2, %s573
        $region80: #{tpu_custom_call.1} parent=67 // pred_fallthru
          _
      $region68: #{tpu_custom_call.1} parent=5 // pred_fallthru
        _
      %p575 = scmp.le.s32.totalorder 1, %s39
      %p576 = scmp.lt.s32.totalorder %s39, 3
      %p577 = pnand %p575, %p576
      %p578 = pneg %p577
      // Predicated region
      $region81: #{tpu_custom_call.1} parent=5 // pred_check
        _
      $region82: #{tpu_custom_call.1} parent=5 // pred_check_branch
        %580 = sbr.rel (%p577) target = $region84
      $region83: #{tpu_custom_call.1} parent=5 // pred_region
        %s581 = ssub.s32 %s39, 1
        %s582 = smul.u32 128, %s44
        %p583 = scmp.lt.s32.totalorder %s582, 255
        %s584 = scalar_select %p583, %s582, 255
        %s585 = smul.addr %s584, 8
        %s586 = scalar_lea.vmem %s0, %s585
        %p587 = pneg %p65
        %p588 = pneg %p62
        %p589 = scmp.lt.s32.totalorder %s44, 1
        %s590 = scalar_select %p589, %s44, 1
        %s591 = smul.addr %s590, 8
        %s592 = scalar_lea.vmem %s1, %s591
        %p593 = pneg %p91
        %p594 = pneg %p88
        %p595 = scmp.lt.s32.totalorder %s44, 1
        %s596 = scalar_select %p595, %s44, 1
        %s597 = smul.addr %s596, 8
        %s598 = scalar_lea.vmem %s2, %s597
        %p599 = pneg %p117
        %p600 = pneg %p114
        %p601 = pneg %p138
        %p602 = pneg %p135
        %p603 = pneg %p159
        %p604 = pneg %p156
        %p605 = pneg %p180
        %p606 = pneg %p177
        %p607 = pneg %p201
        %p608 = pneg %p198
        %p609 = pneg %p222
        %p610 = pneg %p219
        %p611 = pneg %p243
        %p612 = pneg %p240
        %p613 = pneg %p264
        %p614 = pneg %p261
        %p615 = pneg %p285
        %p616 = pneg %p282
        %p617 = pneg %p306
        %p618 = pneg %p303
        %p619 = pneg %p327
        %p620 = pneg %p324
        %p621 = pneg %p348
        %p622 = pneg %p345
        %p623 = pneg %p369
        %p624 = pneg %p366
        %p625 = pneg %p390
        %p626 = pneg %p387
        %p627 = pneg %p416
        %p628 = pneg %p413
        %s629 = sand.u32 %s403, 1
        %s630 = scalar_lea.sflag [#allocation5], %s629
        %s631 = sand.u32 %s403, 1
        %s632 = smul.addr %s631, 8
        %s633 = scalar_lea.vmem [#allocation4], %s632
        %p634 = pneg %p442
        %p635 = pneg %p439
        %s636 = sand.u32 %s44, 1
        %s637 = scalar_lea.sflag [#allocation7], %s636
        %s638 = sand.u32 %s429, 1
        %s639 = smul.addr %s638, 8
        %s640 = scalar_lea.vmem [#allocation6], %s639
        %p641 = pneg %p468
        %p642 = pneg %p465
        %s643 = sand.u32 %s44, 1
        %s644 = scalar_lea.sflag [#allocation7], %s643
        %s645 = sand.u32 %s455, 1
        %s646 = smul.addr %s645, 8
        %s647 = scalar_lea.vmem [#allocation8], %s646
        %p648 = pneg %p494
        %p649 = pneg %p491
        %s650 = sand.u32 %s481, 1
        %s651 = scalar_lea.sflag [#allocation10], %s650
        %s652 = sand.u32 %s481, 1
        %s653 = smul.addr %s652, 8
        %s654 = scalar_lea.vmem [#allocation9], %s653
        %s655 = smul.u32 128, %s44
        %p656 = scmp.lt.s32.totalorder %s655, 255
        %s657 = scalar_select %p656, %s655, 255
        %s658 = smul.addr %s657, 8
        %s659 = scalar_lea.vmem %s0, %s658
        %s660 = smul.u32 128, %s44
        %p661 = scmp.lt.s32.totalorder %s44, 1
        %s662 = scalar_select %p661, %s44, 1
        %s663 = smul.addr %s662, 8
        %s664 = scalar_lea.vmem %s1, %s663
        %p665 = scmp.lt.s32.totalorder %s44, 1
        %s666 = scalar_select %p665, %s44, 1
        %s667 = smul.addr %s666, 8
        %s668 = scalar_lea.vmem %s2, %s667
        %v669 = vld [vmem:[%s659] sm:$0xff]
        %v670 = vld [vmem:[%s659 + $0x8] sm:$0xff]
        %v671 = vld [vmem:[%s659 + $0x10] sm:$0xff]
        %v672 = vld [vmem:[%s659 + $0x18] sm:$0xff]
        %v673 = vld [vmem:[%s659 + $0x20] sm:$0xff]
        %v674 = vld [vmem:[%s659 + $0x28] sm:$0xff]
        %v675 = vld [vmem:[%s659 + $0x30] sm:$0xff]
        %v676 = vld [vmem:[%s659 + $0x38] sm:$0xff]
        %v677 = vld [vmem:[%s659 + $0x40] sm:$0xff]
        %v678 = vld [vmem:[%s659 + $0x48] sm:$0xff]
        %v679 = vld [vmem:[%s659 + $0x50] sm:$0xff]
        %v680 = vld [vmem:[%s659 + $0x58] sm:$0xff]
        %v681 = vld [vmem:[%s659 + $0x60] sm:$0xff]
        %v682 = vld [vmem:[%s659 + $0x68] sm:$0xff]
        %v683 = vld [vmem:[%s659 + $0x70] sm:$0xff]
        %v684 = vld [vmem:[%s659 + $0x78] sm:$0xff]
        %v685 = vld [vmem:[%s659 + $0x80] sm:$0xff]
        %v686 = vld [vmem:[%s659 + $0x88] sm:$0xff]
        %v687 = vld [vmem:[%s659 + $0x90] sm:$0xff]
        %v688 = vld [vmem:[%s659 + $0x98] sm:$0xff]
        %v689 = vld [vmem:[%s659 + $0xa0] sm:$0xff]
        %v690 = vld [vmem:[%s659 + $0xa8] sm:$0xff]
        %v691 = vld [vmem:[%s659 + $0xb0] sm:$0xff]
        %v692 = vld [vmem:[%s659 + $0xb8] sm:$0xff]
        %v693 = vld [vmem:[%s659 + $0xc0] sm:$0xff]
        %v694 = vld [vmem:[%s659 + $0xc8] sm:$0xff]
        %v695 = vld [vmem:[%s659 + $0xd0] sm:$0xff]
        %v696 = vld [vmem:[%s659 + $0xd8] sm:$0xff]
        %v697 = vld [vmem:[%s659 + $0xe0] sm:$0xff]
        %v698 = vld [vmem:[%s659 + $0xe8] sm:$0xff]
        %v699 = vld [vmem:[%s659 + $0xf0] sm:$0xff]
        %v700 = vld [vmem:[%s659 + $0xf8] sm:$0xff]
        %v701 = vld [vmem:[%s659 + $0x100] sm:$0xff]
        %v702 = vld [vmem:[%s659 + $0x108] sm:$0xff]
        %v703 = vld [vmem:[%s659 + $0x110] sm:$0xff]
        %v704 = vld [vmem:[%s659 + $0x118] sm:$0xff]
        %v705 = vld [vmem:[%s659 + $0x120] sm:$0xff]
        %v706 = vld [vmem:[%s659 + $0x128] sm:$0xff]
        %v707 = vld [vmem:[%s659 + $0x130] sm:$0xff]
        %v708 = vld [vmem:[%s659 + $0x138] sm:$0xff]
        %v709 = vld [vmem:[%s659 + $0x140] sm:$0xff]
        %v710 = vld [vmem:[%s659 + $0x148] sm:$0xff]
        %v711 = vld [vmem:[%s659 + $0x150] sm:$0xff]
        %v712 = vld [vmem:[%s659 + $0x158] sm:$0xff]
        %v713 = vld [vmem:[%s659 + $0x160] sm:$0xff]
        %v714 = vld [vmem:[%s659 + $0x168] sm:$0xff]
        %v715 = vld [vmem:[%s659 + $0x170] sm:$0xff]
        %v716 = vld [vmem:[%s659 + $0x178] sm:$0xff]
        %v717 = vld [vmem:[%s659 + $0x180] sm:$0xff]
        %v718 = vld [vmem:[%s659 + $0x188] sm:$0xff]
        %v719 = vld [vmem:[%s659 + $0x190] sm:$0xff]
        %v720 = vld [vmem:[%s659 + $0x198] sm:$0xff]
        %v721 = vld [vmem:[%s659 + $0x1a0] sm:$0xff]
        %v722 = vld [vmem:[%s659 + $0x1a8] sm:$0xff]
        %v723 = vld [vmem:[%s659 + $0x1b0] sm:$0xff]
        %v724 = vld [vmem:[%s659 + $0x1b8] sm:$0xff]
        %v725 = vld [vmem:[%s659 + $0x1c0] sm:$0xff]
        %v726 = vld [vmem:[%s659 + $0x1c8] sm:$0xff]
        %v727 = vld [vmem:[%s659 + $0x1d0] sm:$0xff]
        %v728 = vld [vmem:[%s659 + $0x1d8] sm:$0xff]
        %v729 = vld [vmem:[%s659 + $0x1e0] sm:$0xff]
        %v730 = vld [vmem:[%s659 + $0x1e8] sm:$0xff]
        %v731 = vld [vmem:[%s659 + $0x1f0] sm:$0xff]
        %v732 = vld [vmem:[%s659 + $0x1f8] sm:$0xff]
        %v733 = vld [vmem:[%s659 + $0x200] sm:$0xff]
        %v734 = vld [vmem:[%s659 + $0x208] sm:$0xff]
        %v735 = vld [vmem:[%s659 + $0x210] sm:$0xff]
        %v736 = vld [vmem:[%s659 + $0x218] sm:$0xff]
        %v737 = vld [vmem:[%s659 + $0x220] sm:$0xff]
        %v738 = vld [vmem:[%s659 + $0x228] sm:$0xff]
        %v739 = vld [vmem:[%s659 + $0x230] sm:$0xff]
        %v740 = vld [vmem:[%s659 + $0x238] sm:$0xff]
        %v741 = vld [vmem:[%s659 + $0x240] sm:$0xff]
        %v742 = vld [vmem:[%s659 + $0x248] sm:$0xff]
        %v743 = vld [vmem:[%s659 + $0x250] sm:$0xff]
        %v744 = vld [vmem:[%s659 + $0x258] sm:$0xff]
        %v745 = vld [vmem:[%s659 + $0x260] sm:$0xff]
        %v746 = vld [vmem:[%s659 + $0x268] sm:$0xff]
        %v747 = vld [vmem:[%s659 + $0x270] sm:$0xff]
        %v748 = vld [vmem:[%s659 + $0x278] sm:$0xff]
        %v749 = vld [vmem:[%s659 + $0x280] sm:$0xff]
        %v750 = vld [vmem:[%s659 + $0x288] sm:$0xff]
        %v751 = vld [vmem:[%s659 + $0x290] sm:$0xff]
        %v752 = vld [vmem:[%s659 + $0x298] sm:$0xff]
        %v753 = vld [vmem:[%s659 + $0x2a0] sm:$0xff]
        %v754 = vld [vmem:[%s659 + $0x2a8] sm:$0xff]
        %v755 = vld [vmem:[%s659 + $0x2b0] sm:$0xff]
        %v756 = vld [vmem:[%s659 + $0x2b8] sm:$0xff]
        %v757 = vld [vmem:[%s659 + $0x2c0] sm:$0xff]
        %v758 = vld [vmem:[%s659 + $0x2c8] sm:$0xff]
        %v759 = vld [vmem:[%s659 + $0x2d0] sm:$0xff]
        %v760 = vld [vmem:[%s659 + $0x2d8] sm:$0xff]
        %v761 = vld [vmem:[%s659 + $0x2e0] sm:$0xff]
        %v762 = vld [vmem:[%s659 + $0x2e8] sm:$0xff]
        %v763 = vld [vmem:[%s659 + $0x2f0] sm:$0xff]
        %v764 = vld [vmem:[%s659 + $0x2f8] sm:$0xff]
        %v765 = vld [vmem:[%s659 + $0x300] sm:$0xff]
        %v766 = vld [vmem:[%s659 + $0x308] sm:$0xff]
        %v767 = vld [vmem:[%s659 + $0x310] sm:$0xff]
        %v768 = vld [vmem:[%s659 + $0x318] sm:$0xff]
        %v769 = vld [vmem:[%s659 + $0x320] sm:$0xff]
        %v770 = vld [vmem:[%s659 + $0x328] sm:$0xff]
        %v771 = vld [vmem:[%s659 + $0x330] sm:$0xff]
        %v772 = vld [vmem:[%s659 + $0x338] sm:$0xff]
        %v773 = vld [vmem:[%s659 + $0x340] sm:$0xff]
        %v774 = vld [vmem:[%s659 + $0x348] sm:$0xff]
        %v775 = vld [vmem:[%s659 + $0x350] sm:$0xff]
        %v776 = vld [vmem:[%s659 + $0x358] sm:$0xff]
        %v777 = vld [vmem:[%s659 + $0x360] sm:$0xff]
        %v778 = vld [vmem:[%s659 + $0x368] sm:$0xff]
        %v779 = vld [vmem:[%s659 + $0x370] sm:$0xff]
        %v780 = vld [vmem:[%s659 + $0x378] sm:$0xff]
        %v781 = vld [vmem:[%s659 + $0x380] sm:$0xff]
        %v782 = vld [vmem:[%s659 + $0x388] sm:$0xff]
        %v783 = vld [vmem:[%s659 + $0x390] sm:$0xff]
        %v784 = vld [vmem:[%s659 + $0x398] sm:$0xff]
        %v785 = vld [vmem:[%s659 + $0x3a0] sm:$0xff]
        %v786 = vld [vmem:[%s659 + $0x3a8] sm:$0xff]
        %v787 = vld [vmem:[%s659 + $0x3b0] sm:$0xff]
        %v788 = vld [vmem:[%s659 + $0x3b8] sm:$0xff]
        %v789 = vld [vmem:[%s659 + $0x3c0] sm:$0xff]
        %v790 = vld [vmem:[%s659 + $0x3c8] sm:$0xff]
        %v791 = vld [vmem:[%s659 + $0x3d0] sm:$0xff]
        %v792 = vld [vmem:[%s659 + $0x3d8] sm:$0xff]
        %v793 = vld [vmem:[%s659 + $0x3e0] sm:$0xff]
        %v794 = vld [vmem:[%s659 + $0x3e8] sm:$0xff]
        %v795 = vld [vmem:[%s659 + $0x3f0] sm:$0xff]
        %v796 = vld [vmem:[%s659 + $0x3f8] sm:$0xff]
        %v797 = vld [vmem:[%s4] sm:$0x3]
        %v798 = vld [vmem:[%s5] sm:$0x1]
        %v800 = vlaneseq
        %v801 = vshrl.u32 %v800, 7
        %v802 = vsub.s32 0, %v801
        %v803 = vrot.slane %v798, %v802
        %vm805 = vcmask 15360
        %v807 = vsel %vm805, %v669, 0
        %v810 = vsel %vm805, %v670, 0
        %v813 = vsel %vm805, %v671, 0
        %v816 = vsel %vm805, %v672, 0
        %v819 = vsel %vm805, %v673, 0
        %v822 = vsel %vm805, %v674, 0
        %v825 = vsel %vm805, %v675, 0
        %v828 = vsel %vm805, %v676, 0
        %v831 = vsel %vm805, %v677, 0
        %v834 = vsel %vm805, %v678, 0
        %v837 = vsel %vm805, %v679, 0
        %v840 = vsel %vm805, %v680, 0
        %v843 = vsel %vm805, %v681, 0
        %v846 = vsel %vm805, %v682, 0
        %v849 = vsel %vm805, %v683, 0
        %v852 = vsel %vm805, %v684, 0
        %v855 = vsel %vm805, %v685, 0
        %v858 = vsel %vm805, %v686, 0
        %v861 = vsel %vm805, %v687, 0
        %v864 = vsel %vm805, %v688, 0
        %v867 = vsel %vm805, %v689, 0
        %v870 = vsel %vm805, %v690, 0
        %v873 = vsel %vm805, %v691, 0
        %v876 = vsel %vm805, %v692, 0
        %v879 = vsel %vm805, %v693, 0
        %v882 = vsel %vm805, %v694, 0
        %v885 = vsel %vm805, %v695, 0
        %v888 = vsel %vm805, %v696, 0
        %v891 = vsel %vm805, %v697, 0
        %v894 = vsel %vm805, %v698, 0
        %v897 = vsel %vm805, %v699, 0
        %v900 = vsel %vm805, %v700, 0
        %v903 = vsel %vm805, %v701, 0
        %v906 = vsel %vm805, %v702, 0
        %v909 = vsel %vm805, %v703, 0
        %v912 = vsel %vm805, %v704, 0
        %v915 = vsel %vm805, %v705, 0
        %v918 = vsel %vm805, %v706, 0
        %v921 = vsel %vm805, %v707, 0
        %v924 = vsel %vm805, %v708, 0
        %v927 = vsel %vm805, %v709, 0
        %v930 = vsel %vm805, %v710, 0
        %v933 = vsel %vm805, %v711, 0
        %v936 = vsel %vm805, %v712, 0
        %v939 = vsel %vm805, %v713, 0
        %v942 = vsel %vm805, %v714, 0
        %v945 = vsel %vm805, %v715, 0
        %v948 = vsel %vm805, %v716, 0
        %v951 = vsel %vm805, %v717, 0
        %v954 = vsel %vm805, %v718, 0
        %v957 = vsel %vm805, %v719, 0
        %v960 = vsel %vm805, %v720, 0
        %v963 = vsel %vm805, %v721, 0
        %v966 = vsel %vm805, %v722, 0
        %v969 = vsel %vm805, %v723, 0
        %v972 = vsel %vm805, %v724, 0
        %v975 = vsel %vm805, %v725, 0
        %v978 = vsel %vm805, %v726, 0
        %v981 = vsel %vm805, %v727, 0
        %v984 = vsel %vm805, %v728, 0
        %v987 = vsel %vm805, %v729, 0
        %v990 = vsel %vm805, %v730, 0
        %v993 = vsel %vm805, %v731, 0
        %v996 = vsel %vm805, %v732, 0
        %v999 = vsel %vm805, %v733, 0
        %v1002 = vsel %vm805, %v734, 0
        %v1005 = vsel %vm805, %v735, 0
        %v1008 = vsel %vm805, %v736, 0
        %v1011 = vsel %vm805, %v737, 0
        %v1014 = vsel %vm805, %v738, 0
        %v1017 = vsel %vm805, %v739, 0
        %v1020 = vsel %vm805, %v740, 0
        %v1023 = vsel %vm805, %v741, 0
        %v1026 = vsel %vm805, %v742, 0
        %v1029 = vsel %vm805, %v743, 0
        %v1032 = vsel %vm805, %v744, 0
        %v1035 = vsel %vm805, %v745, 0
        %v1038 = vsel %vm805, %v746, 0
        %v1041 = vsel %vm805, %v747, 0
        %v1044 = vsel %vm805, %v748, 0
        %v1047 = vsel %vm805, %v749, 0
        %v1050 = vsel %vm805, %v750, 0
        %v1053 = vsel %vm805, %v751, 0
        %v1056 = vsel %vm805, %v752, 0
        %v1059 = vsel %vm805, %v753, 0
        %v1062 = vsel %vm805, %v754, 0
        %v1065 = vsel %vm805, %v755, 0
        %v1068 = vsel %vm805, %v756, 0
        %v1071 = vsel %vm805, %v757, 0
        %v1074 = vsel %vm805, %v758, 0
        %v1077 = vsel %vm805, %v759, 0
        %v1080 = vsel %vm805, %v760, 0
        %v1083 = vsel %vm805, %v761, 0
        %v1086 = vsel %vm805, %v762, 0
        %v1089 = vsel %vm805, %v763, 0
        %v1092 = vsel %vm805, %v764, 0
        %v1095 = vsel %vm805, %v765, 0
        %v1098 = vsel %vm805, %v766, 0
        %v1101 = vsel %vm805, %v767, 0
        %v1104 = vsel %vm805, %v768, 0
        %v1107 = vsel %vm805, %v769, 0
        %v1110 = vsel %vm805, %v770, 0
        %v1113 = vsel %vm805, %v771, 0
        %v1116 = vsel %vm805, %v772, 0
        %v1119 = vsel %vm805, %v773, 0
        %v1122 = vsel %vm805, %v774, 0
        %v1125 = vsel %vm805, %v775, 0
        %v1128 = vsel %vm805, %v776, 0
        %v1131 = vsel %vm805, %v777, 0
        %v1134 = vsel %vm805, %v778, 0
        %v1137 = vsel %vm805, %v779, 0
        %v1140 = vsel %vm805, %v780, 0
        %v1143 = vsel %vm805, %v781, 0
        %v1146 = vsel %vm805, %v782, 0
        %v1149 = vsel %vm805, %v783, 0
        %v1152 = vsel %vm805, %v784, 0
        %v1155 = vsel %vm805, %v785, 0
        %v1158 = vsel %vm805, %v786, 0
        %v1161 = vsel %vm805, %v787, 0
        %v1164 = vsel %vm805, %v788, 0
        %v1167 = vsel %vm805, %v789, 0
        %v1170 = vsel %vm805, %v790, 0
        %v1173 = vsel %vm805, %v791, 0
        %v1176 = vsel %vm805, %v792, 0
        %v1179 = vsel %vm805, %v793, 0
        %v1182 = vsel %vm805, %v794, 0
        %v1185 = vsel %vm805, %v795, 0
        %v1188 = vsel %vm805, %v796, 0
        %vm1190 = vcmask 1041408
        %v1192 = vsel %vm1190, %v797, 0
        %1194 = vmatprep.subr.mxu0 0.0
        %1195 = vmatpush1.msra.mxu0 %v1192
        %1196 = vmatprep.subr.mxu0 0.0
        %1197 = vmatpush1.msra.mxu0 0.0
        %1198 = vmatprep.subr.mxu0 0.0
        %1199 = vmatpush1.msra.mxu0 0.0
        %1200 = vmatprep.subr.mxu0 0.0
        %1201 = vmatpush1.msra.mxu0 0.0
        %1202 = vmatprep.subr.mxu0 0.0
        %1203 = vmatpush1.msra.mxu0 0.0
        %1204 = vmatprep.subr.mxu0 0.0
        %1205 = vmatpush1.msra.mxu0 0.0
        %1206 = vmatprep.subr.mxu0 0.0
        %1207 = vmatpush1.msra.mxu0 0.0
        %1208 = vmatprep.subr.mxu0 0.0
        %1209 = vmatpush1.msra.mxu0 0.0
        %1210 = vmatprep.subr.mxu0 0.0
        %1211 = vmatpush1.msra.mxu0 0.0
        %1212 = vmatprep.subr.mxu0 0.0
        %1213 = vmatpush1.msra.mxu0 0.0
        %1214 = vmatprep.subr.mxu0 0.0
        %1215 = vmatpush1.msra.mxu0 0.0
        %1216 = vmatprep.subr.mxu0 0.0
        %1217 = vmatpush1.msra.mxu0 0.0
        %1218 = vmatprep.subr.mxu0 0.0
        %1219 = vmatpush1.msra.mxu0 0.0
        %1220 = vmatprep.subr.mxu0 0.0
        %1221 = vmatpush1.msra.mxu0 0.0
        %1222 = vmatprep.subr.mxu0 0.0
        %1223 = vmatpush1.msra.mxu0 0.0
        %1224 = vmatprep.subr.mxu0 0.0
        %1225 = vmatpush1.msra.mxu0 0.0
        %1226 = vmatprep.subr.mxu0 0.0
        %1227 = vmatpush1.msra.mxu0 0.0
        %1228 = vmatprep.subr.mxu0 0.0
        %1229 = vmatpush1.msra.mxu0 0.0
        %1230 = vmatprep.subr.mxu0 0.0
        %1231 = vmatpush1.msra.mxu0 0.0
        %1232 = vmatprep.subr.mxu0 0.0
        %1233 = vmatpush1.msra.mxu0 0.0
        %1234 = vmatprep.subr.mxu0 0.0
        %1235 = vmatpush1.msra.mxu0 0.0
        %1236 = vmatprep.subr.mxu0 0.0
        %1237 = vmatpush1.msra.mxu0 0.0
        %1238 = vmatprep.subr.mxu0 0.0
        %1239 = vmatpush1.msra.mxu0 0.0
        %1240 = vmatprep.subr.mxu0 0.0
        %1241 = vmatpush1.msra.mxu0 0.0
        %1242 = vmatprep.subr.mxu0 0.0
        %1243 = vmatpush1.msra.mxu0 0.0
        %1244 = vmatprep.subr.mxu0 0.0
        %1245 = vmatpush1.msra.mxu0 0.0
        %1246 = vmatprep.subr.mxu0 0.0
        %1247 = vmatpush1.msra.mxu0 0.0
        %1248 = vmatprep.subr.mxu0 0.0
        %1249 = vmatpush1.msra.mxu0 0.0
        %1250 = vmatprep.subr.mxu0 0.0
        %1251 = vmatpush1.msra.mxu0 0.0
        %1252 = vmatprep.subr.mxu0 0.0
        %1253 = vmatpush1.msra.mxu0 0.0
        %1254 = vmatprep.subr.mxu0 0.0
        %1255 = vmatpush1.msra.mxu0 0.0
        %1256 = vmatprep.subr.mxu0 0.0
        %1257 = vmatpush1.msra.mxu0 0.0
        %1258 = vmatprep.mubr.f32.mxu0 0.0
        %1259 = vmatmul.mubr.f32.gmra.mrb[0].mxu0 %v807
        %v1260 = vpop.f32.mrb[0].mxu0
        %v1261 = vadd.f32 %v803, %v1260
        %v1262 = vpop.f32.mrb[0].mxu0
        %1263 = vmatprep.mubr.f32.mxu0 0.0
        %1264 = vmatmul.mubr.f32.gmra.mrb[0].mxu0 %v810
        %v1265 = vpop.f32.mrb[0].mxu0
        %v1266 = vadd.f32 %v803, %v1265
        %v1267 = vpop.f32.mrb[0].mxu0
        %1268 = vmatprep.mubr.f32.mxu0 0.0
        %1269 = vmatmul.mubr.f32.gmra.mrb[0].mxu0 %v813
        %v1270 = vpop.f32.mrb[0].mxu0
        %v1271 = vadd.f32 %v803, %v1270
        %v1272 = vpop.f32.mrb[0].mxu0
        %1273 = vmatprep.mubr.f32.mxu0 0.0
        %1274 = vmatmul.mubr.f32.gmra.mrb[0].mxu0 %v816
        %v1275 = vpop.f32.mrb[0].mxu0
        %v1276 = vadd.f32 %v803, %v1275
        %v1277 = vpop.f32.mrb[0].mxu0
        %1278 = vmatprep.mubr.f32.mxu0 0.0
        %1279 = vmatmul.mubr.f32.gmra.mrb[0].mxu0 %v819
        %v1280 = vpop.f32.mrb[0].mxu0
        %v1281 = vadd.f32 %v803, %v1280
        %v1282 = vpop.f32.mrb[0].mxu0
        %1283 = vmatprep.mubr.f32.mxu0 0.0
        %1284 = vmatmul.mubr.f32.gmra.mrb[0].mxu0 %v822
        %v1285 = vpop.f32.mrb[0].mxu0
        %v1286 = vadd.f32 %v803, %v1285
        %v1287 = vpop.f32.mrb[0].mxu0
        %1288 = vmatprep.mubr.f32.mxu0 0.0
        %1289 = vmatmul.mubr.f32.gmra.mrb[0].mxu0 %v825
        %v1290 = vpop.f32.mrb[0].mxu0
        %v1291 = vadd.f32 %v803, %v1290
        %v1292 = vpop.f32.mrb[0].mxu0
        %1293 = vmatprep.mubr.f32.mxu0 0.0
        %1294 = vmatmul.mubr.f32.gmra.mrb[0].mxu0 %v828
        %v1295 = vpop.f32.mrb[0].mxu0
        %v1296 = vadd.f32 %v803, %v1295
        %v1297 = vpop.f32.mrb[0].mxu0
        %1298 = vmatprep.mubr.f32.mxu0 0.0
        %1299 = vmatmul.mubr.f32.gmra.mrb[0].mxu0 %v831
        %v1300 = vpop.f32.mrb[0].mxu0
        %v1301 = vadd.f32 %v803, %v1300
        %v1302 = vpop.f32.mrb[0].mxu0
        %1303 = vmatprep.mubr.f32.mxu0 0.0
        %1304 = vmatmul.mubr.f32.gmra.mrb[0].mxu0 %v834
        %v1305 = vpop.f32.mrb[0].mxu0
        %v1306 = vadd.f32 %v803, %v1305
        %v1307 = vpop.f32.mrb[0].mxu0
        %1308 = vmatprep.mubr.f32.mxu0 0.0
        %1309 = vmatmul.mubr.f32.gmra.mrb[0].mxu0 %v837
        %v1310 = vpop.f32.mrb[0].mxu0
        %v1311 = vadd.f32 %v803, %v1310
        %v1312 = vpop.f32.mrb[0].mxu0
        %1313 = vmatprep.mubr.f32.mxu0 0.0
        %1314 = vmatmul.mubr.f32.gmra.mrb[0].mxu0 %v840
        %v1315 = vpop.f32.mrb[0].mxu0
        %v1316 = vadd.f32 %v803, %v1315
        %v1317 = vpop.f32.mrb[0].mxu0
        %1318 = vmatprep.mubr.f32.mxu0 0.0
        %1319 = vmatmul.mubr.f32.gmra.mrb[0].mxu0 %v843
        %v1320 = vpop.f32.mrb[0].mxu0
        %v1321 = vadd.f32 %v803, %v1320
        %v1322 = vpop.f32.mrb[0].mxu0
        %1323 = vmatprep.mubr.f32.mxu0 0.0
        %1324 = vmatmul.mubr.f32.gmra.mrb[0].mxu0 %v846
        %v1325 = vpop.f32.mrb[0].mxu0
        %v1326 = vadd.f32 %v803, %v1325
        %v1327 = vpop.f32.mrb[0].mxu0
        %1328 = vmatprep.mubr.f32.mxu0 0.0
        %1329 = vmatmul.mubr.f32.gmra.mrb[0].mxu0 %v849
        %v1330 = vpop.f32.mrb[0].mxu0
        %v1331 = vadd.f32 %v803, %v1330
        %v1332 = vpop.f32.mrb[0].mxu0
        %1333 = vmatprep.mubr.f32.mxu0 0.0
        %1334 = vmatmul.mubr.f32.gmra.mrb[0].mxu0 %v852
        %v1335 = vpop.f32.mrb[0].mxu0
        %v1336 = vadd.f32 %v803, %v1335
        %v1337 = vpop.f32.mrb[0].mxu0
        %1338 = vmatprep.mubr.f32.mxu0 0.0
        %1339 = vmatmul.mubr.f32.gmra.mrb[0].mxu0 %v855
        %v1340 = vpop.f32.mrb[0].mxu0
        %v1341 = vadd.f32 %v803, %v1340
        %v1342 = vpop.f32.mrb[0].mxu0
        %1343 = vmatprep.mubr.f32.mxu0 0.0
        %1344 = vmatmul.mubr.f32.gmra.mrb[0].mxu0 %v858
        %v1345 = vpop.f32.mrb[0].mxu0
        %v1346 = vadd.f32 %v803, %v1345
        %v1347 = vpop.f32.mrb[0].mxu0
        %1348 = vmatprep.mubr.f32.mxu0 0.0
        %1349 = vmatmul.mubr.f32.gmra.mrb[0].mxu0 %v861
        %v1350 = vpop.f32.mrb[0].mxu0
        %v1351 = vadd.f32 %v803, %v1350
        %v1352 = vpop.f32.mrb[0].mxu0
        %1353 = vmatprep.mubr.f32.mxu0 0.0
        %1354 = vmatmul.mubr.f32.gmra.mrb[0].mxu0 %v864
        %v1355 = vpop.f32.mrb[0].mxu0
        %v1356 = vadd.f32 %v803, %v1355
        %v1357 = vpop.f32.mrb[0].mxu0
        %1358 = vmatprep.mubr.f32.mxu0 0.0
        %1359 = vmatmul.mubr.f32.gmra.mrb[0].mxu0 %v867
        %v1360 = vpop.f32.mrb[0].mxu0
        %v1361 = vadd.f32 %v803, %v1360
        %v1362 = vpop.f32.mrb[0].mxu0
        %1363 = vmatprep.mubr.f32.mxu0 0.0
        %1364 = vmatmul.mubr.f32.gmra.mrb[0].mxu0 %v870
        %v1365 = vpop.f32.mrb[0].mxu0
        %v1366 = vadd.f32 %v803, %v1365
        %v1367 = vpop.f32.mrb[0].mxu0
        %1368 = vmatprep.mubr.f32.mxu0 0.0
        %1369 = vmatmul.mubr.f32.gmra.mrb[0].mxu0 %v873
        %v1370 = vpop.f32.mrb[0].mxu0
        %v1371 = vadd.f32 %v803, %v1370
        %v1372 = vpop.f32.mrb[0].mxu0
        %1373 = vmatprep.mubr.f32.mxu0 0.0
        %1374 = vmatmul.mubr.f32.gmra.mrb[0].mxu0 %v876
        %v1375 = vpop.f32.mrb[0].mxu0
        %v1376 = vadd.f32 %v803, %v1375
        %v1377 = vpop.f32.mrb[0].mxu0
        %1378 = vmatprep.mubr.f32.mxu0 0.0
        %1379 = vmatmul.mubr.f32.gmra.mrb[0].mxu0 %v879
        %v1380 = vpop.f32.mrb[0].mxu0
        %v1381 = vadd.f32 %v803, %v1380
        %v1382 = vpop.f32.mrb[0].mxu0
        %1383 = vmatprep.mubr.f32.mxu0 0.0
        %1384 = vmatmul.mubr.f32.gmra.mrb[0].mxu0 %v882
        %v1385 = vpop.f32.mrb[0].mxu0
        %v1386 = vadd.f32 %v803, %v1385
        %v1387 = vpop.f32.mrb[0].mxu0
        %1388 = vmatprep.mubr.f32.mxu0 0.0
        %1389 = vmatmul.mubr.f32.gmra.mrb[0].mxu0 %v885
        %v1390 = vpop.f32.mrb[0].mxu0
        %v1391 = vadd.f32 %v803, %v1390
        %v1392 = vpop.f32.mrb[0].mxu0
        %1393 = vmatprep.mubr.f32.mxu0 0.0
        %1394 = vmatmul.mubr.f32.gmra.mrb[0].mxu0 %v888
        %v1395 = vpop.f32.mrb[0].mxu0
        %v1396 = vadd.f32 %v803, %v1395
        %v1397 = vpop.f32.mrb[0].mxu0
        %1398 = vmatprep.mubr.f32.mxu0 0.0
        %1399 = vmatmul.mubr.f32.gmra.mrb[0].mxu0 %v891
        %v1400 = vpop.f32.mrb[0].mxu0
        %v1401 = vadd.f32 %v803, %v1400
        %v1402 = vpop.f32.mrb[0].mxu0
        %1403 = vmatprep.mubr.f32.mxu0 0.0
        %1404 = vmatmul.mubr.f32.gmra.mrb[0].mxu0 %v894
        %v1405 = vpop.f32.mrb[0].mxu0
        %v1406 = vadd.f32 %v803, %v1405
        %v1407 = vpop.f32.mrb[0].mxu0
        %1408 = vmatprep.mubr.f32.mxu0 0.0
        %1409 = vmatmul.mubr.f32.gmra.mrb[0].mxu0 %v897
        %v1410 = vpop.f32.mrb[0].mxu0
        %v1411 = vadd.f32 %v803, %v1410
        %v1412 = vpop.f32.mrb[0].mxu0
        %1413 = vmatprep.mubr.f32.mxu0 0.0
        %1414 = vmatmul.mubr.f32.gmra.mrb[0].mxu0 %v900
        %v1415 = vpop.f32.mrb[0].mxu0
        %v1416 = vadd.f32 %v803, %v1415
        %v1417 = vpop.f32.mrb[0].mxu0
        %1418 = vmatprep.mubr.f32.mxu0 0.0
        %1419 = vmatmul.mubr.f32.gmra.mrb[0].mxu0 %v903
        %v1420 = vpop.f32.mrb[0].mxu0
        %v1421 = vadd.f32 %v803, %v1420
        %v1422 = vpop.f32.mrb[0].mxu0
        %1423 = vmatprep.mubr.f32.mxu0 0.0
        %1424 = vmatmul.mubr.f32.gmra.mrb[0].mxu0 %v906
        %v1425 = vpop.f32.mrb[0].mxu0
        %v1426 = vadd.f32 %v803, %v1425
        %v1427 = vpop.f32.mrb[0].mxu0
        %1428 = vmatprep.mubr.f32.mxu0 0.0
        %1429 = vmatmul.mubr.f32.gmra.mrb[0].mxu0 %v909
        %v1430 = vpop.f32.mrb[0].mxu0
        %v1431 = vadd.f32 %v803, %v1430
        %v1432 = vpop.f32.mrb[0].mxu0
        %1433 = vmatprep.mubr.f32.mxu0 0.0
        %1434 = vmatmul.mubr.f32.gmra.mrb[0].mxu0 %v912
        %v1435 = vpop.f32.mrb[0].mxu0
        %v1436 = vadd.f32 %v803, %v1435
        %v1437 = vpop.f32.mrb[0].mxu0
        %1438 = vmatprep.mubr.f32.mxu0 0.0
        %1439 = vmatmul.mubr.f32.gmra.mrb[0].mxu0 %v915
        %v1440 = vpop.f32.mrb[0].mxu0
        %v1441 = vadd.f32 %v803, %v1440
        %v1442 = vpop.f32.mrb[0].mxu0
        %1443 = vmatprep.mubr.f32.mxu0 0.0
        %1444 = vmatmul.mubr.f32.gmra.mrb[0].mxu0 %v918
        %v1445 = vpop.f32.mrb[0].mxu0
        %v1446 = vadd.f32 %v803, %v1445
        %v1447 = vpop.f32.mrb[0].mxu0
        %1448 = vmatprep.mubr.f32.mxu0 0.0
        %1449 = vmatmul.mubr.f32.gmra.mrb[0].mxu0 %v921
        %v1450 = vpop.f32.mrb[0].mxu0
        %v1451 = vadd.f32 %v803, %v1450
        %v1452 = vpop.f32.mrb[0].mxu0
        %1453 = vmatprep.mubr.f32.mxu0 0.0
        %1454 = vmatmul.mubr.f32.gmra.mrb[0].mxu0 %v924
        %v1455 = vpop.f32.mrb[0].mxu0
        %v1456 = vadd.f32 %v803, %v1455
        %v1457 = vpop.f32.mrb[0].mxu0
        %1458 = vmatprep.mubr.f32.mxu0 0.0
        %1459 = vmatmul.mubr.f32.gmra.mrb[0].mxu0 %v927
        %v1460 = vpop.f32.mrb[0].mxu0
        %v1461 = vadd.f32 %v803, %v1460
        %v1462 = vpop.f32.mrb[0].mxu0
        %1463 = vmatprep.mubr.f32.mxu0 0.0
        %1464 = vmatmul.mubr.f32.gmra.mrb[0].mxu0 %v930
        %v1465 = vpop.f32.mrb[0].mxu0
        %v1466 = vadd.f32 %v803, %v1465
        %v1467 = vpop.f32.mrb[0].mxu0
        %1468 = vmatprep.mubr.f32.mxu0 0.0
        %1469 = vmatmul.mubr.f32.gmra.mrb[0].mxu0 %v933
        %v1470 = vpop.f32.mrb[0].mxu0
        %v1471 = vadd.f32 %v803, %v1470
        %v1472 = vpop.f32.mrb[0].mxu0
        %1473 = vmatprep.mubr.f32.mxu0 0.0
        %1474 = vmatmul.mubr.f32.gmra.mrb[0].mxu0 %v936
        %v1475 = vpop.f32.mrb[0].mxu0
        %v1476 = vadd.f32 %v803, %v1475
        %v1477 = vpop.f32.mrb[0].mxu0
        %1478 = vmatprep.mubr.f32.mxu0 0.0
        %1479 = vmatmul.mubr.f32.gmra.mrb[0].mxu0 %v939
        %v1480 = vpop.f32.mrb[0].mxu0
        %v1481 = vadd.f32 %v803, %v1480
        %v1482 = vpop.f32.mrb[0].mxu0
        %1483 = vmatprep.mubr.f32.mxu0 0.0
        %1484 = vmatmul.mubr.f32.gmra.mrb[0].mxu0 %v942
        %v1485 = vpop.f32.mrb[0].mxu0
        %v1486 = vadd.f32 %v803, %v1485
        %v1487 = vpop.f32.mrb[0].mxu0
        %1488 = vmatprep.mubr.f32.mxu0 0.0
        %1489 = vmatmul.mubr.f32.gmra.mrb[0].mxu0 %v945
        %v1490 = vpop.f32.mrb[0].mxu0
        %v1491 = vadd.f32 %v803, %v1490
        %v1492 = vpop.f32.mrb[0].mxu0
        %1493 = vmatprep.mubr.f32.mxu0 0.0
        %1494 = vmatmul.mubr.f32.gmra.mrb[0].mxu0 %v948
        %v1495 = vpop.f32.mrb[0].mxu0
        %v1496 = vadd.f32 %v803, %v1495
        %v1497 = vpop.f32.mrb[0].mxu0
        %1498 = vmatprep.mubr.f32.mxu0 0.0
        %1499 = vmatmul.mubr.f32.gmra.mrb[0].mxu0 %v951
        %v1500 = vpop.f32.mrb[0].mxu0
        %v1501 = vadd.f32 %v803, %v1500
        %v1502 = vpop.f32.mrb[0].mxu0
        %1503 = vmatprep.mubr.f32.mxu0 0.0
        %1504 = vmatmul.mubr.f32.gmra.mrb[0].mxu0 %v954
        %v1505 = vpop.f32.mrb[0].mxu0
        %v1506 = vadd.f32 %v803, %v1505
        %v1507 = vpop.f32.mrb[0].mxu0
        %1508 = vmatprep.mubr.f32.mxu0 0.0
        %1509 = vmatmul.mubr.f32.gmra.mrb[0].mxu0 %v957
        %v1510 = vpop.f32.mrb[0].mxu0
        %v1511 = vadd.f32 %v803, %v1510
        %v1512 = vpop.f32.mrb[0].mxu0
        %1513 = vmatprep.mubr.f32.mxu0 0.0
        %1514 = vmatmul.mubr.f32.gmra.mrb[0].mxu0 %v960
        %v1515 = vpop.f32.mrb[0].mxu0
        %v1516 = vadd.f32 %v803, %v1515
        %v1517 = vpop.f32.mrb[0].mxu0
        %1518 = vmatprep.mubr.f32.mxu0 0.0
        %1519 = vmatmul.mubr.f32.gmra.mrb[0].mxu0 %v963
        %v1520 = vpop.f32.mrb[0].mxu0
        %v1521 = vadd.f32 %v803, %v1520
        %v1522 = vpop.f32.mrb[0].mxu0
        %1523 = vmatprep.mubr.f32.mxu0 0.0
        %1524 = vmatmul.mubr.f32.gmra.mrb[0].mxu0 %v966
        %v1525 = vpop.f32.mrb[0].mxu0
        %v1526 = vadd.f32 %v803, %v1525
        %v1527 = vpop.f32.mrb[0].mxu0
        %1528 = vmatprep.mubr.f32.mxu0 0.0
        %1529 = vmatmul.mubr.f32.gmra.mrb[0].mxu0 %v969
        %v1530 = vpop.f32.mrb[0].mxu0
        %v1531 = vadd.f32 %v803, %v1530
        %v1532 = vpop.f32.mrb[0].mxu0
        %1533 = vmatprep.mubr.f32.mxu0 0.0
        %1534 = vmatmul.mubr.f32.gmra.mrb[0].mxu0 %v972
        %v1535 = vpop.f32.mrb[0].mxu0
        %v1536 = vadd.f32 %v803, %v1535
        %v1537 = vpop.f32.mrb[0].mxu0
        %1538 = vmatprep.mubr.f32.mxu0 0.0
        %1539 = vmatmul.mubr.f32.gmra.mrb[0].mxu0 %v975
        %v1540 = vpop.f32.mrb[0].mxu0
        %v1541 = vadd.f32 %v803, %v1540
        %v1542 = vpop.f32.mrb[0].mxu0
        %1543 = vmatprep.mubr.f32.mxu0 0.0
        %1544 = vmatmul.mubr.f32.gmra.mrb[0].mxu0 %v978
        %v1545 = vpop.f32.mrb[0].mxu0
        %v1546 = vadd.f32 %v803, %v1545
        %v1547 = vpop.f32.mrb[0].mxu0
        %1548 = vmatprep.mubr.f32.mxu0 0.0
        %1549 = vmatmul.mubr.f32.gmra.mrb[0].mxu0 %v981
        %v1550 = vpop.f32.mrb[0].mxu0
        %v1551 = vadd.f32 %v803, %v1550
        %v1552 = vpop.f32.mrb[0].mxu0
        %1553 = vmatprep.mubr.f32.mxu0 0.0
        %1554 = vmatmul.mubr.f32.gmra.mrb[0].mxu0 %v984
        %v1555 = vpop.f32.mrb[0].mxu0
        %v1556 = vadd.f32 %v803, %v1555
        %v1557 = vpop.f32.mrb[0].mxu0
        %1558 = vmatprep.mubr.f32.mxu0 0.0
        %1559 = vmatmul.mubr.f32.gmra.mrb[0].mxu0 %v987
        %v1560 = vpop.f32.mrb[0].mxu0
        %v1561 = vadd.f32 %v803, %v1560
        %v1562 = vpop.f32.mrb[0].mxu0
        %1563 = vmatprep.mubr.f32.mxu0 0.0
        %1564 = vmatmul.mubr.f32.gmra.mrb[0].mxu0 %v990
        %v1565 = vpop.f32.mrb[0].mxu0
        %v1566 = vadd.f32 %v803, %v1565
        %v1567 = vpop.f32.mrb[0].mxu0
        %1568 = vmatprep.mubr.f32.mxu0 0.0
        %1569 = vmatmul.mubr.f32.gmra.mrb[0].mxu0 %v993
        %v1570 = vpop.f32.mrb[0].mxu0
        %v1571 = vadd.f32 %v803, %v1570
        %v1572 = vpop.f32.mrb[0].mxu0
        %1573 = vmatprep.mubr.f32.mxu0 0.0
        %1574 = vmatmul.mubr.f32.gmra.mrb[0].mxu0 %v996
        %v1575 = vpop.f32.mrb[0].mxu0
        %v1576 = vadd.f32 %v803, %v1575
        %v1577 = vpop.f32.mrb[0].mxu0
        %1578 = vmatprep.mubr.f32.mxu0 0.0
        %1579 = vmatmul.mubr.f32.gmra.mrb[0].mxu0 %v999
        %v1580 = vpop.f32.mrb[0].mxu0
        %v1581 = vadd.f32 %v803, %v1580
        %v1582 = vpop.f32.mrb[0].mxu0
        %1583 = vmatprep.mubr.f32.mxu0 0.0
        %1584 = vmatmul.mubr.f32.gmra.mrb[0].mxu0 %v1002
        %v1585 = vpop.f32.mrb[0].mxu0
        %v1586 = vadd.f32 %v803, %v1585
        %v1587 = vpop.f32.mrb[0].mxu0
        %1588 = vmatprep.mubr.f32.mxu0 0.0
        %1589 = vmatmul.mubr.f32.gmra.mrb[0].mxu0 %v1005
        %v1590 = vpop.f32.mrb[0].mxu0
        %v1591 = vadd.f32 %v803, %v1590
        %v1592 = vpop.f32.mrb[0].mxu0
        %1593 = vmatprep.mubr.f32.mxu0 0.0
        %1594 = vmatmul.mubr.f32.gmra.mrb[0].mxu0 %v1008
        %v1595 = vpop.f32.mrb[0].mxu0
        %v1596 = vadd.f32 %v803, %v1595
        %v1597 = vpop.f32.mrb[0].mxu0
        %1598 = vmatprep.mubr.f32.mxu0 0.0
        %1599 = vmatmul.mubr.f32.gmra.mrb[0].mxu0 %v1011
        %v1600 = vpop.f32.mrb[0].mxu0
        %v1601 = vadd.f32 %v803, %v1600
        %v1602 = vpop.f32.mrb[0].mxu0
        %1603 = vmatprep.mubr.f32.mxu0 0.0
        %1604 = vmatmul.mubr.f32.gmra.mrb[0].mxu0 %v1014
        %v1605 = vpop.f32.mrb[0].mxu0
        %v1606 = vadd.f32 %v803, %v1605
        %v1607 = vpop.f32.mrb[0].mxu0
        %1608 = vmatprep.mubr.f32.mxu0 0.0
        %1609 = vmatmul.mubr.f32.gmra.mrb[0].mxu0 %v1017
        %v1610 = vpop.f32.mrb[0].mxu0
        %v1611 = vadd.f32 %v803, %v1610
        %v1612 = vpop.f32.mrb[0].mxu0
        %1613 = vmatprep.mubr.f32.mxu0 0.0
        %1614 = vmatmul.mubr.f32.gmra.mrb[0].mxu0 %v1020
        %v1615 = vpop.f32.mrb[0].mxu0
        %v1616 = vadd.f32 %v803, %v1615
        %v1617 = vpop.f32.mrb[0].mxu0
        %1618 = vmatprep.mubr.f32.mxu0 0.0
        %1619 = vmatmul.mubr.f32.gmra.mrb[0].mxu0 %v1023
        %v1620 = vpop.f32.mrb[0].mxu0
        %v1621 = vadd.f32 %v803, %v1620
        %v1622 = vpop.f32.mrb[0].mxu0
        %1623 = vmatprep.mubr.f32.mxu0 0.0
        %1624 = vmatmul.mubr.f32.gmra.mrb[0].mxu0 %v1026
        %v1625 = vpop.f32.mrb[0].mxu0
        %v1626 = vadd.f32 %v803, %v1625
        %v1627 = vpop.f32.mrb[0].mxu0
        %1628 = vmatprep.mubr.f32.mxu0 0.0
        %1629 = vmatmul.mubr.f32.gmra.mrb[0].mxu0 %v1029
        %v1630 = vpop.f32.mrb[0].mxu0
        %v1631 = vadd.f32 %v803, %v1630
        %v1632 = vpop.f32.mrb[0].mxu0
        %1633 = vmatprep.mubr.f32.mxu0 0.0
        %1634 = vmatmul.mubr.f32.gmra.mrb[0].mxu0 %v1032
        %v1635 = vpop.f32.mrb[0].mxu0
        %v1636 = vadd.f32 %v803, %v1635
        %v1637 = vpop.f32.mrb[0].mxu0
        %1638 = vmatprep.mubr.f32.mxu0 0.0
        %1639 = vmatmul.mubr.f32.gmra.mrb[0].mxu0 %v1035
        %v1640 = vpop.f32.mrb[0].mxu0
        %v1641 = vadd.f32 %v803, %v1640
        %v1642 = vpop.f32.mrb[0].mxu0
        %1643 = vmatprep.mubr.f32.mxu0 0.0
        %1644 = vmatmul.mubr.f32.gmra.mrb[0].mxu0 %v1038
        %v1645 = vpop.f32.mrb[0].mxu0
        %v1646 = vadd.f32 %v803, %v1645
        %v1647 = vpop.f32.mrb[0].mxu0
        %1648 = vmatprep.mubr.f32.mxu0 0.0
        %1649 = vmatmul.mubr.f32.gmra.mrb[0].mxu0 %v1041
        %v1650 = vpop.f32.mrb[0].mxu0
        %v1651 = vadd.f32 %v803, %v1650
        %v1652 = vpop.f32.mrb[0].mxu0
        %1653 = vmatprep.mubr.f32.mxu0 0.0
        %1654 = vmatmul.mubr.f32.gmra.mrb[0].mxu0 %v1044
        %v1655 = vpop.f32.mrb[0].mxu0
        %v1656 = vadd.f32 %v803, %v1655
        %v1657 = vpop.f32.mrb[0].mxu0
        %1658 = vmatprep.mubr.f32.mxu0 0.0
        %1659 = vmatmul.mubr.f32.gmra.mrb[0].mxu0 %v1047
        %v1660 = vpop.f32.mrb[0].mxu0
        %v1661 = vadd.f32 %v803, %v1660
        %v1662 = vpop.f32.mrb[0].mxu0
        %1663 = vmatprep.mubr.f32.mxu0 0.0
        %1664 = vmatmul.mubr.f32.gmra.mrb[0].mxu0 %v1050
        %v1665 = vpop.f32.mrb[0].mxu0
        %v1666 = vadd.f32 %v803, %v1665
        %v1667 = vpop.f32.mrb[0].mxu0
        %1668 = vmatprep.mubr.f32.mxu0 0.0
        %1669 = vmatmul.mubr.f32.gmra.mrb[0].mxu0 %v1053
        %v1670 = vpop.f32.mrb[0].mxu0
        %v1671 = vadd.f32 %v803, %v1670
        %v1672 = vpop.f32.mrb[0].mxu0
        %1673 = vmatprep.mubr.f32.mxu0 0.0
        %1674 = vmatmul.mubr.f32.gmra.mrb[0].mxu0 %v1056
        %v1675 = vpop.f32.mrb[0].mxu0
        %v1676 = vadd.f32 %v803, %v1675
        %v1677 = vpop.f32.mrb[0].mxu0
        %1678 = vmatprep.mubr.f32.mxu0 0.0
        %1679 = vmatmul.mubr.f32.gmra.mrb[0].mxu0 %v1059
        %v1680 = vpop.f32.mrb[0].mxu0
        %v1681 = vadd.f32 %v803, %v1680
        %v1682 = vpop.f32.mrb[0].mxu0
        %1683 = vmatprep.mubr.f32.mxu0 0.0
        %1684 = vmatmul.mubr.f32.gmra.mrb[0].mxu0 %v1062
        %v1685 = vpop.f32.mrb[0].mxu0
        %v1686 = vadd.f32 %v803, %v1685
        %v1687 = vpop.f32.mrb[0].mxu0
        %1688 = vmatprep.mubr.f32.mxu0 0.0
        %1689 = vmatmul.mubr.f32.gmra.mrb[0].mxu0 %v1065
        %v1690 = vpop.f32.mrb[0].mxu0
        %v1691 = vadd.f32 %v803, %v1690
        %v1692 = vpop.f32.mrb[0].mxu0
        %1693 = vmatprep.mubr.f32.mxu0 0.0
        %1694 = vmatmul.mubr.f32.gmra.mrb[0].mxu0 %v1068
        %v1695 = vpop.f32.mrb[0].mxu0
        %v1696 = vadd.f32 %v803, %v1695
        %v1697 = vpop.f32.mrb[0].mxu0
        %1698 = vmatprep.mubr.f32.mxu0 0.0
        %1699 = vmatmul.mubr.f32.gmra.mrb[0].mxu0 %v1071
        %v1700 = vpop.f32.mrb[0].mxu0
        %v1701 = vadd.f32 %v803, %v1700
        %v1702 = vpop.f32.mrb[0].mxu0
        %1703 = vmatprep.mubr.f32.mxu0 0.0
        %1704 = vmatmul.mubr.f32.gmra.mrb[0].mxu0 %v1074
        %v1705 = vpop.f32.mrb[0].mxu0
        %v1706 = vadd.f32 %v803, %v1705
        %v1707 = vpop.f32.mrb[0].mxu0
        %1708 = vmatprep.mubr.f32.mxu0 0.0
        %1709 = vmatmul.mubr.f32.gmra.mrb[0].mxu0 %v1077
        %v1710 = vpop.f32.mrb[0].mxu0
        %v1711 = vadd.f32 %v803, %v1710
        %v1712 = vpop.f32.mrb[0].mxu0
        %1713 = vmatprep.mubr.f32.mxu0 0.0
        %1714 = vmatmul.mubr.f32.gmra.mrb[0].mxu0 %v1080
        %v1715 = vpop.f32.mrb[0].mxu0
        %v1716 = vadd.f32 %v803, %v1715
        %v1717 = vpop.f32.mrb[0].mxu0
        %1718 = vmatprep.mubr.f32.mxu0 0.0
        %1719 = vmatmul.mubr.f32.gmra.mrb[0].mxu0 %v1083
        %v1720 = vpop.f32.mrb[0].mxu0
        %v1721 = vadd.f32 %v803, %v1720
        %v1722 = vpop.f32.mrb[0].mxu0
        %1723 = vmatprep.mubr.f32.mxu0 0.0
        %1724 = vmatmul.mubr.f32.gmra.mrb[0].mxu0 %v1086
        %v1725 = vpop.f32.mrb[0].mxu0
        %v1726 = vadd.f32 %v803, %v1725
        %v1727 = vpop.f32.mrb[0].mxu0
        %1728 = vmatprep.mubr.f32.mxu0 0.0
        %1729 = vmatmul.mubr.f32.gmra.mrb[0].mxu0 %v1089
        %v1730 = vpop.f32.mrb[0].mxu0
        %v1731 = vadd.f32 %v803, %v1730
        %v1732 = vpop.f32.mrb[0].mxu0
        %1733 = vmatprep.mubr.f32.mxu0 0.0
        %1734 = vmatmul.mubr.f32.gmra.mrb[0].mxu0 %v1092
        %v1735 = vpop.f32.mrb[0].mxu0
        %v1736 = vadd.f32 %v803, %v1735
        %v1737 = vpop.f32.mrb[0].mxu0
        %1738 = vmatprep.mubr.f32.mxu0 0.0
        %1739 = vmatmul.mubr.f32.gmra.mrb[0].mxu0 %v1095
        %v1740 = vpop.f32.mrb[0].mxu0
        %v1741 = vadd.f32 %v803, %v1740
        %v1742 = vpop.f32.mrb[0].mxu0
        %1743 = vmatprep.mubr.f32.mxu0 0.0
        %1744 = vmatmul.mubr.f32.gmra.mrb[0].mxu0 %v1098
        %v1745 = vpop.f32.mrb[0].mxu0
        %v1746 = vadd.f32 %v803, %v1745
        %v1747 = vpop.f32.mrb[0].mxu0
        %1748 = vmatprep.mubr.f32.mxu0 0.0
        %1749 = vmatmul.mubr.f32.gmra.mrb[0].mxu0 %v1101
        %v1750 = vpop.f32.mrb[0].mxu0
        %v1751 = vadd.f32 %v803, %v1750
        %v1752 = vpop.f32.mrb[0].mxu0
        %1753 = vmatprep.mubr.f32.mxu0 0.0
        %1754 = vmatmul.mubr.f32.gmra.mrb[0].mxu0 %v1104
        %v1755 = vpop.f32.mrb[0].mxu0
        %v1756 = vadd.f32 %v803, %v1755
        %v1757 = vpop.f32.mrb[0].mxu0
        %1758 = vmatprep.mubr.f32.mxu0 0.0
        %1759 = vmatmul.mubr.f32.gmra.mrb[0].mxu0 %v1107
        %v1760 = vpop.f32.mrb[0].mxu0
        %v1761 = vadd.f32 %v803, %v1760
        %v1762 = vpop.f32.mrb[0].mxu0
        %1763 = vmatprep.mubr.f32.mxu0 0.0
        %1764 = vmatmul.mubr.f32.gmra.mrb[0].mxu0 %v1110
        %v1765 = vpop.f32.mrb[0].mxu0
        %v1766 = vadd.f32 %v803, %v1765
        %v1767 = vpop.f32.mrb[0].mxu0
        %1768 = vmatprep.mubr.f32.mxu0 0.0
        %1769 = vmatmul.mubr.f32.gmra.mrb[0].mxu0 %v1113
        %v1770 = vpop.f32.mrb[0].mxu0
        %v1771 = vadd.f32 %v803, %v1770
        %v1772 = vpop.f32.mrb[0].mxu0
        %1773 = vmatprep.mubr.f32.mxu0 0.0
        %1774 = vmatmul.mubr.f32.gmra.mrb[0].mxu0 %v1116
        %v1775 = vpop.f32.mrb[0].mxu0
        %v1776 = vadd.f32 %v803, %v1775
        %v1777 = vpop.f32.mrb[0].mxu0
        %1778 = vmatprep.mubr.f32.mxu0 0.0
        %1779 = vmatmul.mubr.f32.gmra.mrb[0].mxu0 %v1119
        %v1780 = vpop.f32.mrb[0].mxu0
        %v1781 = vadd.f32 %v803, %v1780
        %v1782 = vpop.f32.mrb[0].mxu0
        %1783 = vmatprep.mubr.f32.mxu0 0.0
        %1784 = vmatmul.mubr.f32.gmra.mrb[0].mxu0 %v1122
        %v1785 = vpop.f32.mrb[0].mxu0
        %v1786 = vadd.f32 %v803, %v1785
        %v1787 = vpop.f32.mrb[0].mxu0
        %1788 = vmatprep.mubr.f32.mxu0 0.0
        %1789 = vmatmul.mubr.f32.gmra.mrb[0].mxu0 %v1125
        %v1790 = vpop.f32.mrb[0].mxu0
        %v1791 = vadd.f32 %v803, %v1790
        %v1792 = vpop.f32.mrb[0].mxu0
        %1793 = vmatprep.mubr.f32.mxu0 0.0
        %1794 = vmatmul.mubr.f32.gmra.mrb[0].mxu0 %v1128
        %v1795 = vpop.f32.mrb[0].mxu0
        %v1796 = vadd.f32 %v803, %v1795
        %v1797 = vpop.f32.mrb[0].mxu0
        %1798 = vmatprep.mubr.f32.mxu0 0.0
        %1799 = vmatmul.mubr.f32.gmra.mrb[0].mxu0 %v1131
        %v1800 = vpop.f32.mrb[0].mxu0
        %v1801 = vadd.f32 %v803, %v1800
        %v1802 = vpop.f32.mrb[0].mxu0
        %1803 = vmatprep.mubr.f32.mxu0 0.0
        %1804 = vmatmul.mubr.f32.gmra.mrb[0].mxu0 %v1134
        %v1805 = vpop.f32.mrb[0].mxu0
        %v1806 = vadd.f32 %v803, %v1805
        %v1807 = vpop.f32.mrb[0].mxu0
        %1808 = vmatprep.mubr.f32.mxu0 0.0
        %1809 = vmatmul.mubr.f32.gmra.mrb[0].mxu0 %v1137
        %v1810 = vpop.f32.mrb[0].mxu0
        %v1811 = vadd.f32 %v803, %v1810
        %v1812 = vpop.f32.mrb[0].mxu0
        %1813 = vmatprep.mubr.f32.mxu0 0.0
        %1814 = vmatmul.mubr.f32.gmra.mrb[0].mxu0 %v1140
        %v1815 = vpop.f32.mrb[0].mxu0
        %v1816 = vadd.f32 %v803, %v1815
        %v1817 = vpop.f32.mrb[0].mxu0
        %1818 = vmatprep.mubr.f32.mxu0 0.0
        %1819 = vmatmul.mubr.f32.gmra.mrb[0].mxu0 %v1143
        %v1820 = vpop.f32.mrb[0].mxu0
        %v1821 = vadd.f32 %v803, %v1820
        %v1822 = vpop.f32.mrb[0].mxu0
        %1823 = vmatprep.mubr.f32.mxu0 0.0
        %1824 = vmatmul.mubr.f32.gmra.mrb[0].mxu0 %v1146
        %v1825 = vpop.f32.mrb[0].mxu0
        %v1826 = vadd.f32 %v803, %v1825
        %v1827 = vpop.f32.mrb[0].mxu0
        %1828 = vmatprep.mubr.f32.mxu0 0.0
        %1829 = vmatmul.mubr.f32.gmra.mrb[0].mxu0 %v1149
        %v1830 = vpop.f32.mrb[0].mxu0
        %v1831 = vadd.f32 %v803, %v1830
        %v1832 = vpop.f32.mrb[0].mxu0
        %1833 = vmatprep.mubr.f32.mxu0 0.0
        %1834 = vmatmul.mubr.f32.gmra.mrb[0].mxu0 %v1152
        %v1835 = vpop.f32.mrb[0].mxu0
        %v1836 = vadd.f32 %v803, %v1835
        %v1837 = vpop.f32.mrb[0].mxu0
        %1838 = vmatprep.mubr.f32.mxu0 0.0
        %1839 = vmatmul.mubr.f32.gmra.mrb[0].mxu0 %v1155
        %v1840 = vpop.f32.mrb[0].mxu0
        %v1841 = vadd.f32 %v803, %v1840
        %v1842 = vpop.f32.mrb[0].mxu0
        %1843 = vmatprep.mubr.f32.mxu0 0.0
        %1844 = vmatmul.mubr.f32.gmra.mrb[0].mxu0 %v1158
        %v1845 = vpop.f32.mrb[0].mxu0
        %v1846 = vadd.f32 %v803, %v1845
        %v1847 = vpop.f32.mrb[0].mxu0
        %1848 = vmatprep.mubr.f32.mxu0 0.0
        %1849 = vmatmul.mubr.f32.gmra.mrb[0].mxu0 %v1161
        %v1850 = vpop.f32.mrb[0].mxu0
        %v1851 = vadd.f32 %v803, %v1850
        %v1852 = vpop.f32.mrb[0].mxu0
        %1853 = vmatprep.mubr.f32.mxu0 0.0
        %1854 = vmatmul.mubr.f32.gmra.mrb[0].mxu0 %v1164
        %v1855 = vpop.f32.mrb[0].mxu0
        %v1856 = vadd.f32 %v803, %v1855
        %v1857 = vpop.f32.mrb[0].mxu0
        %1858 = vmatprep.mubr.f32.mxu0 0.0
        %1859 = vmatmul.mubr.f32.gmra.mrb[0].mxu0 %v1167
        %v1860 = vpop.f32.mrb[0].mxu0
        %v1861 = vadd.f32 %v803, %v1860
        %v1862 = vpop.f32.mrb[0].mxu0
        %1863 = vmatprep.mubr.f32.mxu0 0.0
        %1864 = vmatmul.mubr.f32.gmra.mrb[0].mxu0 %v1170
        %v1865 = vpop.f32.mrb[0].mxu0
        %v1866 = vadd.f32 %v803, %v1865
        %v1867 = vpop.f32.mrb[0].mxu0
        %1868 = vmatprep.mubr.f32.mxu0 0.0
        %1869 = vmatmul.mubr.f32.gmra.mrb[0].mxu0 %v1173
        %v1870 = vpop.f32.mrb[0].mxu0
        %v1871 = vadd.f32 %v803, %v1870
        %v1872 = vpop.f32.mrb[0].mxu0
        %1873 = vmatprep.mubr.f32.mxu0 0.0
        %1874 = vmatmul.mubr.f32.gmra.mrb[0].mxu0 %v1176
        %v1875 = vpop.f32.mrb[0].mxu0
        %v1876 = vadd.f32 %v803, %v1875
        %v1877 = vpop.f32.mrb[0].mxu0
        %1878 = vmatprep.mubr.f32.mxu0 0.0
        %1879 = vmatmul.mubr.f32.gmra.mrb[0].mxu0 %v1179
        %v1880 = vpop.f32.mrb[0].mxu0
        %v1881 = vadd.f32 %v803, %v1880
        %v1882 = vpop.f32.mrb[0].mxu0
        %1883 = vmatprep.mubr.f32.mxu0 0.0
        %1884 = vmatmul.mubr.f32.gmra.mrb[0].mxu0 %v1182
        %v1885 = vpop.f32.mrb[0].mxu0
        %v1886 = vadd.f32 %v803, %v1885
        %v1887 = vpop.f32.mrb[0].mxu0
        %1888 = vmatprep.mubr.f32.mxu0 0.0
        %1889 = vmatmul.mubr.f32.gmra.mrb[0].mxu0 %v1185
        %v1890 = vpop.f32.mrb[0].mxu0
        %v1891 = vadd.f32 %v803, %v1890
        %v1892 = vpop.f32.mrb[0].mxu0
        %1893 = vmatprep.mubr.f32.mxu0 0.0
        %1894 = vmatmul.mubr.f32.gmra.mrb[0].mxu0 %v1188
        %v1895 = vpop.f32.mrb[0].mxu0
        %v1896 = vadd.f32 %v803, %v1895
        %v1897 = vpop.f32.mrb[0].mxu0
        %1898 = vdwg.mxu0
        %v1899 = vtanh.pop %v1261
        %v1900 = vtanh.pop %v1266
        %v1901 = vtanh.pop %v1271
        %v1902 = vtanh.pop %v1276
        %v1903 = vtanh.pop %v1281
        %v1904 = vtanh.pop %v1286
        %v1905 = vtanh.pop %v1291
        %v1906 = vtanh.pop %v1296
        %v1907 = vtanh.pop %v1301
        %v1908 = vtanh.pop %v1306
        %v1909 = vtanh.pop %v1311
        %v1910 = vtanh.pop %v1316
        %v1911 = vtanh.pop %v1321
        %v1912 = vtanh.pop %v1326
        %v1913 = vtanh.pop %v1331
        %v1914 = vtanh.pop %v1336
        %v1915 = vtanh.pop %v1341
        %v1916 = vtanh.pop %v1346
        %v1917 = vtanh.pop %v1351
        %v1918 = vtanh.pop %v1356
        %v1919 = vtanh.pop %v1361
        %v1920 = vtanh.pop %v1366
        %v1921 = vtanh.pop %v1371
        %v1922 = vtanh.pop %v1376
        %v1923 = vtanh.pop %v1381
        %v1924 = vtanh.pop %v1386
        %v1925 = vtanh.pop %v1391
        %v1926 = vtanh.pop %v1396
        %v1927 = vtanh.pop %v1401
        %v1928 = vtanh.pop %v1406
        %v1929 = vtanh.pop %v1411
        %v1930 = vtanh.pop %v1416
        %v1931 = vtanh.pop %v1421
        %v1932 = vtanh.pop %v1426
        %v1933 = vtanh.pop %v1431
        %v1934 = vtanh.pop %v1436
        %v1935 = vtanh.pop %v1441
        %v1936 = vtanh.pop %v1446
        %v1937 = vtanh.pop %v1451
        %v1938 = vtanh.pop %v1456
        %v1939 = vtanh.pop %v1461
        %v1940 = vtanh.pop %v1466
        %v1941 = vtanh.pop %v1471
        %v1942 = vtanh.pop %v1476
        %v1943 = vtanh.pop %v1481
        %v1944 = vtanh.pop %v1486
        %v1945 = vtanh.pop %v1491
        %v1946 = vtanh.pop %v1496
        %v1947 = vtanh.pop %v1501
        %v1948 = vtanh.pop %v1506
        %v1949 = vtanh.pop %v1511
        %v1950 = vtanh.pop %v1516
        %v1951 = vtanh.pop %v1521
        %v1952 = vtanh.pop %v1526
        %v1953 = vtanh.pop %v1531
        %v1954 = vtanh.pop %v1536
        %v1955 = vtanh.pop %v1541
        %v1956 = vtanh.pop %v1546
        %v1957 = vtanh.pop %v1551
        %v1958 = vtanh.pop %v1556
        %v1959 = vtanh.pop %v1561
        %v1960 = vtanh.pop %v1566
        %v1961 = vtanh.pop %v1571
        %v1962 = vtanh.pop %v1576
        %v1963 = vtanh.pop %v1581
        %v1964 = vtanh.pop %v1586
        %v1965 = vtanh.pop %v1591
        %v1966 = vtanh.pop %v1596
        %v1967 = vtanh.pop %v1601
        %v1968 = vtanh.pop %v1606
        %v1969 = vtanh.pop %v1611
        %v1970 = vtanh.pop %v1616
        %v1971 = vtanh.pop %v1621
        %v1972 = vtanh.pop %v1626
        %v1973 = vtanh.pop %v1631
        %v1974 = vtanh.pop %v1636
        %v1975 = vtanh.pop %v1641
        %v1976 = vtanh.pop %v1646
        %v1977 = vtanh.pop %v1651
        %v1978 = vtanh.pop %v1656
        %v1979 = vtanh.pop %v1661
        %v1980 = vtanh.pop %v1666
        %v1981 = vtanh.pop %v1671
        %v1982 = vtanh.pop %v1676
        %v1983 = vtanh.pop %v1681
        %v1984 = vtanh.pop %v1686
        %v1985 = vtanh.pop %v1691
        %v1986 = vtanh.pop %v1696
        %v1987 = vtanh.pop %v1701
        %v1988 = vtanh.pop %v1706
        %v1989 = vtanh.pop %v1711
        %v1990 = vtanh.pop %v1716
        %v1991 = vtanh.pop %v1721
        %v1992 = vtanh.pop %v1726
        %v1993 = vtanh.pop %v1731
        %v1994 = vtanh.pop %v1736
        %v1995 = vtanh.pop %v1741
        %v1996 = vtanh.pop %v1746
        %v1997 = vtanh.pop %v1751
        %v1998 = vtanh.pop %v1756
        %v1999 = vtanh.pop %v1761
        %v2000 = vtanh.pop %v1766
        %v2001 = vtanh.pop %v1771
        %v2002 = vtanh.pop %v1776
        %v2003 = vtanh.pop %v1781
        %v2004 = vtanh.pop %v1786
        %v2005 = vtanh.pop %v1791
        %v2006 = vtanh.pop %v1796
        %v2007 = vtanh.pop %v1801
        %v2008 = vtanh.pop %v1806
        %v2009 = vtanh.pop %v1811
        %v2010 = vtanh.pop %v1816
        %v2011 = vtanh.pop %v1821
        %v2012 = vtanh.pop %v1826
        %v2013 = vtanh.pop %v1831
        %v2014 = vtanh.pop %v1836
        %v2015 = vtanh.pop %v1841
        %v2016 = vtanh.pop %v1846
        %v2017 = vtanh.pop %v1851
        %v2018 = vtanh.pop %v1856
        %v2019 = vtanh.pop %v1861
        %v2020 = vtanh.pop %v1866
        %v2021 = vtanh.pop %v1871
        %v2022 = vtanh.pop %v1876
        %v2023 = vtanh.pop %v1881
        %v2024 = vtanh.pop %v1886
        %v2025 = vtanh.pop %v1891
        %v2026 = vtanh.pop %v1896
        %v2027 = vld [vmem:[%s6] sm:$0xff]
        %v2028 = vld [vmem:[%s6 + $0x8] sm:$0xff]
        %v2029 = vld [vmem:[%s6 + $0x10] sm:$0xff]
        %v2030 = vld [vmem:[%s6 + $0x18] sm:$0x3f]
        %v2031 = vld [vmem:[%s7] sm:$0x1]
        %v2033 = vlaneseq
        %v2034 = vshrl.u32 %v2033, 7
        %v2035 = vsub.s32 0, %v2034
        %v2036 = vrot.slane %v2031, %v2035
        %vm2038 = vcmask 244736
        %v2040 = vsel %vm2038, %v1899, 0
        %v2043 = vsel %vm2038, %v1900, 0
        %v2046 = vsel %vm2038, %v1901, 0
        %v2049 = vsel %vm2038, %v1902, 0
        %v2052 = vsel %vm2038, %v1903, 0
        %v2055 = vsel %vm2038, %v1904, 0
        %v2058 = vsel %vm2038, %v1905, 0
        %v2061 = vsel %vm2038, %v1906, 0
        %v2064 = vsel %vm2038, %v1907, 0
        %v2067 = vsel %vm2038, %v1908, 0
        %v2070 = vsel %vm2038, %v1909, 0
        %v2073 = vsel %vm2038, %v1910, 0
        %v2076 = vsel %vm2038, %v1911, 0
        %v2079 = vsel %vm2038, %v1912, 0
        %v2082 = vsel %vm2038, %v1913, 0
        %v2085 = vsel %vm2038, %v1914, 0
        %v2088 = vsel %vm2038, %v1915, 0
        %v2091 = vsel %vm2038, %v1916, 0
        %v2094 = vsel %vm2038, %v1917, 0
        %v2097 = vsel %vm2038, %v1918, 0
        %v2100 = vsel %vm2038, %v1919, 0
        %v2103 = vsel %vm2038, %v1920, 0
        %v2106 = vsel %vm2038, %v1921, 0
        %v2109 = vsel %vm2038, %v1922, 0
        %v2112 = vsel %vm2038, %v1923, 0
        %v2115 = vsel %vm2038, %v1924, 0
        %v2118 = vsel %vm2038, %v1925, 0
        %v2121 = vsel %vm2038, %v1926, 0
        %v2124 = vsel %vm2038, %v1927, 0
        %v2127 = vsel %vm2038, %v1928, 0
        %v2130 = vsel %vm2038, %v1929, 0
        %v2133 = vsel %vm2038, %v1930, 0
        %v2136 = vsel %vm2038, %v1931, 0
        %v2139 = vsel %vm2038, %v1932, 0
        %v2142 = vsel %vm2038, %v1933, 0
        %v2145 = vsel %vm2038, %v1934, 0
        %v2148 = vsel %vm2038, %v1935, 0
        %v2151 = vsel %vm2038, %v1936, 0
        %v2154 = vsel %vm2038, %v1937, 0
        %v2157 = vsel %vm2038, %v1938, 0
        %v2160 = vsel %vm2038, %v1939, 0
        %v2163 = vsel %vm2038, %v1940, 0
        %v2166 = vsel %vm2038, %v1941, 0
        %v2169 = vsel %vm2038, %v1942, 0
        %v2172 = vsel %vm2038, %v1943, 0
        %v2175 = vsel %vm2038, %v1944, 0
        %v2178 = vsel %vm2038, %v1945, 0
        %v2181 = vsel %vm2038, %v1946, 0
        %v2184 = vsel %vm2038, %v1947, 0
        %v2187 = vsel %vm2038, %v1948, 0
        %v2190 = vsel %vm2038, %v1949, 0
        %v2193 = vsel %vm2038, %v1950, 0
        %v2196 = vsel %vm2038, %v1951, 0
        %v2199 = vsel %vm2038, %v1952, 0
        %v2202 = vsel %vm2038, %v1953, 0
        %v2205 = vsel %vm2038, %v1954, 0
        %v2208 = vsel %vm2038, %v1955, 0
        %v2211 = vsel %vm2038, %v1956, 0
        %v2214 = vsel %vm2038, %v1957, 0
        %v2217 = vsel %vm2038, %v1958, 0
        %v2220 = vsel %vm2038, %v1959, 0
        %v2223 = vsel %vm2038, %v1960, 0
        %v2226 = vsel %vm2038, %v1961, 0
        %v2229 = vsel %vm2038, %v1962, 0
        %v2232 = vsel %vm2038, %v1963, 0
        %v2235 = vsel %vm2038, %v1964, 0
        %v2238 = vsel %vm2038, %v1965, 0
        %v2241 = vsel %vm2038, %v1966, 0
        %v2244 = vsel %vm2038, %v1967, 0
        %v2247 = vsel %vm2038, %v1968, 0
        %v2250 = vsel %vm2038, %v1969, 0
        %v2253 = vsel %vm2038, %v1970, 0
        %v2256 = vsel %vm2038, %v1971, 0
        %v2259 = vsel %vm2038, %v1972, 0
        %v2262 = vsel %vm2038, %v1973, 0
        %v2265 = vsel %vm2038, %v1974, 0
        %v2268 = vsel %vm2038, %v1975, 0
        %v2271 = vsel %vm2038, %v1976, 0
        %v2274 = vsel %vm2038, %v1977, 0
        %v2277 = vsel %vm2038, %v1978, 0
        %v2280 = vsel %vm2038, %v1979, 0
        %v2283 = vsel %vm2038, %v1980, 0
        %v2286 = vsel %vm2038, %v1981, 0
        %v2289 = vsel %vm2038, %v1982, 0
        %v2292 = vsel %vm2038, %v1983, 0
        %v2295 = vsel %vm2038, %v1984, 0
        %v2298 = vsel %vm2038, %v1985, 0
        %v2301 = vsel %vm2038, %v1986, 0
        %v2304 = vsel %vm2038, %v1987, 0
        %v2307 = vsel %vm2038, %v1988, 0
        %v2310 = vsel %vm2038, %v1989, 0
        %v2313 = vsel %vm2038, %v1990, 0
        %v2316 = vsel %vm2038, %v1991, 0
        %v2319 = vsel %vm2038, %v1992, 0
        %v2322 = vsel %vm2038, %v1993, 0
        %v2325 = vsel %vm2038, %v1994, 0
        %v2328 = vsel %vm2038, %v1995, 0
        %v2331 = vsel %vm2038, %v1996, 0
        %v2334 = vsel %vm2038, %v1997, 0
        %v2337 = vsel %vm2038, %v1998, 0
        %v2340 = vsel %vm2038, %v1999, 0
        %v2343 = vsel %vm2038, %v2000, 0
        %v2346 = vsel %vm2038, %v2001, 0
        %v2349 = vsel %vm2038, %v2002, 0
        %v2352 = vsel %vm2038, %v2003, 0
        %v2355 = vsel %vm2038, %v2004, 0
        %v2358 = vsel %vm2038, %v2005, 0
        %v2361 = vsel %vm2038, %v2006, 0
        %v2364 = vsel %vm2038, %v2007, 0
        %v2367 = vsel %vm2038, %v2008, 0
        %v2370 = vsel %vm2038, %v2009, 0
        %v2373 = vsel %vm2038, %v2010, 0
        %v2376 = vsel %vm2038, %v2011, 0
        %v2379 = vsel %vm2038, %v2012, 0
        %v2382 = vsel %vm2038, %v2013, 0
        %v2385 = vsel %vm2038, %v2014, 0
        %v2388 = vsel %vm2038, %v2015, 0
        %v2391 = vsel %vm2038, %v2016, 0
        %v2394 = vsel %vm2038, %v2017, 0
        %v2397 = vsel %vm2038, %v2018, 0
        %v2400 = vsel %vm2038, %v2019, 0
        %v2403 = vsel %vm2038, %v2020, 0
        %v2406 = vsel %vm2038, %v2021, 0
        %v2409 = vsel %vm2038, %v2022, 0
        %v2412 = vsel %vm2038, %v2023, 0
        %v2415 = vsel %vm2038, %v2024, 0
        %v2418 = vsel %vm2038, %v2025, 0
        %v2421 = vsel %vm2038, %v2026, 0
        %vm2423 = vcmask 1045504
        %v2425 = vsel %vm2423, %v2030, 0
        %2427 = vmatprep.subr.mxu0 0.0
        %2428 = vmatpush1.msra.mxu0 %v2027
        %2429 = vmatprep.subr.mxu0 0.0
        %2430 = vmatpush1.msra.mxu0 %v2028
        %2431 = vmatprep.subr.mxu0 0.0
        %2432 = vmatpush1.msra.mxu0 %v2029
        %2433 = vmatprep.subr.mxu0 0.0
        %2434 = vmatpush1.msra.mxu0 %v2425
        %2435 = vmatprep.subr.mxu0 0.0
        %2436 = vmatpush1.msra.mxu0 0.0
        %2437 = vmatprep.subr.mxu0 0.0
        %2438 = vmatpush1.msra.mxu0 0.0
        %2439 = vmatprep.subr.mxu0 0.0
        %2440 = vmatpush1.msra.mxu0 0.0
        %2441 = vmatprep.subr.mxu0 0.0
        %2442 = vmatpush1.msra.mxu0 0.0
        %2443 = vmatprep.subr.mxu0 0.0
        %2444 = vmatpush1.msra.mxu0 0.0
        %2445 = vmatprep.subr.mxu0 0.0
        %2446 = vmatpush1.msra.mxu0 0.0
        %2447 = vmatprep.subr.mxu0 0.0
        %2448 = vmatpush1.msra.mxu0 0.0
        %2449 = vmatprep.subr.mxu0 0.0
        %2450 = vmatpush1.msra.mxu0 0.0
        %2451 = vmatprep.subr.mxu0 0.0
        %2452 = vmatpush1.msra.mxu0 0.0
        %2453 = vmatprep.subr.mxu0 0.0
        %2454 = vmatpush1.msra.mxu0 0.0
        %2455 = vmatprep.subr.mxu0 0.0
        %2456 = vmatpush1.msra.mxu0 0.0
        %2457 = vmatprep.subr.mxu0 0.0
        %2458 = vmatpush1.msra.mxu0 0.0
        %2459 = vmatprep.subr.mxu0 0.0
        %2460 = vmatpush1.msra.mxu0 0.0
        %2461 = vmatprep.subr.mxu0 0.0
        %2462 = vmatpush1.msra.mxu0 0.0
        %2463 = vmatprep.subr.mxu0 0.0
        %2464 = vmatpush1.msra.mxu0 0.0
        %2465 = vmatprep.subr.mxu0 0.0
        %2466 = vmatpush1.msra.mxu0 0.0
        %2467 = vmatprep.subr.mxu0 0.0
        %2468 = vmatpush1.msra.mxu0 0.0
        %2469 = vmatprep.subr.mxu0 0.0
        %2470 = vmatpush1.msra.mxu0 0.0
        %2471 = vmatprep.subr.mxu0 0.0
        %2472 = vmatpush1.msra.mxu0 0.0
        %2473 = vmatprep.subr.mxu0 0.0
        %2474 = vmatpush1.msra.mxu0 0.0
        %2475 = vmatprep.subr.mxu0 0.0
        %2476 = vmatpush1.msra.mxu0 0.0
        %2477 = vmatprep.subr.mxu0 0.0
        %2478 = vmatpush1.msra.mxu0 0.0
        %2479 = vmatprep.subr.mxu0 0.0
        %2480 = vmatpush1.msra.mxu0 0.0
        %2481 = vmatprep.subr.mxu0 0.0
        %2482 = vmatpush1.msra.mxu0 0.0
        %2483 = vmatprep.subr.mxu0 0.0
        %2484 = vmatpush1.msra.mxu0 0.0
        %2485 = vmatprep.subr.mxu0 0.0
        %2486 = vmatpush1.msra.mxu0 0.0
        %2487 = vmatprep.subr.mxu0 0.0
        %2488 = vmatpush1.msra.mxu0 0.0
        %2489 = vmatprep.subr.mxu0 0.0
        %2490 = vmatpush1.msra.mxu0 0.0
        %2491 = vmatprep.mubr.f32.mxu0 0.0
        %2492 = vmatmul.mubr.f32.gmra.mrb[0].mxu0 %v2040
        %v2493 = vpop.f32.mrb[0].mxu0
        %v2494 = vadd.f32 %v2036, %v2493
        %v2495 = vpop.f32.mrb[0].mxu0
        %2496 = vmatprep.mubr.f32.mxu0 0.0
        %2497 = vmatmul.mubr.f32.gmra.mrb[0].mxu0 %v2043
        %v2498 = vpop.f32.mrb[0].mxu0
        %v2499 = vadd.f32 %v2036, %v2498
        %v2500 = vpop.f32.mrb[0].mxu0
        %2501 = vmatprep.mubr.f32.mxu0 0.0
        %2502 = vmatmul.mubr.f32.gmra.mrb[0].mxu0 %v2046
        %v2503 = vpop.f32.mrb[0].mxu0
        %v2504 = vadd.f32 %v2036, %v2503
        %v2505 = vpop.f32.mrb[0].mxu0
        %2506 = vmatprep.mubr.f32.mxu0 0.0
        %2507 = vmatmul.mubr.f32.gmra.mrb[0].mxu0 %v2049
        %v2508 = vpop.f32.mrb[0].mxu0
        %v2509 = vadd.f32 %v2036, %v2508
        %v2510 = vpop.f32.mrb[0].mxu0
        %2511 = vmatprep.mubr.f32.mxu0 0.0
        %2512 = vmatmul.mubr.f32.gmra.mrb[0].mxu0 %v2052
        %v2513 = vpop.f32.mrb[0].mxu0
        %v2514 = vadd.f32 %v2036, %v2513
        %v2515 = vpop.f32.mrb[0].mxu0
        %2516 = vmatprep.mubr.f32.mxu0 0.0
        %2517 = vmatmul.mubr.f32.gmra.mrb[0].mxu0 %v2055
        %v2518 = vpop.f32.mrb[0].mxu0
        %v2519 = vadd.f32 %v2036, %v2518
        %v2520 = vpop.f32.mrb[0].mxu0
        %2521 = vmatprep.mubr.f32.mxu0 0.0
        %2522 = vmatmul.mubr.f32.gmra.mrb[0].mxu0 %v2058
        %v2523 = vpop.f32.mrb[0].mxu0
        %v2524 = vadd.f32 %v2036, %v2523
        %v2525 = vpop.f32.mrb[0].mxu0
        %2526 = vmatprep.mubr.f32.mxu0 0.0
        %2527 = vmatmul.mubr.f32.gmra.mrb[0].mxu0 %v2061
        %v2528 = vpop.f32.mrb[0].mxu0
        %v2529 = vadd.f32 %v2036, %v2528
        %v2530 = vpop.f32.mrb[0].mxu0
        %2531 = vmatprep.mubr.f32.mxu0 0.0
        %2532 = vmatmul.mubr.f32.gmra.mrb[0].mxu0 %v2064
        %v2533 = vpop.f32.mrb[0].mxu0
        %v2534 = vadd.f32 %v2036, %v2533
        %v2535 = vpop.f32.mrb[0].mxu0
        %2536 = vmatprep.mubr.f32.mxu0 0.0
        %2537 = vmatmul.mubr.f32.gmra.mrb[0].mxu0 %v2067
        %v2538 = vpop.f32.mrb[0].mxu0
        %v2539 = vadd.f32 %v2036, %v2538
        %v2540 = vpop.f32.mrb[0].mxu0
        %2541 = vmatprep.mubr.f32.mxu0 0.0
        %2542 = vmatmul.mubr.f32.gmra.mrb[0].mxu0 %v2070
        %v2543 = vpop.f32.mrb[0].mxu0
        %v2544 = vadd.f32 %v2036, %v2543
        %v2545 = vpop.f32.mrb[0].mxu0
        %2546 = vmatprep.mubr.f32.mxu0 0.0
        %2547 = vmatmul.mubr.f32.gmra.mrb[0].mxu0 %v2073
        %v2548 = vpop.f32.mrb[0].mxu0
        %v2549 = vadd.f32 %v2036, %v2548
        %v2550 = vpop.f32.mrb[0].mxu0
        %2551 = vmatprep.mubr.f32.mxu0 0.0
        %2552 = vmatmul.mubr.f32.gmra.mrb[0].mxu0 %v2076
        %v2553 = vpop.f32.mrb[0].mxu0
        %v2554 = vadd.f32 %v2036, %v2553
        %v2555 = vpop.f32.mrb[0].mxu0
        %2556 = vmatprep.mubr.f32.mxu0 0.0
        %2557 = vmatmul.mubr.f32.gmra.mrb[0].mxu0 %v2079
        %v2558 = vpop.f32.mrb[0].mxu0
        %v2559 = vadd.f32 %v2036, %v2558
        %v2560 = vpop.f32.mrb[0].mxu0
        %2561 = vmatprep.mubr.f32.mxu0 0.0
        %2562 = vmatmul.mubr.f32.gmra.mrb[0].mxu0 %v2082
        %v2563 = vpop.f32.mrb[0].mxu0
        %v2564 = vadd.f32 %v2036, %v2563
        %v2565 = vpop.f32.mrb[0].mxu0
        %2566 = vmatprep.mubr.f32.mxu0 0.0
        %2567 = vmatmul.mubr.f32.gmra.mrb[0].mxu0 %v2085
        %v2568 = vpop.f32.mrb[0].mxu0
        %v2569 = vadd.f32 %v2036, %v2568
        %v2570 = vpop.f32.mrb[0].mxu0
        %2571 = vmatprep.mubr.f32.mxu0 0.0
        %2572 = vmatmul.mubr.f32.gmra.mrb[0].mxu0 %v2088
        %v2573 = vpop.f32.mrb[0].mxu0
        %v2574 = vadd.f32 %v2036, %v2573
        %v2575 = vpop.f32.mrb[0].mxu0
        %2576 = vmatprep.mubr.f32.mxu0 0.0
        %2577 = vmatmul.mubr.f32.gmra.mrb[0].mxu0 %v2091
        %v2578 = vpop.f32.mrb[0].mxu0
        %v2579 = vadd.f32 %v2036, %v2578
        %v2580 = vpop.f32.mrb[0].mxu0
        %2581 = vmatprep.mubr.f32.mxu0 0.0
        %2582 = vmatmul.mubr.f32.gmra.mrb[0].mxu0 %v2094
        %v2583 = vpop.f32.mrb[0].mxu0
        %v2584 = vadd.f32 %v2036, %v2583
        %v2585 = vpop.f32.mrb[0].mxu0
        %2586 = vmatprep.mubr.f32.mxu0 0.0
        %2587 = vmatmul.mubr.f32.gmra.mrb[0].mxu0 %v2097
        %v2588 = vpop.f32.mrb[0].mxu0
        %v2589 = vadd.f32 %v2036, %v2588
        %v2590 = vpop.f32.mrb[0].mxu0
        %2591 = vmatprep.mubr.f32.mxu0 0.0
        %2592 = vmatmul.mubr.f32.gmra.mrb[0].mxu0 %v2100
        %v2593 = vpop.f32.mrb[0].mxu0
        %v2594 = vadd.f32 %v2036, %v2593
        %v2595 = vpop.f32.mrb[0].mxu0
        %2596 = vmatprep.mubr.f32.mxu0 0.0
        %2597 = vmatmul.mubr.f32.gmra.mrb[0].mxu0 %v2103
        %v2598 = vpop.f32.mrb[0].mxu0
        %v2599 = vadd.f32 %v2036, %v2598
        %v2600 = vpop.f32.mrb[0].mxu0
        %2601 = vmatprep.mubr.f32.mxu0 0.0
        %2602 = vmatmul.mubr.f32.gmra.mrb[0].mxu0 %v2106
        %v2603 = vpop.f32.mrb[0].mxu0
        %v2604 = vadd.f32 %v2036, %v2603
        %v2605 = vpop.f32.mrb[0].mxu0
        %2606 = vmatprep.mubr.f32.mxu0 0.0
        %2607 = vmatmul.mubr.f32.gmra.mrb[0].mxu0 %v2109
        %v2608 = vpop.f32.mrb[0].mxu0
        %v2609 = vadd.f32 %v2036, %v2608
        %v2610 = vpop.f32.mrb[0].mxu0
        %2611 = vmatprep.mubr.f32.mxu0 0.0
        %2612 = vmatmul.mubr.f32.gmra.mrb[0].mxu0 %v2112
        %v2613 = vpop.f32.mrb[0].mxu0
        %v2614 = vadd.f32 %v2036, %v2613
        %v2615 = vpop.f32.mrb[0].mxu0
        %2616 = vmatprep.mubr.f32.mxu0 0.0
        %2617 = vmatmul.mubr.f32.gmra.mrb[0].mxu0 %v2115
        %v2618 = vpop.f32.mrb[0].mxu0
        %v2619 = vadd.f32 %v2036, %v2618
        %v2620 = vpop.f32.mrb[0].mxu0
        %2621 = vmatprep.mubr.f32.mxu0 0.0
        %2622 = vmatmul.mubr.f32.gmra.mrb[0].mxu0 %v2118
        %v2623 = vpop.f32.mrb[0].mxu0
        %v2624 = vadd.f32 %v2036, %v2623
        %v2625 = vpop.f32.mrb[0].mxu0
        %2626 = vmatprep.mubr.f32.mxu0 0.0
        %2627 = vmatmul.mubr.f32.gmra.mrb[0].mxu0 %v2121
        %v2628 = vpop.f32.mrb[0].mxu0
        %v2629 = vadd.f32 %v2036, %v2628
        %v2630 = vpop.f32.mrb[0].mxu0
        %2631 = vmatprep.mubr.f32.mxu0 0.0
        %2632 = vmatmul.mubr.f32.gmra.mrb[0].mxu0 %v2124
        %v2633 = vpop.f32.mrb[0].mxu0
        %v2634 = vadd.f32 %v2036, %v2633
        %v2635 = vpop.f32.mrb[0].mxu0
        %2636 = vmatprep.mubr.f32.mxu0 0.0
        %2637 = vmatmul.mubr.f32.gmra.mrb[0].mxu0 %v2127
        %v2638 = vpop.f32.mrb[0].mxu0
        %v2639 = vadd.f32 %v2036, %v2638
        %v2640 = vpop.f32.mrb[0].mxu0
        %2641 = vmatprep.mubr.f32.mxu0 0.0
        %2642 = vmatmul.mubr.f32.gmra.mrb[0].mxu0 %v2130
        %v2643 = vpop.f32.mrb[0].mxu0
        %v2644 = vadd.f32 %v2036, %v2643
        %v2645 = vpop.f32.mrb[0].mxu0
        %2646 = vmatprep.mubr.f32.mxu0 0.0
        %2647 = vmatmul.mubr.f32.gmra.mrb[0].mxu0 %v2133
        %v2648 = vpop.f32.mrb[0].mxu0
        %v2649 = vadd.f32 %v2036, %v2648
        %v2650 = vpop.f32.mrb[0].mxu0
        %2651 = vmatprep.mubr.f32.mxu0 0.0
        %2652 = vmatmul.mubr.f32.gmra.mrb[0].mxu0 %v2136
        %v2653 = vpop.f32.mrb[0].mxu0
        %v2654 = vadd.f32 %v2036, %v2653
        %v2655 = vpop.f32.mrb[0].mxu0
        %2656 = vmatprep.mubr.f32.mxu0 0.0
        %2657 = vmatmul.mubr.f32.gmra.mrb[0].mxu0 %v2139
        %v2658 = vpop.f32.mrb[0].mxu0
        %v2659 = vadd.f32 %v2036, %v2658
        %v2660 = vpop.f32.mrb[0].mxu0
        %2661 = vmatprep.mubr.f32.mxu0 0.0
        %2662 = vmatmul.mubr.f32.gmra.mrb[0].mxu0 %v2142
        %v2663 = vpop.f32.mrb[0].mxu0
        %v2664 = vadd.f32 %v2036, %v2663
        %v2665 = vpop.f32.mrb[0].mxu0
        %2666 = vmatprep.mubr.f32.mxu0 0.0
        %2667 = vmatmul.mubr.f32.gmra.mrb[0].mxu0 %v2145
        %v2668 = vpop.f32.mrb[0].mxu0
        %v2669 = vadd.f32 %v2036, %v2668
        %v2670 = vpop.f32.mrb[0].mxu0
        %2671 = vmatprep.mubr.f32.mxu0 0.0
        %2672 = vmatmul.mubr.f32.gmra.mrb[0].mxu0 %v2148
        %v2673 = vpop.f32.mrb[0].mxu0
        %v2674 = vadd.f32 %v2036, %v2673
        %v2675 = vpop.f32.mrb[0].mxu0
        %2676 = vmatprep.mubr.f32.mxu0 0.0
        %2677 = vmatmul.mubr.f32.gmra.mrb[0].mxu0 %v2151
        %v2678 = vpop.f32.mrb[0].mxu0
        %v2679 = vadd.f32 %v2036, %v2678
        %v2680 = vpop.f32.mrb[0].mxu0
        %2681 = vmatprep.mubr.f32.mxu0 0.0
        %2682 = vmatmul.mubr.f32.gmra.mrb[0].mxu0 %v2154
        %v2683 = vpop.f32.mrb[0].mxu0
        %v2684 = vadd.f32 %v2036, %v2683
        %v2685 = vpop.f32.mrb[0].mxu0
        %2686 = vmatprep.mubr.f32.mxu0 0.0
        %2687 = vmatmul.mubr.f32.gmra.mrb[0].mxu0 %v2157
        %v2688 = vpop.f32.mrb[0].mxu0
        %v2689 = vadd.f32 %v2036, %v2688
        %v2690 = vpop.f32.mrb[0].mxu0
        %2691 = vmatprep.mubr.f32.mxu0 0.0
        %2692 = vmatmul.mubr.f32.gmra.mrb[0].mxu0 %v2160
        %v2693 = vpop.f32.mrb[0].mxu0
        %v2694 = vadd.f32 %v2036, %v2693
        %v2695 = vpop.f32.mrb[0].mxu0
        %2696 = vmatprep.mubr.f32.mxu0 0.0
        %2697 = vmatmul.mubr.f32.gmra.mrb[0].mxu0 %v2163
        %v2698 = vpop.f32.mrb[0].mxu0
        %v2699 = vadd.f32 %v2036, %v2698
        %v2700 = vpop.f32.mrb[0].mxu0
        %2701 = vmatprep.mubr.f32.mxu0 0.0
        %2702 = vmatmul.mubr.f32.gmra.mrb[0].mxu0 %v2166
        %v2703 = vpop.f32.mrb[0].mxu0
        %v2704 = vadd.f32 %v2036, %v2703
        %v2705 = vpop.f32.mrb[0].mxu0
        %2706 = vmatprep.mubr.f32.mxu0 0.0
        %2707 = vmatmul.mubr.f32.gmra.mrb[0].mxu0 %v2169
        %v2708 = vpop.f32.mrb[0].mxu0
        %v2709 = vadd.f32 %v2036, %v2708
        %v2710 = vpop.f32.mrb[0].mxu0
        %2711 = vmatprep.mubr.f32.mxu0 0.0
        %2712 = vmatmul.mubr.f32.gmra.mrb[0].mxu0 %v2172
        %v2713 = vpop.f32.mrb[0].mxu0
        %v2714 = vadd.f32 %v2036, %v2713
        %v2715 = vpop.f32.mrb[0].mxu0
        %2716 = vmatprep.mubr.f32.mxu0 0.0
        %2717 = vmatmul.mubr.f32.gmra.mrb[0].mxu0 %v2175
        %v2718 = vpop.f32.mrb[0].mxu0
        %v2719 = vadd.f32 %v2036, %v2718
        %v2720 = vpop.f32.mrb[0].mxu0
        %2721 = vmatprep.mubr.f32.mxu0 0.0
        %2722 = vmatmul.mubr.f32.gmra.mrb[0].mxu0 %v2178
        %v2723 = vpop.f32.mrb[0].mxu0
        %v2724 = vadd.f32 %v2036, %v2723
        %v2725 = vpop.f32.mrb[0].mxu0
        %2726 = vmatprep.mubr.f32.mxu0 0.0
        %2727 = vmatmul.mubr.f32.gmra.mrb[0].mxu0 %v2181
        %v2728 = vpop.f32.mrb[0].mxu0
        %v2729 = vadd.f32 %v2036, %v2728
        %v2730 = vpop.f32.mrb[0].mxu0
        %2731 = vmatprep.mubr.f32.mxu0 0.0
        %2732 = vmatmul.mubr.f32.gmra.mrb[0].mxu0 %v2184
        %v2733 = vpop.f32.mrb[0].mxu0
        %v2734 = vadd.f32 %v2036, %v2733
        %v2735 = vpop.f32.mrb[0].mxu0
        %2736 = vmatprep.mubr.f32.mxu0 0.0
        %2737 = vmatmul.mubr.f32.gmra.mrb[0].mxu0 %v2187
        %v2738 = vpop.f32.mrb[0].mxu0
        %v2739 = vadd.f32 %v2036, %v2738
        %v2740 = vpop.f32.mrb[0].mxu0
        %2741 = vmatprep.mubr.f32.mxu0 0.0
        %2742 = vmatmul.mubr.f32.gmra.mrb[0].mxu0 %v2190
        %v2743 = vpop.f32.mrb[0].mxu0
        %v2744 = vadd.f32 %v2036, %v2743
        %v2745 = vpop.f32.mrb[0].mxu0
        %2746 = vmatprep.mubr.f32.mxu0 0.0
        %2747 = vmatmul.mubr.f32.gmra.mrb[0].mxu0 %v2193
        %v2748 = vpop.f32.mrb[0].mxu0
        %v2749 = vadd.f32 %v2036, %v2748
        %v2750 = vpop.f32.mrb[0].mxu0
        %2751 = vmatprep.mubr.f32.mxu0 0.0
        %2752 = vmatmul.mubr.f32.gmra.mrb[0].mxu0 %v2196
        %v2753 = vpop.f32.mrb[0].mxu0
        %v2754 = vadd.f32 %v2036, %v2753
        %v2755 = vpop.f32.mrb[0].mxu0
        %2756 = vmatprep.mubr.f32.mxu0 0.0
        %2757 = vmatmul.mubr.f32.gmra.mrb[0].mxu0 %v2199
        %v2758 = vpop.f32.mrb[0].mxu0
        %v2759 = vadd.f32 %v2036, %v2758
        %v2760 = vpop.f32.mrb[0].mxu0
        %2761 = vmatprep.mubr.f32.mxu0 0.0
        %2762 = vmatmul.mubr.f32.gmra.mrb[0].mxu0 %v2202
        %v2763 = vpop.f32.mrb[0].mxu0
        %v2764 = vadd.f32 %v2036, %v2763
        %v2765 = vpop.f32.mrb[0].mxu0
        %2766 = vmatprep.mubr.f32.mxu0 0.0
        %2767 = vmatmul.mubr.f32.gmra.mrb[0].mxu0 %v2205
        %v2768 = vpop.f32.mrb[0].mxu0
        %v2769 = vadd.f32 %v2036, %v2768
        %v2770 = vpop.f32.mrb[0].mxu0
        %2771 = vmatprep.mubr.f32.mxu0 0.0
        %2772 = vmatmul.mubr.f32.gmra.mrb[0].mxu0 %v2208
        %v2773 = vpop.f32.mrb[0].mxu0
        %v2774 = vadd.f32 %v2036, %v2773
        %v2775 = vpop.f32.mrb[0].mxu0
        %2776 = vmatprep.mubr.f32.mxu0 0.0
        %2777 = vmatmul.mubr.f32.gmra.mrb[0].mxu0 %v2211
        %v2778 = vpop.f32.mrb[0].mxu0
        %v2779 = vadd.f32 %v2036, %v2778
        %v2780 = vpop.f32.mrb[0].mxu0
        %2781 = vmatprep.mubr.f32.mxu0 0.0
        %2782 = vmatmul.mubr.f32.gmra.mrb[0].mxu0 %v2214
        %v2783 = vpop.f32.mrb[0].mxu0
        %v2784 = vadd.f32 %v2036, %v2783
        %v2785 = vpop.f32.mrb[0].mxu0
        %2786 = vmatprep.mubr.f32.mxu0 0.0
        %2787 = vmatmul.mubr.f32.gmra.mrb[0].mxu0 %v2217
        %v2788 = vpop.f32.mrb[0].mxu0
        %v2789 = vadd.f32 %v2036, %v2788
        %v2790 = vpop.f32.mrb[0].mxu0
        %2791 = vmatprep.mubr.f32.mxu0 0.0
        %2792 = vmatmul.mubr.f32.gmra.mrb[0].mxu0 %v2220
        %v2793 = vpop.f32.mrb[0].mxu0
        %v2794 = vadd.f32 %v2036, %v2793
        %v2795 = vpop.f32.mrb[0].mxu0
        %2796 = vmatprep.mubr.f32.mxu0 0.0
        %2797 = vmatmul.mubr.f32.gmra.mrb[0].mxu0 %v2223
        %v2798 = vpop.f32.mrb[0].mxu0
        %v2799 = vadd.f32 %v2036, %v2798
        %v2800 = vpop.f32.mrb[0].mxu0
        %2801 = vmatprep.mubr.f32.mxu0 0.0
        %2802 = vmatmul.mubr.f32.gmra.mrb[0].mxu0 %v2226
        %v2803 = vpop.f32.mrb[0].mxu0
        %v2804 = vadd.f32 %v2036, %v2803
        %v2805 = vpop.f32.mrb[0].mxu0
        %2806 = vmatprep.mubr.f32.mxu0 0.0
        %2807 = vmatmul.mubr.f32.gmra.mrb[0].mxu0 %v2229
        %v2808 = vpop.f32.mrb[0].mxu0
        %v2809 = vadd.f32 %v2036, %v2808
        %v2810 = vpop.f32.mrb[0].mxu0
        %2811 = vmatprep.mubr.f32.mxu0 0.0
        %2812 = vmatmul.mubr.f32.gmra.mrb[0].mxu0 %v2232
        %v2813 = vpop.f32.mrb[0].mxu0
        %v2814 = vadd.f32 %v2036, %v2813
        %v2815 = vpop.f32.mrb[0].mxu0
        %2816 = vmatprep.mubr.f32.mxu0 0.0
        %2817 = vmatmul.mubr.f32.gmra.mrb[0].mxu0 %v2235
        %v2818 = vpop.f32.mrb[0].mxu0
        %v2819 = vadd.f32 %v2036, %v2818
        %v2820 = vpop.f32.mrb[0].mxu0
        %2821 = vmatprep.mubr.f32.mxu0 0.0
        %2822 = vmatmul.mubr.f32.gmra.mrb[0].mxu0 %v2238
        %v2823 = vpop.f32.mrb[0].mxu0
        %v2824 = vadd.f32 %v2036, %v2823
        %v2825 = vpop.f32.mrb[0].mxu0
        %2826 = vmatprep.mubr.f32.mxu0 0.0
        %2827 = vmatmul.mubr.f32.gmra.mrb[0].mxu0 %v2241
        %v2828 = vpop.f32.mrb[0].mxu0
        %v2829 = vadd.f32 %v2036, %v2828
        %v2830 = vpop.f32.mrb[0].mxu0
        %2831 = vmatprep.mubr.f32.mxu0 0.0
        %2832 = vmatmul.mubr.f32.gmra.mrb[0].mxu0 %v2244
        %v2833 = vpop.f32.mrb[0].mxu0
        %v2834 = vadd.f32 %v2036, %v2833
        %v2835 = vpop.f32.mrb[0].mxu0
        %2836 = vmatprep.mubr.f32.mxu0 0.0
        %2837 = vmatmul.mubr.f32.gmra.mrb[0].mxu0 %v2247
        %v2838 = vpop.f32.mrb[0].mxu0
        %v2839 = vadd.f32 %v2036, %v2838
        %v2840 = vpop.f32.mrb[0].mxu0
        %2841 = vmatprep.mubr.f32.mxu0 0.0
        %2842 = vmatmul.mubr.f32.gmra.mrb[0].mxu0 %v2250
        %v2843 = vpop.f32.mrb[0].mxu0
        %v2844 = vadd.f32 %v2036, %v2843
        %v2845 = vpop.f32.mrb[0].mxu0
        %2846 = vmatprep.mubr.f32.mxu0 0.0
        %2847 = vmatmul.mubr.f32.gmra.mrb[0].mxu0 %v2253
        %v2848 = vpop.f32.mrb[0].mxu0
        %v2849 = vadd.f32 %v2036, %v2848
        %v2850 = vpop.f32.mrb[0].mxu0
        %2851 = vmatprep.mubr.f32.mxu0 0.0
        %2852 = vmatmul.mubr.f32.gmra.mrb[0].mxu0 %v2256
        %v2853 = vpop.f32.mrb[0].mxu0
        %v2854 = vadd.f32 %v2036, %v2853
        %v2855 = vpop.f32.mrb[0].mxu0
        %2856 = vmatprep.mubr.f32.mxu0 0.0
        %2857 = vmatmul.mubr.f32.gmra.mrb[0].mxu0 %v2259
        %v2858 = vpop.f32.mrb[0].mxu0
        %v2859 = vadd.f32 %v2036, %v2858
        %v2860 = vpop.f32.mrb[0].mxu0
        %2861 = vmatprep.mubr.f32.mxu0 0.0
        %2862 = vmatmul.mubr.f32.gmra.mrb[0].mxu0 %v2262
        %v2863 = vpop.f32.mrb[0].mxu0
        %v2864 = vadd.f32 %v2036, %v2863
        %v2865 = vpop.f32.mrb[0].mxu0
        %2866 = vmatprep.mubr.f32.mxu0 0.0
        %2867 = vmatmul.mubr.f32.gmra.mrb[0].mxu0 %v2265
        %v2868 = vpop.f32.mrb[0].mxu0
        %v2869 = vadd.f32 %v2036, %v2868
        %v2870 = vpop.f32.mrb[0].mxu0
        %2871 = vmatprep.mubr.f32.mxu0 0.0
        %2872 = vmatmul.mubr.f32.gmra.mrb[0].mxu0 %v2268
        %v2873 = vpop.f32.mrb[0].mxu0
        %v2874 = vadd.f32 %v2036, %v2873
        %v2875 = vpop.f32.mrb[0].mxu0
        %2876 = vmatprep.mubr.f32.mxu0 0.0
        %2877 = vmatmul.mubr.f32.gmra.mrb[0].mxu0 %v2271
        %v2878 = vpop.f32.mrb[0].mxu0
        %v2879 = vadd.f32 %v2036, %v2878
        %v2880 = vpop.f32.mrb[0].mxu0
        %2881 = vmatprep.mubr.f32.mxu0 0.0
        %2882 = vmatmul.mubr.f32.gmra.mrb[0].mxu0 %v2274
        %v2883 = vpop.f32.mrb[0].mxu0
        %v2884 = vadd.f32 %v2036, %v2883
        %v2885 = vpop.f32.mrb[0].mxu0
        %2886 = vmatprep.mubr.f32.mxu0 0.0
        %2887 = vmatmul.mubr.f32.gmra.mrb[0].mxu0 %v2277
        %v2888 = vpop.f32.mrb[0].mxu0
        %v2889 = vadd.f32 %v2036, %v2888
        %v2890 = vpop.f32.mrb[0].mxu0
        %2891 = vmatprep.mubr.f32.mxu0 0.0
        %2892 = vmatmul.mubr.f32.gmra.mrb[0].mxu0 %v2280
        %v2893 = vpop.f32.mrb[0].mxu0
        %v2894 = vadd.f32 %v2036, %v2893
        %v2895 = vpop.f32.mrb[0].mxu0
        %2896 = vmatprep.mubr.f32.mxu0 0.0
        %2897 = vmatmul.mubr.f32.gmra.mrb[0].mxu0 %v2283
        %v2898 = vpop.f32.mrb[0].mxu0
        %v2899 = vadd.f32 %v2036, %v2898
        %v2900 = vpop.f32.mrb[0].mxu0
        %2901 = vmatprep.mubr.f32.mxu0 0.0
        %2902 = vmatmul.mubr.f32.gmra.mrb[0].mxu0 %v2286
        %v2903 = vpop.f32.mrb[0].mxu0
        %v2904 = vadd.f32 %v2036, %v2903
        %v2905 = vpop.f32.mrb[0].mxu0
        %2906 = vmatprep.mubr.f32.mxu0 0.0
        %2907 = vmatmul.mubr.f32.gmra.mrb[0].mxu0 %v2289
        %v2908 = vpop.f32.mrb[0].mxu0
        %v2909 = vadd.f32 %v2036, %v2908
        %v2910 = vpop.f32.mrb[0].mxu0
        %2911 = vmatprep.mubr.f32.mxu0 0.0
        %2912 = vmatmul.mubr.f32.gmra.mrb[0].mxu0 %v2292
        %v2913 = vpop.f32.mrb[0].mxu0
        %v2914 = vadd.f32 %v2036, %v2913
        %v2915 = vpop.f32.mrb[0].mxu0
        %2916 = vmatprep.mubr.f32.mxu0 0.0
        %2917 = vmatmul.mubr.f32.gmra.mrb[0].mxu0 %v2295
        %v2918 = vpop.f32.mrb[0].mxu0
        %v2919 = vadd.f32 %v2036, %v2918
        %v2920 = vpop.f32.mrb[0].mxu0
        %2921 = vmatprep.mubr.f32.mxu0 0.0
        %2922 = vmatmul.mubr.f32.gmra.mrb[0].mxu0 %v2298
        %v2923 = vpop.f32.mrb[0].mxu0
        %v2924 = vadd.f32 %v2036, %v2923
        %v2925 = vpop.f32.mrb[0].mxu0
        %2926 = vmatprep.mubr.f32.mxu0 0.0
        %2927 = vmatmul.mubr.f32.gmra.mrb[0].mxu0 %v2301
        %v2928 = vpop.f32.mrb[0].mxu0
        %v2929 = vadd.f32 %v2036, %v2928
        %v2930 = vpop.f32.mrb[0].mxu0
        %2931 = vmatprep.mubr.f32.mxu0 0.0
        %2932 = vmatmul.mubr.f32.gmra.mrb[0].mxu0 %v2304
        %v2933 = vpop.f32.mrb[0].mxu0
        %v2934 = vadd.f32 %v2036, %v2933
        %v2935 = vpop.f32.mrb[0].mxu0
        %2936 = vmatprep.mubr.f32.mxu0 0.0
        %2937 = vmatmul.mubr.f32.gmra.mrb[0].mxu0 %v2307
        %v2938 = vpop.f32.mrb[0].mxu0
        %v2939 = vadd.f32 %v2036, %v2938
        %v2940 = vpop.f32.mrb[0].mxu0
        %2941 = vmatprep.mubr.f32.mxu0 0.0
        %2942 = vmatmul.mubr.f32.gmra.mrb[0].mxu0 %v2310
        %v2943 = vpop.f32.mrb[0].mxu0
        %v2944 = vadd.f32 %v2036, %v2943
        %v2945 = vpop.f32.mrb[0].mxu0
        %2946 = vmatprep.mubr.f32.mxu0 0.0
        %2947 = vmatmul.mubr.f32.gmra.mrb[0].mxu0 %v2313
        %v2948 = vpop.f32.mrb[0].mxu0
        %v2949 = vadd.f32 %v2036, %v2948
        %v2950 = vpop.f32.mrb[0].mxu0
        %2951 = vmatprep.mubr.f32.mxu0 0.0
        %2952 = vmatmul.mubr.f32.gmra.mrb[0].mxu0 %v2316
        %v2953 = vpop.f32.mrb[0].mxu0
        %v2954 = vadd.f32 %v2036, %v2953
        %v2955 = vpop.f32.mrb[0].mxu0
        %2956 = vmatprep.mubr.f32.mxu0 0.0
        %2957 = vmatmul.mubr.f32.gmra.mrb[0].mxu0 %v2319
        %v2958 = vpop.f32.mrb[0].mxu0
        %v2959 = vadd.f32 %v2036, %v2958
        %v2960 = vpop.f32.mrb[0].mxu0
        %2961 = vmatprep.mubr.f32.mxu0 0.0
        %2962 = vmatmul.mubr.f32.gmra.mrb[0].mxu0 %v2322
        %v2963 = vpop.f32.mrb[0].mxu0
        %v2964 = vadd.f32 %v2036, %v2963
        %v2965 = vpop.f32.mrb[0].mxu0
        %2966 = vmatprep.mubr.f32.mxu0 0.0
        %2967 = vmatmul.mubr.f32.gmra.mrb[0].mxu0 %v2325
        %v2968 = vpop.f32.mrb[0].mxu0
        %v2969 = vadd.f32 %v2036, %v2968
        %v2970 = vpop.f32.mrb[0].mxu0
        %2971 = vmatprep.mubr.f32.mxu0 0.0
        %2972 = vmatmul.mubr.f32.gmra.mrb[0].mxu0 %v2328
        %v2973 = vpop.f32.mrb[0].mxu0
        %v2974 = vadd.f32 %v2036, %v2973
        %v2975 = vpop.f32.mrb[0].mxu0
        %2976 = vmatprep.mubr.f32.mxu0 0.0
        %2977 = vmatmul.mubr.f32.gmra.mrb[0].mxu0 %v2331
        %v2978 = vpop.f32.mrb[0].mxu0
        %v2979 = vadd.f32 %v2036, %v2978
        %v2980 = vpop.f32.mrb[0].mxu0
        %2981 = vmatprep.mubr.f32.mxu0 0.0
        %2982 = vmatmul.mubr.f32.gmra.mrb[0].mxu0 %v2334
        %v2983 = vpop.f32.mrb[0].mxu0
        %v2984 = vadd.f32 %v2036, %v2983
        %v2985 = vpop.f32.mrb[0].mxu0
        %2986 = vmatprep.mubr.f32.mxu0 0.0
        %2987 = vmatmul.mubr.f32.gmra.mrb[0].mxu0 %v2337
        %v2988 = vpop.f32.mrb[0].mxu0
        %v2989 = vadd.f32 %v2036, %v2988
        %v2990 = vpop.f32.mrb[0].mxu0
        %2991 = vmatprep.mubr.f32.mxu0 0.0
        %2992 = vmatmul.mubr.f32.gmra.mrb[0].mxu0 %v2340
        %v2993 = vpop.f32.mrb[0].mxu0
        %v2994 = vadd.f32 %v2036, %v2993
        %v2995 = vpop.f32.mrb[0].mxu0
        %2996 = vmatprep.mubr.f32.mxu0 0.0
        %2997 = vmatmul.mubr.f32.gmra.mrb[0].mxu0 %v2343
        %v2998 = vpop.f32.mrb[0].mxu0
        %v2999 = vadd.f32 %v2036, %v2998
        %v3000 = vpop.f32.mrb[0].mxu0
        %3001 = vmatprep.mubr.f32.mxu0 0.0
        %3002 = vmatmul.mubr.f32.gmra.mrb[0].mxu0 %v2346
        %v3003 = vpop.f32.mrb[0].mxu0
        %v3004 = vadd.f32 %v2036, %v3003
        %v3005 = vpop.f32.mrb[0].mxu0
        %3006 = vmatprep.mubr.f32.mxu0 0.0
        %3007 = vmatmul.mubr.f32.gmra.mrb[0].mxu0 %v2349
        %v3008 = vpop.f32.mrb[0].mxu0
        %v3009 = vadd.f32 %v2036, %v3008
        %v3010 = vpop.f32.mrb[0].mxu0
        %3011 = vmatprep.mubr.f32.mxu0 0.0
        %3012 = vmatmul.mubr.f32.gmra.mrb[0].mxu0 %v2352
        %v3013 = vpop.f32.mrb[0].mxu0
        %v3014 = vadd.f32 %v2036, %v3013
        %v3015 = vpop.f32.mrb[0].mxu0
        %3016 = vmatprep.mubr.f32.mxu0 0.0
        %3017 = vmatmul.mubr.f32.gmra.mrb[0].mxu0 %v2355
        %v3018 = vpop.f32.mrb[0].mxu0
        %v3019 = vadd.f32 %v2036, %v3018
        %v3020 = vpop.f32.mrb[0].mxu0
        %3021 = vmatprep.mubr.f32.mxu0 0.0
        %3022 = vmatmul.mubr.f32.gmra.mrb[0].mxu0 %v2358
        %v3023 = vpop.f32.mrb[0].mxu0
        %v3024 = vadd.f32 %v2036, %v3023
        %v3025 = vpop.f32.mrb[0].mxu0
        %3026 = vmatprep.mubr.f32.mxu0 0.0
        %3027 = vmatmul.mubr.f32.gmra.mrb[0].mxu0 %v2361
        %v3028 = vpop.f32.mrb[0].mxu0
        %v3029 = vadd.f32 %v2036, %v3028
        %v3030 = vpop.f32.mrb[0].mxu0
        %3031 = vmatprep.mubr.f32.mxu0 0.0
        %3032 = vmatmul.mubr.f32.gmra.mrb[0].mxu0 %v2364
        %v3033 = vpop.f32.mrb[0].mxu0
        %v3034 = vadd.f32 %v2036, %v3033
        %v3035 = vpop.f32.mrb[0].mxu0
        %3036 = vmatprep.mubr.f32.mxu0 0.0
        %3037 = vmatmul.mubr.f32.gmra.mrb[0].mxu0 %v2367
        %v3038 = vpop.f32.mrb[0].mxu0
        %v3039 = vadd.f32 %v2036, %v3038
        %v3040 = vpop.f32.mrb[0].mxu0
        %3041 = vmatprep.mubr.f32.mxu0 0.0
        %3042 = vmatmul.mubr.f32.gmra.mrb[0].mxu0 %v2370
        %v3043 = vpop.f32.mrb[0].mxu0
        %v3044 = vadd.f32 %v2036, %v3043
        %v3045 = vpop.f32.mrb[0].mxu0
        %3046 = vmatprep.mubr.f32.mxu0 0.0
        %3047 = vmatmul.mubr.f32.gmra.mrb[0].mxu0 %v2373
        %v3048 = vpop.f32.mrb[0].mxu0
        %v3049 = vadd.f32 %v2036, %v3048
        %v3050 = vpop.f32.mrb[0].mxu0
        %3051 = vmatprep.mubr.f32.mxu0 0.0
        %3052 = vmatmul.mubr.f32.gmra.mrb[0].mxu0 %v2376
        %v3053 = vpop.f32.mrb[0].mxu0
        %v3054 = vadd.f32 %v2036, %v3053
        %v3055 = vpop.f32.mrb[0].mxu0
        %3056 = vmatprep.mubr.f32.mxu0 0.0
        %3057 = vmatmul.mubr.f32.gmra.mrb[0].mxu0 %v2379
        %v3058 = vpop.f32.mrb[0].mxu0
        %v3059 = vadd.f32 %v2036, %v3058
        %v3060 = vpop.f32.mrb[0].mxu0
        %3061 = vmatprep.mubr.f32.mxu0 0.0
        %3062 = vmatmul.mubr.f32.gmra.mrb[0].mxu0 %v2382
        %v3063 = vpop.f32.mrb[0].mxu0
        %v3064 = vadd.f32 %v2036, %v3063
        %v3065 = vpop.f32.mrb[0].mxu0
        %3066 = vmatprep.mubr.f32.mxu0 0.0
        %3067 = vmatmul.mubr.f32.gmra.mrb[0].mxu0 %v2385
        %v3068 = vpop.f32.mrb[0].mxu0
        %v3069 = vadd.f32 %v2036, %v3068
        %v3070 = vpop.f32.mrb[0].mxu0
        %3071 = vmatprep.mubr.f32.mxu0 0.0
        %3072 = vmatmul.mubr.f32.gmra.mrb[0].mxu0 %v2388
        %v3073 = vpop.f32.mrb[0].mxu0
        %v3074 = vadd.f32 %v2036, %v3073
        %v3075 = vpop.f32.mrb[0].mxu0
        %3076 = vmatprep.mubr.f32.mxu0 0.0
        %3077 = vmatmul.mubr.f32.gmra.mrb[0].mxu0 %v2391
        %v3078 = vpop.f32.mrb[0].mxu0
        %v3079 = vadd.f32 %v2036, %v3078
        %v3080 = vpop.f32.mrb[0].mxu0
        %3081 = vmatprep.mubr.f32.mxu0 0.0
        %3082 = vmatmul.mubr.f32.gmra.mrb[0].mxu0 %v2394
        %v3083 = vpop.f32.mrb[0].mxu0
        %v3084 = vadd.f32 %v2036, %v3083
        %v3085 = vpop.f32.mrb[0].mxu0
        %3086 = vmatprep.mubr.f32.mxu0 0.0
        %3087 = vmatmul.mubr.f32.gmra.mrb[0].mxu0 %v2397
        %v3088 = vpop.f32.mrb[0].mxu0
        %v3089 = vadd.f32 %v2036, %v3088
        %v3090 = vpop.f32.mrb[0].mxu0
        %3091 = vmatprep.mubr.f32.mxu0 0.0
        %3092 = vmatmul.mubr.f32.gmra.mrb[0].mxu0 %v2400
        %v3093 = vpop.f32.mrb[0].mxu0
        %v3094 = vadd.f32 %v2036, %v3093
        %v3095 = vpop.f32.mrb[0].mxu0
        %3096 = vmatprep.mubr.f32.mxu0 0.0
        %3097 = vmatmul.mubr.f32.gmra.mrb[0].mxu0 %v2403
        %v3098 = vpop.f32.mrb[0].mxu0
        %v3099 = vadd.f32 %v2036, %v3098
        %v3100 = vpop.f32.mrb[0].mxu0
        %3101 = vmatprep.mubr.f32.mxu0 0.0
        %3102 = vmatmul.mubr.f32.gmra.mrb[0].mxu0 %v2406
        %v3103 = vpop.f32.mrb[0].mxu0
        %v3104 = vadd.f32 %v2036, %v3103
        %v3105 = vpop.f32.mrb[0].mxu0
        %3106 = vmatprep.mubr.f32.mxu0 0.0
        %3107 = vmatmul.mubr.f32.gmra.mrb[0].mxu0 %v2409
        %v3108 = vpop.f32.mrb[0].mxu0
        %v3109 = vadd.f32 %v2036, %v3108
        %v3110 = vpop.f32.mrb[0].mxu0
        %3111 = vmatprep.mubr.f32.mxu0 0.0
        %3112 = vmatmul.mubr.f32.gmra.mrb[0].mxu0 %v2412
        %v3113 = vpop.f32.mrb[0].mxu0
        %v3114 = vadd.f32 %v2036, %v3113
        %v3115 = vpop.f32.mrb[0].mxu0
        %3116 = vmatprep.mubr.f32.mxu0 0.0
        %3117 = vmatmul.mubr.f32.gmra.mrb[0].mxu0 %v2415
        %v3118 = vpop.f32.mrb[0].mxu0
        %v3119 = vadd.f32 %v2036, %v3118
        %v3120 = vpop.f32.mrb[0].mxu0
        %3121 = vmatprep.mubr.f32.mxu0 0.0
        %3122 = vmatmul.mubr.f32.gmra.mrb[0].mxu0 %v2418
        %v3123 = vpop.f32.mrb[0].mxu0
        %v3124 = vadd.f32 %v2036, %v3123
        %v3125 = vpop.f32.mrb[0].mxu0
        %3126 = vmatprep.mubr.f32.mxu0 0.0
        %3127 = vmatmul.mubr.f32.gmra.mrb[0].mxu0 %v2421
        %v3128 = vpop.f32.mrb[0].mxu0
        %v3129 = vadd.f32 %v2036, %v3128
        %v3130 = vpop.f32.mrb[0].mxu0
        %3131 = vdwg.mxu0
        %v3132 = vtanh.pop %v2494
        %v3133 = vtanh.pop %v2499
        %v3134 = vtanh.pop %v2504
        %v3135 = vtanh.pop %v2509
        %v3136 = vtanh.pop %v2514
        %v3137 = vtanh.pop %v2519
        %v3138 = vtanh.pop %v2524
        %v3139 = vtanh.pop %v2529
        %v3140 = vtanh.pop %v2534
        %v3141 = vtanh.pop %v2539
        %v3142 = vtanh.pop %v2544
        %v3143 = vtanh.pop %v2549
        %v3144 = vtanh.pop %v2554
        %v3145 = vtanh.pop %v2559
        %v3146 = vtanh.pop %v2564
        %v3147 = vtanh.pop %v2569
        %v3148 = vtanh.pop %v2574
        %v3149 = vtanh.pop %v2579
        %v3150 = vtanh.pop %v2584
        %v3151 = vtanh.pop %v2589
        %v3152 = vtanh.pop %v2594
        %v3153 = vtanh.pop %v2599
        %v3154 = vtanh.pop %v2604
        %v3155 = vtanh.pop %v2609
        %v3156 = vtanh.pop %v2614
        %v3157 = vtanh.pop %v2619
        %v3158 = vtanh.pop %v2624
        %v3159 = vtanh.pop %v2629
        %v3160 = vtanh.pop %v2634
        %v3161 = vtanh.pop %v2639
        %v3162 = vtanh.pop %v2644
        %v3163 = vtanh.pop %v2649
        %v3164 = vtanh.pop %v2654
        %v3165 = vtanh.pop %v2659
        %v3166 = vtanh.pop %v2664
        %v3167 = vtanh.pop %v2669
        %v3168 = vtanh.pop %v2674
        %v3169 = vtanh.pop %v2679
        %v3170 = vtanh.pop %v2684
        %v3171 = vtanh.pop %v2689
        %v3172 = vtanh.pop %v2694
        %v3173 = vtanh.pop %v2699
        %v3174 = vtanh.pop %v2704
        %v3175 = vtanh.pop %v2709
        %v3176 = vtanh.pop %v2714
        %v3177 = vtanh.pop %v2719
        %v3178 = vtanh.pop %v2724
        %v3179 = vtanh.pop %v2729
        %v3180 = vtanh.pop %v2734
        %v3181 = vtanh.pop %v2739
        %v3182 = vtanh.pop %v2744
        %v3183 = vtanh.pop %v2749
        %v3184 = vtanh.pop %v2754
        %v3185 = vtanh.pop %v2759
        %v3186 = vtanh.pop %v2764
        %v3187 = vtanh.pop %v2769
        %v3188 = vtanh.pop %v2774
        %v3189 = vtanh.pop %v2779
        %v3190 = vtanh.pop %v2784
        %v3191 = vtanh.pop %v2789
        %v3192 = vtanh.pop %v2794
        %v3193 = vtanh.pop %v2799
        %v3194 = vtanh.pop %v2804
        %v3195 = vtanh.pop %v2809
        %v3196 = vtanh.pop %v2814
        %v3197 = vtanh.pop %v2819
        %v3198 = vtanh.pop %v2824
        %v3199 = vtanh.pop %v2829
        %v3200 = vtanh.pop %v2834
        %v3201 = vtanh.pop %v2839
        %v3202 = vtanh.pop %v2844
        %v3203 = vtanh.pop %v2849
        %v3204 = vtanh.pop %v2854
        %v3205 = vtanh.pop %v2859
        %v3206 = vtanh.pop %v2864
        %v3207 = vtanh.pop %v2869
        %v3208 = vtanh.pop %v2874
        %v3209 = vtanh.pop %v2879
        %v3210 = vtanh.pop %v2884
        %v3211 = vtanh.pop %v2889
        %v3212 = vtanh.pop %v2894
        %v3213 = vtanh.pop %v2899
        %v3214 = vtanh.pop %v2904
        %v3215 = vtanh.pop %v2909
        %v3216 = vtanh.pop %v2914
        %v3217 = vtanh.pop %v2919
        %v3218 = vtanh.pop %v2924
        %v3219 = vtanh.pop %v2929
        %v3220 = vtanh.pop %v2934
        %v3221 = vtanh.pop %v2939
        %v3222 = vtanh.pop %v2944
        %v3223 = vtanh.pop %v2949
        %v3224 = vtanh.pop %v2954
        %v3225 = vtanh.pop %v2959
        %v3226 = vtanh.pop %v2964
        %v3227 = vtanh.pop %v2969
        %v3228 = vtanh.pop %v2974
        %v3229 = vtanh.pop %v2979
        %v3230 = vtanh.pop %v2984
        %v3231 = vtanh.pop %v2989
        %v3232 = vtanh.pop %v2994
        %v3233 = vtanh.pop %v2999
        %v3234 = vtanh.pop %v3004
        %v3235 = vtanh.pop %v3009
        %v3236 = vtanh.pop %v3014
        %v3237 = vtanh.pop %v3019
        %v3238 = vtanh.pop %v3024
        %v3239 = vtanh.pop %v3029
        %v3240 = vtanh.pop %v3034
        %v3241 = vtanh.pop %v3039
        %v3242 = vtanh.pop %v3044
        %v3243 = vtanh.pop %v3049
        %v3244 = vtanh.pop %v3054
        %v3245 = vtanh.pop %v3059
        %v3246 = vtanh.pop %v3064
        %v3247 = vtanh.pop %v3069
        %v3248 = vtanh.pop %v3074
        %v3249 = vtanh.pop %v3079
        %v3250 = vtanh.pop %v3084
        %v3251 = vtanh.pop %v3089
        %v3252 = vtanh.pop %v3094
        %v3253 = vtanh.pop %v3099
        %v3254 = vtanh.pop %v3104
        %v3255 = vtanh.pop %v3109
        %v3256 = vtanh.pop %v3114
        %v3257 = vtanh.pop %v3119
        %v3258 = vtanh.pop %v3124
        %v3259 = vtanh.pop %v3129
        %v3260 = vld [vmem:[%s8] sm:$0xff]
        %v3261 = vld [vmem:[%s8 + $0x8] sm:$0xff]
        %v3262 = vld [vmem:[%s8 + $0x10] sm:$0xff]
        %v3263 = vld [vmem:[%s8 + $0x18] sm:$0x3f]
        %v3264 = vld [vmem:[%s9] sm:$0x1]
        %v3266 = vlaneseq
        %v3267 = vshrl.u32 %v3266, 7
        %v3268 = vsub.s32 0, %v3267
        %v3269 = vrot.slane %v3264, %v3268
        %v3272 = vsel %vm2038, %v3132, 0
        %v3275 = vsel %vm2038, %v3133, 0
        %v3278 = vsel %vm2038, %v3134, 0
        %v3281 = vsel %vm2038, %v3135, 0
        %v3284 = vsel %vm2038, %v3136, 0
        %v3287 = vsel %vm2038, %v3137, 0
        %v3290 = vsel %vm2038, %v3138, 0
        %v3293 = vsel %vm2038, %v3139, 0
        %v3296 = vsel %vm2038, %v3140, 0
        %v3299 = vsel %vm2038, %v3141, 0
        %v3302 = vsel %vm2038, %v3142, 0
        %v3305 = vsel %vm2038, %v3143, 0
        %v3308 = vsel %vm2038, %v3144, 0
        %v3311 = vsel %vm2038, %v3145, 0
        %v3314 = vsel %vm2038, %v3146, 0
        %v3317 = vsel %vm2038, %v3147, 0
        %v3320 = vsel %vm2038, %v3148, 0
        %v3323 = vsel %vm2038, %v3149, 0
        %v3326 = vsel %vm2038, %v3150, 0
        %v3329 = vsel %vm2038, %v3151, 0
        %v3332 = vsel %vm2038, %v3152, 0
        %v3335 = vsel %vm2038, %v3153, 0
        %v3338 = vsel %vm2038, %v3154, 0
        %v3341 = vsel %vm2038, %v3155, 0
        %v3344 = vsel %vm2038, %v3156, 0
        %v3347 = vsel %vm2038, %v3157, 0
        %v3350 = vsel %vm2038, %v3158, 0
        %v3353 = vsel %vm2038, %v3159, 0
        %v3356 = vsel %vm2038, %v3160, 0
        %v3359 = vsel %vm2038, %v3161, 0
        %v3362 = vsel %vm2038, %v3162, 0
        %v3365 = vsel %vm2038, %v3163, 0
        %v3368 = vsel %vm2038, %v3164, 0
        %v3371 = vsel %vm2038, %v3165, 0
        %v3374 = vsel %vm2038, %v3166, 0
        %v3377 = vsel %vm2038, %v3167, 0
        %v3380 = vsel %vm2038, %v3168, 0
        %v3383 = vsel %vm2038, %v3169, 0
        %v3386 = vsel %vm2038, %v3170, 0
        %v3389 = vsel %vm2038, %v3171, 0
        %v3392 = vsel %vm2038, %v3172, 0
        %v3395 = vsel %vm2038, %v3173, 0
        %v3398 = vsel %vm2038, %v3174, 0
        %v3401 = vsel %vm2038, %v3175, 0
        %v3404 = vsel %vm2038, %v3176, 0
        %v3407 = vsel %vm2038, %v3177, 0
        %v3410 = vsel %vm2038, %v3178, 0
        %v3413 = vsel %vm2038, %v3179, 0
        %v3416 = vsel %vm2038, %v3180, 0
        %v3419 = vsel %vm2038, %v3181, 0
        %v3422 = vsel %vm2038, %v3182, 0
        %v3425 = vsel %vm2038, %v3183, 0
        %v3428 = vsel %vm2038, %v3184, 0
        %v3431 = vsel %vm2038, %v3185, 0
        %v3434 = vsel %vm2038, %v3186, 0
        %v3437 = vsel %vm2038, %v3187, 0
        %v3440 = vsel %vm2038, %v3188, 0
        %v3443 = vsel %vm2038, %v3189, 0
        %v3446 = vsel %vm2038, %v3190, 0
        %v3449 = vsel %vm2038, %v3191, 0
        %v3452 = vsel %vm2038, %v3192, 0
        %v3455 = vsel %vm2038, %v3193, 0
        %v3458 = vsel %vm2038, %v3194, 0
        %v3461 = vsel %vm2038, %v3195, 0
        %v3464 = vsel %vm2038, %v3196, 0
        %v3467 = vsel %vm2038, %v3197, 0
        %v3470 = vsel %vm2038, %v3198, 0
        %v3473 = vsel %vm2038, %v3199, 0
        %v3476 = vsel %vm2038, %v3200, 0
        %v3479 = vsel %vm2038, %v3201, 0
        %v3482 = vsel %vm2038, %v3202, 0
        %v3485 = vsel %vm2038, %v3203, 0
        %v3488 = vsel %vm2038, %v3204, 0
        %v3491 = vsel %vm2038, %v3205, 0
        %v3494 = vsel %vm2038, %v3206, 0
        %v3497 = vsel %vm2038, %v3207, 0
        %v3500 = vsel %vm2038, %v3208, 0
        %v3503 = vsel %vm2038, %v3209, 0
        %v3506 = vsel %vm2038, %v3210, 0
        %v3509 = vsel %vm2038, %v3211, 0
        %v3512 = vsel %vm2038, %v3212, 0
        %v3515 = vsel %vm2038, %v3213, 0
        %v3518 = vsel %vm2038, %v3214, 0
        %v3521 = vsel %vm2038, %v3215, 0
        %v3524 = vsel %vm2038, %v3216, 0
        %v3527 = vsel %vm2038, %v3217, 0
        %v3530 = vsel %vm2038, %v3218, 0
        %v3533 = vsel %vm2038, %v3219, 0
        %v3536 = vsel %vm2038, %v3220, 0
        %v3539 = vsel %vm2038, %v3221, 0
        %v3542 = vsel %vm2038, %v3222, 0
        %v3545 = vsel %vm2038, %v3223, 0
        %v3548 = vsel %vm2038, %v3224, 0
        %v3551 = vsel %vm2038, %v3225, 0
        %v3554 = vsel %vm2038, %v3226, 0
        %v3557 = vsel %vm2038, %v3227, 0
        %v3560 = vsel %vm2038, %v3228, 0
        %v3563 = vsel %vm2038, %v3229, 0
        %v3566 = vsel %vm2038, %v3230, 0
        %v3569 = vsel %vm2038, %v3231, 0
        %v3572 = vsel %vm2038, %v3232, 0
        %v3575 = vsel %vm2038, %v3233, 0
        %v3578 = vsel %vm2038, %v3234, 0
        %v3581 = vsel %vm2038, %v3235, 0
        %v3584 = vsel %vm2038, %v3236, 0
        %v3587 = vsel %vm2038, %v3237, 0
        %v3590 = vsel %vm2038, %v3238, 0
        %v3593 = vsel %vm2038, %v3239, 0
        %v3596 = vsel %vm2038, %v3240, 0
        %v3599 = vsel %vm2038, %v3241, 0
        %v3602 = vsel %vm2038, %v3242, 0
        %v3605 = vsel %vm2038, %v3243, 0
        %v3608 = vsel %vm2038, %v3244, 0
        %v3611 = vsel %vm2038, %v3245, 0
        %v3614 = vsel %vm2038, %v3246, 0
        %v3617 = vsel %vm2038, %v3247, 0
        %v3620 = vsel %vm2038, %v3248, 0
        %v3623 = vsel %vm2038, %v3249, 0
        %v3626 = vsel %vm2038, %v3250, 0
        %v3629 = vsel %vm2038, %v3251, 0
        %v3632 = vsel %vm2038, %v3252, 0
        %v3635 = vsel %vm2038, %v3253, 0
        %v3638 = vsel %vm2038, %v3254, 0
        %v3641 = vsel %vm2038, %v3255, 0
        %v3644 = vsel %vm2038, %v3256, 0
        %v3647 = vsel %vm2038, %v3257, 0
        %v3650 = vsel %vm2038, %v3258, 0
        %v3653 = vsel %vm2038, %v3259, 0
        %v3656 = vsel %vm2423, %v3263, 0
        %3658 = vmatprep.subr.mxu0 0.0
        %3659 = vmatpush1.msra.mxu0 %v3260
        %3660 = vmatprep.subr.mxu0 0.0
        %3661 = vmatpush1.msra.mxu0 %v3261
        %3662 = vmatprep.subr.mxu0 0.0
        %3663 = vmatpush1.msra.mxu0 %v3262
        %3664 = vmatprep.subr.mxu0 0.0
        %3665 = vmatpush1.msra.mxu0 %v3656
        %3666 = vmatprep.subr.mxu0 0.0
        %3667 = vmatpush1.msra.mxu0 0.0
        %3668 = vmatprep.subr.mxu0 0.0
        %3669 = vmatpush1.msra.mxu0 0.0
        %3670 = vmatprep.subr.mxu0 0.0
        %3671 = vmatpush1.msra.mxu0 0.0
        %3672 = vmatprep.subr.mxu0 0.0
        %3673 = vmatpush1.msra.mxu0 0.0
        %3674 = vmatprep.subr.mxu0 0.0
        %3675 = vmatpush1.msra.mxu0 0.0
        %3676 = vmatprep.subr.mxu0 0.0
        %3677 = vmatpush1.msra.mxu0 0.0
        %3678 = vmatprep.subr.mxu0 0.0
        %3679 = vmatpush1.msra.mxu0 0.0
        %3680 = vmatprep.subr.mxu0 0.0
        %3681 = vmatpush1.msra.mxu0 0.0
        %3682 = vmatprep.subr.mxu0 0.0
        %3683 = vmatpush1.msra.mxu0 0.0
        %3684 = vmatprep.subr.mxu0 0.0
        %3685 = vmatpush1.msra.mxu0 0.0
        %3686 = vmatprep.subr.mxu0 0.0
        %3687 = vmatpush1.msra.mxu0 0.0
        %3688 = vmatprep.subr.mxu0 0.0
        %3689 = vmatpush1.msra.mxu0 0.0
        %3690 = vmatprep.subr.mxu0 0.0
        %3691 = vmatpush1.msra.mxu0 0.0
        %3692 = vmatprep.subr.mxu0 0.0
        %3693 = vmatpush1.msra.mxu0 0.0
        %3694 = vmatprep.subr.mxu0 0.0
        %3695 = vmatpush1.msra.mxu0 0.0
        %3696 = vmatprep.subr.mxu0 0.0
        %3697 = vmatpush1.msra.mxu0 0.0
        %3698 = vmatprep.subr.mxu0 0.0
        %3699 = vmatpush1.msra.mxu0 0.0
        %3700 = vmatprep.subr.mxu0 0.0
        %3701 = vmatpush1.msra.mxu0 0.0
        %3702 = vmatprep.subr.mxu0 0.0
        %3703 = vmatpush1.msra.mxu0 0.0
        %3704 = vmatprep.subr.mxu0 0.0
        %3705 = vmatpush1.msra.mxu0 0.0
        %3706 = vmatprep.subr.mxu0 0.0
        %3707 = vmatpush1.msra.mxu0 0.0
        %3708 = vmatprep.subr.mxu0 0.0
        %3709 = vmatpush1.msra.mxu0 0.0
        %3710 = vmatprep.subr.mxu0 0.0
        %3711 = vmatpush1.msra.mxu0 0.0
        %3712 = vmatprep.subr.mxu0 0.0
        %3713 = vmatpush1.msra.mxu0 0.0
        %3714 = vmatprep.subr.mxu0 0.0
        %3715 = vmatpush1.msra.mxu0 0.0
        %3716 = vmatprep.subr.mxu0 0.0
        %3717 = vmatpush1.msra.mxu0 0.0
        %3718 = vmatprep.subr.mxu0 0.0
        %3719 = vmatpush1.msra.mxu0 0.0
        %3720 = vmatprep.subr.mxu0 0.0
        %3721 = vmatpush1.msra.mxu0 0.0
        %3722 = vmatprep.mubr.f32.mxu0 0.0
        %3723 = vmatmul.mubr.f32.gmra.mrb[0].mxu0 %v3272
        %v3724 = vpop.f32.mrb[0].mxu0
        %v3725 = vadd.f32 %v3269, %v3724
        %v3726 = vpop.f32.mrb[0].mxu0
        %3727 = vmatprep.mubr.f32.mxu0 0.0
        %3728 = vmatmul.mubr.f32.gmra.mrb[0].mxu0 %v3275
        %v3729 = vpop.f32.mrb[0].mxu0
        %v3730 = vadd.f32 %v3269, %v3729
        %v3731 = vpop.f32.mrb[0].mxu0
        %3732 = vmatprep.mubr.f32.mxu0 0.0
        %3733 = vmatmul.mubr.f32.gmra.mrb[0].mxu0 %v3278
        %v3734 = vpop.f32.mrb[0].mxu0
        %v3735 = vadd.f32 %v3269, %v3734
        %v3736 = vpop.f32.mrb[0].mxu0
        %3737 = vmatprep.mubr.f32.mxu0 0.0
        %3738 = vmatmul.mubr.f32.gmra.mrb[0].mxu0 %v3281
        %v3739 = vpop.f32.mrb[0].mxu0
        %v3740 = vadd.f32 %v3269, %v3739
        %v3741 = vpop.f32.mrb[0].mxu0
        %3742 = vmatprep.mubr.f32.mxu0 0.0
        %3743 = vmatmul.mubr.f32.gmra.mrb[0].mxu0 %v3284
        %v3744 = vpop.f32.mrb[0].mxu0
        %v3745 = vadd.f32 %v3269, %v3744
        %v3746 = vpop.f32.mrb[0].mxu0
        %3747 = vmatprep.mubr.f32.mxu0 0.0
        %3748 = vmatmul.mubr.f32.gmra.mrb[0].mxu0 %v3287
        %v3749 = vpop.f32.mrb[0].mxu0
        %v3750 = vadd.f32 %v3269, %v3749
        %v3751 = vpop.f32.mrb[0].mxu0
        %3752 = vmatprep.mubr.f32.mxu0 0.0
        %3753 = vmatmul.mubr.f32.gmra.mrb[0].mxu0 %v3290
        %v3754 = vpop.f32.mrb[0].mxu0
        %v3755 = vadd.f32 %v3269, %v3754
        %v3756 = vpop.f32.mrb[0].mxu0
        %3757 = vmatprep.mubr.f32.mxu0 0.0
        %3758 = vmatmul.mubr.f32.gmra.mrb[0].mxu0 %v3293
        %v3759 = vpop.f32.mrb[0].mxu0
        %v3760 = vadd.f32 %v3269, %v3759
        %v3761 = vpop.f32.mrb[0].mxu0
        %3762 = vmatprep.mubr.f32.mxu0 0.0
        %3763 = vmatmul.mubr.f32.gmra.mrb[0].mxu0 %v3296
        %v3764 = vpop.f32.mrb[0].mxu0
        %v3765 = vadd.f32 %v3269, %v3764
        %v3766 = vpop.f32.mrb[0].mxu0
        %3767 = vmatprep.mubr.f32.mxu0 0.0
        %3768 = vmatmul.mubr.f32.gmra.mrb[0].mxu0 %v3299
        %v3769 = vpop.f32.mrb[0].mxu0
        %v3770 = vadd.f32 %v3269, %v3769
        %v3771 = vpop.f32.mrb[0].mxu0
        %3772 = vmatprep.mubr.f32.mxu0 0.0
        %3773 = vmatmul.mubr.f32.gmra.mrb[0].mxu0 %v3302
        %v3774 = vpop.f32.mrb[0].mxu0
        %v3775 = vadd.f32 %v3269, %v3774
        %v3776 = vpop.f32.mrb[0].mxu0
        %3777 = vmatprep.mubr.f32.mxu0 0.0
        %3778 = vmatmul.mubr.f32.gmra.mrb[0].mxu0 %v3305
        %v3779 = vpop.f32.mrb[0].mxu0
        %v3780 = vadd.f32 %v3269, %v3779
        %v3781 = vpop.f32.mrb[0].mxu0
        %3782 = vmatprep.mubr.f32.mxu0 0.0
        %3783 = vmatmul.mubr.f32.gmra.mrb[0].mxu0 %v3308
        %v3784 = vpop.f32.mrb[0].mxu0
        %v3785 = vadd.f32 %v3269, %v3784
        %v3786 = vpop.f32.mrb[0].mxu0
        %3787 = vmatprep.mubr.f32.mxu0 0.0
        %3788 = vmatmul.mubr.f32.gmra.mrb[0].mxu0 %v3311
        %v3789 = vpop.f32.mrb[0].mxu0
        %v3790 = vadd.f32 %v3269, %v3789
        %v3791 = vpop.f32.mrb[0].mxu0
        %3792 = vmatprep.mubr.f32.mxu0 0.0
        %3793 = vmatmul.mubr.f32.gmra.mrb[0].mxu0 %v3314
        %v3794 = vpop.f32.mrb[0].mxu0
        %v3795 = vadd.f32 %v3269, %v3794
        %v3796 = vpop.f32.mrb[0].mxu0
        %3797 = vmatprep.mubr.f32.mxu0 0.0
        %3798 = vmatmul.mubr.f32.gmra.mrb[0].mxu0 %v3317
        %v3799 = vpop.f32.mrb[0].mxu0
        %v3800 = vadd.f32 %v3269, %v3799
        %v3801 = vpop.f32.mrb[0].mxu0
        %3802 = vmatprep.mubr.f32.mxu0 0.0
        %3803 = vmatmul.mubr.f32.gmra.mrb[0].mxu0 %v3320
        %v3804 = vpop.f32.mrb[0].mxu0
        %v3805 = vadd.f32 %v3269, %v3804
        %v3806 = vpop.f32.mrb[0].mxu0
        %3807 = vmatprep.mubr.f32.mxu0 0.0
        %3808 = vmatmul.mubr.f32.gmra.mrb[0].mxu0 %v3323
        %v3809 = vpop.f32.mrb[0].mxu0
        %v3810 = vadd.f32 %v3269, %v3809
        %v3811 = vpop.f32.mrb[0].mxu0
        %3812 = vmatprep.mubr.f32.mxu0 0.0
        %3813 = vmatmul.mubr.f32.gmra.mrb[0].mxu0 %v3326
        %v3814 = vpop.f32.mrb[0].mxu0
        %v3815 = vadd.f32 %v3269, %v3814
        %v3816 = vpop.f32.mrb[0].mxu0
        %3817 = vmatprep.mubr.f32.mxu0 0.0
        %3818 = vmatmul.mubr.f32.gmra.mrb[0].mxu0 %v3329
        %v3819 = vpop.f32.mrb[0].mxu0
        %v3820 = vadd.f32 %v3269, %v3819
        %v3821 = vpop.f32.mrb[0].mxu0
        %3822 = vmatprep.mubr.f32.mxu0 0.0
        %3823 = vmatmul.mubr.f32.gmra.mrb[0].mxu0 %v3332
        %v3824 = vpop.f32.mrb[0].mxu0
        %v3825 = vadd.f32 %v3269, %v3824
        %v3826 = vpop.f32.mrb[0].mxu0
        %3827 = vmatprep.mubr.f32.mxu0 0.0
        %3828 = vmatmul.mubr.f32.gmra.mrb[0].mxu0 %v3335
        %v3829 = vpop.f32.mrb[0].mxu0
        %v3830 = vadd.f32 %v3269, %v3829
        %v3831 = vpop.f32.mrb[0].mxu0
        %3832 = vmatprep.mubr.f32.mxu0 0.0
        %3833 = vmatmul.mubr.f32.gmra.mrb[0].mxu0 %v3338
        %v3834 = vpop.f32.mrb[0].mxu0
        %v3835 = vadd.f32 %v3269, %v3834
        %v3836 = vpop.f32.mrb[0].mxu0
        %3837 = vmatprep.mubr.f32.mxu0 0.0
        %3838 = vmatmul.mubr.f32.gmra.mrb[0].mxu0 %v3341
        %v3839 = vpop.f32.mrb[0].mxu0
        %v3840 = vadd.f32 %v3269, %v3839
        %v3841 = vpop.f32.mrb[0].mxu0
        %3842 = vmatprep.mubr.f32.mxu0 0.0
        %3843 = vmatmul.mubr.f32.gmra.mrb[0].mxu0 %v3344
        %v3844 = vpop.f32.mrb[0].mxu0
        %v3845 = vadd.f32 %v3269, %v3844
        %v3846 = vpop.f32.mrb[0].mxu0
        %3847 = vmatprep.mubr.f32.mxu0 0.0
        %3848 = vmatmul.mubr.f32.gmra.mrb[0].mxu0 %v3347
        %v3849 = vpop.f32.mrb[0].mxu0
        %v3850 = vadd.f32 %v3269, %v3849
        %v3851 = vpop.f32.mrb[0].mxu0
        %3852 = vmatprep.mubr.f32.mxu0 0.0
        %3853 = vmatmul.mubr.f32.gmra.mrb[0].mxu0 %v3350
        %v3854 = vpop.f32.mrb[0].mxu0
        %v3855 = vadd.f32 %v3269, %v3854
        %v3856 = vpop.f32.mrb[0].mxu0
        %3857 = vmatprep.mubr.f32.mxu0 0.0
        %3858 = vmatmul.mubr.f32.gmra.mrb[0].mxu0 %v3353
        %v3859 = vpop.f32.mrb[0].mxu0
        %v3860 = vadd.f32 %v3269, %v3859
        %v3861 = vpop.f32.mrb[0].mxu0
        %3862 = vmatprep.mubr.f32.mxu0 0.0
        %3863 = vmatmul.mubr.f32.gmra.mrb[0].mxu0 %v3356
        %v3864 = vpop.f32.mrb[0].mxu0
        %v3865 = vadd.f32 %v3269, %v3864
        %v3866 = vpop.f32.mrb[0].mxu0
        %3867 = vmatprep.mubr.f32.mxu0 0.0
        %3868 = vmatmul.mubr.f32.gmra.mrb[0].mxu0 %v3359
        %v3869 = vpop.f32.mrb[0].mxu0
        %v3870 = vadd.f32 %v3269, %v3869
        %v3871 = vpop.f32.mrb[0].mxu0
        %3872 = vmatprep.mubr.f32.mxu0 0.0
        %3873 = vmatmul.mubr.f32.gmra.mrb[0].mxu0 %v3362
        %v3874 = vpop.f32.mrb[0].mxu0
        %v3875 = vadd.f32 %v3269, %v3874
        %v3876 = vpop.f32.mrb[0].mxu0
        %3877 = vmatprep.mubr.f32.mxu0 0.0
        %3878 = vmatmul.mubr.f32.gmra.mrb[0].mxu0 %v3365
        %v3879 = vpop.f32.mrb[0].mxu0
        %v3880 = vadd.f32 %v3269, %v3879
        %v3881 = vpop.f32.mrb[0].mxu0
        %3882 = vmatprep.mubr.f32.mxu0 0.0
        %3883 = vmatmul.mubr.f32.gmra.mrb[0].mxu0 %v3368
        %v3884 = vpop.f32.mrb[0].mxu0
        %v3885 = vadd.f32 %v3269, %v3884
        %v3886 = vpop.f32.mrb[0].mxu0
        %3887 = vmatprep.mubr.f32.mxu0 0.0
        %3888 = vmatmul.mubr.f32.gmra.mrb[0].mxu0 %v3371
        %v3889 = vpop.f32.mrb[0].mxu0
        %v3890 = vadd.f32 %v3269, %v3889
        %v3891 = vpop.f32.mrb[0].mxu0
        %3892 = vmatprep.mubr.f32.mxu0 0.0
        %3893 = vmatmul.mubr.f32.gmra.mrb[0].mxu0 %v3374
        %v3894 = vpop.f32.mrb[0].mxu0
        %v3895 = vadd.f32 %v3269, %v3894
        %v3896 = vpop.f32.mrb[0].mxu0
        %3897 = vmatprep.mubr.f32.mxu0 0.0
        %3898 = vmatmul.mubr.f32.gmra.mrb[0].mxu0 %v3377
        %v3899 = vpop.f32.mrb[0].mxu0
        %v3900 = vadd.f32 %v3269, %v3899
        %v3901 = vpop.f32.mrb[0].mxu0
        %3902 = vmatprep.mubr.f32.mxu0 0.0
        %3903 = vmatmul.mubr.f32.gmra.mrb[0].mxu0 %v3380
        %v3904 = vpop.f32.mrb[0].mxu0
        %v3905 = vadd.f32 %v3269, %v3904
        %v3906 = vpop.f32.mrb[0].mxu0
        %3907 = vmatprep.mubr.f32.mxu0 0.0
        %3908 = vmatmul.mubr.f32.gmra.mrb[0].mxu0 %v3383
        %v3909 = vpop.f32.mrb[0].mxu0
        %v3910 = vadd.f32 %v3269, %v3909
        %v3911 = vpop.f32.mrb[0].mxu0
        %3912 = vmatprep.mubr.f32.mxu0 0.0
        %3913 = vmatmul.mubr.f32.gmra.mrb[0].mxu0 %v3386
        %v3914 = vpop.f32.mrb[0].mxu0
        %v3915 = vadd.f32 %v3269, %v3914
        %v3916 = vpop.f32.mrb[0].mxu0
        %3917 = vmatprep.mubr.f32.mxu0 0.0
        %3918 = vmatmul.mubr.f32.gmra.mrb[0].mxu0 %v3389
        %v3919 = vpop.f32.mrb[0].mxu0
        %v3920 = vadd.f32 %v3269, %v3919
        %v3921 = vpop.f32.mrb[0].mxu0
        %3922 = vmatprep.mubr.f32.mxu0 0.0
        %3923 = vmatmul.mubr.f32.gmra.mrb[0].mxu0 %v3392
        %v3924 = vpop.f32.mrb[0].mxu0
        %v3925 = vadd.f32 %v3269, %v3924
        %v3926 = vpop.f32.mrb[0].mxu0
        %3927 = vmatprep.mubr.f32.mxu0 0.0
        %3928 = vmatmul.mubr.f32.gmra.mrb[0].mxu0 %v3395
        %v3929 = vpop.f32.mrb[0].mxu0
        %v3930 = vadd.f32 %v3269, %v3929
        %v3931 = vpop.f32.mrb[0].mxu0
        %3932 = vmatprep.mubr.f32.mxu0 0.0
        %3933 = vmatmul.mubr.f32.gmra.mrb[0].mxu0 %v3398
        %v3934 = vpop.f32.mrb[0].mxu0
        %v3935 = vadd.f32 %v3269, %v3934
        %v3936 = vpop.f32.mrb[0].mxu0
        %3937 = vmatprep.mubr.f32.mxu0 0.0
        %3938 = vmatmul.mubr.f32.gmra.mrb[0].mxu0 %v3401
        %v3939 = vpop.f32.mrb[0].mxu0
        %v3940 = vadd.f32 %v3269, %v3939
        %v3941 = vpop.f32.mrb[0].mxu0
        %3942 = vmatprep.mubr.f32.mxu0 0.0
        %3943 = vmatmul.mubr.f32.gmra.mrb[0].mxu0 %v3404
        %v3944 = vpop.f32.mrb[0].mxu0
        %v3945 = vadd.f32 %v3269, %v3944
        %v3946 = vpop.f32.mrb[0].mxu0
        %3947 = vmatprep.mubr.f32.mxu0 0.0
        %3948 = vmatmul.mubr.f32.gmra.mrb[0].mxu0 %v3407
        %v3949 = vpop.f32.mrb[0].mxu0
        %v3950 = vadd.f32 %v3269, %v3949
        %v3951 = vpop.f32.mrb[0].mxu0
        %3952 = vmatprep.mubr.f32.mxu0 0.0
        %3953 = vmatmul.mubr.f32.gmra.mrb[0].mxu0 %v3410
        %v3954 = vpop.f32.mrb[0].mxu0
        %v3955 = vadd.f32 %v3269, %v3954
        %v3956 = vpop.f32.mrb[0].mxu0
        %3957 = vmatprep.mubr.f32.mxu0 0.0
        %3958 = vmatmul.mubr.f32.gmra.mrb[0].mxu0 %v3413
        %v3959 = vpop.f32.mrb[0].mxu0
        %v3960 = vadd.f32 %v3269, %v3959
        %v3961 = vpop.f32.mrb[0].mxu0
        %3962 = vmatprep.mubr.f32.mxu0 0.0
        %3963 = vmatmul.mubr.f32.gmra.mrb[0].mxu0 %v3416
        %v3964 = vpop.f32.mrb[0].mxu0
        %v3965 = vadd.f32 %v3269, %v3964
        %v3966 = vpop.f32.mrb[0].mxu0
        %3967 = vmatprep.mubr.f32.mxu0 0.0
        %3968 = vmatmul.mubr.f32.gmra.mrb[0].mxu0 %v3419
        %v3969 = vpop.f32.mrb[0].mxu0
        %v3970 = vadd.f32 %v3269, %v3969
        %v3971 = vpop.f32.mrb[0].mxu0
        %3972 = vmatprep.mubr.f32.mxu0 0.0
        %3973 = vmatmul.mubr.f32.gmra.mrb[0].mxu0 %v3422
        %v3974 = vpop.f32.mrb[0].mxu0
        %v3975 = vadd.f32 %v3269, %v3974
        %v3976 = vpop.f32.mrb[0].mxu0
        %3977 = vmatprep.mubr.f32.mxu0 0.0
        %3978 = vmatmul.mubr.f32.gmra.mrb[0].mxu0 %v3425
        %v3979 = vpop.f32.mrb[0].mxu0
        %v3980 = vadd.f32 %v3269, %v3979
        %v3981 = vpop.f32.mrb[0].mxu0
        %3982 = vmatprep.mubr.f32.mxu0 0.0
        %3983 = vmatmul.mubr.f32.gmra.mrb[0].mxu0 %v3428
        %v3984 = vpop.f32.mrb[0].mxu0
        %v3985 = vadd.f32 %v3269, %v3984
        %v3986 = vpop.f32.mrb[0].mxu0
        %3987 = vmatprep.mubr.f32.mxu0 0.0
        %3988 = vmatmul.mubr.f32.gmra.mrb[0].mxu0 %v3431
        %v3989 = vpop.f32.mrb[0].mxu0
        %v3990 = vadd.f32 %v3269, %v3989
        %v3991 = vpop.f32.mrb[0].mxu0
        %3992 = vmatprep.mubr.f32.mxu0 0.0
        %3993 = vmatmul.mubr.f32.gmra.mrb[0].mxu0 %v3434
        %v3994 = vpop.f32.mrb[0].mxu0
        %v3995 = vadd.f32 %v3269, %v3994
        %v3996 = vpop.f32.mrb[0].mxu0
        %3997 = vmatprep.mubr.f32.mxu0 0.0
        %3998 = vmatmul.mubr.f32.gmra.mrb[0].mxu0 %v3437
        %v3999 = vpop.f32.mrb[0].mxu0
        %v4000 = vadd.f32 %v3269, %v3999
        %v4001 = vpop.f32.mrb[0].mxu0
        %4002 = vmatprep.mubr.f32.mxu0 0.0
        %4003 = vmatmul.mubr.f32.gmra.mrb[0].mxu0 %v3440
        %v4004 = vpop.f32.mrb[0].mxu0
        %v4005 = vadd.f32 %v3269, %v4004
        %v4006 = vpop.f32.mrb[0].mxu0
        %4007 = vmatprep.mubr.f32.mxu0 0.0
        %4008 = vmatmul.mubr.f32.gmra.mrb[0].mxu0 %v3443
        %v4009 = vpop.f32.mrb[0].mxu0
        %v4010 = vadd.f32 %v3269, %v4009
        %v4011 = vpop.f32.mrb[0].mxu0
        %4012 = vmatprep.mubr.f32.mxu0 0.0
        %4013 = vmatmul.mubr.f32.gmra.mrb[0].mxu0 %v3446
        %v4014 = vpop.f32.mrb[0].mxu0
        %v4015 = vadd.f32 %v3269, %v4014
        %v4016 = vpop.f32.mrb[0].mxu0
        %4017 = vmatprep.mubr.f32.mxu0 0.0
        %4018 = vmatmul.mubr.f32.gmra.mrb[0].mxu0 %v3449
        %v4019 = vpop.f32.mrb[0].mxu0
        %v4020 = vadd.f32 %v3269, %v4019
        %v4021 = vpop.f32.mrb[0].mxu0
        %4022 = vmatprep.mubr.f32.mxu0 0.0
        %4023 = vmatmul.mubr.f32.gmra.mrb[0].mxu0 %v3452
        %v4024 = vpop.f32.mrb[0].mxu0
        %v4025 = vadd.f32 %v3269, %v4024
        %v4026 = vpop.f32.mrb[0].mxu0
        %4027 = vmatprep.mubr.f32.mxu0 0.0
        %4028 = vmatmul.mubr.f32.gmra.mrb[0].mxu0 %v3455
        %v4029 = vpop.f32.mrb[0].mxu0
        %v4030 = vadd.f32 %v3269, %v4029
        %v4031 = vpop.f32.mrb[0].mxu0
        %4032 = vmatprep.mubr.f32.mxu0 0.0
        %4033 = vmatmul.mubr.f32.gmra.mrb[0].mxu0 %v3458
        %v4034 = vpop.f32.mrb[0].mxu0
        %v4035 = vadd.f32 %v3269, %v4034
        %v4036 = vpop.f32.mrb[0].mxu0
        %4037 = vmatprep.mubr.f32.mxu0 0.0
        %4038 = vmatmul.mubr.f32.gmra.mrb[0].mxu0 %v3461
        %v4039 = vpop.f32.mrb[0].mxu0
        %v4040 = vadd.f32 %v3269, %v4039
        %v4041 = vpop.f32.mrb[0].mxu0
        %4042 = vmatprep.mubr.f32.mxu0 0.0
        %4043 = vmatmul.mubr.f32.gmra.mrb[0].mxu0 %v3464
        %v4044 = vpop.f32.mrb[0].mxu0
        %v4045 = vadd.f32 %v3269, %v4044
        %v4046 = vpop.f32.mrb[0].mxu0
        %4047 = vmatprep.mubr.f32.mxu0 0.0
        %4048 = vmatmul.mubr.f32.gmra.mrb[0].mxu0 %v3467
        %v4049 = vpop.f32.mrb[0].mxu0
        %v4050 = vadd.f32 %v3269, %v4049
        %v4051 = vpop.f32.mrb[0].mxu0
        %4052 = vmatprep.mubr.f32.mxu0 0.0
        %4053 = vmatmul.mubr.f32.gmra.mrb[0].mxu0 %v3470
        %v4054 = vpop.f32.mrb[0].mxu0
        %v4055 = vadd.f32 %v3269, %v4054
        %v4056 = vpop.f32.mrb[0].mxu0
        %4057 = vmatprep.mubr.f32.mxu0 0.0
        %4058 = vmatmul.mubr.f32.gmra.mrb[0].mxu0 %v3473
        %v4059 = vpop.f32.mrb[0].mxu0
        %v4060 = vadd.f32 %v3269, %v4059
        %v4061 = vpop.f32.mrb[0].mxu0
        %4062 = vmatprep.mubr.f32.mxu0 0.0
        %4063 = vmatmul.mubr.f32.gmra.mrb[0].mxu0 %v3476
        %v4064 = vpop.f32.mrb[0].mxu0
        %v4065 = vadd.f32 %v3269, %v4064
        %v4066 = vpop.f32.mrb[0].mxu0
        %4067 = vmatprep.mubr.f32.mxu0 0.0
        %4068 = vmatmul.mubr.f32.gmra.mrb[0].mxu0 %v3479
        %v4069 = vpop.f32.mrb[0].mxu0
        %v4070 = vadd.f32 %v3269, %v4069
        %v4071 = vpop.f32.mrb[0].mxu0
        %4072 = vmatprep.mubr.f32.mxu0 0.0
        %4073 = vmatmul.mubr.f32.gmra.mrb[0].mxu0 %v3482
        %v4074 = vpop.f32.mrb[0].mxu0
        %v4075 = vadd.f32 %v3269, %v4074
        %v4076 = vpop.f32.mrb[0].mxu0
        %4077 = vmatprep.mubr.f32.mxu0 0.0
        %4078 = vmatmul.mubr.f32.gmra.mrb[0].mxu0 %v3485
        %v4079 = vpop.f32.mrb[0].mxu0
        %v4080 = vadd.f32 %v3269, %v4079
        %v4081 = vpop.f32.mrb[0].mxu0
        %4082 = vmatprep.mubr.f32.mxu0 0.0
        %4083 = vmatmul.mubr.f32.gmra.mrb[0].mxu0 %v3488
        %v4084 = vpop.f32.mrb[0].mxu0
        %v4085 = vadd.f32 %v3269, %v4084
        %v4086 = vpop.f32.mrb[0].mxu0
        %4087 = vmatprep.mubr.f32.mxu0 0.0
        %4088 = vmatmul.mubr.f32.gmra.mrb[0].mxu0 %v3491
        %v4089 = vpop.f32.mrb[0].mxu0
        %v4090 = vadd.f32 %v3269, %v4089
        %v4091 = vpop.f32.mrb[0].mxu0
        %4092 = vmatprep.mubr.f32.mxu0 0.0
        %4093 = vmatmul.mubr.f32.gmra.mrb[0].mxu0 %v3494
        %v4094 = vpop.f32.mrb[0].mxu0
        %v4095 = vadd.f32 %v3269, %v4094
        %v4096 = vpop.f32.mrb[0].mxu0
        %4097 = vmatprep.mubr.f32.mxu0 0.0
        %4098 = vmatmul.mubr.f32.gmra.mrb[0].mxu0 %v3497
        %v4099 = vpop.f32.mrb[0].mxu0
        %v4100 = vadd.f32 %v3269, %v4099
        %v4101 = vpop.f32.mrb[0].mxu0
        %4102 = vmatprep.mubr.f32.mxu0 0.0
        %4103 = vmatmul.mubr.f32.gmra.mrb[0].mxu0 %v3500
        %v4104 = vpop.f32.mrb[0].mxu0
        %v4105 = vadd.f32 %v3269, %v4104
        %v4106 = vpop.f32.mrb[0].mxu0
        %4107 = vmatprep.mubr.f32.mxu0 0.0
        %4108 = vmatmul.mubr.f32.gmra.mrb[0].mxu0 %v3503
        %v4109 = vpop.f32.mrb[0].mxu0
        %v4110 = vadd.f32 %v3269, %v4109
        %v4111 = vpop.f32.mrb[0].mxu0
        %4112 = vmatprep.mubr.f32.mxu0 0.0
        %4113 = vmatmul.mubr.f32.gmra.mrb[0].mxu0 %v3506
        %v4114 = vpop.f32.mrb[0].mxu0
        %v4115 = vadd.f32 %v3269, %v4114
        %v4116 = vpop.f32.mrb[0].mxu0
        %4117 = vmatprep.mubr.f32.mxu0 0.0
        %4118 = vmatmul.mubr.f32.gmra.mrb[0].mxu0 %v3509
        %v4119 = vpop.f32.mrb[0].mxu0
        %v4120 = vadd.f32 %v3269, %v4119
        %v4121 = vpop.f32.mrb[0].mxu0
        %4122 = vmatprep.mubr.f32.mxu0 0.0
        %4123 = vmatmul.mubr.f32.gmra.mrb[0].mxu0 %v3512
        %v4124 = vpop.f32.mrb[0].mxu0
        %v4125 = vadd.f32 %v3269, %v4124
        %v4126 = vpop.f32.mrb[0].mxu0
        %4127 = vmatprep.mubr.f32.mxu0 0.0
        %4128 = vmatmul.mubr.f32.gmra.mrb[0].mxu0 %v3515
        %v4129 = vpop.f32.mrb[0].mxu0
        %v4130 = vadd.f32 %v3269, %v4129
        %v4131 = vpop.f32.mrb[0].mxu0
        %4132 = vmatprep.mubr.f32.mxu0 0.0
        %4133 = vmatmul.mubr.f32.gmra.mrb[0].mxu0 %v3518
        %v4134 = vpop.f32.mrb[0].mxu0
        %v4135 = vadd.f32 %v3269, %v4134
        %v4136 = vpop.f32.mrb[0].mxu0
        %4137 = vmatprep.mubr.f32.mxu0 0.0
        %4138 = vmatmul.mubr.f32.gmra.mrb[0].mxu0 %v3521
        %v4139 = vpop.f32.mrb[0].mxu0
        %v4140 = vadd.f32 %v3269, %v4139
        %v4141 = vpop.f32.mrb[0].mxu0
        %4142 = vmatprep.mubr.f32.mxu0 0.0
        %4143 = vmatmul.mubr.f32.gmra.mrb[0].mxu0 %v3524
        %v4144 = vpop.f32.mrb[0].mxu0
        %v4145 = vadd.f32 %v3269, %v4144
        %v4146 = vpop.f32.mrb[0].mxu0
        %4147 = vmatprep.mubr.f32.mxu0 0.0
        %4148 = vmatmul.mubr.f32.gmra.mrb[0].mxu0 %v3527
        %v4149 = vpop.f32.mrb[0].mxu0
        %v4150 = vadd.f32 %v3269, %v4149
        %v4151 = vpop.f32.mrb[0].mxu0
        %4152 = vmatprep.mubr.f32.mxu0 0.0
        %4153 = vmatmul.mubr.f32.gmra.mrb[0].mxu0 %v3530
        %v4154 = vpop.f32.mrb[0].mxu0
        %v4155 = vadd.f32 %v3269, %v4154
        %v4156 = vpop.f32.mrb[0].mxu0
        %4157 = vmatprep.mubr.f32.mxu0 0.0
        %4158 = vmatmul.mubr.f32.gmra.mrb[0].mxu0 %v3533
        %v4159 = vpop.f32.mrb[0].mxu0
        %v4160 = vadd.f32 %v3269, %v4159
        %v4161 = vpop.f32.mrb[0].mxu0
        %4162 = vmatprep.mubr.f32.mxu0 0.0
        %4163 = vmatmul.mubr.f32.gmra.mrb[0].mxu0 %v3536
        %v4164 = vpop.f32.mrb[0].mxu0
        %v4165 = vadd.f32 %v3269, %v4164
        %v4166 = vpop.f32.mrb[0].mxu0
        %4167 = vmatprep.mubr.f32.mxu0 0.0
        %4168 = vmatmul.mubr.f32.gmra.mrb[0].mxu0 %v3539
        %v4169 = vpop.f32.mrb[0].mxu0
        %v4170 = vadd.f32 %v3269, %v4169
        %v4171 = vpop.f32.mrb[0].mxu0
        %4172 = vmatprep.mubr.f32.mxu0 0.0
        %4173 = vmatmul.mubr.f32.gmra.mrb[0].mxu0 %v3542
        %v4174 = vpop.f32.mrb[0].mxu0
        %v4175 = vadd.f32 %v3269, %v4174
        %v4176 = vpop.f32.mrb[0].mxu0
        %4177 = vmatprep.mubr.f32.mxu0 0.0
        %4178 = vmatmul.mubr.f32.gmra.mrb[0].mxu0 %v3545
        %v4179 = vpop.f32.mrb[0].mxu0
        %v4180 = vadd.f32 %v3269, %v4179
        %v4181 = vpop.f32.mrb[0].mxu0
        %4182 = vmatprep.mubr.f32.mxu0 0.0
        %4183 = vmatmul.mubr.f32.gmra.mrb[0].mxu0 %v3548
        %v4184 = vpop.f32.mrb[0].mxu0
        %v4185 = vadd.f32 %v3269, %v4184
        %v4186 = vpop.f32.mrb[0].mxu0
        %4187 = vmatprep.mubr.f32.mxu0 0.0
        %4188 = vmatmul.mubr.f32.gmra.mrb[0].mxu0 %v3551
        %v4189 = vpop.f32.mrb[0].mxu0
        %v4190 = vadd.f32 %v3269, %v4189
        %v4191 = vpop.f32.mrb[0].mxu0
        %4192 = vmatprep.mubr.f32.mxu0 0.0
        %4193 = vmatmul.mubr.f32.gmra.mrb[0].mxu0 %v3554
        %v4194 = vpop.f32.mrb[0].mxu0
        %v4195 = vadd.f32 %v3269, %v4194
        %v4196 = vpop.f32.mrb[0].mxu0
        %4197 = vmatprep.mubr.f32.mxu0 0.0
        %4198 = vmatmul.mubr.f32.gmra.mrb[0].mxu0 %v3557
        %v4199 = vpop.f32.mrb[0].mxu0
        %v4200 = vadd.f32 %v3269, %v4199
        %v4201 = vpop.f32.mrb[0].mxu0
        %4202 = vmatprep.mubr.f32.mxu0 0.0
        %4203 = vmatmul.mubr.f32.gmra.mrb[0].mxu0 %v3560
        %v4204 = vpop.f32.mrb[0].mxu0
        %v4205 = vadd.f32 %v3269, %v4204
        %v4206 = vpop.f32.mrb[0].mxu0
        %4207 = vmatprep.mubr.f32.mxu0 0.0
        %4208 = vmatmul.mubr.f32.gmra.mrb[0].mxu0 %v3563
        %v4209 = vpop.f32.mrb[0].mxu0
        %v4210 = vadd.f32 %v3269, %v4209
        %v4211 = vpop.f32.mrb[0].mxu0
        %4212 = vmatprep.mubr.f32.mxu0 0.0
        %4213 = vmatmul.mubr.f32.gmra.mrb[0].mxu0 %v3566
        %v4214 = vpop.f32.mrb[0].mxu0
        %v4215 = vadd.f32 %v3269, %v4214
        %v4216 = vpop.f32.mrb[0].mxu0
        %4217 = vmatprep.mubr.f32.mxu0 0.0
        %4218 = vmatmul.mubr.f32.gmra.mrb[0].mxu0 %v3569
        %v4219 = vpop.f32.mrb[0].mxu0
        %v4220 = vadd.f32 %v3269, %v4219
        %v4221 = vpop.f32.mrb[0].mxu0
        %4222 = vmatprep.mubr.f32.mxu0 0.0
        %4223 = vmatmul.mubr.f32.gmra.mrb[0].mxu0 %v3572
        %v4224 = vpop.f32.mrb[0].mxu0
        %v4225 = vadd.f32 %v3269, %v4224
        %v4226 = vpop.f32.mrb[0].mxu0
        %4227 = vmatprep.mubr.f32.mxu0 0.0
        %4228 = vmatmul.mubr.f32.gmra.mrb[0].mxu0 %v3575
        %v4229 = vpop.f32.mrb[0].mxu0
        %v4230 = vadd.f32 %v3269, %v4229
        %v4231 = vpop.f32.mrb[0].mxu0
        %4232 = vmatprep.mubr.f32.mxu0 0.0
        %4233 = vmatmul.mubr.f32.gmra.mrb[0].mxu0 %v3578
        %v4234 = vpop.f32.mrb[0].mxu0
        %v4235 = vadd.f32 %v3269, %v4234
        %v4236 = vpop.f32.mrb[0].mxu0
        %4237 = vmatprep.mubr.f32.mxu0 0.0
        %4238 = vmatmul.mubr.f32.gmra.mrb[0].mxu0 %v3581
        %v4239 = vpop.f32.mrb[0].mxu0
        %v4240 = vadd.f32 %v3269, %v4239
        %v4241 = vpop.f32.mrb[0].mxu0
        %4242 = vmatprep.mubr.f32.mxu0 0.0
        %4243 = vmatmul.mubr.f32.gmra.mrb[0].mxu0 %v3584
        %v4244 = vpop.f32.mrb[0].mxu0
        %v4245 = vadd.f32 %v3269, %v4244
        %v4246 = vpop.f32.mrb[0].mxu0
        %4247 = vmatprep.mubr.f32.mxu0 0.0
        %4248 = vmatmul.mubr.f32.gmra.mrb[0].mxu0 %v3587
        %v4249 = vpop.f32.mrb[0].mxu0
        %v4250 = vadd.f32 %v3269, %v4249
        %v4251 = vpop.f32.mrb[0].mxu0
        %4252 = vmatprep.mubr.f32.mxu0 0.0
        %4253 = vmatmul.mubr.f32.gmra.mrb[0].mxu0 %v3590
        %v4254 = vpop.f32.mrb[0].mxu0
        %v4255 = vadd.f32 %v3269, %v4254
        %v4256 = vpop.f32.mrb[0].mxu0
        %4257 = vmatprep.mubr.f32.mxu0 0.0
        %4258 = vmatmul.mubr.f32.gmra.mrb[0].mxu0 %v3593
        %v4259 = vpop.f32.mrb[0].mxu0
        %v4260 = vadd.f32 %v3269, %v4259
        %v4261 = vpop.f32.mrb[0].mxu0
        %4262 = vmatprep.mubr.f32.mxu0 0.0
        %4263 = vmatmul.mubr.f32.gmra.mrb[0].mxu0 %v3596
        %v4264 = vpop.f32.mrb[0].mxu0
        %v4265 = vadd.f32 %v3269, %v4264
        %v4266 = vpop.f32.mrb[0].mxu0
        %4267 = vmatprep.mubr.f32.mxu0 0.0
        %4268 = vmatmul.mubr.f32.gmra.mrb[0].mxu0 %v3599
        %v4269 = vpop.f32.mrb[0].mxu0
        %v4270 = vadd.f32 %v3269, %v4269
        %v4271 = vpop.f32.mrb[0].mxu0
        %4272 = vmatprep.mubr.f32.mxu0 0.0
        %4273 = vmatmul.mubr.f32.gmra.mrb[0].mxu0 %v3602
        %v4274 = vpop.f32.mrb[0].mxu0
        %v4275 = vadd.f32 %v3269, %v4274
        %v4276 = vpop.f32.mrb[0].mxu0
        %4277 = vmatprep.mubr.f32.mxu0 0.0
        %4278 = vmatmul.mubr.f32.gmra.mrb[0].mxu0 %v3605
        %v4279 = vpop.f32.mrb[0].mxu0
        %v4280 = vadd.f32 %v3269, %v4279
        %v4281 = vpop.f32.mrb[0].mxu0
        %4282 = vmatprep.mubr.f32.mxu0 0.0
        %4283 = vmatmul.mubr.f32.gmra.mrb[0].mxu0 %v3608
        %v4284 = vpop.f32.mrb[0].mxu0
        %v4285 = vadd.f32 %v3269, %v4284
        %v4286 = vpop.f32.mrb[0].mxu0
        %4287 = vmatprep.mubr.f32.mxu0 0.0
        %4288 = vmatmul.mubr.f32.gmra.mrb[0].mxu0 %v3611
        %v4289 = vpop.f32.mrb[0].mxu0
        %v4290 = vadd.f32 %v3269, %v4289
        %v4291 = vpop.f32.mrb[0].mxu0
        %4292 = vmatprep.mubr.f32.mxu0 0.0
        %4293 = vmatmul.mubr.f32.gmra.mrb[0].mxu0 %v3614
        %v4294 = vpop.f32.mrb[0].mxu0
        %v4295 = vadd.f32 %v3269, %v4294
        %v4296 = vpop.f32.mrb[0].mxu0
        %4297 = vmatprep.mubr.f32.mxu0 0.0
        %4298 = vmatmul.mubr.f32.gmra.mrb[0].mxu0 %v3617
        %v4299 = vpop.f32.mrb[0].mxu0
        %v4300 = vadd.f32 %v3269, %v4299
        %v4301 = vpop.f32.mrb[0].mxu0
        %4302 = vmatprep.mubr.f32.mxu0 0.0
        %4303 = vmatmul.mubr.f32.gmra.mrb[0].mxu0 %v3620
        %v4304 = vpop.f32.mrb[0].mxu0
        %v4305 = vadd.f32 %v3269, %v4304
        %v4306 = vpop.f32.mrb[0].mxu0
        %4307 = vmatprep.mubr.f32.mxu0 0.0
        %4308 = vmatmul.mubr.f32.gmra.mrb[0].mxu0 %v3623
        %v4309 = vpop.f32.mrb[0].mxu0
        %v4310 = vadd.f32 %v3269, %v4309
        %v4311 = vpop.f32.mrb[0].mxu0
        %4312 = vmatprep.mubr.f32.mxu0 0.0
        %4313 = vmatmul.mubr.f32.gmra.mrb[0].mxu0 %v3626
        %v4314 = vpop.f32.mrb[0].mxu0
        %v4315 = vadd.f32 %v3269, %v4314
        %v4316 = vpop.f32.mrb[0].mxu0
        %4317 = vmatprep.mubr.f32.mxu0 0.0
        %4318 = vmatmul.mubr.f32.gmra.mrb[0].mxu0 %v3629
        %v4319 = vpop.f32.mrb[0].mxu0
        %v4320 = vadd.f32 %v3269, %v4319
        %v4321 = vpop.f32.mrb[0].mxu0
        %4322 = vmatprep.mubr.f32.mxu0 0.0
        %4323 = vmatmul.mubr.f32.gmra.mrb[0].mxu0 %v3632
        %v4324 = vpop.f32.mrb[0].mxu0
        %v4325 = vadd.f32 %v3269, %v4324
        %v4326 = vpop.f32.mrb[0].mxu0
        %4327 = vmatprep.mubr.f32.mxu0 0.0
        %4328 = vmatmul.mubr.f32.gmra.mrb[0].mxu0 %v3635
        %v4329 = vpop.f32.mrb[0].mxu0
        %v4330 = vadd.f32 %v3269, %v4329
        %v4331 = vpop.f32.mrb[0].mxu0
        %4332 = vmatprep.mubr.f32.mxu0 0.0
        %4333 = vmatmul.mubr.f32.gmra.mrb[0].mxu0 %v3638
        %v4334 = vpop.f32.mrb[0].mxu0
        %v4335 = vadd.f32 %v3269, %v4334
        %v4336 = vpop.f32.mrb[0].mxu0
        %4337 = vmatprep.mubr.f32.mxu0 0.0
        %4338 = vmatmul.mubr.f32.gmra.mrb[0].mxu0 %v3641
        %v4339 = vpop.f32.mrb[0].mxu0
        %v4340 = vadd.f32 %v3269, %v4339
        %v4341 = vpop.f32.mrb[0].mxu0
        %4342 = vmatprep.mubr.f32.mxu0 0.0
        %4343 = vmatmul.mubr.f32.gmra.mrb[0].mxu0 %v3644
        %v4344 = vpop.f32.mrb[0].mxu0
        %v4345 = vadd.f32 %v3269, %v4344
        %v4346 = vpop.f32.mrb[0].mxu0
        %4347 = vmatprep.mubr.f32.mxu0 0.0
        %4348 = vmatmul.mubr.f32.gmra.mrb[0].mxu0 %v3647
        %v4349 = vpop.f32.mrb[0].mxu0
        %v4350 = vadd.f32 %v3269, %v4349
        %v4351 = vpop.f32.mrb[0].mxu0
        %4352 = vmatprep.mubr.f32.mxu0 0.0
        %4353 = vmatmul.mubr.f32.gmra.mrb[0].mxu0 %v3650
        %v4354 = vpop.f32.mrb[0].mxu0
        %v4355 = vadd.f32 %v3269, %v4354
        %v4356 = vpop.f32.mrb[0].mxu0
        %4357 = vmatprep.mubr.f32.mxu0 0.0
        %4358 = vmatmul.mubr.f32.gmra.mrb[0].mxu0 %v3653
        %v4359 = vpop.f32.mrb[0].mxu0
        %v4360 = vadd.f32 %v3269, %v4359
        %v4361 = vpop.f32.mrb[0].mxu0
        %4362 = vdwg.mxu0
        %v4363 = vtanh.pop %v3725
        %v4364 = vtanh.pop %v3730
        %v4365 = vtanh.pop %v3735
        %v4366 = vtanh.pop %v3740
        %v4367 = vtanh.pop %v3745
        %v4368 = vtanh.pop %v3750
        %v4369 = vtanh.pop %v3755
        %v4370 = vtanh.pop %v3760
        %v4371 = vtanh.pop %v3765
        %v4372 = vtanh.pop %v3770
        %v4373 = vtanh.pop %v3775
        %v4374 = vtanh.pop %v3780
        %v4375 = vtanh.pop %v3785
        %v4376 = vtanh.pop %v3790
        %v4377 = vtanh.pop %v3795
        %v4378 = vtanh.pop %v3800
        %v4379 = vtanh.pop %v3805
        %v4380 = vtanh.pop %v3810
        %v4381 = vtanh.pop %v3815
        %v4382 = vtanh.pop %v3820
        %v4383 = vtanh.pop %v3825
        %v4384 = vtanh.pop %v3830
        %v4385 = vtanh.pop %v3835
        %v4386 = vtanh.pop %v3840
        %v4387 = vtanh.pop %v3845
        %v4388 = vtanh.pop %v3850
        %v4389 = vtanh.pop %v3855
        %v4390 = vtanh.pop %v3860
        %v4391 = vtanh.pop %v3865
        %v4392 = vtanh.pop %v3870
        %v4393 = vtanh.pop %v3875
        %v4394 = vtanh.pop %v3880
        %v4395 = vtanh.pop %v3885
        %v4396 = vtanh.pop %v3890
        %v4397 = vtanh.pop %v3895
        %v4398 = vtanh.pop %v3900
        %v4399 = vtanh.pop %v3905
        %v4400 = vtanh.pop %v3910
        %v4401 = vtanh.pop %v3915
        %v4402 = vtanh.pop %v3920
        %v4403 = vtanh.pop %v3925
        %v4404 = vtanh.pop %v3930
        %v4405 = vtanh.pop %v3935
        %v4406 = vtanh.pop %v3940
        %v4407 = vtanh.pop %v3945
        %v4408 = vtanh.pop %v3950
        %v4409 = vtanh.pop %v3955
        %v4410 = vtanh.pop %v3960
        %v4411 = vtanh.pop %v3965
        %v4412 = vtanh.pop %v3970
        %v4413 = vtanh.pop %v3975
        %v4414 = vtanh.pop %v3980
        %v4415 = vtanh.pop %v3985
        %v4416 = vtanh.pop %v3990
        %v4417 = vtanh.pop %v3995
        %v4418 = vtanh.pop %v4000
        %v4419 = vtanh.pop %v4005
        %v4420 = vtanh.pop %v4010
        %v4421 = vtanh.pop %v4015
        %v4422 = vtanh.pop %v4020
        %v4423 = vtanh.pop %v4025
        %v4424 = vtanh.pop %v4030
        %v4425 = vtanh.pop %v4035
        %v4426 = vtanh.pop %v4040
        %v4427 = vtanh.pop %v4045
        %v4428 = vtanh.pop %v4050
        %v4429 = vtanh.pop %v4055
        %v4430 = vtanh.pop %v4060
        %v4431 = vtanh.pop %v4065
        %v4432 = vtanh.pop %v4070
        %v4433 = vtanh.pop %v4075
        %v4434 = vtanh.pop %v4080
        %v4435 = vtanh.pop %v4085
        %v4436 = vtanh.pop %v4090
        %v4437 = vtanh.pop %v4095
        %v4438 = vtanh.pop %v4100
        %v4439 = vtanh.pop %v4105
        %v4440 = vtanh.pop %v4110
        %v4441 = vtanh.pop %v4115
        %v4442 = vtanh.pop %v4120
        %v4443 = vtanh.pop %v4125
        %v4444 = vtanh.pop %v4130
        %v4445 = vtanh.pop %v4135
        %v4446 = vtanh.pop %v4140
        %v4447 = vtanh.pop %v4145
        %v4448 = vtanh.pop %v4150
        %v4449 = vtanh.pop %v4155
        %v4450 = vtanh.pop %v4160
        %v4451 = vtanh.pop %v4165
        %v4452 = vtanh.pop %v4170
        %v4453 = vtanh.pop %v4175
        %v4454 = vtanh.pop %v4180
        %v4455 = vtanh.pop %v4185
        %v4456 = vtanh.pop %v4190
        %v4457 = vtanh.pop %v4195
        %v4458 = vtanh.pop %v4200
        %v4459 = vtanh.pop %v4205
        %v4460 = vtanh.pop %v4210
        %v4461 = vtanh.pop %v4215
        %v4462 = vtanh.pop %v4220
        %v4463 = vtanh.pop %v4225
        %v4464 = vtanh.pop %v4230
        %v4465 = vtanh.pop %v4235
        %v4466 = vtanh.pop %v4240
        %v4467 = vtanh.pop %v4245
        %v4468 = vtanh.pop %v4250
        %v4469 = vtanh.pop %v4255
        %v4470 = vtanh.pop %v4260
        %v4471 = vtanh.pop %v4265
        %v4472 = vtanh.pop %v4270
        %v4473 = vtanh.pop %v4275
        %v4474 = vtanh.pop %v4280
        %v4475 = vtanh.pop %v4285
        %v4476 = vtanh.pop %v4290
        %v4477 = vtanh.pop %v4295
        %v4478 = vtanh.pop %v4300
        %v4479 = vtanh.pop %v4305
        %v4480 = vtanh.pop %v4310
        %v4481 = vtanh.pop %v4315
        %v4482 = vtanh.pop %v4320
        %v4483 = vtanh.pop %v4325
        %v4484 = vtanh.pop %v4330
        %v4485 = vtanh.pop %v4335
        %v4486 = vtanh.pop %v4340
        %v4487 = vtanh.pop %v4345
        %v4488 = vtanh.pop %v4350
        %v4489 = vtanh.pop %v4355
        %v4490 = vtanh.pop %v4360
        %v4491 = vld [vmem:[%s10] sm:$0xff]
        %v4492 = vld [vmem:[%s10 + $0x8] sm:$0xff]
        %v4493 = vld [vmem:[%s10 + $0x10] sm:$0xff]
        %v4494 = vld [vmem:[%s10 + $0x18] sm:$0x3f]
        %v4495 = vld [vmem:[#allocation2] sm:$0x1]
        %v4497 = vlaneseq
        %v4498 = vshrl.u32 %v4497, 7
        %v4499 = vsub.s32 0, %v4498
        %v4500 = vrot.slane %v4495, %v4499
        %v4503 = vsel %vm2038, %v4363, 0
        %v4506 = vsel %vm2038, %v4364, 0
        %v4509 = vsel %vm2038, %v4365, 0
        %v4512 = vsel %vm2038, %v4366, 0
        %v4515 = vsel %vm2038, %v4367, 0
        %v4518 = vsel %vm2038, %v4368, 0
        %v4521 = vsel %vm2038, %v4369, 0
        %v4524 = vsel %vm2038, %v4370, 0
        %v4527 = vsel %vm2038, %v4371, 0
        %v4530 = vsel %vm2038, %v4372, 0
        %v4533 = vsel %vm2038, %v4373, 0
        %v4536 = vsel %vm2038, %v4374, 0
        %v4539 = vsel %vm2038, %v4375, 0
        %v4542 = vsel %vm2038, %v4376, 0
        %v4545 = vsel %vm2038, %v4377, 0
        %v4548 = vsel %vm2038, %v4378, 0
        %v4551 = vsel %vm2038, %v4379, 0
        %v4554 = vsel %vm2038, %v4380, 0
        %v4557 = vsel %vm2038, %v4381, 0
        %v4560 = vsel %vm2038, %v4382, 0
        %v4563 = vsel %vm2038, %v4383, 0
        %v4566 = vsel %vm2038, %v4384, 0
        %v4569 = vsel %vm2038, %v4385, 0
        %v4572 = vsel %vm2038, %v4386, 0
        %v4575 = vsel %vm2038, %v4387, 0
        %v4578 = vsel %vm2038, %v4388, 0
        %v4581 = vsel %vm2038, %v4389, 0
        %v4584 = vsel %vm2038, %v4390, 0
        %v4587 = vsel %vm2038, %v4391, 0
        %v4590 = vsel %vm2038, %v4392, 0
        %v4593 = vsel %vm2038, %v4393, 0
        %v4596 = vsel %vm2038, %v4394, 0
        %v4599 = vsel %vm2038, %v4395, 0
        %v4602 = vsel %vm2038, %v4396, 0
        %v4605 = vsel %vm2038, %v4397, 0
        %v4608 = vsel %vm2038, %v4398, 0
        %v4611 = vsel %vm2038, %v4399, 0
        %v4614 = vsel %vm2038, %v4400, 0
        %v4617 = vsel %vm2038, %v4401, 0
        %v4620 = vsel %vm2038, %v4402, 0
        %v4623 = vsel %vm2038, %v4403, 0
        %v4626 = vsel %vm2038, %v4404, 0
        %v4629 = vsel %vm2038, %v4405, 0
        %v4632 = vsel %vm2038, %v4406, 0
        %v4635 = vsel %vm2038, %v4407, 0
        %v4638 = vsel %vm2038, %v4408, 0
        %v4641 = vsel %vm2038, %v4409, 0
        %v4644 = vsel %vm2038, %v4410, 0
        %v4647 = vsel %vm2038, %v4411, 0
        %v4650 = vsel %vm2038, %v4412, 0
        %v4653 = vsel %vm2038, %v4413, 0
        %v4656 = vsel %vm2038, %v4414, 0
        %v4659 = vsel %vm2038, %v4415, 0
        %v4662 = vsel %vm2038, %v4416, 0
        %v4665 = vsel %vm2038, %v4417, 0
        %v4668 = vsel %vm2038, %v4418, 0
        %v4671 = vsel %vm2038, %v4419, 0
        %v4674 = vsel %vm2038, %v4420, 0
        %v4677 = vsel %vm2038, %v4421, 0
        %v4680 = vsel %vm2038, %v4422, 0
        %v4683 = vsel %vm2038, %v4423, 0
        %v4686 = vsel %vm2038, %v4424, 0
        %v4689 = vsel %vm2038, %v4425, 0
        %v4692 = vsel %vm2038, %v4426, 0
        %v4695 = vsel %vm2038, %v4427, 0
        %v4698 = vsel %vm2038, %v4428, 0
        %v4701 = vsel %vm2038, %v4429, 0
        %v4704 = vsel %vm2038, %v4430, 0
        %v4707 = vsel %vm2038, %v4431, 0
        %v4710 = vsel %vm2038, %v4432, 0
        %v4713 = vsel %vm2038, %v4433, 0
        %v4716 = vsel %vm2038, %v4434, 0
        %v4719 = vsel %vm2038, %v4435, 0
        %v4722 = vsel %vm2038, %v4436, 0
        %v4725 = vsel %vm2038, %v4437, 0
        %v4728 = vsel %vm2038, %v4438, 0
        %v4731 = vsel %vm2038, %v4439, 0
        %v4734 = vsel %vm2038, %v4440, 0
        %v4737 = vsel %vm2038, %v4441, 0
        %v4740 = vsel %vm2038, %v4442, 0
        %v4743 = vsel %vm2038, %v4443, 0
        %v4746 = vsel %vm2038, %v4444, 0
        %v4749 = vsel %vm2038, %v4445, 0
        %v4752 = vsel %vm2038, %v4446, 0
        %v4755 = vsel %vm2038, %v4447, 0
        %v4758 = vsel %vm2038, %v4448, 0
        %v4761 = vsel %vm2038, %v4449, 0
        %v4764 = vsel %vm2038, %v4450, 0
        %v4767 = vsel %vm2038, %v4451, 0
        %v4770 = vsel %vm2038, %v4452, 0
        %v4773 = vsel %vm2038, %v4453, 0
        %v4776 = vsel %vm2038, %v4454, 0
        %v4779 = vsel %vm2038, %v4455, 0
        %v4782 = vsel %vm2038, %v4456, 0
        %v4785 = vsel %vm2038, %v4457, 0
        %v4788 = vsel %vm2038, %v4458, 0
        %v4791 = vsel %vm2038, %v4459, 0
        %v4794 = vsel %vm2038, %v4460, 0
        %v4797 = vsel %vm2038, %v4461, 0
        %v4800 = vsel %vm2038, %v4462, 0
        %v4803 = vsel %vm2038, %v4463, 0
        %v4806 = vsel %vm2038, %v4464, 0
        %v4809 = vsel %vm2038, %v4465, 0
        %v4812 = vsel %vm2038, %v4466, 0
        %v4815 = vsel %vm2038, %v4467, 0
        %v4818 = vsel %vm2038, %v4468, 0
        %v4821 = vsel %vm2038, %v4469, 0
        %v4824 = vsel %vm2038, %v4470, 0
        %v4827 = vsel %vm2038, %v4471, 0
        %v4830 = vsel %vm2038, %v4472, 0
        %v4833 = vsel %vm2038, %v4473, 0
        %v4836 = vsel %vm2038, %v4474, 0
        %v4839 = vsel %vm2038, %v4475, 0
        %v4842 = vsel %vm2038, %v4476, 0
        %v4845 = vsel %vm2038, %v4477, 0
        %v4848 = vsel %vm2038, %v4478, 0
        %v4851 = vsel %vm2038, %v4479, 0
        %v4854 = vsel %vm2038, %v4480, 0
        %v4857 = vsel %vm2038, %v4481, 0
        %v4860 = vsel %vm2038, %v4482, 0
        %v4863 = vsel %vm2038, %v4483, 0
        %v4866 = vsel %vm2038, %v4484, 0
        %v4869 = vsel %vm2038, %v4485, 0
        %v4872 = vsel %vm2038, %v4486, 0
        %v4875 = vsel %vm2038, %v4487, 0
        %v4878 = vsel %vm2038, %v4488, 0
        %v4881 = vsel %vm2038, %v4489, 0
        %v4884 = vsel %vm2038, %v4490, 0
        %v4887 = vsel %vm2423, %v4494, 0
        %4889 = vmatprep.subr.mxu0 0.0
        %4890 = vmatpush1.msra.mxu0 %v4491
        %4891 = vmatprep.subr.mxu0 0.0
        %4892 = vmatpush1.msra.mxu0 %v4492
        %4893 = vmatprep.subr.mxu0 0.0
        %4894 = vmatpush1.msra.mxu0 %v4493
        %4895 = vmatprep.subr.mxu0 0.0
        %4896 = vmatpush1.msra.mxu0 %v4887
        %4897 = vmatprep.subr.mxu0 0.0
        %4898 = vmatpush1.msra.mxu0 0.0
        %4899 = vmatprep.subr.mxu0 0.0
        %4900 = vmatpush1.msra.mxu0 0.0
        %4901 = vmatprep.subr.mxu0 0.0
        %4902 = vmatpush1.msra.mxu0 0.0
        %4903 = vmatprep.subr.mxu0 0.0
        %4904 = vmatpush1.msra.mxu0 0.0
        %4905 = vmatprep.subr.mxu0 0.0
        %4906 = vmatpush1.msra.mxu0 0.0
        %4907 = vmatprep.subr.mxu0 0.0
        %4908 = vmatpush1.msra.mxu0 0.0
        %4909 = vmatprep.subr.mxu0 0.0
        %4910 = vmatpush1.msra.mxu0 0.0
        %4911 = vmatprep.subr.mxu0 0.0
        %4912 = vmatpush1.msra.mxu0 0.0
        %4913 = vmatprep.subr.mxu0 0.0
        %4914 = vmatpush1.msra.mxu0 0.0
        %4915 = vmatprep.subr.mxu0 0.0
        %4916 = vmatpush1.msra.mxu0 0.0
        %4917 = vmatprep.subr.mxu0 0.0
        %4918 = vmatpush1.msra.mxu0 0.0
        %4919 = vmatprep.subr.mxu0 0.0
        %4920 = vmatpush1.msra.mxu0 0.0
        %4921 = vmatprep.subr.mxu0 0.0
        %4922 = vmatpush1.msra.mxu0 0.0
        %4923 = vmatprep.subr.mxu0 0.0
        %4924 = vmatpush1.msra.mxu0 0.0
        %4925 = vmatprep.subr.mxu0 0.0
        %4926 = vmatpush1.msra.mxu0 0.0
        %4927 = vmatprep.subr.mxu0 0.0
        %4928 = vmatpush1.msra.mxu0 0.0
        %4929 = vmatprep.subr.mxu0 0.0
        %4930 = vmatpush1.msra.mxu0 0.0
        %4931 = vmatprep.subr.mxu0 0.0
        %4932 = vmatpush1.msra.mxu0 0.0
        %4933 = vmatprep.subr.mxu0 0.0
        %4934 = vmatpush1.msra.mxu0 0.0
        %4935 = vmatprep.subr.mxu0 0.0
        %4936 = vmatpush1.msra.mxu0 0.0
        %4937 = vmatprep.subr.mxu0 0.0
        %4938 = vmatpush1.msra.mxu0 0.0
        %4939 = vmatprep.subr.mxu0 0.0
        %4940 = vmatpush1.msra.mxu0 0.0
        %4941 = vmatprep.subr.mxu0 0.0
        %4942 = vmatpush1.msra.mxu0 0.0
        %4943 = vmatprep.subr.mxu0 0.0
        %4944 = vmatpush1.msra.mxu0 0.0
        %4945 = vmatprep.subr.mxu0 0.0
        %4946 = vmatpush1.msra.mxu0 0.0
        %4947 = vmatprep.subr.mxu0 0.0
        %4948 = vmatpush1.msra.mxu0 0.0
        %4949 = vmatprep.subr.mxu0 0.0
        %4950 = vmatpush1.msra.mxu0 0.0
        %4951 = vmatprep.subr.mxu0 0.0
        %4952 = vmatpush1.msra.mxu0 0.0
        %4953 = vmatprep.mubr.f32.mxu0 0.0
        %4954 = vmatmul.mubr.f32.gmra.mrb[0].mxu0 %v4503
        %v4955 = vpop.f32.mrb[0].mxu0
        %v4956 = vadd.f32 %v4500, %v4955
        %v4957 = vpop.f32.mrb[0].mxu0
        %4958 = vmatprep.mubr.f32.mxu0 0.0
        %4959 = vmatmul.mubr.f32.gmra.mrb[0].mxu0 %v4506
        %v4960 = vpop.f32.mrb[0].mxu0
        %v4961 = vadd.f32 %v4500, %v4960
        %v4962 = vpop.f32.mrb[0].mxu0
        %4963 = vmatprep.mubr.f32.mxu0 0.0
        %4964 = vmatmul.mubr.f32.gmra.mrb[0].mxu0 %v4509
        %v4965 = vpop.f32.mrb[0].mxu0
        %v4966 = vadd.f32 %v4500, %v4965
        %v4967 = vpop.f32.mrb[0].mxu0
        %4968 = vmatprep.mubr.f32.mxu0 0.0
        %4969 = vmatmul.mubr.f32.gmra.mrb[0].mxu0 %v4512
        %v4970 = vpop.f32.mrb[0].mxu0
        %v4971 = vadd.f32 %v4500, %v4970
        %v4972 = vpop.f32.mrb[0].mxu0
        %4973 = vmatprep.mubr.f32.mxu0 0.0
        %4974 = vmatmul.mubr.f32.gmra.mrb[0].mxu0 %v4515
        %v4975 = vpop.f32.mrb[0].mxu0
        %v4976 = vadd.f32 %v4500, %v4975
        %v4977 = vpop.f32.mrb[0].mxu0
        %4978 = vmatprep.mubr.f32.mxu0 0.0
        %4979 = vmatmul.mubr.f32.gmra.mrb[0].mxu0 %v4518
        %v4980 = vpop.f32.mrb[0].mxu0
        %v4981 = vadd.f32 %v4500, %v4980
        %v4982 = vpop.f32.mrb[0].mxu0
        %4983 = vmatprep.mubr.f32.mxu0 0.0
        %4984 = vmatmul.mubr.f32.gmra.mrb[0].mxu0 %v4521
        %v4985 = vpop.f32.mrb[0].mxu0
        %v4986 = vadd.f32 %v4500, %v4985
        %v4987 = vpop.f32.mrb[0].mxu0
        %4988 = vmatprep.mubr.f32.mxu0 0.0
        %4989 = vmatmul.mubr.f32.gmra.mrb[0].mxu0 %v4524
        %v4990 = vpop.f32.mrb[0].mxu0
        %v4991 = vadd.f32 %v4500, %v4990
        %v4992 = vpop.f32.mrb[0].mxu0
        %4993 = vmatprep.mubr.f32.mxu0 0.0
        %4994 = vmatmul.mubr.f32.gmra.mrb[0].mxu0 %v4527
        %v4995 = vpop.f32.mrb[0].mxu0
        %v4996 = vadd.f32 %v4500, %v4995
        %v4997 = vpop.f32.mrb[0].mxu0
        %4998 = vmatprep.mubr.f32.mxu0 0.0
        %4999 = vmatmul.mubr.f32.gmra.mrb[0].mxu0 %v4530
        %v5000 = vpop.f32.mrb[0].mxu0
        %v5001 = vadd.f32 %v4500, %v5000
        %v5002 = vpop.f32.mrb[0].mxu0
        %5003 = vmatprep.mubr.f32.mxu0 0.0
        %5004 = vmatmul.mubr.f32.gmra.mrb[0].mxu0 %v4533
        %v5005 = vpop.f32.mrb[0].mxu0
        %v5006 = vadd.f32 %v4500, %v5005
        %v5007 = vpop.f32.mrb[0].mxu0
        %5008 = vmatprep.mubr.f32.mxu0 0.0
        %5009 = vmatmul.mubr.f32.gmra.mrb[0].mxu0 %v4536
        %v5010 = vpop.f32.mrb[0].mxu0
        %v5011 = vadd.f32 %v4500, %v5010
        %v5012 = vpop.f32.mrb[0].mxu0
        %5013 = vmatprep.mubr.f32.mxu0 0.0
        %5014 = vmatmul.mubr.f32.gmra.mrb[0].mxu0 %v4539
        %v5015 = vpop.f32.mrb[0].mxu0
        %v5016 = vadd.f32 %v4500, %v5015
        %v5017 = vpop.f32.mrb[0].mxu0
        %5018 = vmatprep.mubr.f32.mxu0 0.0
        %5019 = vmatmul.mubr.f32.gmra.mrb[0].mxu0 %v4542
        %v5020 = vpop.f32.mrb[0].mxu0
        %v5021 = vadd.f32 %v4500, %v5020
        %v5022 = vpop.f32.mrb[0].mxu0
        %5023 = vmatprep.mubr.f32.mxu0 0.0
        %5024 = vmatmul.mubr.f32.gmra.mrb[0].mxu0 %v4545
        %v5025 = vpop.f32.mrb[0].mxu0
        %v5026 = vadd.f32 %v4500, %v5025
        %v5027 = vpop.f32.mrb[0].mxu0
        %5028 = vmatprep.mubr.f32.mxu0 0.0
        %5029 = vmatmul.mubr.f32.gmra.mrb[0].mxu0 %v4548
        %v5030 = vpop.f32.mrb[0].mxu0
        %v5031 = vadd.f32 %v4500, %v5030
        %v5032 = vpop.f32.mrb[0].mxu0
        %5033 = vmatprep.mubr.f32.mxu0 0.0
        %5034 = vmatmul.mubr.f32.gmra.mrb[0].mxu0 %v4551
        %v5035 = vpop.f32.mrb[0].mxu0
        %v5036 = vadd.f32 %v4500, %v5035
        %v5037 = vpop.f32.mrb[0].mxu0
        %5038 = vmatprep.mubr.f32.mxu0 0.0
        %5039 = vmatmul.mubr.f32.gmra.mrb[0].mxu0 %v4554
        %v5040 = vpop.f32.mrb[0].mxu0
        %v5041 = vadd.f32 %v4500, %v5040
        %v5042 = vpop.f32.mrb[0].mxu0
        %5043 = vmatprep.mubr.f32.mxu0 0.0
        %5044 = vmatmul.mubr.f32.gmra.mrb[0].mxu0 %v4557
        %v5045 = vpop.f32.mrb[0].mxu0
        %v5046 = vadd.f32 %v4500, %v5045
        %v5047 = vpop.f32.mrb[0].mxu0
        %5048 = vmatprep.mubr.f32.mxu0 0.0
        %5049 = vmatmul.mubr.f32.gmra.mrb[0].mxu0 %v4560
        %v5050 = vpop.f32.mrb[0].mxu0
        %v5051 = vadd.f32 %v4500, %v5050
        %v5052 = vpop.f32.mrb[0].mxu0
        %5053 = vmatprep.mubr.f32.mxu0 0.0
        %5054 = vmatmul.mubr.f32.gmra.mrb[0].mxu0 %v4563
        %v5055 = vpop.f32.mrb[0].mxu0
        %v5056 = vadd.f32 %v4500, %v5055
        %v5057 = vpop.f32.mrb[0].mxu0
        %5058 = vmatprep.mubr.f32.mxu0 0.0
        %5059 = vmatmul.mubr.f32.gmra.mrb[0].mxu0 %v4566
        %v5060 = vpop.f32.mrb[0].mxu0
        %v5061 = vadd.f32 %v4500, %v5060
        %v5062 = vpop.f32.mrb[0].mxu0
        %5063 = vmatprep.mubr.f32.mxu0 0.0
        %5064 = vmatmul.mubr.f32.gmra.mrb[0].mxu0 %v4569
        %v5065 = vpop.f32.mrb[0].mxu0
        %v5066 = vadd.f32 %v4500, %v5065
        %v5067 = vpop.f32.mrb[0].mxu0
        %5068 = vmatprep.mubr.f32.mxu0 0.0
        %5069 = vmatmul.mubr.f32.gmra.mrb[0].mxu0 %v4572
        %v5070 = vpop.f32.mrb[0].mxu0
        %v5071 = vadd.f32 %v4500, %v5070
        %v5072 = vpop.f32.mrb[0].mxu0
        %5073 = vmatprep.mubr.f32.mxu0 0.0
        %5074 = vmatmul.mubr.f32.gmra.mrb[0].mxu0 %v4575
        %v5075 = vpop.f32.mrb[0].mxu0
        %v5076 = vadd.f32 %v4500, %v5075
        %v5077 = vpop.f32.mrb[0].mxu0
        %5078 = vmatprep.mubr.f32.mxu0 0.0
        %5079 = vmatmul.mubr.f32.gmra.mrb[0].mxu0 %v4578
        %v5080 = vpop.f32.mrb[0].mxu0
        %v5081 = vadd.f32 %v4500, %v5080
        %v5082 = vpop.f32.mrb[0].mxu0
        %5083 = vmatprep.mubr.f32.mxu0 0.0
        %5084 = vmatmul.mubr.f32.gmra.mrb[0].mxu0 %v4581
        %v5085 = vpop.f32.mrb[0].mxu0
        %v5086 = vadd.f32 %v4500, %v5085
        %v5087 = vpop.f32.mrb[0].mxu0
        %5088 = vmatprep.mubr.f32.mxu0 0.0
        %5089 = vmatmul.mubr.f32.gmra.mrb[0].mxu0 %v4584
        %v5090 = vpop.f32.mrb[0].mxu0
        %v5091 = vadd.f32 %v4500, %v5090
        %v5092 = vpop.f32.mrb[0].mxu0
        %5093 = vmatprep.mubr.f32.mxu0 0.0
        %5094 = vmatmul.mubr.f32.gmra.mrb[0].mxu0 %v4587
        %v5095 = vpop.f32.mrb[0].mxu0
        %v5096 = vadd.f32 %v4500, %v5095
        %v5097 = vpop.f32.mrb[0].mxu0
        %5098 = vmatprep.mubr.f32.mxu0 0.0
        %5099 = vmatmul.mubr.f32.gmra.mrb[0].mxu0 %v4590
        %v5100 = vpop.f32.mrb[0].mxu0
        %v5101 = vadd.f32 %v4500, %v5100
        %v5102 = vpop.f32.mrb[0].mxu0
        %5103 = vmatprep.mubr.f32.mxu0 0.0
        %5104 = vmatmul.mubr.f32.gmra.mrb[0].mxu0 %v4593
        %v5105 = vpop.f32.mrb[0].mxu0
        %v5106 = vadd.f32 %v4500, %v5105
        %v5107 = vpop.f32.mrb[0].mxu0
        %5108 = vmatprep.mubr.f32.mxu0 0.0
        %5109 = vmatmul.mubr.f32.gmra.mrb[0].mxu0 %v4596
        %v5110 = vpop.f32.mrb[0].mxu0
        %v5111 = vadd.f32 %v4500, %v5110
        %v5112 = vpop.f32.mrb[0].mxu0
        %5113 = vmatprep.mubr.f32.mxu0 0.0
        %5114 = vmatmul.mubr.f32.gmra.mrb[0].mxu0 %v4599
        %v5115 = vpop.f32.mrb[0].mxu0
        %v5116 = vadd.f32 %v4500, %v5115
        %v5117 = vpop.f32.mrb[0].mxu0
        %5118 = vmatprep.mubr.f32.mxu0 0.0
        %5119 = vmatmul.mubr.f32.gmra.mrb[0].mxu0 %v4602
        %v5120 = vpop.f32.mrb[0].mxu0
        %v5121 = vadd.f32 %v4500, %v5120
        %v5122 = vpop.f32.mrb[0].mxu0
        %5123 = vmatprep.mubr.f32.mxu0 0.0
        %5124 = vmatmul.mubr.f32.gmra.mrb[0].mxu0 %v4605
        %v5125 = vpop.f32.mrb[0].mxu0
        %v5126 = vadd.f32 %v4500, %v5125
        %v5127 = vpop.f32.mrb[0].mxu0
        %5128 = vmatprep.mubr.f32.mxu0 0.0
        %5129 = vmatmul.mubr.f32.gmra.mrb[0].mxu0 %v4608
        %v5130 = vpop.f32.mrb[0].mxu0
        %v5131 = vadd.f32 %v4500, %v5130
        %v5132 = vpop.f32.mrb[0].mxu0
        %5133 = vmatprep.mubr.f32.mxu0 0.0
        %5134 = vmatmul.mubr.f32.gmra.mrb[0].mxu0 %v4611
        %v5135 = vpop.f32.mrb[0].mxu0
        %v5136 = vadd.f32 %v4500, %v5135
        %v5137 = vpop.f32.mrb[0].mxu0
        %5138 = vmatprep.mubr.f32.mxu0 0.0
        %5139 = vmatmul.mubr.f32.gmra.mrb[0].mxu0 %v4614
        %v5140 = vpop.f32.mrb[0].mxu0
        %v5141 = vadd.f32 %v4500, %v5140
        %v5142 = vpop.f32.mrb[0].mxu0
        %5143 = vmatprep.mubr.f32.mxu0 0.0
        %5144 = vmatmul.mubr.f32.gmra.mrb[0].mxu0 %v4617
        %v5145 = vpop.f32.mrb[0].mxu0
        %v5146 = vadd.f32 %v4500, %v5145
        %v5147 = vpop.f32.mrb[0].mxu0
        %5148 = vmatprep.mubr.f32.mxu0 0.0
        %5149 = vmatmul.mubr.f32.gmra.mrb[0].mxu0 %v4620
        %v5150 = vpop.f32.mrb[0].mxu0
        %v5151 = vadd.f32 %v4500, %v5150
        %v5152 = vpop.f32.mrb[0].mxu0
        %5153 = vmatprep.mubr.f32.mxu0 0.0
        %5154 = vmatmul.mubr.f32.gmra.mrb[0].mxu0 %v4623
        %v5155 = vpop.f32.mrb[0].mxu0
        %v5156 = vadd.f32 %v4500, %v5155
        %v5157 = vpop.f32.mrb[0].mxu0
        %5158 = vmatprep.mubr.f32.mxu0 0.0
        %5159 = vmatmul.mubr.f32.gmra.mrb[0].mxu0 %v4626
        %v5160 = vpop.f32.mrb[0].mxu0
        %v5161 = vadd.f32 %v4500, %v5160
        %v5162 = vpop.f32.mrb[0].mxu0
        %5163 = vmatprep.mubr.f32.mxu0 0.0
        %5164 = vmatmul.mubr.f32.gmra.mrb[0].mxu0 %v4629
        %v5165 = vpop.f32.mrb[0].mxu0
        %v5166 = vadd.f32 %v4500, %v5165
        %v5167 = vpop.f32.mrb[0].mxu0
        %5168 = vmatprep.mubr.f32.mxu0 0.0
        %5169 = vmatmul.mubr.f32.gmra.mrb[0].mxu0 %v4632
        %v5170 = vpop.f32.mrb[0].mxu0
        %v5171 = vadd.f32 %v4500, %v5170
        %v5172 = vpop.f32.mrb[0].mxu0
        %5173 = vmatprep.mubr.f32.mxu0 0.0
        %5174 = vmatmul.mubr.f32.gmra.mrb[0].mxu0 %v4635
        %v5175 = vpop.f32.mrb[0].mxu0
        %v5176 = vadd.f32 %v4500, %v5175
        %v5177 = vpop.f32.mrb[0].mxu0
        %5178 = vmatprep.mubr.f32.mxu0 0.0
        %5179 = vmatmul.mubr.f32.gmra.mrb[0].mxu0 %v4638
        %v5180 = vpop.f32.mrb[0].mxu0
        %v5181 = vadd.f32 %v4500, %v5180
        %v5182 = vpop.f32.mrb[0].mxu0
        %5183 = vmatprep.mubr.f32.mxu0 0.0
        %5184 = vmatmul.mubr.f32.gmra.mrb[0].mxu0 %v4641
        %v5185 = vpop.f32.mrb[0].mxu0
        %v5186 = vadd.f32 %v4500, %v5185
        %v5187 = vpop.f32.mrb[0].mxu0
        %5188 = vmatprep.mubr.f32.mxu0 0.0
        %5189 = vmatmul.mubr.f32.gmra.mrb[0].mxu0 %v4644
        %v5190 = vpop.f32.mrb[0].mxu0
        %v5191 = vadd.f32 %v4500, %v5190
        %v5192 = vpop.f32.mrb[0].mxu0
        %5193 = vmatprep.mubr.f32.mxu0 0.0
        %5194 = vmatmul.mubr.f32.gmra.mrb[0].mxu0 %v4647
        %v5195 = vpop.f32.mrb[0].mxu0
        %v5196 = vadd.f32 %v4500, %v5195
        %v5197 = vpop.f32.mrb[0].mxu0
        %5198 = vmatprep.mubr.f32.mxu0 0.0
        %5199 = vmatmul.mubr.f32.gmra.mrb[0].mxu0 %v4650
        %v5200 = vpop.f32.mrb[0].mxu0
        %v5201 = vadd.f32 %v4500, %v5200
        %v5202 = vpop.f32.mrb[0].mxu0
        %5203 = vmatprep.mubr.f32.mxu0 0.0
        %5204 = vmatmul.mubr.f32.gmra.mrb[0].mxu0 %v4653
        %v5205 = vpop.f32.mrb[0].mxu0
        %v5206 = vadd.f32 %v4500, %v5205
        %v5207 = vpop.f32.mrb[0].mxu0
        %5208 = vmatprep.mubr.f32.mxu0 0.0
        %5209 = vmatmul.mubr.f32.gmra.mrb[0].mxu0 %v4656
        %v5210 = vpop.f32.mrb[0].mxu0
        %v5211 = vadd.f32 %v4500, %v5210
        %v5212 = vpop.f32.mrb[0].mxu0
        %5213 = vmatprep.mubr.f32.mxu0 0.0
        %5214 = vmatmul.mubr.f32.gmra.mrb[0].mxu0 %v4659
        %v5215 = vpop.f32.mrb[0].mxu0
        %v5216 = vadd.f32 %v4500, %v5215
        %v5217 = vpop.f32.mrb[0].mxu0
        %5218 = vmatprep.mubr.f32.mxu0 0.0
        %5219 = vmatmul.mubr.f32.gmra.mrb[0].mxu0 %v4662
        %v5220 = vpop.f32.mrb[0].mxu0
        %v5221 = vadd.f32 %v4500, %v5220
        %v5222 = vpop.f32.mrb[0].mxu0
        %5223 = vmatprep.mubr.f32.mxu0 0.0
        %5224 = vmatmul.mubr.f32.gmra.mrb[0].mxu0 %v4665
        %v5225 = vpop.f32.mrb[0].mxu0
        %v5226 = vadd.f32 %v4500, %v5225
        %v5227 = vpop.f32.mrb[0].mxu0
        %5228 = vmatprep.mubr.f32.mxu0 0.0
        %5229 = vmatmul.mubr.f32.gmra.mrb[0].mxu0 %v4668
        %v5230 = vpop.f32.mrb[0].mxu0
        %v5231 = vadd.f32 %v4500, %v5230
        %v5232 = vpop.f32.mrb[0].mxu0
        %5233 = vmatprep.mubr.f32.mxu0 0.0
        %5234 = vmatmul.mubr.f32.gmra.mrb[0].mxu0 %v4671
        %v5235 = vpop.f32.mrb[0].mxu0
        %v5236 = vadd.f32 %v4500, %v5235
        %v5237 = vpop.f32.mrb[0].mxu0
        %5238 = vmatprep.mubr.f32.mxu0 0.0
        %5239 = vmatmul.mubr.f32.gmra.mrb[0].mxu0 %v4674
        %v5240 = vpop.f32.mrb[0].mxu0
        %v5241 = vadd.f32 %v4500, %v5240
        %v5242 = vpop.f32.mrb[0].mxu0
        %5243 = vmatprep.mubr.f32.mxu0 0.0
        %5244 = vmatmul.mubr.f32.gmra.mrb[0].mxu0 %v4677
        %v5245 = vpop.f32.mrb[0].mxu0
        %v5246 = vadd.f32 %v4500, %v5245
        %v5247 = vpop.f32.mrb[0].mxu0
        %5248 = vmatprep.mubr.f32.mxu0 0.0
        %5249 = vmatmul.mubr.f32.gmra.mrb[0].mxu0 %v4680
        %v5250 = vpop.f32.mrb[0].mxu0
        %v5251 = vadd.f32 %v4500, %v5250
        %v5252 = vpop.f32.mrb[0].mxu0
        %5253 = vmatprep.mubr.f32.mxu0 0.0
        %5254 = vmatmul.mubr.f32.gmra.mrb[0].mxu0 %v4683
        %v5255 = vpop.f32.mrb[0].mxu0
        %v5256 = vadd.f32 %v4500, %v5255
        %v5257 = vpop.f32.mrb[0].mxu0
        %5258 = vmatprep.mubr.f32.mxu0 0.0
        %5259 = vmatmul.mubr.f32.gmra.mrb[0].mxu0 %v4686
        %v5260 = vpop.f32.mrb[0].mxu0
        %v5261 = vadd.f32 %v4500, %v5260
        %v5262 = vpop.f32.mrb[0].mxu0
        %5263 = vmatprep.mubr.f32.mxu0 0.0
        %5264 = vmatmul.mubr.f32.gmra.mrb[0].mxu0 %v4689
        %v5265 = vpop.f32.mrb[0].mxu0
        %v5266 = vadd.f32 %v4500, %v5265
        %v5267 = vpop.f32.mrb[0].mxu0
        %5268 = vmatprep.mubr.f32.mxu0 0.0
        %5269 = vmatmul.mubr.f32.gmra.mrb[0].mxu0 %v4692
        %v5270 = vpop.f32.mrb[0].mxu0
        %v5271 = vadd.f32 %v4500, %v5270
        %v5272 = vpop.f32.mrb[0].mxu0
        %5273 = vmatprep.mubr.f32.mxu0 0.0
        %5274 = vmatmul.mubr.f32.gmra.mrb[0].mxu0 %v4695
        %v5275 = vpop.f32.mrb[0].mxu0
        %v5276 = vadd.f32 %v4500, %v5275
        %v5277 = vpop.f32.mrb[0].mxu0
        %5278 = vmatprep.mubr.f32.mxu0 0.0
        %5279 = vmatmul.mubr.f32.gmra.mrb[0].mxu0 %v4698
        %v5280 = vpop.f32.mrb[0].mxu0
        %v5281 = vadd.f32 %v4500, %v5280
        %v5282 = vpop.f32.mrb[0].mxu0
        %5283 = vmatprep.mubr.f32.mxu0 0.0
        %5284 = vmatmul.mubr.f32.gmra.mrb[0].mxu0 %v4701
        %v5285 = vpop.f32.mrb[0].mxu0
        %v5286 = vadd.f32 %v4500, %v5285
        %v5287 = vpop.f32.mrb[0].mxu0
        %5288 = vmatprep.mubr.f32.mxu0 0.0
        %5289 = vmatmul.mubr.f32.gmra.mrb[0].mxu0 %v4704
        %v5290 = vpop.f32.mrb[0].mxu0
        %v5291 = vadd.f32 %v4500, %v5290
        %v5292 = vpop.f32.mrb[0].mxu0
        %5293 = vmatprep.mubr.f32.mxu0 0.0
        %5294 = vmatmul.mubr.f32.gmra.mrb[0].mxu0 %v4707
        %v5295 = vpop.f32.mrb[0].mxu0
        %v5296 = vadd.f32 %v4500, %v5295
        %v5297 = vpop.f32.mrb[0].mxu0
        %5298 = vmatprep.mubr.f32.mxu0 0.0
        %5299 = vmatmul.mubr.f32.gmra.mrb[0].mxu0 %v4710
        %v5300 = vpop.f32.mrb[0].mxu0
        %v5301 = vadd.f32 %v4500, %v5300
        %v5302 = vpop.f32.mrb[0].mxu0
        %5303 = vmatprep.mubr.f32.mxu0 0.0
        %5304 = vmatmul.mubr.f32.gmra.mrb[0].mxu0 %v4713
        %v5305 = vpop.f32.mrb[0].mxu0
        %v5306 = vadd.f32 %v4500, %v5305
        %v5307 = vpop.f32.mrb[0].mxu0
        %5308 = vmatprep.mubr.f32.mxu0 0.0
        %5309 = vmatmul.mubr.f32.gmra.mrb[0].mxu0 %v4716
        %v5310 = vpop.f32.mrb[0].mxu0
        %v5311 = vadd.f32 %v4500, %v5310
        %v5312 = vpop.f32.mrb[0].mxu0
        %5313 = vmatprep.mubr.f32.mxu0 0.0
        %5314 = vmatmul.mubr.f32.gmra.mrb[0].mxu0 %v4719
        %v5315 = vpop.f32.mrb[0].mxu0
        %v5316 = vadd.f32 %v4500, %v5315
        %v5317 = vpop.f32.mrb[0].mxu0
        %5318 = vmatprep.mubr.f32.mxu0 0.0
        %5319 = vmatmul.mubr.f32.gmra.mrb[0].mxu0 %v4722
        %v5320 = vpop.f32.mrb[0].mxu0
        %v5321 = vadd.f32 %v4500, %v5320
        %v5322 = vpop.f32.mrb[0].mxu0
        %5323 = vmatprep.mubr.f32.mxu0 0.0
        %5324 = vmatmul.mubr.f32.gmra.mrb[0].mxu0 %v4725
        %v5325 = vpop.f32.mrb[0].mxu0
        %v5326 = vadd.f32 %v4500, %v5325
        %v5327 = vpop.f32.mrb[0].mxu0
        %5328 = vmatprep.mubr.f32.mxu0 0.0
        %5329 = vmatmul.mubr.f32.gmra.mrb[0].mxu0 %v4728
        %v5330 = vpop.f32.mrb[0].mxu0
        %v5331 = vadd.f32 %v4500, %v5330
        %v5332 = vpop.f32.mrb[0].mxu0
        %5333 = vmatprep.mubr.f32.mxu0 0.0
        %5334 = vmatmul.mubr.f32.gmra.mrb[0].mxu0 %v4731
        %v5335 = vpop.f32.mrb[0].mxu0
        %v5336 = vadd.f32 %v4500, %v5335
        %v5337 = vpop.f32.mrb[0].mxu0
        %5338 = vmatprep.mubr.f32.mxu0 0.0
        %5339 = vmatmul.mubr.f32.gmra.mrb[0].mxu0 %v4734
        %v5340 = vpop.f32.mrb[0].mxu0
        %v5341 = vadd.f32 %v4500, %v5340
        %v5342 = vpop.f32.mrb[0].mxu0
        %5343 = vmatprep.mubr.f32.mxu0 0.0
        %5344 = vmatmul.mubr.f32.gmra.mrb[0].mxu0 %v4737
        %v5345 = vpop.f32.mrb[0].mxu0
        %v5346 = vadd.f32 %v4500, %v5345
        %v5347 = vpop.f32.mrb[0].mxu0
        %5348 = vmatprep.mubr.f32.mxu0 0.0
        %5349 = vmatmul.mubr.f32.gmra.mrb[0].mxu0 %v4740
        %v5350 = vpop.f32.mrb[0].mxu0
        %v5351 = vadd.f32 %v4500, %v5350
        %v5352 = vpop.f32.mrb[0].mxu0
        %5353 = vmatprep.mubr.f32.mxu0 0.0
        %5354 = vmatmul.mubr.f32.gmra.mrb[0].mxu0 %v4743
        %v5355 = vpop.f32.mrb[0].mxu0
        %v5356 = vadd.f32 %v4500, %v5355
        %v5357 = vpop.f32.mrb[0].mxu0
        %5358 = vmatprep.mubr.f32.mxu0 0.0
        %5359 = vmatmul.mubr.f32.gmra.mrb[0].mxu0 %v4746
        %v5360 = vpop.f32.mrb[0].mxu0
        %v5361 = vadd.f32 %v4500, %v5360
        %v5362 = vpop.f32.mrb[0].mxu0
        %5363 = vmatprep.mubr.f32.mxu0 0.0
        %5364 = vmatmul.mubr.f32.gmra.mrb[0].mxu0 %v4749
        %v5365 = vpop.f32.mrb[0].mxu0
        %v5366 = vadd.f32 %v4500, %v5365
        %v5367 = vpop.f32.mrb[0].mxu0
        %5368 = vmatprep.mubr.f32.mxu0 0.0
        %5369 = vmatmul.mubr.f32.gmra.mrb[0].mxu0 %v4752
        %v5370 = vpop.f32.mrb[0].mxu0
        %v5371 = vadd.f32 %v4500, %v5370
        %v5372 = vpop.f32.mrb[0].mxu0
        %5373 = vmatprep.mubr.f32.mxu0 0.0
        %5374 = vmatmul.mubr.f32.gmra.mrb[0].mxu0 %v4755
        %v5375 = vpop.f32.mrb[0].mxu0
        %v5376 = vadd.f32 %v4500, %v5375
        %v5377 = vpop.f32.mrb[0].mxu0
        %5378 = vmatprep.mubr.f32.mxu0 0.0
        %5379 = vmatmul.mubr.f32.gmra.mrb[0].mxu0 %v4758
        %v5380 = vpop.f32.mrb[0].mxu0
        %v5381 = vadd.f32 %v4500, %v5380
        %v5382 = vpop.f32.mrb[0].mxu0
        %5383 = vmatprep.mubr.f32.mxu0 0.0
        %5384 = vmatmul.mubr.f32.gmra.mrb[0].mxu0 %v4761
        %v5385 = vpop.f32.mrb[0].mxu0
        %v5386 = vadd.f32 %v4500, %v5385
        %v5387 = vpop.f32.mrb[0].mxu0
        %5388 = vmatprep.mubr.f32.mxu0 0.0
        %5389 = vmatmul.mubr.f32.gmra.mrb[0].mxu0 %v4764
        %v5390 = vpop.f32.mrb[0].mxu0
        %v5391 = vadd.f32 %v4500, %v5390
        %v5392 = vpop.f32.mrb[0].mxu0
        %5393 = vmatprep.mubr.f32.mxu0 0.0
        %5394 = vmatmul.mubr.f32.gmra.mrb[0].mxu0 %v4767
        %v5395 = vpop.f32.mrb[0].mxu0
        %v5396 = vadd.f32 %v4500, %v5395
        %v5397 = vpop.f32.mrb[0].mxu0
        %5398 = vmatprep.mubr.f32.mxu0 0.0
        %5399 = vmatmul.mubr.f32.gmra.mrb[0].mxu0 %v4770
        %v5400 = vpop.f32.mrb[0].mxu0
        %v5401 = vadd.f32 %v4500, %v5400
        %v5402 = vpop.f32.mrb[0].mxu0
        %5403 = vmatprep.mubr.f32.mxu0 0.0
        %5404 = vmatmul.mubr.f32.gmra.mrb[0].mxu0 %v4773
        %v5405 = vpop.f32.mrb[0].mxu0
        %v5406 = vadd.f32 %v4500, %v5405
        %v5407 = vpop.f32.mrb[0].mxu0
        %5408 = vmatprep.mubr.f32.mxu0 0.0
        %5409 = vmatmul.mubr.f32.gmra.mrb[0].mxu0 %v4776
        %v5410 = vpop.f32.mrb[0].mxu0
        %v5411 = vadd.f32 %v4500, %v5410
        %v5412 = vpop.f32.mrb[0].mxu0
        %5413 = vmatprep.mubr.f32.mxu0 0.0
        %5414 = vmatmul.mubr.f32.gmra.mrb[0].mxu0 %v4779
        %v5415 = vpop.f32.mrb[0].mxu0
        %v5416 = vadd.f32 %v4500, %v5415
        %v5417 = vpop.f32.mrb[0].mxu0
        %5418 = vmatprep.mubr.f32.mxu0 0.0
        %5419 = vmatmul.mubr.f32.gmra.mrb[0].mxu0 %v4782
        %v5420 = vpop.f32.mrb[0].mxu0
        %v5421 = vadd.f32 %v4500, %v5420
        %v5422 = vpop.f32.mrb[0].mxu0
        %5423 = vmatprep.mubr.f32.mxu0 0.0
        %5424 = vmatmul.mubr.f32.gmra.mrb[0].mxu0 %v4785
        %v5425 = vpop.f32.mrb[0].mxu0
        %v5426 = vadd.f32 %v4500, %v5425
        %v5427 = vpop.f32.mrb[0].mxu0
        %5428 = vmatprep.mubr.f32.mxu0 0.0
        %5429 = vmatmul.mubr.f32.gmra.mrb[0].mxu0 %v4788
        %v5430 = vpop.f32.mrb[0].mxu0
        %v5431 = vadd.f32 %v4500, %v5430
        %v5432 = vpop.f32.mrb[0].mxu0
        %5433 = vmatprep.mubr.f32.mxu0 0.0
        %5434 = vmatmul.mubr.f32.gmra.mrb[0].mxu0 %v4791
        %v5435 = vpop.f32.mrb[0].mxu0
        %v5436 = vadd.f32 %v4500, %v5435
        %v5437 = vpop.f32.mrb[0].mxu0
        %5438 = vmatprep.mubr.f32.mxu0 0.0
        %5439 = vmatmul.mubr.f32.gmra.mrb[0].mxu0 %v4794
        %v5440 = vpop.f32.mrb[0].mxu0
        %v5441 = vadd.f32 %v4500, %v5440
        %v5442 = vpop.f32.mrb[0].mxu0
        %5443 = vmatprep.mubr.f32.mxu0 0.0
        %5444 = vmatmul.mubr.f32.gmra.mrb[0].mxu0 %v4797
        %v5445 = vpop.f32.mrb[0].mxu0
        %v5446 = vadd.f32 %v4500, %v5445
        %v5447 = vpop.f32.mrb[0].mxu0
        %5448 = vmatprep.mubr.f32.mxu0 0.0
        %5449 = vmatmul.mubr.f32.gmra.mrb[0].mxu0 %v4800
        %v5450 = vpop.f32.mrb[0].mxu0
        %v5451 = vadd.f32 %v4500, %v5450
        %v5452 = vpop.f32.mrb[0].mxu0
        %5453 = vmatprep.mubr.f32.mxu0 0.0
        %5454 = vmatmul.mubr.f32.gmra.mrb[0].mxu0 %v4803
        %v5455 = vpop.f32.mrb[0].mxu0
        %v5456 = vadd.f32 %v4500, %v5455
        %v5457 = vpop.f32.mrb[0].mxu0
        %5458 = vmatprep.mubr.f32.mxu0 0.0
        %5459 = vmatmul.mubr.f32.gmra.mrb[0].mxu0 %v4806
        %v5460 = vpop.f32.mrb[0].mxu0
        %v5461 = vadd.f32 %v4500, %v5460
        %v5462 = vpop.f32.mrb[0].mxu0
        %5463 = vmatprep.mubr.f32.mxu0 0.0
        %5464 = vmatmul.mubr.f32.gmra.mrb[0].mxu0 %v4809
        %v5465 = vpop.f32.mrb[0].mxu0
        %v5466 = vadd.f32 %v4500, %v5465
        %v5467 = vpop.f32.mrb[0].mxu0
        %5468 = vmatprep.mubr.f32.mxu0 0.0
        %5469 = vmatmul.mubr.f32.gmra.mrb[0].mxu0 %v4812
        %v5470 = vpop.f32.mrb[0].mxu0
        %v5471 = vadd.f32 %v4500, %v5470
        %v5472 = vpop.f32.mrb[0].mxu0
        %5473 = vmatprep.mubr.f32.mxu0 0.0
        %5474 = vmatmul.mubr.f32.gmra.mrb[0].mxu0 %v4815
        %v5475 = vpop.f32.mrb[0].mxu0
        %v5476 = vadd.f32 %v4500, %v5475
        %v5477 = vpop.f32.mrb[0].mxu0
        %5478 = vmatprep.mubr.f32.mxu0 0.0
        %5479 = vmatmul.mubr.f32.gmra.mrb[0].mxu0 %v4818
        %v5480 = vpop.f32.mrb[0].mxu0
        %v5481 = vadd.f32 %v4500, %v5480
        %v5482 = vpop.f32.mrb[0].mxu0
        %5483 = vmatprep.mubr.f32.mxu0 0.0
        %5484 = vmatmul.mubr.f32.gmra.mrb[0].mxu0 %v4821
        %v5485 = vpop.f32.mrb[0].mxu0
        %v5486 = vadd.f32 %v4500, %v5485
        %v5487 = vpop.f32.mrb[0].mxu0
        %5488 = vmatprep.mubr.f32.mxu0 0.0
        %5489 = vmatmul.mubr.f32.gmra.mrb[0].mxu0 %v4824
        %v5490 = vpop.f32.mrb[0].mxu0
        %v5491 = vadd.f32 %v4500, %v5490
        %v5492 = vpop.f32.mrb[0].mxu0
        %5493 = vmatprep.mubr.f32.mxu0 0.0
        %5494 = vmatmul.mubr.f32.gmra.mrb[0].mxu0 %v4827
        %v5495 = vpop.f32.mrb[0].mxu0
        %v5496 = vadd.f32 %v4500, %v5495
        %v5497 = vpop.f32.mrb[0].mxu0
        %5498 = vmatprep.mubr.f32.mxu0 0.0
        %5499 = vmatmul.mubr.f32.gmra.mrb[0].mxu0 %v4830
        %v5500 = vpop.f32.mrb[0].mxu0
        %v5501 = vadd.f32 %v4500, %v5500
        %v5502 = vpop.f32.mrb[0].mxu0
        %5503 = vmatprep.mubr.f32.mxu0 0.0
        %5504 = vmatmul.mubr.f32.gmra.mrb[0].mxu0 %v4833
        %v5505 = vpop.f32.mrb[0].mxu0
        %v5506 = vadd.f32 %v4500, %v5505
        %v5507 = vpop.f32.mrb[0].mxu0
        %5508 = vmatprep.mubr.f32.mxu0 0.0
        %5509 = vmatmul.mubr.f32.gmra.mrb[0].mxu0 %v4836
        %v5510 = vpop.f32.mrb[0].mxu0
        %v5511 = vadd.f32 %v4500, %v5510
        %v5512 = vpop.f32.mrb[0].mxu0
        %5513 = vmatprep.mubr.f32.mxu0 0.0
        %5514 = vmatmul.mubr.f32.gmra.mrb[0].mxu0 %v4839
        %v5515 = vpop.f32.mrb[0].mxu0
        %v5516 = vadd.f32 %v4500, %v5515
        %v5517 = vpop.f32.mrb[0].mxu0
        %5518 = vmatprep.mubr.f32.mxu0 0.0
        %5519 = vmatmul.mubr.f32.gmra.mrb[0].mxu0 %v4842
        %v5520 = vpop.f32.mrb[0].mxu0
        %v5521 = vadd.f32 %v4500, %v5520
        %v5522 = vpop.f32.mrb[0].mxu0
        %5523 = vmatprep.mubr.f32.mxu0 0.0
        %5524 = vmatmul.mubr.f32.gmra.mrb[0].mxu0 %v4845
        %v5525 = vpop.f32.mrb[0].mxu0
        %v5526 = vadd.f32 %v4500, %v5525
        %v5527 = vpop.f32.mrb[0].mxu0
        %5528 = vmatprep.mubr.f32.mxu0 0.0
        %5529 = vmatmul.mubr.f32.gmra.mrb[0].mxu0 %v4848
        %v5530 = vpop.f32.mrb[0].mxu0
        %v5531 = vadd.f32 %v4500, %v5530
        %v5532 = vpop.f32.mrb[0].mxu0
        %5533 = vmatprep.mubr.f32.mxu0 0.0
        %5534 = vmatmul.mubr.f32.gmra.mrb[0].mxu0 %v4851
        %v5535 = vpop.f32.mrb[0].mxu0
        %v5536 = vadd.f32 %v4500, %v5535
        %v5537 = vpop.f32.mrb[0].mxu0
        %5538 = vmatprep.mubr.f32.mxu0 0.0
        %5539 = vmatmul.mubr.f32.gmra.mrb[0].mxu0 %v4854
        %v5540 = vpop.f32.mrb[0].mxu0
        %v5541 = vadd.f32 %v4500, %v5540
        %v5542 = vpop.f32.mrb[0].mxu0
        %5543 = vmatprep.mubr.f32.mxu0 0.0
        %5544 = vmatmul.mubr.f32.gmra.mrb[0].mxu0 %v4857
        %v5545 = vpop.f32.mrb[0].mxu0
        %v5546 = vadd.f32 %v4500, %v5545
        %v5547 = vpop.f32.mrb[0].mxu0
        %5548 = vmatprep.mubr.f32.mxu0 0.0
        %5549 = vmatmul.mubr.f32.gmra.mrb[0].mxu0 %v4860
        %v5550 = vpop.f32.mrb[0].mxu0
        %v5551 = vadd.f32 %v4500, %v5550
        %v5552 = vpop.f32.mrb[0].mxu0
        %5553 = vmatprep.mubr.f32.mxu0 0.0
        %5554 = vmatmul.mubr.f32.gmra.mrb[0].mxu0 %v4863
        %v5555 = vpop.f32.mrb[0].mxu0
        %v5556 = vadd.f32 %v4500, %v5555
        %v5557 = vpop.f32.mrb[0].mxu0
        %5558 = vmatprep.mubr.f32.mxu0 0.0
        %5559 = vmatmul.mubr.f32.gmra.mrb[0].mxu0 %v4866
        %v5560 = vpop.f32.mrb[0].mxu0
        %v5561 = vadd.f32 %v4500, %v5560
        %v5562 = vpop.f32.mrb[0].mxu0
        %5563 = vmatprep.mubr.f32.mxu0 0.0
        %5564 = vmatmul.mubr.f32.gmra.mrb[0].mxu0 %v4869
        %v5565 = vpop.f32.mrb[0].mxu0
        %v5566 = vadd.f32 %v4500, %v5565
        %v5567 = vpop.f32.mrb[0].mxu0
        %5568 = vmatprep.mubr.f32.mxu0 0.0
        %5569 = vmatmul.mubr.f32.gmra.mrb[0].mxu0 %v4872
        %v5570 = vpop.f32.mrb[0].mxu0
        %v5571 = vadd.f32 %v4500, %v5570
        %v5572 = vpop.f32.mrb[0].mxu0
        %5573 = vmatprep.mubr.f32.mxu0 0.0
        %5574 = vmatmul.mubr.f32.gmra.mrb[0].mxu0 %v4875
        %v5575 = vpop.f32.mrb[0].mxu0
        %v5576 = vadd.f32 %v4500, %v5575
        %v5577 = vpop.f32.mrb[0].mxu0
        %5578 = vmatprep.mubr.f32.mxu0 0.0
        %5579 = vmatmul.mubr.f32.gmra.mrb[0].mxu0 %v4878
        %v5580 = vpop.f32.mrb[0].mxu0
        %v5581 = vadd.f32 %v4500, %v5580
        %v5582 = vpop.f32.mrb[0].mxu0
        %5583 = vmatprep.mubr.f32.mxu0 0.0
        %5584 = vmatmul.mubr.f32.gmra.mrb[0].mxu0 %v4881
        %v5585 = vpop.f32.mrb[0].mxu0
        %v5586 = vadd.f32 %v4500, %v5585
        %v5587 = vpop.f32.mrb[0].mxu0
        %5588 = vmatprep.mubr.f32.mxu0 0.0
        %5589 = vmatmul.mubr.f32.gmra.mrb[0].mxu0 %v4884
        %v5590 = vpop.f32.mrb[0].mxu0
        %v5591 = vadd.f32 %v4500, %v5590
        %v5592 = vpop.f32.mrb[0].mxu0
        %5593 = vdwg.mxu0
        %v5594 = vmul.f32 %v4956, 1.442695
        %v5595 = vpow.pop %v5594
        %v5596 = vmul.f32 %v4961, 1.442695
        %v5597 = vpow.pop %v5596
        %v5598 = vmul.f32 %v4966, 1.442695
        %v5599 = vpow.pop %v5598
        %v5600 = vmul.f32 %v4971, 1.442695
        %v5601 = vpow.pop %v5600
        %v5602 = vmul.f32 %v4976, 1.442695
        %v5603 = vpow.pop %v5602
        %v5604 = vmul.f32 %v4981, 1.442695
        %v5605 = vpow.pop %v5604
        %v5606 = vmul.f32 %v4986, 1.442695
        %v5607 = vpow.pop %v5606
        %v5608 = vmul.f32 %v4991, 1.442695
        %v5609 = vpow.pop %v5608
        %v5610 = vmul.f32 %v4996, 1.442695
        %v5611 = vpow.pop %v5610
        %v5612 = vmul.f32 %v5001, 1.442695
        %v5613 = vpow.pop %v5612
        %v5614 = vmul.f32 %v5006, 1.442695
        %v5615 = vpow.pop %v5614
        %v5616 = vmul.f32 %v5011, 1.442695
        %v5617 = vpow.pop %v5616
        %v5618 = vmul.f32 %v5016, 1.442695
        %v5619 = vpow.pop %v5618
        %v5620 = vmul.f32 %v5021, 1.442695
        %v5621 = vpow.pop %v5620
        %v5622 = vmul.f32 %v5026, 1.442695
        %v5623 = vpow.pop %v5622
        %v5624 = vmul.f32 %v5031, 1.442695
        %v5625 = vpow.pop %v5624
        %v5626 = vmul.f32 %v5036, 1.442695
        %v5627 = vpow.pop %v5626
        %v5628 = vmul.f32 %v5041, 1.442695
        %v5629 = vpow.pop %v5628
        %v5630 = vmul.f32 %v5046, 1.442695
        %v5631 = vpow.pop %v5630
        %v5632 = vmul.f32 %v5051, 1.442695
        %v5633 = vpow.pop %v5632
        %v5634 = vmul.f32 %v5056, 1.442695
        %v5635 = vpow.pop %v5634
        %v5636 = vmul.f32 %v5061, 1.442695
        %v5637 = vpow.pop %v5636
        %v5638 = vmul.f32 %v5066, 1.442695
        %v5639 = vpow.pop %v5638
        %v5640 = vmul.f32 %v5071, 1.442695
        %v5641 = vpow.pop %v5640
        %v5642 = vmul.f32 %v5076, 1.442695
        %v5643 = vpow.pop %v5642
        %v5644 = vmul.f32 %v5081, 1.442695
        %v5645 = vpow.pop %v5644
        %v5646 = vmul.f32 %v5086, 1.442695
        %v5647 = vpow.pop %v5646
        %v5648 = vmul.f32 %v5091, 1.442695
        %v5649 = vpow.pop %v5648
        %v5650 = vmul.f32 %v5096, 1.442695
        %v5651 = vpow.pop %v5650
        %v5652 = vmul.f32 %v5101, 1.442695
        %v5653 = vpow.pop %v5652
        %v5654 = vmul.f32 %v5106, 1.442695
        %v5655 = vpow.pop %v5654
        %v5656 = vmul.f32 %v5111, 1.442695
        %v5657 = vpow.pop %v5656
        %v5658 = vmul.f32 %v5116, 1.442695
        %v5659 = vpow.pop %v5658
        %v5660 = vmul.f32 %v5121, 1.442695
        %v5661 = vpow.pop %v5660
        %v5662 = vmul.f32 %v5126, 1.442695
        %v5663 = vpow.pop %v5662
        %v5664 = vmul.f32 %v5131, 1.442695
        %v5665 = vpow.pop %v5664
        %v5666 = vmul.f32 %v5136, 1.442695
        %v5667 = vpow.pop %v5666
        %v5668 = vmul.f32 %v5141, 1.442695
        %v5669 = vpow.pop %v5668
        %v5670 = vmul.f32 %v5146, 1.442695
        %v5671 = vpow.pop %v5670
        %v5672 = vmul.f32 %v5151, 1.442695
        %v5673 = vpow.pop %v5672
        %v5674 = vmul.f32 %v5156, 1.442695
        %v5675 = vpow.pop %v5674
        %v5676 = vmul.f32 %v5161, 1.442695
        %v5677 = vpow.pop %v5676
        %v5678 = vmul.f32 %v5166, 1.442695
        %v5679 = vpow.pop %v5678
        %v5680 = vmul.f32 %v5171, 1.442695
        %v5681 = vpow.pop %v5680
        %v5682 = vmul.f32 %v5176, 1.442695
        %v5683 = vpow.pop %v5682
        %v5684 = vmul.f32 %v5181, 1.442695
        %v5685 = vpow.pop %v5684
        %v5686 = vmul.f32 %v5186, 1.442695
        %v5687 = vpow.pop %v5686
        %v5688 = vmul.f32 %v5191, 1.442695
        %v5689 = vpow.pop %v5688
        %v5690 = vmul.f32 %v5196, 1.442695
        %v5691 = vpow.pop %v5690
        %v5692 = vmul.f32 %v5201, 1.442695
        %v5693 = vpow.pop %v5692
        %v5694 = vmul.f32 %v5206, 1.442695
        %v5695 = vpow.pop %v5694
        %v5696 = vmul.f32 %v5211, 1.442695
        %v5697 = vpow.pop %v5696
        %v5698 = vmul.f32 %v5216, 1.442695
        %v5699 = vpow.pop %v5698
        %v5700 = vmul.f32 %v5221, 1.442695
        %v5701 = vpow.pop %v5700
        %v5702 = vmul.f32 %v5226, 1.442695
        %v5703 = vpow.pop %v5702
        %v5704 = vmul.f32 %v5231, 1.442695
        %v5705 = vpow.pop %v5704
        %v5706 = vmul.f32 %v5236, 1.442695
        %v5707 = vpow.pop %v5706
        %v5708 = vmul.f32 %v5241, 1.442695
        %v5709 = vpow.pop %v5708
        %v5710 = vmul.f32 %v5246, 1.442695
        %v5711 = vpow.pop %v5710
        %v5712 = vmul.f32 %v5251, 1.442695
        %v5713 = vpow.pop %v5712
        %v5714 = vmul.f32 %v5256, 1.442695
        %v5715 = vpow.pop %v5714
        %v5716 = vmul.f32 %v5261, 1.442695
        %v5717 = vpow.pop %v5716
        %v5718 = vmul.f32 %v5266, 1.442695
        %v5719 = vpow.pop %v5718
        %v5720 = vmul.f32 %v5271, 1.442695
        %v5721 = vpow.pop %v5720
        %v5722 = vmul.f32 %v5276, 1.442695
        %v5723 = vpow.pop %v5722
        %v5724 = vmul.f32 %v5281, 1.442695
        %v5725 = vpow.pop %v5724
        %v5726 = vmul.f32 %v5286, 1.442695
        %v5727 = vpow.pop %v5726
        %v5728 = vmul.f32 %v5291, 1.442695
        %v5729 = vpow.pop %v5728
        %v5730 = vmul.f32 %v5296, 1.442695
        %v5731 = vpow.pop %v5730
        %v5732 = vmul.f32 %v5301, 1.442695
        %v5733 = vpow.pop %v5732
        %v5734 = vmul.f32 %v5306, 1.442695
        %v5735 = vpow.pop %v5734
        %v5736 = vmul.f32 %v5311, 1.442695
        %v5737 = vpow.pop %v5736
        %v5738 = vmul.f32 %v5316, 1.442695
        %v5739 = vpow.pop %v5738
        %v5740 = vmul.f32 %v5321, 1.442695
        %v5741 = vpow.pop %v5740
        %v5742 = vmul.f32 %v5326, 1.442695
        %v5743 = vpow.pop %v5742
        %v5744 = vmul.f32 %v5331, 1.442695
        %v5745 = vpow.pop %v5744
        %v5746 = vmul.f32 %v5336, 1.442695
        %v5747 = vpow.pop %v5746
        %v5748 = vmul.f32 %v5341, 1.442695
        %v5749 = vpow.pop %v5748
        %v5750 = vmul.f32 %v5346, 1.442695
        %v5751 = vpow.pop %v5750
        %v5752 = vmul.f32 %v5351, 1.442695
        %v5753 = vpow.pop %v5752
        %v5754 = vmul.f32 %v5356, 1.442695
        %v5755 = vpow.pop %v5754
        %v5756 = vmul.f32 %v5361, 1.442695
        %v5757 = vpow.pop %v5756
        %v5758 = vmul.f32 %v5366, 1.442695
        %v5759 = vpow.pop %v5758
        %v5760 = vmul.f32 %v5371, 1.442695
        %v5761 = vpow.pop %v5760
        %v5762 = vmul.f32 %v5376, 1.442695
        %v5763 = vpow.pop %v5762
        %v5764 = vmul.f32 %v5381, 1.442695
        %v5765 = vpow.pop %v5764
        %v5766 = vmul.f32 %v5386, 1.442695
        %v5767 = vpow.pop %v5766
        %v5768 = vmul.f32 %v5391, 1.442695
        %v5769 = vpow.pop %v5768
        %v5770 = vmul.f32 %v5396, 1.442695
        %v5771 = vpow.pop %v5770
        %v5772 = vmul.f32 %v5401, 1.442695
        %v5773 = vpow.pop %v5772
        %v5774 = vmul.f32 %v5406, 1.442695
        %v5775 = vpow.pop %v5774
        %v5776 = vmul.f32 %v5411, 1.442695
        %v5777 = vpow.pop %v5776
        %v5778 = vmul.f32 %v5416, 1.442695
        %v5779 = vpow.pop %v5778
        %v5780 = vmul.f32 %v5421, 1.442695
        %v5781 = vpow.pop %v5780
        %v5782 = vmul.f32 %v5426, 1.442695
        %v5783 = vpow.pop %v5782
        %v5784 = vmul.f32 %v5431, 1.442695
        %v5785 = vpow.pop %v5784
        %v5786 = vmul.f32 %v5436, 1.442695
        %v5787 = vpow.pop %v5786
        %v5788 = vmul.f32 %v5441, 1.442695
        %v5789 = vpow.pop %v5788
        %v5790 = vmul.f32 %v5446, 1.442695
        %v5791 = vpow.pop %v5790
        %v5792 = vmul.f32 %v5451, 1.442695
        %v5793 = vpow.pop %v5792
        %v5794 = vmul.f32 %v5456, 1.442695
        %v5795 = vpow.pop %v5794
        %v5796 = vmul.f32 %v5461, 1.442695
        %v5797 = vpow.pop %v5796
        %v5798 = vmul.f32 %v5466, 1.442695
        %v5799 = vpow.pop %v5798
        %v5800 = vmul.f32 %v5471, 1.442695
        %v5801 = vpow.pop %v5800
        %v5802 = vmul.f32 %v5476, 1.442695
        %v5803 = vpow.pop %v5802
        %v5804 = vmul.f32 %v5481, 1.442695
        %v5805 = vpow.pop %v5804
        %v5806 = vmul.f32 %v5486, 1.442695
        %v5807 = vpow.pop %v5806
        %v5808 = vmul.f32 %v5491, 1.442695
        %v5809 = vpow.pop %v5808
        %v5810 = vmul.f32 %v5496, 1.442695
        %v5811 = vpow.pop %v5810
        %v5812 = vmul.f32 %v5501, 1.442695
        %v5813 = vpow.pop %v5812
        %v5814 = vmul.f32 %v5506, 1.442695
        %v5815 = vpow.pop %v5814
        %v5816 = vmul.f32 %v5511, 1.442695
        %v5817 = vpow.pop %v5816
        %v5818 = vmul.f32 %v5516, 1.442695
        %v5819 = vpow.pop %v5818
        %v5820 = vmul.f32 %v5521, 1.442695
        %v5821 = vpow.pop %v5820
        %v5822 = vmul.f32 %v5526, 1.442695
        %v5823 = vpow.pop %v5822
        %v5824 = vmul.f32 %v5531, 1.442695
        %v5825 = vpow.pop %v5824
        %v5826 = vmul.f32 %v5536, 1.442695
        %v5827 = vpow.pop %v5826
        %v5828 = vmul.f32 %v5541, 1.442695
        %v5829 = vpow.pop %v5828
        %v5830 = vmul.f32 %v5546, 1.442695
        %v5831 = vpow.pop %v5830
        %v5832 = vmul.f32 %v5551, 1.442695
        %v5833 = vpow.pop %v5832
        %v5834 = vmul.f32 %v5556, 1.442695
        %v5835 = vpow.pop %v5834
        %v5836 = vmul.f32 %v5561, 1.442695
        %v5837 = vpow.pop %v5836
        %v5838 = vmul.f32 %v5566, 1.442695
        %v5839 = vpow.pop %v5838
        %v5840 = vmul.f32 %v5571, 1.442695
        %v5841 = vpow.pop %v5840
        %v5842 = vmul.f32 %v5576, 1.442695
        %v5843 = vpow.pop %v5842
        %v5844 = vmul.f32 %v5581, 1.442695
        %v5845 = vpow.pop %v5844
        %v5846 = vmul.f32 %v5586, 1.442695
        %v5847 = vpow.pop %v5846
        %v5848 = vmul.f32 %v5591, 1.442695
        %v5849 = vpow.pop %v5848
        %v5850 = vld [vmem:[%s664] sm:$0xff]
        %5979 = vset.pattern.permute.xlu0 0
        %5980 = vperm.xlu0 %5979, %v5595
        %v5981 = vpop.permute.xlu0 %5980
        %5982 = vset.pattern.permute.xlu0 0
        %5983 = vperm.xlu0 %5982, %v5597
        %v5984 = vpop.permute.xlu0 %5983
        %5985 = vset.pattern.permute.xlu0 0
        %5986 = vperm.xlu0 %5985, %v5599
        %v5987 = vpop.permute.xlu0 %5986
        %5988 = vset.pattern.permute.xlu0 0
        %5989 = vperm.xlu0 %5988, %v5601
        %v5990 = vpop.permute.xlu0 %5989
        %5991 = vset.pattern.permute.xlu0 0
        %5992 = vperm.xlu0 %5991, %v5603
        %v5993 = vpop.permute.xlu0 %5992
        %5994 = vset.pattern.permute.xlu0 0
        %5995 = vperm.xlu0 %5994, %v5605
        %v5996 = vpop.permute.xlu0 %5995
        %5997 = vset.pattern.permute.xlu0 0
        %5998 = vperm.xlu0 %5997, %v5607
        %v5999 = vpop.permute.xlu0 %5998
        %6000 = vset.pattern.permute.xlu0 0
        %6001 = vperm.xlu0 %6000, %v5609
        %v6002 = vpop.permute.xlu0 %6001
        %6003 = vset.pattern.permute.xlu0 0
        %6004 = vperm.xlu0 %6003, %v5611
        %v6005 = vpop.permute.xlu0 %6004
        %6006 = vset.pattern.permute.xlu0 0
        %6007 = vperm.xlu0 %6006, %v5613
        %v6008 = vpop.permute.xlu0 %6007
        %6009 = vset.pattern.permute.xlu0 0
        %6010 = vperm.xlu0 %6009, %v5615
        %v6011 = vpop.permute.xlu0 %6010
        %6012 = vset.pattern.permute.xlu0 0
        %6013 = vperm.xlu0 %6012, %v5617
        %v6014 = vpop.permute.xlu0 %6013
        %6015 = vset.pattern.permute.xlu0 0
        %6016 = vperm.xlu0 %6015, %v5619
        %v6017 = vpop.permute.xlu0 %6016
        %6018 = vset.pattern.permute.xlu0 0
        %6019 = vperm.xlu0 %6018, %v5621
        %v6020 = vpop.permute.xlu0 %6019
        %6021 = vset.pattern.permute.xlu0 0
        %6022 = vperm.xlu0 %6021, %v5623
        %v6023 = vpop.permute.xlu0 %6022
        %6024 = vset.pattern.permute.xlu0 0
        %6025 = vperm.xlu0 %6024, %v5625
        %v6026 = vpop.permute.xlu0 %6025
        %6027 = vset.pattern.permute.xlu0 0
        %6028 = vperm.xlu0 %6027, %v5627
        %v6029 = vpop.permute.xlu0 %6028
        %6030 = vset.pattern.permute.xlu0 0
        %6031 = vperm.xlu0 %6030, %v5629
        %v6032 = vpop.permute.xlu0 %6031
        %6033 = vset.pattern.permute.xlu0 0
        %6034 = vperm.xlu0 %6033, %v5631
        %v6035 = vpop.permute.xlu0 %6034
        %6036 = vset.pattern.permute.xlu0 0
        %6037 = vperm.xlu0 %6036, %v5633
        %v6038 = vpop.permute.xlu0 %6037
        %6039 = vset.pattern.permute.xlu0 0
        %6040 = vperm.xlu0 %6039, %v5635
        %v6041 = vpop.permute.xlu0 %6040
        %6042 = vset.pattern.permute.xlu0 0
        %6043 = vperm.xlu0 %6042, %v5637
        %v6044 = vpop.permute.xlu0 %6043
        %6045 = vset.pattern.permute.xlu0 0
        %6046 = vperm.xlu0 %6045, %v5639
        %v6047 = vpop.permute.xlu0 %6046
        %6048 = vset.pattern.permute.xlu0 0
        %6049 = vperm.xlu0 %6048, %v5641
        %v6050 = vpop.permute.xlu0 %6049
        %6051 = vset.pattern.permute.xlu0 0
        %6052 = vperm.xlu0 %6051, %v5643
        %v6053 = vpop.permute.xlu0 %6052
        %6054 = vset.pattern.permute.xlu0 0
        %6055 = vperm.xlu0 %6054, %v5645
        %v6056 = vpop.permute.xlu0 %6055
        %6057 = vset.pattern.permute.xlu0 0
        %6058 = vperm.xlu0 %6057, %v5647
        %v6059 = vpop.permute.xlu0 %6058
        %6060 = vset.pattern.permute.xlu0 0
        %6061 = vperm.xlu0 %6060, %v5649
        %v6062 = vpop.permute.xlu0 %6061
        %6063 = vset.pattern.permute.xlu0 0
        %6064 = vperm.xlu0 %6063, %v5651
        %v6065 = vpop.permute.xlu0 %6064
        %6066 = vset.pattern.permute.xlu0 0
        %6067 = vperm.xlu0 %6066, %v5653
        %v6068 = vpop.permute.xlu0 %6067
        %6069 = vset.pattern.permute.xlu0 0
        %6070 = vperm.xlu0 %6069, %v5655
        %v6071 = vpop.permute.xlu0 %6070
        %6072 = vset.pattern.permute.xlu0 0
        %6073 = vperm.xlu0 %6072, %v5657
        %v6074 = vpop.permute.xlu0 %6073
        %6075 = vset.pattern.permute.xlu0 0
        %6076 = vperm.xlu0 %6075, %v5659
        %v6077 = vpop.permute.xlu0 %6076
        %6078 = vset.pattern.permute.xlu0 0
        %6079 = vperm.xlu0 %6078, %v5661
        %v6080 = vpop.permute.xlu0 %6079
        %6081 = vset.pattern.permute.xlu0 0
        %6082 = vperm.xlu0 %6081, %v5663
        %v6083 = vpop.permute.xlu0 %6082
        %6084 = vset.pattern.permute.xlu0 0
        %6085 = vperm.xlu0 %6084, %v5665
        %v6086 = vpop.permute.xlu0 %6085
        %6087 = vset.pattern.permute.xlu0 0
        %6088 = vperm.xlu0 %6087, %v5667
        %v6089 = vpop.permute.xlu0 %6088
        %6090 = vset.pattern.permute.xlu0 0
        %6091 = vperm.xlu0 %6090, %v5669
        %v6092 = vpop.permute.xlu0 %6091
        %6093 = vset.pattern.permute.xlu0 0
        %6094 = vperm.xlu0 %6093, %v5671
        %v6095 = vpop.permute.xlu0 %6094
        %6096 = vset.pattern.permute.xlu0 0
        %6097 = vperm.xlu0 %6096, %v5673
        %v6098 = vpop.permute.xlu0 %6097
        %6099 = vset.pattern.permute.xlu0 0
        %6100 = vperm.xlu0 %6099, %v5675
        %v6101 = vpop.permute.xlu0 %6100
        %6102 = vset.pattern.permute.xlu0 0
        %6103 = vperm.xlu0 %6102, %v5677
        %v6104 = vpop.permute.xlu0 %6103
        %6105 = vset.pattern.permute.xlu0 0
        %6106 = vperm.xlu0 %6105, %v5679
        %v6107 = vpop.permute.xlu0 %6106
        %6108 = vset.pattern.permute.xlu0 0
        %6109 = vperm.xlu0 %6108, %v5681
        %v6110 = vpop.permute.xlu0 %6109
        %6111 = vset.pattern.permute.xlu0 0
        %6112 = vperm.xlu0 %6111, %v5683
        %v6113 = vpop.permute.xlu0 %6112
        %6114 = vset.pattern.permute.xlu0 0
        %6115 = vperm.xlu0 %6114, %v5685
        %v6116 = vpop.permute.xlu0 %6115
        %6117 = vset.pattern.permute.xlu0 0
        %6118 = vperm.xlu0 %6117, %v5687
        %v6119 = vpop.permute.xlu0 %6118
        %6120 = vset.pattern.permute.xlu0 0
        %6121 = vperm.xlu0 %6120, %v5689
        %v6122 = vpop.permute.xlu0 %6121
        %6123 = vset.pattern.permute.xlu0 0
        %6124 = vperm.xlu0 %6123, %v5691
        %v6125 = vpop.permute.xlu0 %6124
        %6126 = vset.pattern.permute.xlu0 0
        %6127 = vperm.xlu0 %6126, %v5693
        %v6128 = vpop.permute.xlu0 %6127
        %6129 = vset.pattern.permute.xlu0 0
        %6130 = vperm.xlu0 %6129, %v5695
        %v6131 = vpop.permute.xlu0 %6130
        %6132 = vset.pattern.permute.xlu0 0
        %6133 = vperm.xlu0 %6132, %v5697
        %v6134 = vpop.permute.xlu0 %6133
        %6135 = vset.pattern.permute.xlu0 0
        %6136 = vperm.xlu0 %6135, %v5699
        %v6137 = vpop.permute.xlu0 %6136
        %6138 = vset.pattern.permute.xlu0 0
        %6139 = vperm.xlu0 %6138, %v5701
        %v6140 = vpop.permute.xlu0 %6139
        %6141 = vset.pattern.permute.xlu0 0
        %6142 = vperm.xlu0 %6141, %v5703
        %v6143 = vpop.permute.xlu0 %6142
        %6144 = vset.pattern.permute.xlu0 0
        %6145 = vperm.xlu0 %6144, %v5705
        %v6146 = vpop.permute.xlu0 %6145
        %6147 = vset.pattern.permute.xlu0 0
        %6148 = vperm.xlu0 %6147, %v5707
        %v6149 = vpop.permute.xlu0 %6148
        %6150 = vset.pattern.permute.xlu0 0
        %6151 = vperm.xlu0 %6150, %v5709
        %v6152 = vpop.permute.xlu0 %6151
        %6153 = vset.pattern.permute.xlu0 0
        %6154 = vperm.xlu0 %6153, %v5711
        %v6155 = vpop.permute.xlu0 %6154
        %6156 = vset.pattern.permute.xlu0 0
        %6157 = vperm.xlu0 %6156, %v5713
        %v6158 = vpop.permute.xlu0 %6157
        %6159 = vset.pattern.permute.xlu0 0
        %6160 = vperm.xlu0 %6159, %v5715
        %v6161 = vpop.permute.xlu0 %6160
        %6162 = vset.pattern.permute.xlu0 0
        %6163 = vperm.xlu0 %6162, %v5717
        %v6164 = vpop.permute.xlu0 %6163
        %6165 = vset.pattern.permute.xlu0 0
        %6166 = vperm.xlu0 %6165, %v5719
        %v6167 = vpop.permute.xlu0 %6166
        %6168 = vset.pattern.permute.xlu0 0
        %6169 = vperm.xlu0 %6168, %v5721
        %v6170 = vpop.permute.xlu0 %6169
        %6171 = vset.pattern.permute.xlu0 0
        %6172 = vperm.xlu0 %6171, %v5723
        %v6173 = vpop.permute.xlu0 %6172
        %6174 = vset.pattern.permute.xlu0 0
        %6175 = vperm.xlu0 %6174, %v5725
        %v6176 = vpop.permute.xlu0 %6175
        %6177 = vset.pattern.permute.xlu0 0
        %6178 = vperm.xlu0 %6177, %v5727
        %v6179 = vpop.permute.xlu0 %6178
        %6180 = vset.pattern.permute.xlu0 0
        %6181 = vperm.xlu0 %6180, %v5729
        %v6182 = vpop.permute.xlu0 %6181
        %6183 = vset.pattern.permute.xlu0 0
        %6184 = vperm.xlu0 %6183, %v5731
        %v6185 = vpop.permute.xlu0 %6184
        %6186 = vset.pattern.permute.xlu0 0
        %6187 = vperm.xlu0 %6186, %v5733
        %v6188 = vpop.permute.xlu0 %6187
        %6189 = vset.pattern.permute.xlu0 0
        %6190 = vperm.xlu0 %6189, %v5735
        %v6191 = vpop.permute.xlu0 %6190
        %6192 = vset.pattern.permute.xlu0 0
        %6193 = vperm.xlu0 %6192, %v5737
        %v6194 = vpop.permute.xlu0 %6193
        %6195 = vset.pattern.permute.xlu0 0
        %6196 = vperm.xlu0 %6195, %v5739
        %v6197 = vpop.permute.xlu0 %6196
        %6198 = vset.pattern.permute.xlu0 0
        %6199 = vperm.xlu0 %6198, %v5741
        %v6200 = vpop.permute.xlu0 %6199
        %6201 = vset.pattern.permute.xlu0 0
        %6202 = vperm.xlu0 %6201, %v5743
        %v6203 = vpop.permute.xlu0 %6202
        %6204 = vset.pattern.permute.xlu0 0
        %6205 = vperm.xlu0 %6204, %v5745
        %v6206 = vpop.permute.xlu0 %6205
        %6207 = vset.pattern.permute.xlu0 0
        %6208 = vperm.xlu0 %6207, %v5747
        %v6209 = vpop.permute.xlu0 %6208
        %6210 = vset.pattern.permute.xlu0 0
        %6211 = vperm.xlu0 %6210, %v5749
        %v6212 = vpop.permute.xlu0 %6211
        %6213 = vset.pattern.permute.xlu0 0
        %6214 = vperm.xlu0 %6213, %v5751
        %v6215 = vpop.permute.xlu0 %6214
        %6216 = vset.pattern.permute.xlu0 0
        %6217 = vperm.xlu0 %6216, %v5753
        %v6218 = vpop.permute.xlu0 %6217
        %6219 = vset.pattern.permute.xlu0 0
        %6220 = vperm.xlu0 %6219, %v5755
        %v6221 = vpop.permute.xlu0 %6220
        %6222 = vset.pattern.permute.xlu0 0
        %6223 = vperm.xlu0 %6222, %v5757
        %v6224 = vpop.permute.xlu0 %6223
        %6225 = vset.pattern.permute.xlu0 0
        %6226 = vperm.xlu0 %6225, %v5759
        %v6227 = vpop.permute.xlu0 %6226
        %6228 = vset.pattern.permute.xlu0 0
        %6229 = vperm.xlu0 %6228, %v5761
        %v6230 = vpop.permute.xlu0 %6229
        %6231 = vset.pattern.permute.xlu0 0
        %6232 = vperm.xlu0 %6231, %v5763
        %v6233 = vpop.permute.xlu0 %6232
        %6234 = vset.pattern.permute.xlu0 0
        %6235 = vperm.xlu0 %6234, %v5765
        %v6236 = vpop.permute.xlu0 %6235
        %6237 = vset.pattern.permute.xlu0 0
        %6238 = vperm.xlu0 %6237, %v5767
        %v6239 = vpop.permute.xlu0 %6238
        %6240 = vset.pattern.permute.xlu0 0
        %6241 = vperm.xlu0 %6240, %v5769
        %v6242 = vpop.permute.xlu0 %6241
        %6243 = vset.pattern.permute.xlu0 0
        %6244 = vperm.xlu0 %6243, %v5771
        %v6245 = vpop.permute.xlu0 %6244
        %6246 = vset.pattern.permute.xlu0 0
        %6247 = vperm.xlu0 %6246, %v5773
        %v6248 = vpop.permute.xlu0 %6247
        %6249 = vset.pattern.permute.xlu0 0
        %6250 = vperm.xlu0 %6249, %v5775
        %v6251 = vpop.permute.xlu0 %6250
        %6252 = vset.pattern.permute.xlu0 0
        %6253 = vperm.xlu0 %6252, %v5777
        %v6254 = vpop.permute.xlu0 %6253
        %6255 = vset.pattern.permute.xlu0 0
        %6256 = vperm.xlu0 %6255, %v5779
        %v6257 = vpop.permute.xlu0 %6256
        %6258 = vset.pattern.permute.xlu0 0
        %6259 = vperm.xlu0 %6258, %v5781
        %v6260 = vpop.permute.xlu0 %6259
        %6261 = vset.pattern.permute.xlu0 0
        %6262 = vperm.xlu0 %6261, %v5783
        %v6263 = vpop.permute.xlu0 %6262
        %6264 = vset.pattern.permute.xlu0 0
        %6265 = vperm.xlu0 %6264, %v5785
        %v6266 = vpop.permute.xlu0 %6265
        %6267 = vset.pattern.permute.xlu0 0
        %6268 = vperm.xlu0 %6267, %v5787
        %v6269 = vpop.permute.xlu0 %6268
        %6270 = vset.pattern.permute.xlu0 0
        %6271 = vperm.xlu0 %6270, %v5789
        %v6272 = vpop.permute.xlu0 %6271
        %6273 = vset.pattern.permute.xlu0 0
        %6274 = vperm.xlu0 %6273, %v5791
        %v6275 = vpop.permute.xlu0 %6274
        %6276 = vset.pattern.permute.xlu0 0
        %6277 = vperm.xlu0 %6276, %v5793
        %v6278 = vpop.permute.xlu0 %6277
        %6279 = vset.pattern.permute.xlu0 0
        %6280 = vperm.xlu0 %6279, %v5795
        %v6281 = vpop.permute.xlu0 %6280
        %6282 = vset.pattern.permute.xlu0 0
        %6283 = vperm.xlu0 %6282, %v5797
        %v6284 = vpop.permute.xlu0 %6283
        %6285 = vset.pattern.permute.xlu0 0
        %6286 = vperm.xlu0 %6285, %v5799
        %v6287 = vpop.permute.xlu0 %6286
        %6288 = vset.pattern.permute.xlu0 0
        %6289 = vperm.xlu0 %6288, %v5801
        %v6290 = vpop.permute.xlu0 %6289
        %6291 = vset.pattern.permute.xlu0 0
        %6292 = vperm.xlu0 %6291, %v5803
        %v6293 = vpop.permute.xlu0 %6292
        %6294 = vset.pattern.permute.xlu0 0
        %6295 = vperm.xlu0 %6294, %v5805
        %v6296 = vpop.permute.xlu0 %6295
        %6297 = vset.pattern.permute.xlu0 0
        %6298 = vperm.xlu0 %6297, %v5807
        %v6299 = vpop.permute.xlu0 %6298
        %6300 = vset.pattern.permute.xlu0 0
        %6301 = vperm.xlu0 %6300, %v5809
        %v6302 = vpop.permute.xlu0 %6301
        %6303 = vset.pattern.permute.xlu0 0
        %6304 = vperm.xlu0 %6303, %v5811
        %v6305 = vpop.permute.xlu0 %6304
        %6306 = vset.pattern.permute.xlu0 0
        %6307 = vperm.xlu0 %6306, %v5813
        %v6308 = vpop.permute.xlu0 %6307
        %6309 = vset.pattern.permute.xlu0 0
        %6310 = vperm.xlu0 %6309, %v5815
        %v6311 = vpop.permute.xlu0 %6310
        %6312 = vset.pattern.permute.xlu0 0
        %6313 = vperm.xlu0 %6312, %v5817
        %v6314 = vpop.permute.xlu0 %6313
        %6315 = vset.pattern.permute.xlu0 0
        %6316 = vperm.xlu0 %6315, %v5819
        %v6317 = vpop.permute.xlu0 %6316
        %6318 = vset.pattern.permute.xlu0 0
        %6319 = vperm.xlu0 %6318, %v5821
        %v6320 = vpop.permute.xlu0 %6319
        %6321 = vset.pattern.permute.xlu0 0
        %6322 = vperm.xlu0 %6321, %v5823
        %v6323 = vpop.permute.xlu0 %6322
        %6324 = vset.pattern.permute.xlu0 0
        %6325 = vperm.xlu0 %6324, %v5825
        %v6326 = vpop.permute.xlu0 %6325
        %6327 = vset.pattern.permute.xlu0 0
        %6328 = vperm.xlu0 %6327, %v5827
        %v6329 = vpop.permute.xlu0 %6328
        %6330 = vset.pattern.permute.xlu0 0
        %6331 = vperm.xlu0 %6330, %v5829
        %v6332 = vpop.permute.xlu0 %6331
        %6333 = vset.pattern.permute.xlu0 0
        %6334 = vperm.xlu0 %6333, %v5831
        %v6335 = vpop.permute.xlu0 %6334
        %6336 = vset.pattern.permute.xlu0 0
        %6337 = vperm.xlu0 %6336, %v5833
        %v6338 = vpop.permute.xlu0 %6337
        %6339 = vset.pattern.permute.xlu0 0
        %6340 = vperm.xlu0 %6339, %v5835
        %v6341 = vpop.permute.xlu0 %6340
        %6342 = vset.pattern.permute.xlu0 0
        %6343 = vperm.xlu0 %6342, %v5837
        %v6344 = vpop.permute.xlu0 %6343
        %6345 = vset.pattern.permute.xlu0 0
        %6346 = vperm.xlu0 %6345, %v5839
        %v6347 = vpop.permute.xlu0 %6346
        %6348 = vset.pattern.permute.xlu0 0
        %6349 = vperm.xlu0 %6348, %v5841
        %v6350 = vpop.permute.xlu0 %6349
        %6351 = vset.pattern.permute.xlu0 0
        %6352 = vperm.xlu0 %6351, %v5843
        %v6353 = vpop.permute.xlu0 %6352
        %6354 = vset.pattern.permute.xlu0 0
        %6355 = vperm.xlu0 %6354, %v5845
        %v6356 = vpop.permute.xlu0 %6355
        %6357 = vset.pattern.permute.xlu0 0
        %6358 = vperm.xlu0 %6357, %v5847
        %v6359 = vpop.permute.xlu0 %6358
        %6360 = vset.pattern.permute.xlu0 0
        %6361 = vperm.xlu0 %6360, %v5849
        %v6362 = vpop.permute.xlu0 %6361
        %v6363 = vlaneseq
        %v6364 = vand.u32 %v6363, 127
        %v6365 = vlaneseq
        %v6366 = vshrl.u32 %v6365, 7
        %v6367 = vsub.s32 %v6364, %v6366
        %v6368 = vrot.slane %v5981, %v6367
        %v6369 = vadd.s32 %v6364, 4294967288
        %v6370 = vlaneseq
        %v6371 = vshrl.u32 %v6370, 7
        %v6372 = vsub.s32 %v6369, %v6371
        %v6373 = vrot.slane %v5984, %v6372
        %vm6374 = vcmask 130112
        %v6375 = vsel %vm6374, %v6373, %v6368
        %v6376 = vadd.s32 %v6364, 4294967280
        %v6377 = vlaneseq
        %v6378 = vshrl.u32 %v6377, 7
        %v6379 = vsub.s32 %v6376, %v6378
        %v6380 = vrot.slane %v5987, %v6379
        %vm6381 = vcmask 195712
        %v6382 = vsel %vm6381, %v6380, %v6375
        %v6383 = vadd.s32 %v6364, 4294967272
        %v6384 = vlaneseq
        %v6385 = vshrl.u32 %v6384, 7
        %v6386 = vsub.s32 %v6383, %v6385
        %v6387 = vrot.slane %v5990, %v6386
        %vm6388 = vcmask 261312
        %v6389 = vsel %vm6388, %v6387, %v6382
        %v6390 = vadd.s32 %v6364, 4294967264
        %v6391 = vlaneseq
        %v6392 = vshrl.u32 %v6391, 7
        %v6393 = vsub.s32 %v6390, %v6392
        %v6394 = vrot.slane %v5993, %v6393
        %vm6395 = vcmask 326912
        %v6396 = vsel %vm6395, %v6394, %v6389
        %v6397 = vadd.s32 %v6364, 4294967256
        %v6398 = vlaneseq
        %v6399 = vshrl.u32 %v6398, 7
        %v6400 = vsub.s32 %v6397, %v6399
        %v6401 = vrot.slane %v5996, %v6400
        %vm6402 = vcmask 392512
        %v6403 = vsel %vm6402, %v6401, %v6396
        %v6404 = vadd.s32 %v6364, 4294967248
        %v6405 = vlaneseq
        %v6406 = vshrl.u32 %v6405, 7
        %v6407 = vsub.s32 %v6404, %v6406
        %v6408 = vrot.slane %v5999, %v6407
        %vm6409 = vcmask 458112
        %v6410 = vsel %vm6409, %v6408, %v6403
        %v6411 = vadd.s32 %v6364, 4294967240
        %v6412 = vlaneseq
        %v6413 = vshrl.u32 %v6412, 7
        %v6414 = vsub.s32 %v6411, %v6413
        %v6415 = vrot.slane %v6002, %v6414
        %vm6416 = vcmask 523712
        %v6417 = vsel %vm6416, %v6415, %v6410
        %v6418 = vadd.s32 %v6364, 4294967232
        %v6419 = vlaneseq
        %v6420 = vshrl.u32 %v6419, 7
        %v6421 = vsub.s32 %v6418, %v6420
        %v6422 = vrot.slane %v6005, %v6421
        %vm6423 = vcmask 589312
        %v6424 = vsel %vm6423, %v6422, %v6417
        %v6425 = vadd.s32 %v6364, 4294967224
        %v6426 = vlaneseq
        %v6427 = vshrl.u32 %v6426, 7
        %v6428 = vsub.s32 %v6425, %v6427
        %v6429 = vrot.slane %v6008, %v6428
        %vm6430 = vcmask 654912
        %v6431 = vsel %vm6430, %v6429, %v6424
        %v6432 = vadd.s32 %v6364, 4294967216
        %v6433 = vlaneseq
        %v6434 = vshrl.u32 %v6433, 7
        %v6435 = vsub.s32 %v6432, %v6434
        %v6436 = vrot.slane %v6011, %v6435
        %vm6437 = vcmask 720512
        %v6438 = vsel %vm6437, %v6436, %v6431
        %v6439 = vadd.s32 %v6364, 4294967208
        %v6440 = vlaneseq
        %v6441 = vshrl.u32 %v6440, 7
        %v6442 = vsub.s32 %v6439, %v6441
        %v6443 = vrot.slane %v6014, %v6442
        %vm6444 = vcmask 786112
        %v6445 = vsel %vm6444, %v6443, %v6438
        %v6446 = vadd.s32 %v6364, 4294967200
        %v6447 = vlaneseq
        %v6448 = vshrl.u32 %v6447, 7
        %v6449 = vsub.s32 %v6446, %v6448
        %v6450 = vrot.slane %v6017, %v6449
        %vm6451 = vcmask 851712
        %v6452 = vsel %vm6451, %v6450, %v6445
        %v6453 = vadd.s32 %v6364, 4294967192
        %v6454 = vlaneseq
        %v6455 = vshrl.u32 %v6454, 7
        %v6456 = vsub.s32 %v6453, %v6455
        %v6457 = vrot.slane %v6020, %v6456
        %vm6458 = vcmask 917312
        %v6459 = vsel %vm6458, %v6457, %v6452
        %v6460 = vadd.s32 %v6364, 4294967184
        %v6461 = vlaneseq
        %v6462 = vshrl.u32 %v6461, 7
        %v6463 = vsub.s32 %v6460, %v6462
        %v6464 = vrot.slane %v6023, %v6463
        %vm6465 = vcmask 982912
        %v6466 = vsel %vm6465, %v6464, %v6459
        %v6467 = vadd.s32 %v6364, 4294967176
        %v6468 = vlaneseq
        %v6469 = vshrl.u32 %v6468, 7
        %v6470 = vsub.s32 %v6467, %v6469
        %v6471 = vrot.slane %v6026, %v6470
        %vm6472 = vcmask 1048512
        %v6473 = vsel %vm6472, %v6471, %v6466
        %v6474 = vlaneseq
        %v6475 = vshrl.u32 %v6474, 7
        %v6476 = vsub.s32 %v6364, %v6475
        %v6477 = vrot.slane %v6029, %v6476
        %v6478 = vlaneseq
        %v6479 = vshrl.u32 %v6478, 7
        %v6480 = vsub.s32 %v6369, %v6479
        %v6481 = vrot.slane %v6032, %v6480
        %v6482 = vsel %vm6374, %v6481, %v6477
        %v6483 = vlaneseq
        %v6484 = vshrl.u32 %v6483, 7
        %v6485 = vsub.s32 %v6376, %v6484
        %v6486 = vrot.slane %v6035, %v6485
        %v6487 = vsel %vm6381, %v6486, %v6482
        %v6488 = vlaneseq
        %v6489 = vshrl.u32 %v6488, 7
        %v6490 = vsub.s32 %v6383, %v6489
        %v6491 = vrot.slane %v6038, %v6490
        %v6492 = vsel %vm6388, %v6491, %v6487
        %v6493 = vlaneseq
        %v6494 = vshrl.u32 %v6493, 7
        %v6495 = vsub.s32 %v6390, %v6494
        %v6496 = vrot.slane %v6041, %v6495
        %v6497 = vsel %vm6395, %v6496, %v6492
        %v6498 = vlaneseq
        %v6499 = vshrl.u32 %v6498, 7
        %v6500 = vsub.s32 %v6397, %v6499
        %v6501 = vrot.slane %v6044, %v6500
        %v6502 = vsel %vm6402, %v6501, %v6497
        %v6503 = vlaneseq
        %v6504 = vshrl.u32 %v6503, 7
        %v6505 = vsub.s32 %v6404, %v6504
        %v6506 = vrot.slane %v6047, %v6505
        %v6507 = vsel %vm6409, %v6506, %v6502
        %v6508 = vlaneseq
        %v6509 = vshrl.u32 %v6508, 7
        %v6510 = vsub.s32 %v6411, %v6509
        %v6511 = vrot.slane %v6050, %v6510
        %v6512 = vsel %vm6416, %v6511, %v6507
        %v6513 = vlaneseq
        %v6514 = vshrl.u32 %v6513, 7
        %v6515 = vsub.s32 %v6418, %v6514
        %v6516 = vrot.slane %v6053, %v6515
        %v6517 = vsel %vm6423, %v6516, %v6512
        %v6518 = vlaneseq
        %v6519 = vshrl.u32 %v6518, 7
        %v6520 = vsub.s32 %v6425, %v6519
        %v6521 = vrot.slane %v6056, %v6520
        %v6522 = vsel %vm6430, %v6521, %v6517
        %v6523 = vlaneseq
        %v6524 = vshrl.u32 %v6523, 7
        %v6525 = vsub.s32 %v6432, %v6524
        %v6526 = vrot.slane %v6059, %v6525
        %v6527 = vsel %vm6437, %v6526, %v6522
        %v6528 = vlaneseq
        %v6529 = vshrl.u32 %v6528, 7
        %v6530 = vsub.s32 %v6439, %v6529
        %v6531 = vrot.slane %v6062, %v6530
        %v6532 = vsel %vm6444, %v6531, %v6527
        %v6533 = vlaneseq
        %v6534 = vshrl.u32 %v6533, 7
        %v6535 = vsub.s32 %v6446, %v6534
        %v6536 = vrot.slane %v6065, %v6535
        %v6537 = vsel %vm6451, %v6536, %v6532
        %v6538 = vlaneseq
        %v6539 = vshrl.u32 %v6538, 7
        %v6540 = vsub.s32 %v6453, %v6539
        %v6541 = vrot.slane %v6068, %v6540
        %v6542 = vsel %vm6458, %v6541, %v6537
        %v6543 = vlaneseq
        %v6544 = vshrl.u32 %v6543, 7
        %v6545 = vsub.s32 %v6460, %v6544
        %v6546 = vrot.slane %v6071, %v6545
        %v6547 = vsel %vm6465, %v6546, %v6542
        %v6548 = vlaneseq
        %v6549 = vshrl.u32 %v6548, 7
        %v6550 = vsub.s32 %v6467, %v6549
        %v6551 = vrot.slane %v6074, %v6550
        %v6552 = vsel %vm6472, %v6551, %v6547
        %v6553 = vlaneseq
        %v6554 = vshrl.u32 %v6553, 7
        %v6555 = vsub.s32 %v6364, %v6554
        %v6556 = vrot.slane %v6077, %v6555
        %v6557 = vlaneseq
        %v6558 = vshrl.u32 %v6557, 7
        %v6559 = vsub.s32 %v6369, %v6558
        %v6560 = vrot.slane %v6080, %v6559
        %v6561 = vsel %vm6374, %v6560, %v6556
        %v6562 = vlaneseq
        %v6563 = vshrl.u32 %v6562, 7
        %v6564 = vsub.s32 %v6376, %v6563
        %v6565 = vrot.slane %v6083, %v6564
        %v6566 = vsel %vm6381, %v6565, %v6561
        %v6567 = vlaneseq
        %v6568 = vshrl.u32 %v6567, 7
        %v6569 = vsub.s32 %v6383, %v6568
        %v6570 = vrot.slane %v6086, %v6569
        %v6571 = vsel %vm6388, %v6570, %v6566
        %v6572 = vlaneseq
        %v6573 = vshrl.u32 %v6572, 7
        %v6574 = vsub.s32 %v6390, %v6573
        %v6575 = vrot.slane %v6089, %v6574
        %v6576 = vsel %vm6395, %v6575, %v6571
        %v6577 = vlaneseq
        %v6578 = vshrl.u32 %v6577, 7
        %v6579 = vsub.s32 %v6397, %v6578
        %v6580 = vrot.slane %v6092, %v6579
        %v6581 = vsel %vm6402, %v6580, %v6576
        %v6582 = vlaneseq
        %v6583 = vshrl.u32 %v6582, 7
        %v6584 = vsub.s32 %v6404, %v6583
        %v6585 = vrot.slane %v6095, %v6584
        %v6586 = vsel %vm6409, %v6585, %v6581
        %v6587 = vlaneseq
        %v6588 = vshrl.u32 %v6587, 7
        %v6589 = vsub.s32 %v6411, %v6588
        %v6590 = vrot.slane %v6098, %v6589
        %v6591 = vsel %vm6416, %v6590, %v6586
        %v6592 = vlaneseq
        %v6593 = vshrl.u32 %v6592, 7
        %v6594 = vsub.s32 %v6418, %v6593
        %v6595 = vrot.slane %v6101, %v6594
        %v6596 = vsel %vm6423, %v6595, %v6591
        %v6597 = vlaneseq
        %v6598 = vshrl.u32 %v6597, 7
        %v6599 = vsub.s32 %v6425, %v6598
        %v6600 = vrot.slane %v6104, %v6599
        %v6601 = vsel %vm6430, %v6600, %v6596
        %v6602 = vlaneseq
        %v6603 = vshrl.u32 %v6602, 7
        %v6604 = vsub.s32 %v6432, %v6603
        %v6605 = vrot.slane %v6107, %v6604
        %v6606 = vsel %vm6437, %v6605, %v6601
        %v6607 = vlaneseq
        %v6608 = vshrl.u32 %v6607, 7
        %v6609 = vsub.s32 %v6439, %v6608
        %v6610 = vrot.slane %v6110, %v6609
        %v6611 = vsel %vm6444, %v6610, %v6606
        %v6612 = vlaneseq
        %v6613 = vshrl.u32 %v6612, 7
        %v6614 = vsub.s32 %v6446, %v6613
        %v6615 = vrot.slane %v6113, %v6614
        %v6616 = vsel %vm6451, %v6615, %v6611
        %v6617 = vlaneseq
        %v6618 = vshrl.u32 %v6617, 7
        %v6619 = vsub.s32 %v6453, %v6618
        %v6620 = vrot.slane %v6116, %v6619
        %v6621 = vsel %vm6458, %v6620, %v6616
        %v6622 = vlaneseq
        %v6623 = vshrl.u32 %v6622, 7
        %v6624 = vsub.s32 %v6460, %v6623
        %v6625 = vrot.slane %v6119, %v6624
        %v6626 = vsel %vm6465, %v6625, %v6621
        %v6627 = vlaneseq
        %v6628 = vshrl.u32 %v6627, 7
        %v6629 = vsub.s32 %v6467, %v6628
        %v6630 = vrot.slane %v6122, %v6629
        %v6631 = vsel %vm6472, %v6630, %v6626
        %v6632 = vlaneseq
        %v6633 = vshrl.u32 %v6632, 7
        %v6634 = vsub.s32 %v6364, %v6633
        %v6635 = vrot.slane %v6125, %v6634
        %v6636 = vlaneseq
        %v6637 = vshrl.u32 %v6636, 7
        %v6638 = vsub.s32 %v6369, %v6637
        %v6639 = vrot.slane %v6128, %v6638
        %v6640 = vsel %vm6374, %v6639, %v6635
        %v6641 = vlaneseq
        %v6642 = vshrl.u32 %v6641, 7
        %v6643 = vsub.s32 %v6376, %v6642
        %v6644 = vrot.slane %v6131, %v6643
        %v6645 = vsel %vm6381, %v6644, %v6640
        %v6646 = vlaneseq
        %v6647 = vshrl.u32 %v6646, 7
        %v6648 = vsub.s32 %v6383, %v6647
        %v6649 = vrot.slane %v6134, %v6648
        %v6650 = vsel %vm6388, %v6649, %v6645
        %v6651 = vlaneseq
        %v6652 = vshrl.u32 %v6651, 7
        %v6653 = vsub.s32 %v6390, %v6652
        %v6654 = vrot.slane %v6137, %v6653
        %v6655 = vsel %vm6395, %v6654, %v6650
        %v6656 = vlaneseq
        %v6657 = vshrl.u32 %v6656, 7
        %v6658 = vsub.s32 %v6397, %v6657
        %v6659 = vrot.slane %v6140, %v6658
        %v6660 = vsel %vm6402, %v6659, %v6655
        %v6661 = vlaneseq
        %v6662 = vshrl.u32 %v6661, 7
        %v6663 = vsub.s32 %v6404, %v6662
        %v6664 = vrot.slane %v6143, %v6663
        %v6665 = vsel %vm6409, %v6664, %v6660
        %v6666 = vlaneseq
        %v6667 = vshrl.u32 %v6666, 7
        %v6668 = vsub.s32 %v6411, %v6667
        %v6669 = vrot.slane %v6146, %v6668
        %v6670 = vsel %vm6416, %v6669, %v6665
        %v6671 = vlaneseq
        %v6672 = vshrl.u32 %v6671, 7
        %v6673 = vsub.s32 %v6418, %v6672
        %v6674 = vrot.slane %v6149, %v6673
        %v6675 = vsel %vm6423, %v6674, %v6670
        %v6676 = vlaneseq
        %v6677 = vshrl.u32 %v6676, 7
        %v6678 = vsub.s32 %v6425, %v6677
        %v6679 = vrot.slane %v6152, %v6678
        %v6680 = vsel %vm6430, %v6679, %v6675
        %v6681 = vlaneseq
        %v6682 = vshrl.u32 %v6681, 7
        %v6683 = vsub.s32 %v6432, %v6682
        %v6684 = vrot.slane %v6155, %v6683
        %v6685 = vsel %vm6437, %v6684, %v6680
        %v6686 = vlaneseq
        %v6687 = vshrl.u32 %v6686, 7
        %v6688 = vsub.s32 %v6439, %v6687
        %v6689 = vrot.slane %v6158, %v6688
        %v6690 = vsel %vm6444, %v6689, %v6685
        %v6691 = vlaneseq
        %v6692 = vshrl.u32 %v6691, 7
        %v6693 = vsub.s32 %v6446, %v6692
        %v6694 = vrot.slane %v6161, %v6693
        %v6695 = vsel %vm6451, %v6694, %v6690
        %v6696 = vlaneseq
        %v6697 = vshrl.u32 %v6696, 7
        %v6698 = vsub.s32 %v6453, %v6697
        %v6699 = vrot.slane %v6164, %v6698
        %v6700 = vsel %vm6458, %v6699, %v6695
        %v6701 = vlaneseq
        %v6702 = vshrl.u32 %v6701, 7
        %v6703 = vsub.s32 %v6460, %v6702
        %v6704 = vrot.slane %v6167, %v6703
        %v6705 = vsel %vm6465, %v6704, %v6700
        %v6706 = vlaneseq
        %v6707 = vshrl.u32 %v6706, 7
        %v6708 = vsub.s32 %v6467, %v6707
        %v6709 = vrot.slane %v6170, %v6708
        %v6710 = vsel %vm6472, %v6709, %v6705
        %v6711 = vlaneseq
        %v6712 = vshrl.u32 %v6711, 7
        %v6713 = vsub.s32 %v6364, %v6712
        %v6714 = vrot.slane %v6173, %v6713
        %v6715 = vlaneseq
        %v6716 = vshrl.u32 %v6715, 7
        %v6717 = vsub.s32 %v6369, %v6716
        %v6718 = vrot.slane %v6176, %v6717
        %v6719 = vsel %vm6374, %v6718, %v6714
        %v6720 = vlaneseq
        %v6721 = vshrl.u32 %v6720, 7
        %v6722 = vsub.s32 %v6376, %v6721
        %v6723 = vrot.slane %v6179, %v6722
        %v6724 = vsel %vm6381, %v6723, %v6719
        %v6725 = vlaneseq
        %v6726 = vshrl.u32 %v6725, 7
        %v6727 = vsub.s32 %v6383, %v6726
        %v6728 = vrot.slane %v6182, %v6727
        %v6729 = vsel %vm6388, %v6728, %v6724
        %v6730 = vlaneseq
        %v6731 = vshrl.u32 %v6730, 7
        %v6732 = vsub.s32 %v6390, %v6731
        %v6733 = vrot.slane %v6185, %v6732
        %v6734 = vsel %vm6395, %v6733, %v6729
        %v6735 = vlaneseq
        %v6736 = vshrl.u32 %v6735, 7
        %v6737 = vsub.s32 %v6397, %v6736
        %v6738 = vrot.slane %v6188, %v6737
        %v6739 = vsel %vm6402, %v6738, %v6734
        %v6740 = vlaneseq
        %v6741 = vshrl.u32 %v6740, 7
        %v6742 = vsub.s32 %v6404, %v6741
        %v6743 = vrot.slane %v6191, %v6742
        %v6744 = vsel %vm6409, %v6743, %v6739
        %v6745 = vlaneseq
        %v6746 = vshrl.u32 %v6745, 7
        %v6747 = vsub.s32 %v6411, %v6746
        %v6748 = vrot.slane %v6194, %v6747
        %v6749 = vsel %vm6416, %v6748, %v6744
        %v6750 = vlaneseq
        %v6751 = vshrl.u32 %v6750, 7
        %v6752 = vsub.s32 %v6418, %v6751
        %v6753 = vrot.slane %v6197, %v6752
        %v6754 = vsel %vm6423, %v6753, %v6749
        %v6755 = vlaneseq
        %v6756 = vshrl.u32 %v6755, 7
        %v6757 = vsub.s32 %v6425, %v6756
        %v6758 = vrot.slane %v6200, %v6757
        %v6759 = vsel %vm6430, %v6758, %v6754
        %v6760 = vlaneseq
        %v6761 = vshrl.u32 %v6760, 7
        %v6762 = vsub.s32 %v6432, %v6761
        %v6763 = vrot.slane %v6203, %v6762
        %v6764 = vsel %vm6437, %v6763, %v6759
        %v6765 = vlaneseq
        %v6766 = vshrl.u32 %v6765, 7
        %v6767 = vsub.s32 %v6439, %v6766
        %v6768 = vrot.slane %v6206, %v6767
        %v6769 = vsel %vm6444, %v6768, %v6764
        %v6770 = vlaneseq
        %v6771 = vshrl.u32 %v6770, 7
        %v6772 = vsub.s32 %v6446, %v6771
        %v6773 = vrot.slane %v6209, %v6772
        %v6774 = vsel %vm6451, %v6773, %v6769
        %v6775 = vlaneseq
        %v6776 = vshrl.u32 %v6775, 7
        %v6777 = vsub.s32 %v6453, %v6776
        %v6778 = vrot.slane %v6212, %v6777
        %v6779 = vsel %vm6458, %v6778, %v6774
        %v6780 = vlaneseq
        %v6781 = vshrl.u32 %v6780, 7
        %v6782 = vsub.s32 %v6460, %v6781
        %v6783 = vrot.slane %v6215, %v6782
        %v6784 = vsel %vm6465, %v6783, %v6779
        %v6785 = vlaneseq
        %v6786 = vshrl.u32 %v6785, 7
        %v6787 = vsub.s32 %v6467, %v6786
        %v6788 = vrot.slane %v6218, %v6787
        %v6789 = vsel %vm6472, %v6788, %v6784
        %v6790 = vlaneseq
        %v6791 = vshrl.u32 %v6790, 7
        %v6792 = vsub.s32 %v6364, %v6791
        %v6793 = vrot.slane %v6221, %v6792
        %v6794 = vlaneseq
        %v6795 = vshrl.u32 %v6794, 7
        %v6796 = vsub.s32 %v6369, %v6795
        %v6797 = vrot.slane %v6224, %v6796
        %v6798 = vsel %vm6374, %v6797, %v6793
        %v6799 = vlaneseq
        %v6800 = vshrl.u32 %v6799, 7
        %v6801 = vsub.s32 %v6376, %v6800
        %v6802 = vrot.slane %v6227, %v6801
        %v6803 = vsel %vm6381, %v6802, %v6798
        %v6804 = vlaneseq
        %v6805 = vshrl.u32 %v6804, 7
        %v6806 = vsub.s32 %v6383, %v6805
        %v6807 = vrot.slane %v6230, %v6806
        %v6808 = vsel %vm6388, %v6807, %v6803
        %v6809 = vlaneseq
        %v6810 = vshrl.u32 %v6809, 7
        %v6811 = vsub.s32 %v6390, %v6810
        %v6812 = vrot.slane %v6233, %v6811
        %v6813 = vsel %vm6395, %v6812, %v6808
        %v6814 = vlaneseq
        %v6815 = vshrl.u32 %v6814, 7
        %v6816 = vsub.s32 %v6397, %v6815
        %v6817 = vrot.slane %v6236, %v6816
        %v6818 = vsel %vm6402, %v6817, %v6813
        %v6819 = vlaneseq
        %v6820 = vshrl.u32 %v6819, 7
        %v6821 = vsub.s32 %v6404, %v6820
        %v6822 = vrot.slane %v6239, %v6821
        %v6823 = vsel %vm6409, %v6822, %v6818
        %v6824 = vlaneseq
        %v6825 = vshrl.u32 %v6824, 7
        %v6826 = vsub.s32 %v6411, %v6825
        %v6827 = vrot.slane %v6242, %v6826
        %v6828 = vsel %vm6416, %v6827, %v6823
        %v6829 = vlaneseq
        %v6830 = vshrl.u32 %v6829, 7
        %v6831 = vsub.s32 %v6418, %v6830
        %v6832 = vrot.slane %v6245, %v6831
        %v6833 = vsel %vm6423, %v6832, %v6828
        %v6834 = vlaneseq
        %v6835 = vshrl.u32 %v6834, 7
        %v6836 = vsub.s32 %v6425, %v6835
        %v6837 = vrot.slane %v6248, %v6836
        %v6838 = vsel %vm6430, %v6837, %v6833
        %v6839 = vlaneseq
        %v6840 = vshrl.u32 %v6839, 7
        %v6841 = vsub.s32 %v6432, %v6840
        %v6842 = vrot.slane %v6251, %v6841
        %v6843 = vsel %vm6437, %v6842, %v6838
        %v6844 = vlaneseq
        %v6845 = vshrl.u32 %v6844, 7
        %v6846 = vsub.s32 %v6439, %v6845
        %v6847 = vrot.slane %v6254, %v6846
        %v6848 = vsel %vm6444, %v6847, %v6843
        %v6849 = vlaneseq
        %v6850 = vshrl.u32 %v6849, 7
        %v6851 = vsub.s32 %v6446, %v6850
        %v6852 = vrot.slane %v6257, %v6851
        %v6853 = vsel %vm6451, %v6852, %v6848
        %v6854 = vlaneseq
        %v6855 = vshrl.u32 %v6854, 7
        %v6856 = vsub.s32 %v6453, %v6855
        %v6857 = vrot.slane %v6260, %v6856
        %v6858 = vsel %vm6458, %v6857, %v6853
        %v6859 = vlaneseq
        %v6860 = vshrl.u32 %v6859, 7
        %v6861 = vsub.s32 %v6460, %v6860
        %v6862 = vrot.slane %v6263, %v6861
        %v6863 = vsel %vm6465, %v6862, %v6858
        %v6864 = vlaneseq
        %v6865 = vshrl.u32 %v6864, 7
        %v6866 = vsub.s32 %v6467, %v6865
        %v6867 = vrot.slane %v6266, %v6866
        %v6868 = vsel %vm6472, %v6867, %v6863
        %v6869 = vlaneseq
        %v6870 = vshrl.u32 %v6869, 7
        %v6871 = vsub.s32 %v6364, %v6870
        %v6872 = vrot.slane %v6269, %v6871
        %v6873 = vlaneseq
        %v6874 = vshrl.u32 %v6873, 7
        %v6875 = vsub.s32 %v6369, %v6874
        %v6876 = vrot.slane %v6272, %v6875
        %v6877 = vsel %vm6374, %v6876, %v6872
        %v6878 = vlaneseq
        %v6879 = vshrl.u32 %v6878, 7
        %v6880 = vsub.s32 %v6376, %v6879
        %v6881 = vrot.slane %v6275, %v6880
        %v6882 = vsel %vm6381, %v6881, %v6877
        %v6883 = vlaneseq
        %v6884 = vshrl.u32 %v6883, 7
        %v6885 = vsub.s32 %v6383, %v6884
        %v6886 = vrot.slane %v6278, %v6885
        %v6887 = vsel %vm6388, %v6886, %v6882
        %v6888 = vlaneseq
        %v6889 = vshrl.u32 %v6888, 7
        %v6890 = vsub.s32 %v6390, %v6889
        %v6891 = vrot.slane %v6281, %v6890
        %v6892 = vsel %vm6395, %v6891, %v6887
        %v6893 = vlaneseq
        %v6894 = vshrl.u32 %v6893, 7
        %v6895 = vsub.s32 %v6397, %v6894
        %v6896 = vrot.slane %v6284, %v6895
        %v6897 = vsel %vm6402, %v6896, %v6892
        %v6898 = vlaneseq
        %v6899 = vshrl.u32 %v6898, 7
        %v6900 = vsub.s32 %v6404, %v6899
        %v6901 = vrot.slane %v6287, %v6900
        %v6902 = vsel %vm6409, %v6901, %v6897
        %v6903 = vlaneseq
        %v6904 = vshrl.u32 %v6903, 7
        %v6905 = vsub.s32 %v6411, %v6904
        %v6906 = vrot.slane %v6290, %v6905
        %v6907 = vsel %vm6416, %v6906, %v6902
        %v6908 = vlaneseq
        %v6909 = vshrl.u32 %v6908, 7
        %v6910 = vsub.s32 %v6418, %v6909
        %v6911 = vrot.slane %v6293, %v6910
        %v6912 = vsel %vm6423, %v6911, %v6907
        %v6913 = vlaneseq
        %v6914 = vshrl.u32 %v6913, 7
        %v6915 = vsub.s32 %v6425, %v6914
        %v6916 = vrot.slane %v6296, %v6915
        %v6917 = vsel %vm6430, %v6916, %v6912
        %v6918 = vlaneseq
        %v6919 = vshrl.u32 %v6918, 7
        %v6920 = vsub.s32 %v6432, %v6919
        %v6921 = vrot.slane %v6299, %v6920
        %v6922 = vsel %vm6437, %v6921, %v6917
        %v6923 = vlaneseq
        %v6924 = vshrl.u32 %v6923, 7
        %v6925 = vsub.s32 %v6439, %v6924
        %v6926 = vrot.slane %v6302, %v6925
        %v6927 = vsel %vm6444, %v6926, %v6922
        %v6928 = vlaneseq
        %v6929 = vshrl.u32 %v6928, 7
        %v6930 = vsub.s32 %v6446, %v6929
        %v6931 = vrot.slane %v6305, %v6930
        %v6932 = vsel %vm6451, %v6931, %v6927
        %v6933 = vlaneseq
        %v6934 = vshrl.u32 %v6933, 7
        %v6935 = vsub.s32 %v6453, %v6934
        %v6936 = vrot.slane %v6308, %v6935
        %v6937 = vsel %vm6458, %v6936, %v6932
        %v6938 = vlaneseq
        %v6939 = vshrl.u32 %v6938, 7
        %v6940 = vsub.s32 %v6460, %v6939
        %v6941 = vrot.slane %v6311, %v6940
        %v6942 = vsel %vm6465, %v6941, %v6937
        %v6943 = vlaneseq
        %v6944 = vshrl.u32 %v6943, 7
        %v6945 = vsub.s32 %v6467, %v6944
        %v6946 = vrot.slane %v6314, %v6945
        %v6947 = vsel %vm6472, %v6946, %v6942
        %v6948 = vlaneseq
        %v6949 = vshrl.u32 %v6948, 7
        %v6950 = vsub.s32 %v6364, %v6949
        %v6951 = vrot.slane %v6317, %v6950
        %v6952 = vlaneseq
        %v6953 = vshrl.u32 %v6952, 7
        %v6954 = vsub.s32 %v6369, %v6953
        %v6955 = vrot.slane %v6320, %v6954
        %v6956 = vsel %vm6374, %v6955, %v6951
        %v6957 = vlaneseq
        %v6958 = vshrl.u32 %v6957, 7
        %v6959 = vsub.s32 %v6376, %v6958
        %v6960 = vrot.slane %v6323, %v6959
        %v6961 = vsel %vm6381, %v6960, %v6956
        %v6962 = vlaneseq
        %v6963 = vshrl.u32 %v6962, 7
        %v6964 = vsub.s32 %v6383, %v6963
        %v6965 = vrot.slane %v6326, %v6964
        %v6966 = vsel %vm6388, %v6965, %v6961
        %v6967 = vlaneseq
        %v6968 = vshrl.u32 %v6967, 7
        %v6969 = vsub.s32 %v6390, %v6968
        %v6970 = vrot.slane %v6329, %v6969
        %v6971 = vsel %vm6395, %v6970, %v6966
        %v6972 = vlaneseq
        %v6973 = vshrl.u32 %v6972, 7
        %v6974 = vsub.s32 %v6397, %v6973
        %v6975 = vrot.slane %v6332, %v6974
        %v6976 = vsel %vm6402, %v6975, %v6971
        %v6977 = vlaneseq
        %v6978 = vshrl.u32 %v6977, 7
        %v6979 = vsub.s32 %v6404, %v6978
        %v6980 = vrot.slane %v6335, %v6979
        %v6981 = vsel %vm6409, %v6980, %v6976
        %v6982 = vlaneseq
        %v6983 = vshrl.u32 %v6982, 7
        %v6984 = vsub.s32 %v6411, %v6983
        %v6985 = vrot.slane %v6338, %v6984
        %v6986 = vsel %vm6416, %v6985, %v6981
        %v6987 = vlaneseq
        %v6988 = vshrl.u32 %v6987, 7
        %v6989 = vsub.s32 %v6418, %v6988
        %v6990 = vrot.slane %v6341, %v6989
        %v6991 = vsel %vm6423, %v6990, %v6986
        %v6992 = vlaneseq
        %v6993 = vshrl.u32 %v6992, 7
        %v6994 = vsub.s32 %v6425, %v6993
        %v6995 = vrot.slane %v6344, %v6994
        %v6996 = vsel %vm6430, %v6995, %v6991
        %v6997 = vlaneseq
        %v6998 = vshrl.u32 %v6997, 7
        %v6999 = vsub.s32 %v6432, %v6998
        %v7000 = vrot.slane %v6347, %v6999
        %v7001 = vsel %vm6437, %v7000, %v6996
        %v7002 = vlaneseq
        %v7003 = vshrl.u32 %v7002, 7
        %v7004 = vsub.s32 %v6439, %v7003
        %v7005 = vrot.slane %v6350, %v7004
        %v7006 = vsel %vm6444, %v7005, %v7001
        %v7007 = vlaneseq
        %v7008 = vshrl.u32 %v7007, 7
        %v7009 = vsub.s32 %v6446, %v7008
        %v7010 = vrot.slane %v6353, %v7009
        %v7011 = vsel %vm6451, %v7010, %v7006
        %v7012 = vlaneseq
        %v7013 = vshrl.u32 %v7012, 7
        %v7014 = vsub.s32 %v6453, %v7013
        %v7015 = vrot.slane %v6356, %v7014
        %v7016 = vsel %vm6458, %v7015, %v7011
        %v7017 = vlaneseq
        %v7018 = vshrl.u32 %v7017, 7
        %v7019 = vsub.s32 %v6460, %v7018
        %v7020 = vrot.slane %v6359, %v7019
        %v7021 = vsel %vm6465, %v7020, %v7016
        %v7022 = vlaneseq
        %v7023 = vshrl.u32 %v7022, 7
        %v7024 = vsub.s32 %v6467, %v7023
        %v7025 = vrot.slane %v6362, %v7024
        %v7026 = vsel %vm6472, %v7025, %v7021
        %vm7027 = vcmask 1041409
        %v7028 = vsel %vm7027, %v6552, %v6473
        %vm7029 = vcmask 1042434
        %v7030 = vsel %vm7029, %v6631, %v7028
        %vm7031 = vcmask 1043459
        %v7032 = vsel %vm7031, %v6710, %v7030
        %vm7033 = vcmask 1044484
        %v7034 = vsel %vm7033, %v6789, %v7032
        %vm7035 = vcmask 1045509
        %v7036 = vsel %vm7035, %v6868, %v7034
        %vm7037 = vcmask 1046534
        %v7038 = vsel %vm7037, %v6947, %v7036
        %vm7039 = vcmask 1047559
        %v7040 = vsel %vm7039, %v7026, %v7038
        %7042 = vrot.lane.b32.xlu0 %v7040, 127
        %v7043 = vpop.permute.xlu0 %7042
        %7044 = vrot.lane.b32.xlu0 %v5850, 127
        %v7045 = vpop.permute.xlu0 %7044
        %v7046 = vadd.f32 %v7043, %v7040
        %v7047 = vmul.f32 %v7046, 0.5
        %v7048 = vsub.f32 %v7045, %v5850
        %v7049 = vmul.f32 %v7047, %v7048
        %v7050 = vld [vmem:[%s3] sm:$0xff]
        %v7051 = vld [vmem:[%s3 + $0x8] sm:$0xff]
        %v7052 = vld [vmem:[%s3 + $0x10] sm:$0xff]
        %v7053 = vld [vmem:[%s3 + $0x18] sm:$0xff]
        %v7054 = vld [vmem:[%s3 + $0x20] sm:$0xff]
        %v7055 = vld [vmem:[%s3 + $0x28] sm:$0xff]
        %v7056 = vld [vmem:[%s3 + $0x30] sm:$0xff]
        %v7057 = vld [vmem:[%s3 + $0x38] sm:$0xff]
        %v7058 = vld [vmem:[%s3 + $0x40] sm:$0xff]
        %v7059 = vld [vmem:[%s3 + $0x48] sm:$0xff]
        %v7060 = vld [vmem:[%s3 + $0x50] sm:$0xff]
        %v7061 = vld [vmem:[%s3 + $0x58] sm:$0xff]
        %v7062 = vld [vmem:[%s3 + $0x60] sm:$0xff]
        %v7063 = vld [vmem:[%s3 + $0x68] sm:$0xff]
        %v7064 = vld [vmem:[%s3 + $0x70] sm:$0xff]
        %v7065 = vld [vmem:[%s3 + $0x78] sm:$0xff]
        %v7066 = vld [vmem:[%s668] sm:$0xff]
        %v7067 = vld [vmem:[%s12] sm:$0x1]
        %7069 = vset.pattern.permute.xlu0 0
        %7070 = vperm.xlu0 %7069, %v7066
        %v7071 = vpop.permute.xlu0 %7070
        %v7074 = vlaneseq
        %v7075 = vshrl.u32 %v7074, 7
        %v7076 = vsub.s32 0, %v7075
        %v7077 = vrot.slane %v7067, %v7076
        %v7079 = vmul.f32 %v7071, %v7077
        %v7080 = vld [vmem:[%s13] sm:$0x1]
        %v7082 = vlaneseq
        %v7083 = vshrl.u32 %v7082, 7
        %v7084 = vsub.s32 0, %v7083
        %v7085 = vrot.slane %v7080, %v7084
        %v7087 = vadd.f32 %v7079, %v7085
        %v7088 = vtanh.pop %v7087
        %v7089 = vld [vmem:[%s14] sm:$0x1]
        %v7091 = vlaneseq
        %v7092 = vshrl.u32 %v7091, 7
        %v7093 = vsub.s32 0, %v7092
        %v7094 = vrot.slane %v7089, %v7093
        %v7096 = vmul.f32 %v7088, %v7094
        %vm7097 = vcmask 818176
        %v7098 = vsel %vm7097, %v7096, 0.0
        %7099 = vadd.xlane.f32.xlu0 %v7098
        %v7100 = vpop.xlane.xlu0 %7099
        %v7101 = vld [vmem:[#allocation3] sm:$0x1]
        %v7103 = vlaneseq
        %v7104 = vshrl.u32 %v7103, 7
        %v7105 = vsub.s32 0, %v7104
        %v7106 = vrot.slane %v7101, %v7105
        %v7108 = vadd.f32 %v7100, %v7106
        %7110 = vset.pattern.permute.xlu0 0
        %7111 = vperm.xlu0 %7110, %v7108
        %v7112 = vpop.permute.xlu0 %7111
        %7114 = vmatprep.subr.mxu0 0.0
        %7115 = vmatpush1.msra.mxu0 %v7050
        %7116 = vmatprep.subr.mxu0 0.0
        %7117 = vmatpush1.msra.mxu0 %v7051
        %7118 = vmatprep.subr.mxu0 0.0
        %7119 = vmatpush1.msra.mxu0 %v7052
        %7120 = vmatprep.subr.mxu0 0.0
        %7121 = vmatpush1.msra.mxu0 %v7053
        %7122 = vmatprep.subr.mxu0 0.0
        %7123 = vmatpush1.msra.mxu0 %v7054
        %7124 = vmatprep.subr.mxu0 0.0
        %7125 = vmatpush1.msra.mxu0 %v7055
        %7126 = vmatprep.subr.mxu0 0.0
        %7127 = vmatpush1.msra.mxu0 %v7056
        %7128 = vmatprep.subr.mxu0 0.0
        %7129 = vmatpush1.msra.mxu0 %v7057
        %7130 = vmatprep.subr.mxu0 0.0
        %7131 = vmatpush1.msra.mxu0 %v7058
        %7132 = vmatprep.subr.mxu0 0.0
        %7133 = vmatpush1.msra.mxu0 %v7059
        %7134 = vmatprep.subr.mxu0 0.0
        %7135 = vmatpush1.msra.mxu0 %v7060
        %7136 = vmatprep.subr.mxu0 0.0
        %7137 = vmatpush1.msra.mxu0 %v7061
        %7138 = vmatprep.subr.mxu0 0.0
        %7139 = vmatpush1.msra.mxu0 %v7062
        %7140 = vmatprep.subr.mxu0 0.0
        %7141 = vmatpush1.msra.mxu0 %v7063
        %7142 = vmatprep.subr.mxu0 0.0
        %7143 = vmatpush1.msra.mxu0 %v7064
        %7144 = vmatprep.subr.mxu0 0.0
        %7145 = vmatpush1.msra.mxu0 %v7065
        %7146 = vmatprep.subr.mxu0 0.0
        %7147 = vmatpush1.msra.mxu0 0.0
        %7148 = vmatprep.subr.mxu0 0.0
        %7149 = vmatpush1.msra.mxu0 0.0
        %7150 = vmatprep.subr.mxu0 0.0
        %7151 = vmatpush1.msra.mxu0 0.0
        %7152 = vmatprep.subr.mxu0 0.0
        %7153 = vmatpush1.msra.mxu0 0.0
        %7154 = vmatprep.subr.mxu0 0.0
        %7155 = vmatpush1.msra.mxu0 0.0
        %7156 = vmatprep.subr.mxu0 0.0
        %7157 = vmatpush1.msra.mxu0 0.0
        %7158 = vmatprep.subr.mxu0 0.0
        %7159 = vmatpush1.msra.mxu0 0.0
        %7160 = vmatprep.subr.mxu0 0.0
        %7161 = vmatpush1.msra.mxu0 0.0
        %7162 = vmatprep.subr.mxu0 0.0
        %7163 = vmatpush1.msra.mxu0 0.0
        %7164 = vmatprep.subr.mxu0 0.0
        %7165 = vmatpush1.msra.mxu0 0.0
        %7166 = vmatprep.subr.mxu0 0.0
        %7167 = vmatpush1.msra.mxu0 0.0
        %7168 = vmatprep.subr.mxu0 0.0
        %7169 = vmatpush1.msra.mxu0 0.0
        %7170 = vmatprep.subr.mxu0 0.0
        %7171 = vmatpush1.msra.mxu0 0.0
        %7172 = vmatprep.subr.mxu0 0.0
        %7173 = vmatpush1.msra.mxu0 0.0
        %7174 = vmatprep.subr.mxu0 0.0
        %7175 = vmatpush1.msra.mxu0 0.0
        %7176 = vmatprep.subr.mxu0 0.0
        %7177 = vmatpush1.msra.mxu0 0.0
        %7178 = vmatprep.mubr.f32.mxu0 0.0
        %7179 = vmatmul.mubr.f32.gmra.mrb[0].mxu0 %v7049
        %v7180 = vpop.f32.mrb[0].mxu0
        %v7181 = vadd.f32 %v7112, %v7180
        %v7182 = vpop.f32.mrb[0].mxu0
        %7183 = vdwg.mxu0
        %v7184 = vmul.f32 %v7181, -0.5
        %v7185 = vmul.f32 %v7184, %v7181
        %v7186 = vsub.f32 %v7185, 0.9189385
        %7315 = vset.pattern.permute.xlu0 0
        %7316 = vperm.xlu0 %7315, %v4956
        %v7317 = vpop.permute.xlu0 %7316
        %7318 = vset.pattern.permute.xlu0 0
        %7319 = vperm.xlu0 %7318, %v4961
        %v7320 = vpop.permute.xlu0 %7319
        %7321 = vset.pattern.permute.xlu0 0
        %7322 = vperm.xlu0 %7321, %v4966
        %v7323 = vpop.permute.xlu0 %7322
        %7324 = vset.pattern.permute.xlu0 0
        %7325 = vperm.xlu0 %7324, %v4971
        %v7326 = vpop.permute.xlu0 %7325
        %7327 = vset.pattern.permute.xlu0 0
        %7328 = vperm.xlu0 %7327, %v4976
        %v7329 = vpop.permute.xlu0 %7328
        %7330 = vset.pattern.permute.xlu0 0
        %7331 = vperm.xlu0 %7330, %v4981
        %v7332 = vpop.permute.xlu0 %7331
        %7333 = vset.pattern.permute.xlu0 0
        %7334 = vperm.xlu0 %7333, %v4986
        %v7335 = vpop.permute.xlu0 %7334
        %7336 = vset.pattern.permute.xlu0 0
        %7337 = vperm.xlu0 %7336, %v4991
        %v7338 = vpop.permute.xlu0 %7337
        %7339 = vset.pattern.permute.xlu0 0
        %7340 = vperm.xlu0 %7339, %v4996
        %v7341 = vpop.permute.xlu0 %7340
        %7342 = vset.pattern.permute.xlu0 0
        %7343 = vperm.xlu0 %7342, %v5001
        %v7344 = vpop.permute.xlu0 %7343
        %7345 = vset.pattern.permute.xlu0 0
        %7346 = vperm.xlu0 %7345, %v5006
        %v7347 = vpop.permute.xlu0 %7346
        %7348 = vset.pattern.permute.xlu0 0
        %7349 = vperm.xlu0 %7348, %v5011
        %v7350 = vpop.permute.xlu0 %7349
        %7351 = vset.pattern.permute.xlu0 0
        %7352 = vperm.xlu0 %7351, %v5016
        %v7353 = vpop.permute.xlu0 %7352
        %7354 = vset.pattern.permute.xlu0 0
        %7355 = vperm.xlu0 %7354, %v5021
        %v7356 = vpop.permute.xlu0 %7355
        %7357 = vset.pattern.permute.xlu0 0
        %7358 = vperm.xlu0 %7357, %v5026
        %v7359 = vpop.permute.xlu0 %7358
        %7360 = vset.pattern.permute.xlu0 0
        %7361 = vperm.xlu0 %7360, %v5031
        %v7362 = vpop.permute.xlu0 %7361
        %7363 = vset.pattern.permute.xlu0 0
        %7364 = vperm.xlu0 %7363, %v5036
        %v7365 = vpop.permute.xlu0 %7364
        %7366 = vset.pattern.permute.xlu0 0
        %7367 = vperm.xlu0 %7366, %v5041
        %v7368 = vpop.permute.xlu0 %7367
        %7369 = vset.pattern.permute.xlu0 0
        %7370 = vperm.xlu0 %7369, %v5046
        %v7371 = vpop.permute.xlu0 %7370
        %7372 = vset.pattern.permute.xlu0 0
        %7373 = vperm.xlu0 %7372, %v5051
        %v7374 = vpop.permute.xlu0 %7373
        %7375 = vset.pattern.permute.xlu0 0
        %7376 = vperm.xlu0 %7375, %v5056
        %v7377 = vpop.permute.xlu0 %7376
        %7378 = vset.pattern.permute.xlu0 0
        %7379 = vperm.xlu0 %7378, %v5061
        %v7380 = vpop.permute.xlu0 %7379
        %7381 = vset.pattern.permute.xlu0 0
        %7382 = vperm.xlu0 %7381, %v5066
        %v7383 = vpop.permute.xlu0 %7382
        %7384 = vset.pattern.permute.xlu0 0
        %7385 = vperm.xlu0 %7384, %v5071
        %v7386 = vpop.permute.xlu0 %7385
        %7387 = vset.pattern.permute.xlu0 0
        %7388 = vperm.xlu0 %7387, %v5076
        %v7389 = vpop.permute.xlu0 %7388
        %7390 = vset.pattern.permute.xlu0 0
        %7391 = vperm.xlu0 %7390, %v5081
        %v7392 = vpop.permute.xlu0 %7391
        %7393 = vset.pattern.permute.xlu0 0
        %7394 = vperm.xlu0 %7393, %v5086
        %v7395 = vpop.permute.xlu0 %7394
        %7396 = vset.pattern.permute.xlu0 0
        %7397 = vperm.xlu0 %7396, %v5091
        %v7398 = vpop.permute.xlu0 %7397
        %7399 = vset.pattern.permute.xlu0 0
        %7400 = vperm.xlu0 %7399, %v5096
        %v7401 = vpop.permute.xlu0 %7400
        %7402 = vset.pattern.permute.xlu0 0
        %7403 = vperm.xlu0 %7402, %v5101
        %v7404 = vpop.permute.xlu0 %7403
        %7405 = vset.pattern.permute.xlu0 0
        %7406 = vperm.xlu0 %7405, %v5106
        %v7407 = vpop.permute.xlu0 %7406
        %7408 = vset.pattern.permute.xlu0 0
        %7409 = vperm.xlu0 %7408, %v5111
        %v7410 = vpop.permute.xlu0 %7409
        %7411 = vset.pattern.permute.xlu0 0
        %7412 = vperm.xlu0 %7411, %v5116
        %v7413 = vpop.permute.xlu0 %7412
        %7414 = vset.pattern.permute.xlu0 0
        %7415 = vperm.xlu0 %7414, %v5121
        %v7416 = vpop.permute.xlu0 %7415
        %7417 = vset.pattern.permute.xlu0 0
        %7418 = vperm.xlu0 %7417, %v5126
        %v7419 = vpop.permute.xlu0 %7418
        %7420 = vset.pattern.permute.xlu0 0
        %7421 = vperm.xlu0 %7420, %v5131
        %v7422 = vpop.permute.xlu0 %7421
        %7423 = vset.pattern.permute.xlu0 0
        %7424 = vperm.xlu0 %7423, %v5136
        %v7425 = vpop.permute.xlu0 %7424
        %7426 = vset.pattern.permute.xlu0 0
        %7427 = vperm.xlu0 %7426, %v5141
        %v7428 = vpop.permute.xlu0 %7427
        %7429 = vset.pattern.permute.xlu0 0
        %7430 = vperm.xlu0 %7429, %v5146
        %v7431 = vpop.permute.xlu0 %7430
        %7432 = vset.pattern.permute.xlu0 0
        %7433 = vperm.xlu0 %7432, %v5151
        %v7434 = vpop.permute.xlu0 %7433
        %7435 = vset.pattern.permute.xlu0 0
        %7436 = vperm.xlu0 %7435, %v5156
        %v7437 = vpop.permute.xlu0 %7436
        %7438 = vset.pattern.permute.xlu0 0
        %7439 = vperm.xlu0 %7438, %v5161
        %v7440 = vpop.permute.xlu0 %7439
        %7441 = vset.pattern.permute.xlu0 0
        %7442 = vperm.xlu0 %7441, %v5166
        %v7443 = vpop.permute.xlu0 %7442
        %7444 = vset.pattern.permute.xlu0 0
        %7445 = vperm.xlu0 %7444, %v5171
        %v7446 = vpop.permute.xlu0 %7445
        %7447 = vset.pattern.permute.xlu0 0
        %7448 = vperm.xlu0 %7447, %v5176
        %v7449 = vpop.permute.xlu0 %7448
        %7450 = vset.pattern.permute.xlu0 0
        %7451 = vperm.xlu0 %7450, %v5181
        %v7452 = vpop.permute.xlu0 %7451
        %7453 = vset.pattern.permute.xlu0 0
        %7454 = vperm.xlu0 %7453, %v5186
        %v7455 = vpop.permute.xlu0 %7454
        %7456 = vset.pattern.permute.xlu0 0
        %7457 = vperm.xlu0 %7456, %v5191
        %v7458 = vpop.permute.xlu0 %7457
        %7459 = vset.pattern.permute.xlu0 0
        %7460 = vperm.xlu0 %7459, %v5196
        %v7461 = vpop.permute.xlu0 %7460
        %7462 = vset.pattern.permute.xlu0 0
        %7463 = vperm.xlu0 %7462, %v5201
        %v7464 = vpop.permute.xlu0 %7463
        %7465 = vset.pattern.permute.xlu0 0
        %7466 = vperm.xlu0 %7465, %v5206
        %v7467 = vpop.permute.xlu0 %7466
        %7468 = vset.pattern.permute.xlu0 0
        %7469 = vperm.xlu0 %7468, %v5211
        %v7470 = vpop.permute.xlu0 %7469
        %7471 = vset.pattern.permute.xlu0 0
        %7472 = vperm.xlu0 %7471, %v5216
        %v7473 = vpop.permute.xlu0 %7472
        %7474 = vset.pattern.permute.xlu0 0
        %7475 = vperm.xlu0 %7474, %v5221
        %v7476 = vpop.permute.xlu0 %7475
        %7477 = vset.pattern.permute.xlu0 0
        %7478 = vperm.xlu0 %7477, %v5226
        %v7479 = vpop.permute.xlu0 %7478
        %7480 = vset.pattern.permute.xlu0 0
        %7481 = vperm.xlu0 %7480, %v5231
        %v7482 = vpop.permute.xlu0 %7481
        %7483 = vset.pattern.permute.xlu0 0
        %7484 = vperm.xlu0 %7483, %v5236
        %v7485 = vpop.permute.xlu0 %7484
        %7486 = vset.pattern.permute.xlu0 0
        %7487 = vperm.xlu0 %7486, %v5241
        %v7488 = vpop.permute.xlu0 %7487
        %7489 = vset.pattern.permute.xlu0 0
        %7490 = vperm.xlu0 %7489, %v5246
        %v7491 = vpop.permute.xlu0 %7490
        %7492 = vset.pattern.permute.xlu0 0
        %7493 = vperm.xlu0 %7492, %v5251
        %v7494 = vpop.permute.xlu0 %7493
        %7495 = vset.pattern.permute.xlu0 0
        %7496 = vperm.xlu0 %7495, %v5256
        %v7497 = vpop.permute.xlu0 %7496
        %7498 = vset.pattern.permute.xlu0 0
        %7499 = vperm.xlu0 %7498, %v5261
        %v7500 = vpop.permute.xlu0 %7499
        %7501 = vset.pattern.permute.xlu0 0
        %7502 = vperm.xlu0 %7501, %v5266
        %v7503 = vpop.permute.xlu0 %7502
        %7504 = vset.pattern.permute.xlu0 0
        %7505 = vperm.xlu0 %7504, %v5271
        %v7506 = vpop.permute.xlu0 %7505
        %7507 = vset.pattern.permute.xlu0 0
        %7508 = vperm.xlu0 %7507, %v5276
        %v7509 = vpop.permute.xlu0 %7508
        %7510 = vset.pattern.permute.xlu0 0
        %7511 = vperm.xlu0 %7510, %v5281
        %v7512 = vpop.permute.xlu0 %7511
        %7513 = vset.pattern.permute.xlu0 0
        %7514 = vperm.xlu0 %7513, %v5286
        %v7515 = vpop.permute.xlu0 %7514
        %7516 = vset.pattern.permute.xlu0 0
        %7517 = vperm.xlu0 %7516, %v5291
        %v7518 = vpop.permute.xlu0 %7517
        %7519 = vset.pattern.permute.xlu0 0
        %7520 = vperm.xlu0 %7519, %v5296
        %v7521 = vpop.permute.xlu0 %7520
        %7522 = vset.pattern.permute.xlu0 0
        %7523 = vperm.xlu0 %7522, %v5301
        %v7524 = vpop.permute.xlu0 %7523
        %7525 = vset.pattern.permute.xlu0 0
        %7526 = vperm.xlu0 %7525, %v5306
        %v7527 = vpop.permute.xlu0 %7526
        %7528 = vset.pattern.permute.xlu0 0
        %7529 = vperm.xlu0 %7528, %v5311
        %v7530 = vpop.permute.xlu0 %7529
        %7531 = vset.pattern.permute.xlu0 0
        %7532 = vperm.xlu0 %7531, %v5316
        %v7533 = vpop.permute.xlu0 %7532
        %7534 = vset.pattern.permute.xlu0 0
        %7535 = vperm.xlu0 %7534, %v5321
        %v7536 = vpop.permute.xlu0 %7535
        %7537 = vset.pattern.permute.xlu0 0
        %7538 = vperm.xlu0 %7537, %v5326
        %v7539 = vpop.permute.xlu0 %7538
        %7540 = vset.pattern.permute.xlu0 0
        %7541 = vperm.xlu0 %7540, %v5331
        %v7542 = vpop.permute.xlu0 %7541
        %7543 = vset.pattern.permute.xlu0 0
        %7544 = vperm.xlu0 %7543, %v5336
        %v7545 = vpop.permute.xlu0 %7544
        %7546 = vset.pattern.permute.xlu0 0
        %7547 = vperm.xlu0 %7546, %v5341
        %v7548 = vpop.permute.xlu0 %7547
        %7549 = vset.pattern.permute.xlu0 0
        %7550 = vperm.xlu0 %7549, %v5346
        %v7551 = vpop.permute.xlu0 %7550
        %7552 = vset.pattern.permute.xlu0 0
        %7553 = vperm.xlu0 %7552, %v5351
        %v7554 = vpop.permute.xlu0 %7553
        %7555 = vset.pattern.permute.xlu0 0
        %7556 = vperm.xlu0 %7555, %v5356
        %v7557 = vpop.permute.xlu0 %7556
        %7558 = vset.pattern.permute.xlu0 0
        %7559 = vperm.xlu0 %7558, %v5361
        %v7560 = vpop.permute.xlu0 %7559
        %7561 = vset.pattern.permute.xlu0 0
        %7562 = vperm.xlu0 %7561, %v5366
        %v7563 = vpop.permute.xlu0 %7562
        %7564 = vset.pattern.permute.xlu0 0
        %7565 = vperm.xlu0 %7564, %v5371
        %v7566 = vpop.permute.xlu0 %7565
        %7567 = vset.pattern.permute.xlu0 0
        %7568 = vperm.xlu0 %7567, %v5376
        %v7569 = vpop.permute.xlu0 %7568
        %7570 = vset.pattern.permute.xlu0 0
        %7571 = vperm.xlu0 %7570, %v5381
        %v7572 = vpop.permute.xlu0 %7571
        %7573 = vset.pattern.permute.xlu0 0
        %7574 = vperm.xlu0 %7573, %v5386
        %v7575 = vpop.permute.xlu0 %7574
        %7576 = vset.pattern.permute.xlu0 0
        %7577 = vperm.xlu0 %7576, %v5391
        %v7578 = vpop.permute.xlu0 %7577
        %7579 = vset.pattern.permute.xlu0 0
        %7580 = vperm.xlu0 %7579, %v5396
        %v7581 = vpop.permute.xlu0 %7580
        %7582 = vset.pattern.permute.xlu0 0
        %7583 = vperm.xlu0 %7582, %v5401
        %v7584 = vpop.permute.xlu0 %7583
        %7585 = vset.pattern.permute.xlu0 0
        %7586 = vperm.xlu0 %7585, %v5406
        %v7587 = vpop.permute.xlu0 %7586
        %7588 = vset.pattern.permute.xlu0 0
        %7589 = vperm.xlu0 %7588, %v5411
        %v7590 = vpop.permute.xlu0 %7589
        %7591 = vset.pattern.permute.xlu0 0
        %7592 = vperm.xlu0 %7591, %v5416
        %v7593 = vpop.permute.xlu0 %7592
        %7594 = vset.pattern.permute.xlu0 0
        %7595 = vperm.xlu0 %7594, %v5421
        %v7596 = vpop.permute.xlu0 %7595
        %7597 = vset.pattern.permute.xlu0 0
        %7598 = vperm.xlu0 %7597, %v5426
        %v7599 = vpop.permute.xlu0 %7598
        %7600 = vset.pattern.permute.xlu0 0
        %7601 = vperm.xlu0 %7600, %v5431
        %v7602 = vpop.permute.xlu0 %7601
        %7603 = vset.pattern.permute.xlu0 0
        %7604 = vperm.xlu0 %7603, %v5436
        %v7605 = vpop.permute.xlu0 %7604
        %7606 = vset.pattern.permute.xlu0 0
        %7607 = vperm.xlu0 %7606, %v5441
        %v7608 = vpop.permute.xlu0 %7607
        %7609 = vset.pattern.permute.xlu0 0
        %7610 = vperm.xlu0 %7609, %v5446
        %v7611 = vpop.permute.xlu0 %7610
        %7612 = vset.pattern.permute.xlu0 0
        %7613 = vperm.xlu0 %7612, %v5451
        %v7614 = vpop.permute.xlu0 %7613
        %7615 = vset.pattern.permute.xlu0 0
        %7616 = vperm.xlu0 %7615, %v5456
        %v7617 = vpop.permute.xlu0 %7616
        %7618 = vset.pattern.permute.xlu0 0
        %7619 = vperm.xlu0 %7618, %v5461
        %v7620 = vpop.permute.xlu0 %7619
        %7621 = vset.pattern.permute.xlu0 0
        %7622 = vperm.xlu0 %7621, %v5466
        %v7623 = vpop.permute.xlu0 %7622
        %7624 = vset.pattern.permute.xlu0 0
        %7625 = vperm.xlu0 %7624, %v5471
        %v7626 = vpop.permute.xlu0 %7625
        %7627 = vset.pattern.permute.xlu0 0
        %7628 = vperm.xlu0 %7627, %v5476
        %v7629 = vpop.permute.xlu0 %7628
        %7630 = vset.pattern.permute.xlu0 0
        %7631 = vperm.xlu0 %7630, %v5481
        %v7632 = vpop.permute.xlu0 %7631
        %7633 = vset.pattern.permute.xlu0 0
        %7634 = vperm.xlu0 %7633, %v5486
        %v7635 = vpop.permute.xlu0 %7634
        %7636 = vset.pattern.permute.xlu0 0
        %7637 = vperm.xlu0 %7636, %v5491
        %v7638 = vpop.permute.xlu0 %7637
        %7639 = vset.pattern.permute.xlu0 0
        %7640 = vperm.xlu0 %7639, %v5496
        %v7641 = vpop.permute.xlu0 %7640
        %7642 = vset.pattern.permute.xlu0 0
        %7643 = vperm.xlu0 %7642, %v5501
        %v7644 = vpop.permute.xlu0 %7643
        %7645 = vset.pattern.permute.xlu0 0
        %7646 = vperm.xlu0 %7645, %v5506
        %v7647 = vpop.permute.xlu0 %7646
        %7648 = vset.pattern.permute.xlu0 0
        %7649 = vperm.xlu0 %7648, %v5511
        %v7650 = vpop.permute.xlu0 %7649
        %7651 = vset.pattern.permute.xlu0 0
        %7652 = vperm.xlu0 %7651, %v5516
        %v7653 = vpop.permute.xlu0 %7652
        %7654 = vset.pattern.permute.xlu0 0
        %7655 = vperm.xlu0 %7654, %v5521
        %v7656 = vpop.permute.xlu0 %7655
        %7657 = vset.pattern.permute.xlu0 0
        %7658 = vperm.xlu0 %7657, %v5526
        %v7659 = vpop.permute.xlu0 %7658
        %7660 = vset.pattern.permute.xlu0 0
        %7661 = vperm.xlu0 %7660, %v5531
        %v7662 = vpop.permute.xlu0 %7661
        %7663 = vset.pattern.permute.xlu0 0
        %7664 = vperm.xlu0 %7663, %v5536
        %v7665 = vpop.permute.xlu0 %7664
        %7666 = vset.pattern.permute.xlu0 0
        %7667 = vperm.xlu0 %7666, %v5541
        %v7668 = vpop.permute.xlu0 %7667
        %7669 = vset.pattern.permute.xlu0 0
        %7670 = vperm.xlu0 %7669, %v5546
        %v7671 = vpop.permute.xlu0 %7670
        %7672 = vset.pattern.permute.xlu0 0
        %7673 = vperm.xlu0 %7672, %v5551
        %v7674 = vpop.permute.xlu0 %7673
        %7675 = vset.pattern.permute.xlu0 0
        %7676 = vperm.xlu0 %7675, %v5556
        %v7677 = vpop.permute.xlu0 %7676
        %7678 = vset.pattern.permute.xlu0 0
        %7679 = vperm.xlu0 %7678, %v5561
        %v7680 = vpop.permute.xlu0 %7679
        %7681 = vset.pattern.permute.xlu0 0
        %7682 = vperm.xlu0 %7681, %v5566
        %v7683 = vpop.permute.xlu0 %7682
        %7684 = vset.pattern.permute.xlu0 0
        %7685 = vperm.xlu0 %7684, %v5571
        %v7686 = vpop.permute.xlu0 %7685
        %7687 = vset.pattern.permute.xlu0 0
        %7688 = vperm.xlu0 %7687, %v5576
        %v7689 = vpop.permute.xlu0 %7688
        %7690 = vset.pattern.permute.xlu0 0
        %7691 = vperm.xlu0 %7690, %v5581
        %v7692 = vpop.permute.xlu0 %7691
        %7693 = vset.pattern.permute.xlu0 0
        %7694 = vperm.xlu0 %7693, %v5586
        %v7695 = vpop.permute.xlu0 %7694
        %7696 = vset.pattern.permute.xlu0 0
        %7697 = vperm.xlu0 %7696, %v5591
        %v7698 = vpop.permute.xlu0 %7697
        %v7699 = vlaneseq
        %v7700 = vshrl.u32 %v7699, 7
        %v7701 = vsub.s32 %v6364, %v7700
        %v7702 = vrot.slane %v7317, %v7701
        %v7703 = vlaneseq
        %v7704 = vshrl.u32 %v7703, 7
        %v7705 = vsub.s32 %v6369, %v7704
        %v7706 = vrot.slane %v7320, %v7705
        %v7707 = vsel %vm6374, %v7706, %v7702
        %v7708 = vlaneseq
        %v7709 = vshrl.u32 %v7708, 7
        %v7710 = vsub.s32 %v6376, %v7709
        %v7711 = vrot.slane %v7323, %v7710
        %v7712 = vsel %vm6381, %v7711, %v7707
        %v7713 = vlaneseq
        %v7714 = vshrl.u32 %v7713, 7
        %v7715 = vsub.s32 %v6383, %v7714
        %v7716 = vrot.slane %v7326, %v7715
        %v7717 = vsel %vm6388, %v7716, %v7712
        %v7718 = vlaneseq
        %v7719 = vshrl.u32 %v7718, 7
        %v7720 = vsub.s32 %v6390, %v7719
        %v7721 = vrot.slane %v7329, %v7720
        %v7722 = vsel %vm6395, %v7721, %v7717
        %v7723 = vlaneseq
        %v7724 = vshrl.u32 %v7723, 7
        %v7725 = vsub.s32 %v6397, %v7724
        %v7726 = vrot.slane %v7332, %v7725
        %v7727 = vsel %vm6402, %v7726, %v7722
        %v7728 = vlaneseq
        %v7729 = vshrl.u32 %v7728, 7
        %v7730 = vsub.s32 %v6404, %v7729
        %v7731 = vrot.slane %v7335, %v7730
        %v7732 = vsel %vm6409, %v7731, %v7727
        %v7733 = vlaneseq
        %v7734 = vshrl.u32 %v7733, 7
        %v7735 = vsub.s32 %v6411, %v7734
        %v7736 = vrot.slane %v7338, %v7735
        %v7737 = vsel %vm6416, %v7736, %v7732
        %v7738 = vlaneseq
        %v7739 = vshrl.u32 %v7738, 7
        %v7740 = vsub.s32 %v6418, %v7739
        %v7741 = vrot.slane %v7341, %v7740
        %v7742 = vsel %vm6423, %v7741, %v7737
        %v7743 = vlaneseq
        %v7744 = vshrl.u32 %v7743, 7
        %v7745 = vsub.s32 %v6425, %v7744
        %v7746 = vrot.slane %v7344, %v7745
        %v7747 = vsel %vm6430, %v7746, %v7742
        %v7748 = vlaneseq
        %v7749 = vshrl.u32 %v7748, 7
        %v7750 = vsub.s32 %v6432, %v7749
        %v7751 = vrot.slane %v7347, %v7750
        %v7752 = vsel %vm6437, %v7751, %v7747
        %v7753 = vlaneseq
        %v7754 = vshrl.u32 %v7753, 7
        %v7755 = vsub.s32 %v6439, %v7754
        %v7756 = vrot.slane %v7350, %v7755
        %v7757 = vsel %vm6444, %v7756, %v7752
        %v7758 = vlaneseq
        %v7759 = vshrl.u32 %v7758, 7
        %v7760 = vsub.s32 %v6446, %v7759
        %v7761 = vrot.slane %v7353, %v7760
        %v7762 = vsel %vm6451, %v7761, %v7757
        %v7763 = vlaneseq
        %v7764 = vshrl.u32 %v7763, 7
        %v7765 = vsub.s32 %v6453, %v7764
        %v7766 = vrot.slane %v7356, %v7765
        %v7767 = vsel %vm6458, %v7766, %v7762
        %v7768 = vlaneseq
        %v7769 = vshrl.u32 %v7768, 7
        %v7770 = vsub.s32 %v6460, %v7769
        %v7771 = vrot.slane %v7359, %v7770
        %v7772 = vsel %vm6465, %v7771, %v7767
        %v7773 = vlaneseq
        %v7774 = vshrl.u32 %v7773, 7
        %v7775 = vsub.s32 %v6467, %v7774
        %v7776 = vrot.slane %v7362, %v7775
        %v7777 = vsel %vm6472, %v7776, %v7772
        %v7778 = vlaneseq
        %v7779 = vshrl.u32 %v7778, 7
        %v7780 = vsub.s32 %v6364, %v7779
        %v7781 = vrot.slane %v7365, %v7780
        %v7782 = vlaneseq
        %v7783 = vshrl.u32 %v7782, 7
        %v7784 = vsub.s32 %v6369, %v7783
        %v7785 = vrot.slane %v7368, %v7784
        %v7786 = vsel %vm6374, %v7785, %v7781
        %v7787 = vlaneseq
        %v7788 = vshrl.u32 %v7787, 7
        %v7789 = vsub.s32 %v6376, %v7788
        %v7790 = vrot.slane %v7371, %v7789
        %v7791 = vsel %vm6381, %v7790, %v7786
        %v7792 = vlaneseq
        %v7793 = vshrl.u32 %v7792, 7
        %v7794 = vsub.s32 %v6383, %v7793
        %v7795 = vrot.slane %v7374, %v7794
        %v7796 = vsel %vm6388, %v7795, %v7791
        %v7797 = vlaneseq
        %v7798 = vshrl.u32 %v7797, 7
        %v7799 = vsub.s32 %v6390, %v7798
        %v7800 = vrot.slane %v7377, %v7799
        %v7801 = vsel %vm6395, %v7800, %v7796
        %v7802 = vlaneseq
        %v7803 = vshrl.u32 %v7802, 7
        %v7804 = vsub.s32 %v6397, %v7803
        %v7805 = vrot.slane %v7380, %v7804
        %v7806 = vsel %vm6402, %v7805, %v7801
        %v7807 = vlaneseq
        %v7808 = vshrl.u32 %v7807, 7
        %v7809 = vsub.s32 %v6404, %v7808
        %v7810 = vrot.slane %v7383, %v7809
        %v7811 = vsel %vm6409, %v7810, %v7806
        %v7812 = vlaneseq
        %v7813 = vshrl.u32 %v7812, 7
        %v7814 = vsub.s32 %v6411, %v7813
        %v7815 = vrot.slane %v7386, %v7814
        %v7816 = vsel %vm6416, %v7815, %v7811
        %v7817 = vlaneseq
        %v7818 = vshrl.u32 %v7817, 7
        %v7819 = vsub.s32 %v6418, %v7818
        %v7820 = vrot.slane %v7389, %v7819
        %v7821 = vsel %vm6423, %v7820, %v7816
        %v7822 = vlaneseq
        %v7823 = vshrl.u32 %v7822, 7
        %v7824 = vsub.s32 %v6425, %v7823
        %v7825 = vrot.slane %v7392, %v7824
        %v7826 = vsel %vm6430, %v7825, %v7821
        %v7827 = vlaneseq
        %v7828 = vshrl.u32 %v7827, 7
        %v7829 = vsub.s32 %v6432, %v7828
        %v7830 = vrot.slane %v7395, %v7829
        %v7831 = vsel %vm6437, %v7830, %v7826
        %v7832 = vlaneseq
        %v7833 = vshrl.u32 %v7832, 7
        %v7834 = vsub.s32 %v6439, %v7833
        %v7835 = vrot.slane %v7398, %v7834
        %v7836 = vsel %vm6444, %v7835, %v7831
        %v7837 = vlaneseq
        %v7838 = vshrl.u32 %v7837, 7
        %v7839 = vsub.s32 %v6446, %v7838
        %v7840 = vrot.slane %v7401, %v7839
        %v7841 = vsel %vm6451, %v7840, %v7836
        %v7842 = vlaneseq
        %v7843 = vshrl.u32 %v7842, 7
        %v7844 = vsub.s32 %v6453, %v7843
        %v7845 = vrot.slane %v7404, %v7844
        %v7846 = vsel %vm6458, %v7845, %v7841
        %v7847 = vlaneseq
        %v7848 = vshrl.u32 %v7847, 7
        %v7849 = vsub.s32 %v6460, %v7848
        %v7850 = vrot.slane %v7407, %v7849
        %v7851 = vsel %vm6465, %v7850, %v7846
        %v7852 = vlaneseq
        %v7853 = vshrl.u32 %v7852, 7
        %v7854 = vsub.s32 %v6467, %v7853
        %v7855 = vrot.slane %v7410, %v7854
        %v7856 = vsel %vm6472, %v7855, %v7851
        %v7857 = vlaneseq
        %v7858 = vshrl.u32 %v7857, 7
        %v7859 = vsub.s32 %v6364, %v7858
        %v7860 = vrot.slane %v7413, %v7859
        %v7861 = vlaneseq
        %v7862 = vshrl.u32 %v7861, 7
        %v7863 = vsub.s32 %v6369, %v7862
        %v7864 = vrot.slane %v7416, %v7863
        %v7865 = vsel %vm6374, %v7864, %v7860
        %v7866 = vlaneseq
        %v7867 = vshrl.u32 %v7866, 7
        %v7868 = vsub.s32 %v6376, %v7867
        %v7869 = vrot.slane %v7419, %v7868
        %v7870 = vsel %vm6381, %v7869, %v7865
        %v7871 = vlaneseq
        %v7872 = vshrl.u32 %v7871, 7
        %v7873 = vsub.s32 %v6383, %v7872
        %v7874 = vrot.slane %v7422, %v7873
        %v7875 = vsel %vm6388, %v7874, %v7870
        %v7876 = vlaneseq
        %v7877 = vshrl.u32 %v7876, 7
        %v7878 = vsub.s32 %v6390, %v7877
        %v7879 = vrot.slane %v7425, %v7878
        %v7880 = vsel %vm6395, %v7879, %v7875
        %v7881 = vlaneseq
        %v7882 = vshrl.u32 %v7881, 7
        %v7883 = vsub.s32 %v6397, %v7882
        %v7884 = vrot.slane %v7428, %v7883
        %v7885 = vsel %vm6402, %v7884, %v7880
        %v7886 = vlaneseq
        %v7887 = vshrl.u32 %v7886, 7
        %v7888 = vsub.s32 %v6404, %v7887
        %v7889 = vrot.slane %v7431, %v7888
        %v7890 = vsel %vm6409, %v7889, %v7885
        %v7891 = vlaneseq
        %v7892 = vshrl.u32 %v7891, 7
        %v7893 = vsub.s32 %v6411, %v7892
        %v7894 = vrot.slane %v7434, %v7893
        %v7895 = vsel %vm6416, %v7894, %v7890
        %v7896 = vlaneseq
        %v7897 = vshrl.u32 %v7896, 7
        %v7898 = vsub.s32 %v6418, %v7897
        %v7899 = vrot.slane %v7437, %v7898
        %v7900 = vsel %vm6423, %v7899, %v7895
        %v7901 = vlaneseq
        %v7902 = vshrl.u32 %v7901, 7
        %v7903 = vsub.s32 %v6425, %v7902
        %v7904 = vrot.slane %v7440, %v7903
        %v7905 = vsel %vm6430, %v7904, %v7900
        %v7906 = vlaneseq
        %v7907 = vshrl.u32 %v7906, 7
        %v7908 = vsub.s32 %v6432, %v7907
        %v7909 = vrot.slane %v7443, %v7908
        %v7910 = vsel %vm6437, %v7909, %v7905
        %v7911 = vlaneseq
        %v7912 = vshrl.u32 %v7911, 7
        %v7913 = vsub.s32 %v6439, %v7912
        %v7914 = vrot.slane %v7446, %v7913
        %v7915 = vsel %vm6444, %v7914, %v7910
        %v7916 = vlaneseq
        %v7917 = vshrl.u32 %v7916, 7
        %v7918 = vsub.s32 %v6446, %v7917
        %v7919 = vrot.slane %v7449, %v7918
        %v7920 = vsel %vm6451, %v7919, %v7915
        %v7921 = vlaneseq
        %v7922 = vshrl.u32 %v7921, 7
        %v7923 = vsub.s32 %v6453, %v7922
        %v7924 = vrot.slane %v7452, %v7923
        %v7925 = vsel %vm6458, %v7924, %v7920
        %v7926 = vlaneseq
        %v7927 = vshrl.u32 %v7926, 7
        %v7928 = vsub.s32 %v6460, %v7927
        %v7929 = vrot.slane %v7455, %v7928
        %v7930 = vsel %vm6465, %v7929, %v7925
        %v7931 = vlaneseq
        %v7932 = vshrl.u32 %v7931, 7
        %v7933 = vsub.s32 %v6467, %v7932
        %v7934 = vrot.slane %v7458, %v7933
        %v7935 = vsel %vm6472, %v7934, %v7930
        %v7936 = vlaneseq
        %v7937 = vshrl.u32 %v7936, 7
        %v7938 = vsub.s32 %v6364, %v7937
        %v7939 = vrot.slane %v7461, %v7938
        %v7940 = vlaneseq
        %v7941 = vshrl.u32 %v7940, 7
        %v7942 = vsub.s32 %v6369, %v7941
        %v7943 = vrot.slane %v7464, %v7942
        %v7944 = vsel %vm6374, %v7943, %v7939
        %v7945 = vlaneseq
        %v7946 = vshrl.u32 %v7945, 7
        %v7947 = vsub.s32 %v6376, %v7946
        %v7948 = vrot.slane %v7467, %v7947
        %v7949 = vsel %vm6381, %v7948, %v7944
        %v7950 = vlaneseq
        %v7951 = vshrl.u32 %v7950, 7
        %v7952 = vsub.s32 %v6383, %v7951
        %v7953 = vrot.slane %v7470, %v7952
        %v7954 = vsel %vm6388, %v7953, %v7949
        %v7955 = vlaneseq
        %v7956 = vshrl.u32 %v7955, 7
        %v7957 = vsub.s32 %v6390, %v7956
        %v7958 = vrot.slane %v7473, %v7957
        %v7959 = vsel %vm6395, %v7958, %v7954
        %v7960 = vlaneseq
        %v7961 = vshrl.u32 %v7960, 7
        %v7962 = vsub.s32 %v6397, %v7961
        %v7963 = vrot.slane %v7476, %v7962
        %v7964 = vsel %vm6402, %v7963, %v7959
        %v7965 = vlaneseq
        %v7966 = vshrl.u32 %v7965, 7
        %v7967 = vsub.s32 %v6404, %v7966
        %v7968 = vrot.slane %v7479, %v7967
        %v7969 = vsel %vm6409, %v7968, %v7964
        %v7970 = vlaneseq
        %v7971 = vshrl.u32 %v7970, 7
        %v7972 = vsub.s32 %v6411, %v7971
        %v7973 = vrot.slane %v7482, %v7972
        %v7974 = vsel %vm6416, %v7973, %v7969
        %v7975 = vlaneseq
        %v7976 = vshrl.u32 %v7975, 7
        %v7977 = vsub.s32 %v6418, %v7976
        %v7978 = vrot.slane %v7485, %v7977
        %v7979 = vsel %vm6423, %v7978, %v7974
        %v7980 = vlaneseq
        %v7981 = vshrl.u32 %v7980, 7
        %v7982 = vsub.s32 %v6425, %v7981
        %v7983 = vrot.slane %v7488, %v7982
        %v7984 = vsel %vm6430, %v7983, %v7979
        %v7985 = vlaneseq
        %v7986 = vshrl.u32 %v7985, 7
        %v7987 = vsub.s32 %v6432, %v7986
        %v7988 = vrot.slane %v7491, %v7987
        %v7989 = vsel %vm6437, %v7988, %v7984
        %v7990 = vlaneseq
        %v7991 = vshrl.u32 %v7990, 7
        %v7992 = vsub.s32 %v6439, %v7991
        %v7993 = vrot.slane %v7494, %v7992
        %v7994 = vsel %vm6444, %v7993, %v7989
        %v7995 = vlaneseq
        %v7996 = vshrl.u32 %v7995, 7
        %v7997 = vsub.s32 %v6446, %v7996
        %v7998 = vrot.slane %v7497, %v7997
        %v7999 = vsel %vm6451, %v7998, %v7994
        %v8000 = vlaneseq
        %v8001 = vshrl.u32 %v8000, 7
        %v8002 = vsub.s32 %v6453, %v8001
        %v8003 = vrot.slane %v7500, %v8002
        %v8004 = vsel %vm6458, %v8003, %v7999
        %v8005 = vlaneseq
        %v8006 = vshrl.u32 %v8005, 7
        %v8007 = vsub.s32 %v6460, %v8006
        %v8008 = vrot.slane %v7503, %v8007
        %v8009 = vsel %vm6465, %v8008, %v8004
        %v8010 = vlaneseq
        %v8011 = vshrl.u32 %v8010, 7
        %v8012 = vsub.s32 %v6467, %v8011
        %v8013 = vrot.slane %v7506, %v8012
        %v8014 = vsel %vm6472, %v8013, %v8009
        %v8015 = vlaneseq
        %v8016 = vshrl.u32 %v8015, 7
        %v8017 = vsub.s32 %v6364, %v8016
        %v8018 = vrot.slane %v7509, %v8017
        %v8019 = vlaneseq
        %v8020 = vshrl.u32 %v8019, 7
        %v8021 = vsub.s32 %v6369, %v8020
        %v8022 = vrot.slane %v7512, %v8021
        %v8023 = vsel %vm6374, %v8022, %v8018
        %v8024 = vlaneseq
        %v8025 = vshrl.u32 %v8024, 7
        %v8026 = vsub.s32 %v6376, %v8025
        %v8027 = vrot.slane %v7515, %v8026
        %v8028 = vsel %vm6381, %v8027, %v8023
        %v8029 = vlaneseq
        %v8030 = vshrl.u32 %v8029, 7
        %v8031 = vsub.s32 %v6383, %v8030
        %v8032 = vrot.slane %v7518, %v8031
        %v8033 = vsel %vm6388, %v8032, %v8028
        %v8034 = vlaneseq
        %v8035 = vshrl.u32 %v8034, 7
        %v8036 = vsub.s32 %v6390, %v8035
        %v8037 = vrot.slane %v7521, %v8036
        %v8038 = vsel %vm6395, %v8037, %v8033
        %v8039 = vlaneseq
        %v8040 = vshrl.u32 %v8039, 7
        %v8041 = vsub.s32 %v6397, %v8040
        %v8042 = vrot.slane %v7524, %v8041
        %v8043 = vsel %vm6402, %v8042, %v8038
        %v8044 = vlaneseq
        %v8045 = vshrl.u32 %v8044, 7
        %v8046 = vsub.s32 %v6404, %v8045
        %v8047 = vrot.slane %v7527, %v8046
        %v8048 = vsel %vm6409, %v8047, %v8043
        %v8049 = vlaneseq
        %v8050 = vshrl.u32 %v8049, 7
        %v8051 = vsub.s32 %v6411, %v8050
        %v8052 = vrot.slane %v7530, %v8051
        %v8053 = vsel %vm6416, %v8052, %v8048
        %v8054 = vlaneseq
        %v8055 = vshrl.u32 %v8054, 7
        %v8056 = vsub.s32 %v6418, %v8055
        %v8057 = vrot.slane %v7533, %v8056
        %v8058 = vsel %vm6423, %v8057, %v8053
        %v8059 = vlaneseq
        %v8060 = vshrl.u32 %v8059, 7
        %v8061 = vsub.s32 %v6425, %v8060
        %v8062 = vrot.slane %v7536, %v8061
        %v8063 = vsel %vm6430, %v8062, %v8058
        %v8064 = vlaneseq
        %v8065 = vshrl.u32 %v8064, 7
        %v8066 = vsub.s32 %v6432, %v8065
        %v8067 = vrot.slane %v7539, %v8066
        %v8068 = vsel %vm6437, %v8067, %v8063
        %v8069 = vlaneseq
        %v8070 = vshrl.u32 %v8069, 7
        %v8071 = vsub.s32 %v6439, %v8070
        %v8072 = vrot.slane %v7542, %v8071
        %v8073 = vsel %vm6444, %v8072, %v8068
        %v8074 = vlaneseq
        %v8075 = vshrl.u32 %v8074, 7
        %v8076 = vsub.s32 %v6446, %v8075
        %v8077 = vrot.slane %v7545, %v8076
        %v8078 = vsel %vm6451, %v8077, %v8073
        %v8079 = vlaneseq
        %v8080 = vshrl.u32 %v8079, 7
        %v8081 = vsub.s32 %v6453, %v8080
        %v8082 = vrot.slane %v7548, %v8081
        %v8083 = vsel %vm6458, %v8082, %v8078
        %v8084 = vlaneseq
        %v8085 = vshrl.u32 %v8084, 7
        %v8086 = vsub.s32 %v6460, %v8085
        %v8087 = vrot.slane %v7551, %v8086
        %v8088 = vsel %vm6465, %v8087, %v8083
        %v8089 = vlaneseq
        %v8090 = vshrl.u32 %v8089, 7
        %v8091 = vsub.s32 %v6467, %v8090
        %v8092 = vrot.slane %v7554, %v8091
        %v8093 = vsel %vm6472, %v8092, %v8088
        %v8094 = vlaneseq
        %v8095 = vshrl.u32 %v8094, 7
        %v8096 = vsub.s32 %v6364, %v8095
        %v8097 = vrot.slane %v7557, %v8096
        %v8098 = vlaneseq
        %v8099 = vshrl.u32 %v8098, 7
        %v8100 = vsub.s32 %v6369, %v8099
        %v8101 = vrot.slane %v7560, %v8100
        %v8102 = vsel %vm6374, %v8101, %v8097
        %v8103 = vlaneseq
        %v8104 = vshrl.u32 %v8103, 7
        %v8105 = vsub.s32 %v6376, %v8104
        %v8106 = vrot.slane %v7563, %v8105
        %v8107 = vsel %vm6381, %v8106, %v8102
        %v8108 = vlaneseq
        %v8109 = vshrl.u32 %v8108, 7
        %v8110 = vsub.s32 %v6383, %v8109
        %v8111 = vrot.slane %v7566, %v8110
        %v8112 = vsel %vm6388, %v8111, %v8107
        %v8113 = vlaneseq
        %v8114 = vshrl.u32 %v8113, 7
        %v8115 = vsub.s32 %v6390, %v8114
        %v8116 = vrot.slane %v7569, %v8115
        %v8117 = vsel %vm6395, %v8116, %v8112
        %v8118 = vlaneseq
        %v8119 = vshrl.u32 %v8118, 7
        %v8120 = vsub.s32 %v6397, %v8119
        %v8121 = vrot.slane %v7572, %v8120
        %v8122 = vsel %vm6402, %v8121, %v8117
        %v8123 = vlaneseq
        %v8124 = vshrl.u32 %v8123, 7
        %v8125 = vsub.s32 %v6404, %v8124
        %v8126 = vrot.slane %v7575, %v8125
        %v8127 = vsel %vm6409, %v8126, %v8122
        %v8128 = vlaneseq
        %v8129 = vshrl.u32 %v8128, 7
        %v8130 = vsub.s32 %v6411, %v8129
        %v8131 = vrot.slane %v7578, %v8130
        %v8132 = vsel %vm6416, %v8131, %v8127
        %v8133 = vlaneseq
        %v8134 = vshrl.u32 %v8133, 7
        %v8135 = vsub.s32 %v6418, %v8134
        %v8136 = vrot.slane %v7581, %v8135
        %v8137 = vsel %vm6423, %v8136, %v8132
        %v8138 = vlaneseq
        %v8139 = vshrl.u32 %v8138, 7
        %v8140 = vsub.s32 %v6425, %v8139
        %v8141 = vrot.slane %v7584, %v8140
        %v8142 = vsel %vm6430, %v8141, %v8137
        %v8143 = vlaneseq
        %v8144 = vshrl.u32 %v8143, 7
        %v8145 = vsub.s32 %v6432, %v8144
        %v8146 = vrot.slane %v7587, %v8145
        %v8147 = vsel %vm6437, %v8146, %v8142
        %v8148 = vlaneseq
        %v8149 = vshrl.u32 %v8148, 7
        %v8150 = vsub.s32 %v6439, %v8149
        %v8151 = vrot.slane %v7590, %v8150
        %v8152 = vsel %vm6444, %v8151, %v8147
        %v8153 = vlaneseq
        %v8154 = vshrl.u32 %v8153, 7
        %v8155 = vsub.s32 %v6446, %v8154
        %v8156 = vrot.slane %v7593, %v8155
        %v8157 = vsel %vm6451, %v8156, %v8152
        %v8158 = vlaneseq
        %v8159 = vshrl.u32 %v8158, 7
        %v8160 = vsub.s32 %v6453, %v8159
        %v8161 = vrot.slane %v7596, %v8160
        %v8162 = vsel %vm6458, %v8161, %v8157
        %v8163 = vlaneseq
        %v8164 = vshrl.u32 %v8163, 7
        %v8165 = vsub.s32 %v6460, %v8164
        %v8166 = vrot.slane %v7599, %v8165
        %v8167 = vsel %vm6465, %v8166, %v8162
        %v8168 = vlaneseq
        %v8169 = vshrl.u32 %v8168, 7
        %v8170 = vsub.s32 %v6467, %v8169
        %v8171 = vrot.slane %v7602, %v8170
        %v8172 = vsel %vm6472, %v8171, %v8167
        %v8173 = vlaneseq
        %v8174 = vshrl.u32 %v8173, 7
        %v8175 = vsub.s32 %v6364, %v8174
        %v8176 = vrot.slane %v7605, %v8175
        %v8177 = vlaneseq
        %v8178 = vshrl.u32 %v8177, 7
        %v8179 = vsub.s32 %v6369, %v8178
        %v8180 = vrot.slane %v7608, %v8179
        %v8181 = vsel %vm6374, %v8180, %v8176
        %v8182 = vlaneseq
        %v8183 = vshrl.u32 %v8182, 7
        %v8184 = vsub.s32 %v6376, %v8183
        %v8185 = vrot.slane %v7611, %v8184
        %v8186 = vsel %vm6381, %v8185, %v8181
        %v8187 = vlaneseq
        %v8188 = vshrl.u32 %v8187, 7
        %v8189 = vsub.s32 %v6383, %v8188
        %v8190 = vrot.slane %v7614, %v8189
        %v8191 = vsel %vm6388, %v8190, %v8186
        %v8192 = vlaneseq
        %v8193 = vshrl.u32 %v8192, 7
        %v8194 = vsub.s32 %v6390, %v8193
        %v8195 = vrot.slane %v7617, %v8194
        %v8196 = vsel %vm6395, %v8195, %v8191
        %v8197 = vlaneseq
        %v8198 = vshrl.u32 %v8197, 7
        %v8199 = vsub.s32 %v6397, %v8198
        %v8200 = vrot.slane %v7620, %v8199
        %v8201 = vsel %vm6402, %v8200, %v8196
        %v8202 = vlaneseq
        %v8203 = vshrl.u32 %v8202, 7
        %v8204 = vsub.s32 %v6404, %v8203
        %v8205 = vrot.slane %v7623, %v8204
        %v8206 = vsel %vm6409, %v8205, %v8201
        %v8207 = vlaneseq
        %v8208 = vshrl.u32 %v8207, 7
        %v8209 = vsub.s32 %v6411, %v8208
        %v8210 = vrot.slane %v7626, %v8209
        %v8211 = vsel %vm6416, %v8210, %v8206
        %v8212 = vlaneseq
        %v8213 = vshrl.u32 %v8212, 7
        %v8214 = vsub.s32 %v6418, %v8213
        %v8215 = vrot.slane %v7629, %v8214
        %v8216 = vsel %vm6423, %v8215, %v8211
        %v8217 = vlaneseq
        %v8218 = vshrl.u32 %v8217, 7
        %v8219 = vsub.s32 %v6425, %v8218
        %v8220 = vrot.slane %v7632, %v8219
        %v8221 = vsel %vm6430, %v8220, %v8216
        %v8222 = vlaneseq
        %v8223 = vshrl.u32 %v8222, 7
        %v8224 = vsub.s32 %v6432, %v8223
        %v8225 = vrot.slane %v7635, %v8224
        %v8226 = vsel %vm6437, %v8225, %v8221
        %v8227 = vlaneseq
        %v8228 = vshrl.u32 %v8227, 7
        %v8229 = vsub.s32 %v6439, %v8228
        %v8230 = vrot.slane %v7638, %v8229
        %v8231 = vsel %vm6444, %v8230, %v8226
        %v8232 = vlaneseq
        %v8233 = vshrl.u32 %v8232, 7
        %v8234 = vsub.s32 %v6446, %v8233
        %v8235 = vrot.slane %v7641, %v8234
        %v8236 = vsel %vm6451, %v8235, %v8231
        %v8237 = vlaneseq
        %v8238 = vshrl.u32 %v8237, 7
        %v8239 = vsub.s32 %v6453, %v8238
        %v8240 = vrot.slane %v7644, %v8239
        %v8241 = vsel %vm6458, %v8240, %v8236
        %v8242 = vlaneseq
        %v8243 = vshrl.u32 %v8242, 7
        %v8244 = vsub.s32 %v6460, %v8243
        %v8245 = vrot.slane %v7647, %v8244
        %v8246 = vsel %vm6465, %v8245, %v8241
        %v8247 = vlaneseq
        %v8248 = vshrl.u32 %v8247, 7
        %v8249 = vsub.s32 %v6467, %v8248
        %v8250 = vrot.slane %v7650, %v8249
        %v8251 = vsel %vm6472, %v8250, %v8246
        %v8252 = vlaneseq
        %v8253 = vshrl.u32 %v8252, 7
        %v8254 = vsub.s32 %v6364, %v8253
        %v8255 = vrot.slane %v7653, %v8254
        %v8256 = vlaneseq
        %v8257 = vshrl.u32 %v8256, 7
        %v8258 = vsub.s32 %v6369, %v8257
        %v8259 = vrot.slane %v7656, %v8258
        %v8260 = vsel %vm6374, %v8259, %v8255
        %v8261 = vlaneseq
        %v8262 = vshrl.u32 %v8261, 7
        %v8263 = vsub.s32 %v6376, %v8262
        %v8264 = vrot.slane %v7659, %v8263
        %v8265 = vsel %vm6381, %v8264, %v8260
        %v8266 = vlaneseq
        %v8267 = vshrl.u32 %v8266, 7
        %v8268 = vsub.s32 %v6383, %v8267
        %v8269 = vrot.slane %v7662, %v8268
        %v8270 = vsel %vm6388, %v8269, %v8265
        %v8271 = vlaneseq
        %v8272 = vshrl.u32 %v8271, 7
        %v8273 = vsub.s32 %v6390, %v8272
        %v8274 = vrot.slane %v7665, %v8273
        %v8275 = vsel %vm6395, %v8274, %v8270
        %v8276 = vlaneseq
        %v8277 = vshrl.u32 %v8276, 7
        %v8278 = vsub.s32 %v6397, %v8277
        %v8279 = vrot.slane %v7668, %v8278
        %v8280 = vsel %vm6402, %v8279, %v8275
        %v8281 = vlaneseq
        %v8282 = vshrl.u32 %v8281, 7
        %v8283 = vsub.s32 %v6404, %v8282
        %v8284 = vrot.slane %v7671, %v8283
        %v8285 = vsel %vm6409, %v8284, %v8280
        %v8286 = vlaneseq
        %v8287 = vshrl.u32 %v8286, 7
        %v8288 = vsub.s32 %v6411, %v8287
        %v8289 = vrot.slane %v7674, %v8288
        %v8290 = vsel %vm6416, %v8289, %v8285
        %v8291 = vlaneseq
        %v8292 = vshrl.u32 %v8291, 7
        %v8293 = vsub.s32 %v6418, %v8292
        %v8294 = vrot.slane %v7677, %v8293
        %v8295 = vsel %vm6423, %v8294, %v8290
        %v8296 = vlaneseq
        %v8297 = vshrl.u32 %v8296, 7
        %v8298 = vsub.s32 %v6425, %v8297
        %v8299 = vrot.slane %v7680, %v8298
        %v8300 = vsel %vm6430, %v8299, %v8295
        %v8301 = vlaneseq
        %v8302 = vshrl.u32 %v8301, 7
        %v8303 = vsub.s32 %v6432, %v8302
        %v8304 = vrot.slane %v7683, %v8303
        %v8305 = vsel %vm6437, %v8304, %v8300
        %v8306 = vlaneseq
        %v8307 = vshrl.u32 %v8306, 7
        %v8308 = vsub.s32 %v6439, %v8307
        %v8309 = vrot.slane %v7686, %v8308
        %v8310 = vsel %vm6444, %v8309, %v8305
        %v8311 = vlaneseq
        %v8312 = vshrl.u32 %v8311, 7
        %v8313 = vsub.s32 %v6446, %v8312
        %v8314 = vrot.slane %v7689, %v8313
        %v8315 = vsel %vm6451, %v8314, %v8310
        %v8316 = vlaneseq
        %v8317 = vshrl.u32 %v8316, 7
        %v8318 = vsub.s32 %v6453, %v8317
        %v8319 = vrot.slane %v7692, %v8318
        %v8320 = vsel %vm6458, %v8319, %v8315
        %v8321 = vlaneseq
        %v8322 = vshrl.u32 %v8321, 7
        %v8323 = vsub.s32 %v6460, %v8322
        %v8324 = vrot.slane %v7695, %v8323
        %v8325 = vsel %vm6465, %v8324, %v8320
        %v8326 = vlaneseq
        %v8327 = vshrl.u32 %v8326, 7
        %v8328 = vsub.s32 %v6467, %v8327
        %v8329 = vrot.slane %v7698, %v8328
        %v8330 = vsel %vm6472, %v8329, %v8325
        %v8331 = vsel %vm7027, %v7856, %v7777
        %v8332 = vsel %vm7029, %v7935, %v8331
        %v8333 = vsel %vm7031, %v8014, %v8332
        %v8334 = vsel %vm7033, %v8093, %v8333
        %v8335 = vsel %vm7035, %v8172, %v8334
        %v8336 = vsel %vm7037, %v8251, %v8335
        %v8337 = vsel %vm7039, %v8330, %v8336
        %v8339 = vadd.f32 %v7186, %v8337
        %8340 = vst [vmem:[%s633] sm:$0xff] %v8339
        %8341 = vst [vmem:[%s640] sm:$0xff] %v7186
        %8342 = vst [vmem:[%s647] sm:$0xff] %v8337
        %8343 = vst [vmem:[%s654] sm:$0xff] %v7181
        %s8344 = sand.u32 %s403, 1
        %s8345 = scalar_lea.sflag [#allocation5], %s8344
        %s8346 = sand.u32 %s403, 1
        %s8347 = smul.addr %s8346, 8
        %s8348 = scalar_lea.vmem [#allocation4], %s8347
        %s8349 = sand.u32 %s44, 1
        %s8350 = scalar_lea.sflag [#allocation7], %s8349
        %s8351 = sand.u32 %s429, 1
        %s8352 = smul.addr %s8351, 8
        %s8353 = scalar_lea.vmem [#allocation6], %s8352
        %s8354 = sand.u32 %s44, 1
        %s8355 = scalar_lea.sflag [#allocation7], %s8354
        %s8356 = sand.u32 %s455, 1
        %s8357 = smul.addr %s8356, 8
        %s8358 = scalar_lea.vmem [#allocation8], %s8357
        %s8359 = sand.u32 %s481, 1
        %s8360 = scalar_lea.sflag [#allocation10], %s8359
        %s8361 = sand.u32 %s481, 1
        %s8362 = smul.addr %s8361, 8
        %s8363 = scalar_lea.vmem [#allocation9], %s8362
        // Predicated region
        $region85: #{tpu_custom_call.1} parent=83 // pred_check
          %p8364 = pneg %p413
        $region86: #{tpu_custom_call.1} parent=83 // pred_check_branch
          %8366 = sbr.rel (%p8364) target = $region88
        $region87: #{tpu_custom_call.1} parent=83 // pred_region
          %s8368 = ssub.s32 128, 128
          %8369 = vsyncadd %s8345, %s8368
          %s8370 = smul.addr %s44, 128
          %s8371 = scalar_lea.hbm %s16, %s8370
          %s8373 = sshll.u32 %s8348, 4
          %s8374 = int_to_ptr.vmem [resolvable:$true] %s8373
          %8376 = dma.vmem_to_hbm [thread:$0]  %s8374, 128, %s8371, %s8345
        $region88: #{tpu_custom_call.1} parent=83 // pred_fallthru
          _
        // Predicated region
        $region89: #{tpu_custom_call.1} parent=83 // pred_check
          %p8377 = pneg %p439
        $region90: #{tpu_custom_call.1} parent=83 // pred_check_branch
          %8379 = sbr.rel (%p8377) target = $region92
        $region91: #{tpu_custom_call.1} parent=83 // pred_region
          %s8381 = ssub.s32 128, 128
          %8382 = vsyncadd %s8350, %s8381
          %s8383 = smul.addr %s44, 128
          %s8384 = scalar_lea.hbm %s17, %s8383
          %s8386 = sshll.u32 %s8353, 4
          %s8387 = int_to_ptr.vmem [resolvable:$true] %s8386
          %8389 = dma.vmem_to_hbm [thread:$0]  %s8387, 128, %s8384, %s8350
        $region92: #{tpu_custom_call.1} parent=83 // pred_fallthru
          _
        // Predicated region
        $region93: #{tpu_custom_call.1} parent=83 // pred_check
          %p8390 = pneg %p465
        $region94: #{tpu_custom_call.1} parent=83 // pred_check_branch
          %8392 = sbr.rel (%p8390) target = $region96
        $region95: #{tpu_custom_call.1} parent=83 // pred_region
          %s8394 = ssub.s32 128, 128
          %8395 = vsyncadd %s8355, %s8394
          %s8396 = smul.addr %s44, 128
          %s8397 = scalar_lea.hbm %s18, %s8396
          %s8399 = sshll.u32 %s8358, 4
          %s8400 = int_to_ptr.vmem [resolvable:$true] %s8399
          %8402 = dma.vmem_to_hbm [thread:$0]  %s8400, 128, %s8397, %s8355
        $region96: #{tpu_custom_call.1} parent=83 // pred_fallthru
          _
        // Predicated region
        $region97: #{tpu_custom_call.1} parent=83 // pred_check
          %p8403 = pneg %p491
        $region98: #{tpu_custom_call.1} parent=83 // pred_check_branch
          %8405 = sbr.rel (%p8403) target = $region100
        $region99: #{tpu_custom_call.1} parent=83 // pred_region
          %s8407 = ssub.s32 128, 128
          %8408 = vsyncadd %s8360, %s8407
          %s8409 = smul.addr %s44, 128
          %s8410 = scalar_lea.hbm %s19, %s8409
          %s8412 = sshll.u32 %s8363, 4
          %s8413 = int_to_ptr.vmem [resolvable:$true] %s8412
          %8415 = dma.vmem_to_hbm [thread:$0]  %s8413, 128, %s8410, %s8360
        $region100: #{tpu_custom_call.1} parent=83 // pred_fallthru
          _
      $region84: #{tpu_custom_call.1} parent=5 // pred_fallthru
        _
      %p8416 = scmp.le.s32.totalorder 2, %s39
      // Predicated region
      $region101: #{tpu_custom_call.1} parent=5 // pred_check
        %p8417 = pneg %p8416
      $region102: #{tpu_custom_call.1} parent=5 // pred_check_branch
        %8419 = sbr.rel (%p8417) target = $region104
      $region103: #{tpu_custom_call.1} parent=5 // pred_region
        %s8420 = ssub.s32 %s39, 2
        // Predicated region
        $region105: #{tpu_custom_call.1} parent=103 // pred_check
          %p8421 = pneg %p419
        $region106: #{tpu_custom_call.1} parent=103 // pred_check_branch
          %8423 = sbr.rel (%p8421) target = $region108
        $region107: #{tpu_custom_call.1} parent=103 // pred_region
          %s8424 = sand.u32 %s404, 1
          %s8425 = scalar_lea.sflag [#allocation5], %s8424
          %s8426 = sand.u32 %s404, 1
          %s8427 = smul.addr %s8426, 8
          %s8428 = scalar_lea.vmem [#allocation4], %s8427
          %8429 = dma.done %s8425, 128
        $region108: #{tpu_custom_call.1} parent=103 // pred_fallthru
          _
        // Predicated region
        $region109: #{tpu_custom_call.1} parent=103 // pred_check
          %p8430 = pneg %p445
        $region110: #{tpu_custom_call.1} parent=103 // pred_check_branch
          %8432 = sbr.rel (%p8430) target = $region112
        $region111: #{tpu_custom_call.1} parent=103 // pred_region
          %s8433 = sand.u32 %s45, 1
          %s8434 = scalar_lea.sflag [#allocation7], %s8433
          %s8435 = sand.u32 %s430, 1
          %s8436 = smul.addr %s8435, 8
          %s8437 = scalar_lea.vmem [#allocation6], %s8436
          %8438 = dma.done %s8434, 128
        $region112: #{tpu_custom_call.1} parent=103 // pred_fallthru
          _
        // Predicated region
        $region113: #{tpu_custom_call.1} parent=103 // pred_check
          %p8439 = pneg %p471
        $region114: #{tpu_custom_call.1} parent=103 // pred_check_branch
          %8441 = sbr.rel (%p8439) target = $region116
        $region115: #{tpu_custom_call.1} parent=103 // pred_region
          %s8442 = sand.u32 %s45, 1
          %s8443 = scalar_lea.sflag [#allocation7], %s8442
          %s8444 = sand.u32 %s456, 1
          %s8445 = smul.addr %s8444, 8
          %s8446 = scalar_lea.vmem [#allocation8], %s8445
          %8447 = dma.done %s8443, 128
        $region116: #{tpu_custom_call.1} parent=103 // pred_fallthru
          _
        // Predicated region
        $region117: #{tpu_custom_call.1} parent=103 // pred_check
          %p8448 = pneg %p497
        $region118: #{tpu_custom_call.1} parent=103 // pred_check_branch
          %8450 = sbr.rel (%p8448) target = $region120
        $region119: #{tpu_custom_call.1} parent=103 // pred_region
          %s8451 = sand.u32 %s482, 1
          %s8452 = scalar_lea.sflag [#allocation10], %s8451
          %s8453 = sand.u32 %s482, 1
          %s8454 = smul.addr %s8453, 8
          %s8455 = scalar_lea.vmem [#allocation9], %s8454
          %8456 = dma.done %s8452, 128
        $region120: #{tpu_custom_call.1} parent=103 // pred_fallthru
          _
      $region104: #{tpu_custom_call.1} parent=5 // pred_fallthru
        _
    $region6: #{tpu_custom_call.1} parent=1 // loop_footer
      %s43 = sadd.s32 1, %s39
    $region7: #{tpu_custom_call.1} parent=1 // loop_footer_branch
      %38 = sbr.rel target = $region3
    $region8: #{tpu_custom_call.1} parent=1 // loop_exit
      _
    %8457 = vsyncpa [#allocation5], 1
    %s8458 = scalar_lea.sflag [#allocation5], 1
    %8459 = vsyncpa %s8458, 1
    %8460 = vsyncpa [#allocation7], 1
    %s8461 = scalar_lea.sflag [#allocation7], 1
    %8462 = vsyncpa %s8461, 1
    %8463 = vsyncpa [#allocation10], 1
    %s8464 = scalar_lea.sflag [#allocation10], 1
    %8465 = vsyncpa %s8464, 1

</llo_original>
